<compile_context>
chip_gen: v7x
topology: tpu7x:2x2x1
jax: 0.10.0
libtpu: 0.0.40
codegen_flags: <defaults>
</compile_context>

<pallas_src>
import functools

import numpy as np
import jax
import jax.numpy as jnp
from jax.experimental import pallas as pl
from jax.experimental.pallas import tpu as pltpu


def _round_up(n, m):
    return ((n + m - 1) // m) * m


# ----------------------------------------------------------------------------
# The fused kernel: one grid step == one batch image through all four layers.
#
# Buffer conventions (all flattened "rows x channels", channels on lanes):
#   z_ref  (4, 96, 64)  : enc1 output in space-to-depth "phase" layout,
#                         phase p=(r,s), row = bh*9+bw over the 9x9 padded grid
#                         (enc2's input, incl. its zero padding ring).
#   x3_ref (96, 128)    : enc2 output on a 9-wide raster (row = oh*9+ow),
#                         col ow==8 and rows >=72 are zeros = dec1's padding.
#   q_ref  (112, 256)   : dec1 output (4 sub-pixel phases x 64ch) on a 9-wide
#                         raster shifted by +16 rows, zero ring = dec2 padding.
# ----------------------------------------------------------------------------
def _unet_kernel(lhs_ref, w1_ref, bz_ref, w2_ref, b2_ref, w3_ref, b3_ref,
                 w4_ref, b4_ref, cmask_ref, o_ref, z_ref, x3_ref, q_ref):
    f32 = jnp.float32
    bf16 = jnp.bfloat16

    cmask = cmask_ref[...]                      # (72,1): 1.0 where ow<8 else 0

    # ---- enc1: Conv(cin->64, 3x3, s1, p1) + ReLU, emitted directly in the
    # space-to-depth phase layout consumed by the stride-2 enc2.  One matmul
    # per phase; invalid (padding) rows have zero LHS and zero (masked) bias.
    w1 = w1_ref[...]
    for p in range(4):
        y = jnp.dot(lhs_ref[0, p], w1, preferred_element_type=f32)
        y = jnp.maximum(y + bz_ref[p], 0.0)
        z_ref[p] = y.astype(bf16)

    # ---- enc2: Conv(64->128, 3x3, s2, p1) + ReLU == 2x2 stride-1 conv over
    # the phase buffer (4 taps x 4 phase blocks, chained value accumulator).
    acc = None
    for t, off in enumerate((0, 1, 9, 10)):
        for p in range(4):
            d = jnp.dot(z_ref[p, off:off + 72, :], w2_ref[t * 4 + p],
                        preferred_element_type=f32)
            acc = d if acc is None else acc + d
    y = jnp.maximum(acc + b2_ref[...], 0.0) * cmask   # wrap cols -> dec1 pad
    x3_ref[0:72, :] = y.astype(bf16)
    x3_ref[72:96, :] = jnp.zeros((24, 128), bf16)

    # ---- dec1: ConvTranspose(128->64, 3x3, s2, p1, op1) + ReLU via sub-pixel
    # decomposition: 2x2 stride-1 conv producing 4 output phases (256 lanes).
    acc = None
    for t, off in enumerate((0, 1, 9, 10)):
        d = jnp.dot(x3_ref[off:off + 72, :], w3_ref[t],
                    preferred_element_type=f32)
        acc = d if acc is None else acc + d
    y = jnp.maximum(acc + b3_ref[...], 0.0) * cmask   # wrap cols -> dec2 pad
    q_ref[0:16, :] = jnp.zeros((16, 256), bf16)
    q_ref[16:88, :] = y.astype(bf16)
    q_ref[88:112, :] = jnp.zeros((24, 256), bf16)

    # ---- dec2: Conv(64->cout, 3x3, s1, p1), computed per output sub-pixel
    # phase directly from the phase buffer (9 block-shifts, K = 256), no ReLU.
    acc = None
    for t in range(9):
        off = 6 + (t // 3) * 9 + (t % 3)
        d = jnp.dot(q_ref[off:off + 72, :], w4_ref[t],
                    preferred_element_type=f32)
        acc = d if acc is None else acc + d
    o_ref[0] = (acc + b4_ref[...]).astype(o_ref.dtype)


# ----------------------------------------------------------------------------
# Per-forward JAX glue: 27-channel im2col of the tiny input, ordered per
# space-to-depth phase so enc1's output lands directly in enc2's layout.
# ----------------------------------------------------------------------------
def _build_enc1_lhs(x_nchw, k1):
    N, C, H, W = x_nchw.shape
    x = jnp.transpose(x_nchw, (0, 2, 3, 1)).astype(jnp.bfloat16)   # NHWC
    xp = jnp.pad(x, ((0, 0), (1, 1), (1, 1), (0, 0)))              # 18x18xC
    pats = jnp.concatenate(
        [xp[:, kh:kh + H, kw:kw + W, :] for kh in range(3) for kw in range(3)],
        axis=-1)                                                   # (N,16,16,9C)
    pp = jnp.pad(pats, ((0, 0), (1, 1), (1, 1), (0, 0)))           # (N,18,18,9C)
    phases = [pp[:, r:r + 17:2, s:s + 17:2, :].reshape(N, 81, 9 * C)
              for r in range(2) for s in range(2)]
    lhs = jnp.stack(phases, axis=1)                                # (N,4,81,9C)
    lhs = jnp.pad(lhs, ((0, 0), (0, 0), (0, 96 - 81), (0, k1 - 9 * C)))
    return lhs


def _forward(prepared, x_nchw, *, out_channels):
    N, C, H, W = x_nchw.shape
    assert H == 16 and W == 16, "kernel is specialized to 16x16 inputs"
    k1 = prepared["w1"].shape[0]
    lhs = _build_enc1_lhs(x_nchw, k1)

    out = pl.pallas_call(
        _unet_kernel,
        out_shape=jax.ShapeDtypeStruct((N, 72, 128), jnp.float32),
        grid_spec=pltpu.PrefetchScalarGridSpec(
            num_scalar_prefetch=0,
            grid=(N,),
            in_specs=[
                pl.BlockSpec((1, 4, 96, k1), lambda n: (n, 0, 0, 0)),   # im2col
                pl.BlockSpec((k1, 64), lambda n: (0, 0)),               # W1
                pl.BlockSpec((4, 96, 64), lambda n: (0, 0, 0)),         # masked b1
                pl.BlockSpec((16, 64, 128), lambda n: (0, 0, 0)),       # W2
                pl.BlockSpec((1, 128), lambda n: (0, 0)),               # b2
                pl.BlockSpec((4, 128, 256), lambda n: (0, 0, 0)),       # W3
                pl.BlockSpec((1, 256), lambda n: (0, 0)),               # b3
                pl.BlockSpec((9, 256, 128), lambda n: (0, 0, 0)),       # W4
                pl.BlockSpec((1, 128), lambda n: (0, 0)),               # b4
                pl.BlockSpec((72, 1), lambda n: (0, 0)),                # col mask
            ],
            out_specs=pl.BlockSpec((1, 72, 128), lambda n: (n, 0, 0)),
            scratch_shapes=[
                pltpu.VMEM((4, 96, 64), jnp.bfloat16),    # enc1 phase buffer
                pltpu.VMEM((96, 128), jnp.bfloat16),      # enc2 -> dec1 buffer
                pltpu.VMEM((112, 256), jnp.bfloat16),     # dec1 -> dec2 buffer
            ],
        ),
        compiler_params=pltpu.CompilerParams(
            dimension_semantics=("parallel",)),
    )(lhs, prepared["w1"], prepared["bz"], prepared["w2"], prepared["b2"],
      prepared["w3"], prepared["b3"], prepared["w4"], prepared["b4"],
      prepared["cmask"])

    # depth-to-space + crop of the phase-form dec2 output (tiny, in JAX).
    y = out.reshape(N, 8, 9, 4, 32)[:, :, :8, :, :out_channels]
    y = y.reshape(N, 8, 8, 2, 2, out_channels)
    y = jnp.transpose(y, (0, 5, 1, 3, 2, 4))
    return y.reshape(N, out_channels, 16, 16)


# ----------------------------------------------------------------------------
# One-time weight preparation (hoisted out of the jitted forward).
# ----------------------------------------------------------------------------
def prepare_params(params):
    w1 = np.asarray(params["enc1_w"], np.float32)          # (64, cin, 3, 3)
    b1 = np.asarray(params["enc1_b"], np.float32)
    cin = w1.shape[1]
    k1 = _round_up(9 * cin, 8)

    # enc1: (kh,kw,ci) flattened contraction, padded to k1 lanes.
    hwio1 = np.transpose(w1, (2, 3, 1, 0)).reshape(9 * cin, 64)
    w1p = np.zeros((k1, 64), np.float32)
    w1p[:9 * cin] = hwio1
    # Per-phase masked bias for the space-to-depth layout (zero on pad rows).
    bz = np.zeros((4, 96, 64), np.float32)
    for r in range(2):
        for s in range(2):
            mh = np.zeros(9, np.float32); mh[1 - r: 9 - r] = 1.0
            mw = np.zeros(9, np.float32); mw[1 - s: 9 - s] = 1.0
            m = np.outer(mh, mw).reshape(81)
            bz[r * 2 + s, :81, :] = m[:, None] * b1[None, :]

    # enc2 (stride-2 3x3) -> 2x2 taps x 4 input phases.
    w2 = np.asarray(params["enc2_w"], np.float32)           # (128, 64, 3, 3)
    b2 = np.asarray(params["enc2_b"], np.float32)
    hwio2 = np.transpose(w2, (2, 3, 1, 0))                  # (3,3,64,128)
    w2z = np.zeros((4, 4, 64, 128), np.float32)
    for dh in range(2):
        for dw in range(2):
            for r in range(2):
                for s in range(2):
                    kh, kw = 2 * dh + r, 2 * dw + s
                    if kh < 3 and kw < 3:
                        w2z[dh * 2 + dw, r * 2 + s] = hwio2[kh, kw]
    w2z = w2z.reshape(16, 64, 128)

    # dec1 (ConvTranspose 3x3 s2 p1 op1) -> 2x2 taps, 4 output phases x 64ch.
    w3 = np.asarray(params["dec1_w"], np.float32)            # (128, 64, 3, 3)
    b3 = np.asarray(params["dec1_b"], np.float32)
    w_eq = np.transpose(w3[:, :, ::-1, ::-1], (2, 3, 0, 1))   # (3,3,128,64)
    khmap = {(0, 0): 1, (1, 0): 0, (1, 1): 2}                 # (phase, tap)->k
    w3z = np.zeros((4, 128, 256), np.float32)
    for dh in range(2):
        for dw in range(2):
            for r in range(2):
                for s in range(2):
                    if (r, dh) in khmap and (s, dw) in khmap:
                        kh, kw = khmap[(r, dh)], khmap[(s, dw)]
                        blk = (r * 2 + s) * 64
                        w3z[dh * 2 + dw, :, blk:blk + 64] = w_eq[kh, kw]
    b3z = np.tile(b3, 4)

    # dec2 (3x3 s1 p1) expressed over the 4-phase input: 9 block shifts,
    # 4x64 input channels -> 4x32 output lanes (cout padded to 32 per phase).
    w4 = np.asarray(params["dec2_w"], np.float32)             # (cout, 64, 3, 3)
    b4 = np.asarray(params["dec2_b"], np.float32)
    cout = w4.shape[0]
    assert cout <= 32
    hwio4 = np.transpose(w4, (2, 3, 1, 0))                    # (3,3,64,cout)
    w4z = np.zeros((3, 3, 256, 128), np.float32)
    for dh in (-1, 0, 1):
        for dw in (-1, 0, 1):
            for ri in range(2):
                for si in range(2):
                    for ro in range(2):
                        for so in range(2):
                            kh = 2 * dh + ri - ro + 1
                            kw = 2 * dw + si - so + 1
                            if 0 <= kh <= 2 and 0 <= kw <= 2:
                                ib = (ri * 2 + si) * 64
                                ob = (ro * 2 + so) * 32
                                w4z[dh + 1, dw + 1, ib:ib + 64,
                                    ob:ob + cout] = hwio4[kh, kw]
    w4z = w4z.reshape(9, 256, 128)
    b4z = np.zeros(128, np.float32)
    for p in range(4):
        b4z[p * 32:p * 32 + cout] = b4

    # Column mask: zero the wrap-around (ow == 8) columns of 9-wide rasters.
    cm = np.ones((8, 9, 1), np.float32)
    cm[:, 8, :] = 0.0

    return {
        "w1": jnp.asarray(w1p, jnp.bfloat16),
        "bz": jnp.asarray(bz, jnp.float32),
        "w2": jnp.asarray(w2z, jnp.bfloat16),
        "b2": jnp.asarray(b2.reshape(1, 128), jnp.float32),
        "w3": jnp.asarray(w3z, jnp.bfloat16),
        "b3": jnp.asarray(b3z.reshape(1, 256), jnp.float32),
        "w4": jnp.asarray(w4z, jnp.bfloat16),
        "b4": jnp.asarray(b4z.reshape(1, 128), jnp.float32),
        "cmask": jnp.asarray(cm.reshape(72, 1), jnp.float32),
    }


# ----------------------------------------------------------------------------
# UNet parameters (PyTorch-equivalent init) and a pure-JAX f32 reference.
# ----------------------------------------------------------------------------
def init_params(key, in_channels=3, out_channels=3):
    ks = jax.random.split(key, 8)

    def uni(k, shape, fan_in):
        bound = 1.0 / float(np.sqrt(fan_in))
        return jax.random.uniform(k, shape, jnp.float32, -bound, bound)

    return {
        "enc1_w": uni(ks[0], (64, in_channels, 3, 3), in_channels * 9),
        "enc1_b": uni(ks[1], (64,), in_channels * 9),
        "enc2_w": uni(ks[2], (128, 64, 3, 3), 64 * 9),
        "enc2_b": uni(ks[3], (128,), 64 * 9),
        "dec1_w": uni(ks[4], (128, 64, 3, 3), 64 * 9),   # (in, out, kh, kw)
        "dec1_b": uni(ks[5], (64,), 64 * 9),
        "dec2_w": uni(ks[6], (out_channels, 64, 3, 3), 64 * 9),
        "dec2_b": uni(ks[7], (out_channels,), 64 * 9),
    }


def unet_reference(params, x):
    dn = ("NCHW", "OIHW", "NCHW")
    y = jax.lax.conv_general_dilated(x, params["enc1_w"], (1, 1),
                                     ((1, 1), (1, 1)), dimension_numbers=dn)
    y = jnp.maximum(y + params["enc1_b"][None, :, None, None], 0.0)
    y = jax.lax.conv_general_dilated(y, params["enc2_w"], (2, 2),
                                     ((1, 1), (1, 1)), dimension_numbers=dn)
    y = jnp.maximum(y + params["enc2_b"][None, :, None, None], 0.0)
    w_eq = jnp.transpose(params["dec1_w"][:, :, ::-1, ::-1], (1, 0, 2, 3))
    y = jax.lax.conv_general_dilated(y, w_eq, (1, 1), ((1, 2), (1, 2)),
                                     lhs_dilation=(2, 2), dimension_numbers=dn)
    y = jnp.maximum(y + params["dec1_b"][None, :, None, None], 0.0)
    y = jax.lax.conv_general_dilated(y, params["dec2_w"], (1, 1),
                                     ((1, 1), (1, 1)), dimension_numbers=dn)
    return y + params["dec2_b"][None, :, None, None]


if __name__ == "__main__":
    key = jax.random.PRNGKey(0)
    k_param, k_x = jax.random.split(key)
    params = init_params(k_param, in_channels=3, out_channels=3)
    x = jax.random.normal(k_x, (2, 3, 16, 16), jnp.float32)

    prepared = prepare_params(params)                         # one-time prep
    unet_forward = jax.jit(functools.partial(_forward, out_channels=3))

    out = jax.block_until_ready(unet_forward(prepared, x))
    ref = jax.block_until_ready(unet_reference(params, x))

    assert out.shape == (2, 3, 16, 16), out.shape
    # bf16 operands / layer boundaries with f32 accumulation vs f32 reference
    np.testing.assert_allclose(np.asarray(out), np.asarray(ref),
                               rtol=2e-2, atol=2e-2)
    print("KERNEL_OK")
</pallas_src>

<mosaic_0001>
module attributes {stable_mosaic.version = 11 : i64} {
  func.func @_unet_kernel(%arg0: i32, %arg1: memref<1x4x96x32xbf16, #tpu.memory_space<vmem>>, %arg2: memref<32x64xbf16, #tpu.memory_space<vmem>>, %arg3: memref<4x96x64xf32, #tpu.memory_space<vmem>>, %arg4: memref<16x64x128xbf16, #tpu.memory_space<vmem>>, %arg5: memref<1x128xf32, #tpu.memory_space<vmem>>, %arg6: memref<4x128x256xbf16, #tpu.memory_space<vmem>>, %arg7: memref<1x256xf32, #tpu.memory_space<vmem>>, %arg8: memref<9x256x128xbf16, #tpu.memory_space<vmem>>, %arg9: memref<1x128xf32, #tpu.memory_space<vmem>>, %arg10: memref<72x1xf32, #tpu.memory_space<vmem>>, %arg11: memref<1x72x128xf32, #tpu.memory_space<vmem>>, %arg12: memref<4x96x64xbf16, #tpu.memory_space<vmem>>, %arg13: memref<96x128xbf16, #tpu.memory_space<vmem>>, %arg14: memref<112x256xbf16, #tpu.memory_space<vmem>>) attributes {dimension_semantics = [#tpu.dimension_semantics<parallel>], iteration_bounds = array<i64: 2>, scalar_prefetch = 0 : i64, scratch_operands = 3 : i64, tpu.core_type = #tpu.core_type<tc>, window_params = [{transform_indices = @transform_0, window_bounds = array<i64: 1, 4, 96, 32>}, {pipeline_mode = #tpu.pipeline_mode<synchronous>, transform_indices = @transform_1, window_bounds = array<i64: 32, 64>}, {pipeline_mode = #tpu.pipeline_mode<synchronous>, transform_indices = @transform_2, window_bounds = array<i64: 4, 96, 64>}, {pipeline_mode = #tpu.pipeline_mode<synchronous>, transform_indices = @transform_3, window_bounds = array<i64: 16, 64, 128>}, {pipeline_mode = #tpu.pipeline_mode<synchronous>, transform_indices = @transform_4, window_bounds = array<i64: 1, 128>}, {pipeline_mode = #tpu.pipeline_mode<synchronous>, transform_indices = @transform_5, window_bounds = array<i64: 4, 128, 256>}, {pipeline_mode = #tpu.pipeline_mode<synchronous>, transform_indices = @transform_6, window_bounds = array<i64: 1, 256>}, {pipeline_mode = #tpu.pipeline_mode<synchronous>, transform_indices = @transform_7, window_bounds = array<i64: 9, 256, 128>}, {pipeline_mode = #tpu.pipeline_mode<synchronous>, transform_indices = @transform_8, window_bounds = array<i64: 1, 128>}, {pipeline_mode = #tpu.pipeline_mode<synchronous>, transform_indices = @transform_9, window_bounds = array<i64: 72, 1>}, {transform_indices = @transform_10, window_bounds = array<i64: 1, 72, 128>}]} {
    %c0 = arith.constant 0 : index
    %c0_0 = arith.constant 0 : index
    %0 = vector.load %arg10[%c0, %c0_0] : memref<72x1xf32, #tpu.memory_space<vmem>>, vector<72x1xf32>
    %c0_1 = arith.constant 0 : index
    %c0_2 = arith.constant 0 : index
    %1 = vector.load %arg2[%c0_1, %c0_2] : memref<32x64xbf16, #tpu.memory_space<vmem>>, vector<32x64xbf16>
    %c0_3 = arith.constant 0 : index
    %c0_4 = arith.constant 0 : index
    %c0_5 = arith.constant 0 : index
    %c0_6 = arith.constant 0 : index
    %2 = vector.load %arg1[%c0_3, %c0_4, %c0_5, %c0_6] : memref<1x4x96x32xbf16, #tpu.memory_space<vmem>>, vector<1x1x96x32xbf16>
    %3 = vector.shape_cast %2 : vector<1x1x96x32xbf16> to vector<96x32xbf16>
    %cst = arith.constant dense<0.000000e+00> : vector<96x64xf32>
    %4 = tpu.matmul %3, %1, %cst {dimension_numbers = #tpu.dot_dimension_numbers<[1], [0], [0], [1], [0, 0, 1, 1], [], []>} : vector<96x32xbf16>, vector<32x64xbf16>, vector<96x64xf32> -> vector<96x64xf32>
    %c0_7 = arith.constant 0 : index
    %c0_8 = arith.constant 0 : index
    %c0_9 = arith.constant 0 : index
    %5 = vector.load %arg3[%c0_7, %c0_8, %c0_9] : memref<4x96x64xf32, #tpu.memory_space<vmem>>, vector<1x96x64xf32>
    %6 = vector.shape_cast %5 : vector<1x96x64xf32> to vector<96x64xf32>
    %7 = arith.addf %4, %6 : vector<96x64xf32>
    %cst_10 = arith.constant 0.000000e+00 : f32
    %8 = vector.broadcast %cst_10 : f32 to vector<96x64xf32>
    %9 = arith.maximumf %7, %8 : vector<96x64xf32>
    %10 = arith.truncf %9 : vector<96x64xf32> to vector<96x64xbf16>
    %c0_11 = arith.constant 0 : index
    %c0_12 = arith.constant 0 : index
    %c0_13 = arith.constant 0 : index
    %11 = vector.load %arg12[%c0_11, %c0_12, %c0_13] : memref<4x96x64xbf16, #tpu.memory_space<vmem>>, vector<1x96x64xbf16>
    %12 = vector.shape_cast %11 : vector<1x96x64xbf16> to vector<96x64xbf16>
    %13 = vector.shape_cast %10 : vector<96x64xbf16> to vector<1x96x64xbf16>
    tpu.vector_store %arg12[%c0_11, %c0_12, %c0_13], %13 {strides = array<i32>} : memref<4x96x64xbf16, #tpu.memory_space<vmem>>, vector<1x96x64xbf16>,
    %c0_14 = arith.constant 0 : index
    %c1 = arith.constant 1 : index
    %c0_15 = arith.constant 0 : index
    %c0_16 = arith.constant 0 : index
    %14 = vector.load %arg1[%c0_14, %c1, %c0_15, %c0_16] : memref<1x4x96x32xbf16, #tpu.memory_space<vmem>>, vector<1x1x96x32xbf16>
    %15 = vector.shape_cast %14 : vector<1x1x96x32xbf16> to vector<96x32xbf16>
    %cst_17 = arith.constant dense<0.000000e+00> : vector<96x64xf32>
    %16 = tpu.matmul %15, %1, %cst_17 {dimension_numbers = #tpu.dot_dimension_numbers<[1], [0], [0], [1], [0, 0, 1, 1], [], []>} : vector<96x32xbf16>, vector<32x64xbf16>, vector<96x64xf32> -> vector<96x64xf32>
    %c1_18 = arith.constant 1 : index
    %c0_19 = arith.constant 0 : index
    %c0_20 = arith.constant 0 : index
    %17 = vector.load %arg3[%c1_18, %c0_19, %c0_20] : memref<4x96x64xf32, #tpu.memory_space<vmem>>, vector<1x96x64xf32>
    %18 = vector.shape_cast %17 : vector<1x96x64xf32> to vector<96x64xf32>
    %19 = arith.addf %16, %18 : vector<96x64xf32>
    %cst_21 = arith.constant 0.000000e+00 : f32
    %20 = vector.broadcast %cst_21 : f32 to vector<96x64xf32>
    %21 = arith.maximumf %19, %20 : vector<96x64xf32>
    %22 = arith.truncf %21 : vector<96x64xf32> to vector<96x64xbf16>
    %c1_22 = arith.constant 1 : index
    %c0_23 = arith.constant 0 : index
    %c0_24 = arith.constant 0 : index
    %23 = vector.load %arg12[%c1_22, %c0_23, %c0_24] : memref<4x96x64xbf16, #tpu.memory_space<vmem>>, vector<1x96x64xbf16>
    %24 = vector.shape_cast %23 : vector<1x96x64xbf16> to vector<96x64xbf16>
    %25 = vector.shape_cast %22 : vector<96x64xbf16> to vector<1x96x64xbf16>
    tpu.vector_store %arg12[%c1_22, %c0_23, %c0_24], %25 {strides = array<i32>} : memref<4x96x64xbf16, #tpu.memory_space<vmem>>, vector<1x96x64xbf16>,
    %c0_25 = arith.constant 0 : index
    %c2 = arith.constant 2 : index
    %c0_26 = arith.constant 0 : index
    %c0_27 = arith.constant 0 : index
    %26 = vector.load %arg1[%c0_25, %c2, %c0_26, %c0_27] : memref<1x4x96x32xbf16, #tpu.memory_space<vmem>>, vector<1x1x96x32xbf16>
    %27 = vector.shape_cast %26 : vector<1x1x96x32xbf16> to vector<96x32xbf16>
    %cst_28 = arith.constant dense<0.000000e+00> : vector<96x64xf32>
    %28 = tpu.matmul %27, %1, %cst_28 {dimension_numbers = #tpu.dot_dimension_numbers<[1], [0], [0], [1], [0, 0, 1, 1], [], []>} : vector<96x32xbf16>, vector<32x64xbf16>, vector<96x64xf32> -> vector<96x64xf32>
    %c2_29 = arith.constant 2 : index
    %c0_30 = arith.constant 0 : index
    %c0_31 = arith.constant 0 : index
    %29 = vector.load %arg3[%c2_29, %c0_30, %c0_31] : memref<4x96x64xf32, #tpu.memory_space<vmem>>, vector<1x96x64xf32>
    %30 = vector.shape_cast %29 : vector<1x96x64xf32> to vector<96x64xf32>
    %31 = arith.addf %28, %30 : vector<96x64xf32>
    %cst_32 = arith.constant 0.000000e+00 : f32
    %32 = vector.broadcast %cst_32 : f32 to vector<96x64xf32>
    %33 = arith.maximumf %31, %32 : vector<96x64xf32>
    %34 = arith.truncf %33 : vector<96x64xf32> to vector<96x64xbf16>
    %c2_33 = arith.constant 2 : index
    %c0_34 = arith.constant 0 : index
    %c0_35 = arith.constant 0 : index
    %35 = vector.load %arg12[%c2_33, %c0_34, %c0_35] : memref<4x96x64xbf16, #tpu.memory_space<vmem>>, vector<1x96x64xbf16>
    %36 = vector.shape_cast %35 : vector<1x96x64xbf16> to vector<96x64xbf16>
    %37 = vector.shape_cast %34 : vector<96x64xbf16> to vector<1x96x64xbf16>
    tpu.vector_store %arg12[%c2_33, %c0_34, %c0_35], %37 {strides = array<i32>} : memref<4x96x64xbf16, #tpu.memory_space<vmem>>, vector<1x96x64xbf16>,
    %c0_36 = arith.constant 0 : index
    %c3 = arith.constant 3 : index
    %c0_37 = arith.constant 0 : index
    %c0_38 = arith.constant 0 : index
    %38 = vector.load %arg1[%c0_36, %c3, %c0_37, %c0_38] : memref<1x4x96x32xbf16, #tpu.memory_space<vmem>>, vector<1x1x96x32xbf16>
    %39 = vector.shape_cast %38 : vector<1x1x96x32xbf16> to vector<96x32xbf16>
    %cst_39 = arith.constant dense<0.000000e+00> : vector<96x64xf32>
    %40 = tpu.matmul %39, %1, %cst_39 {dimension_numbers = #tpu.dot_dimension_numbers<[1], [0], [0], [1], [0, 0, 1, 1], [], []>} : vector<96x32xbf16>, vector<32x64xbf16>, vector<96x64xf32> -> vector<96x64xf32>
    %c3_40 = arith.constant 3 : index
    %c0_41 = arith.constant 0 : index
    %c0_42 = arith.constant 0 : index
    %41 = vector.load %arg3[%c3_40, %c0_41, %c0_42] : memref<4x96x64xf32, #tpu.memory_space<vmem>>, vector<1x96x64xf32>
    %42 = vector.shape_cast %41 : vector<1x96x64xf32> to vector<96x64xf32>
    %43 = arith.addf %40, %42 : vector<96x64xf32>
    %cst_43 = arith.constant 0.000000e+00 : f32
    %44 = vector.broadcast %cst_43 : f32 to vector<96x64xf32>
    %45 = arith.maximumf %43, %44 : vector<96x64xf32>
    %46 = arith.truncf %45 : vector<96x64xf32> to vector<96x64xbf16>
    %c3_44 = arith.constant 3 : index
    %c0_45 = arith.constant 0 : index
    %c0_46 = arith.constant 0 : index
    %47 = vector.load %arg12[%c3_44, %c0_45, %c0_46] : memref<4x96x64xbf16, #tpu.memory_space<vmem>>, vector<1x96x64xbf16>
    %48 = vector.shape_cast %47 : vector<1x96x64xbf16> to vector<96x64xbf16>
    %49 = vector.shape_cast %46 : vector<96x64xbf16> to vector<1x96x64xbf16>
    tpu.vector_store %arg12[%c3_44, %c0_45, %c0_46], %49 {strides = array<i32>} : memref<4x96x64xbf16, #tpu.memory_space<vmem>>, vector<1x96x64xbf16>,
    %c0_47 = arith.constant 0 : index
    %c0_48 = arith.constant 0 : index
    %c0_49 = arith.constant 0 : index
    %50 = vector.load %arg12[%c0_47, %c0_48, %c0_49] : memref<4x96x64xbf16, #tpu.memory_space<vmem>>, vector<1x72x64xbf16>
    %51 = vector.shape_cast %50 : vector<1x72x64xbf16> to vector<72x64xbf16>
    %c0_50 = arith.constant 0 : index
    %c0_51 = arith.constant 0 : index
    %c0_52 = arith.constant 0 : index
    %52 = vector.load %arg4[%c0_50, %c0_51, %c0_52] : memref<16x64x128xbf16, #tpu.memory_space<vmem>>, vector<1x64x128xbf16>
    %53 = vector.shape_cast %52 : vector<1x64x128xbf16> to vector<64x128xbf16>
    %cst_53 = arith.constant dense<0.000000e+00> : vector<72x128xf32>
    %54 = tpu.matmul %51, %53, %cst_53 {dimension_numbers = #tpu.dot_dimension_numbers<[1], [0], [0], [1], [0, 0, 1, 1], [], []>} : vector<72x64xbf16>, vector<64x128xbf16>, vector<72x128xf32> -> vector<72x128xf32>
    %c1_54 = arith.constant 1 : index
    %c0_55 = arith.constant 0 : index
    %c0_56 = arith.constant 0 : index
    %55 = vector.load %arg12[%c1_54, %c0_55, %c0_56] : memref<4x96x64xbf16, #tpu.memory_space<vmem>>, vector<1x72x64xbf16>
    %56 = vector.shape_cast %55 : vector<1x72x64xbf16> to vector<72x64xbf16>
    %c1_57 = arith.constant 1 : index
    %c0_58 = arith.constant 0 : index
    %c0_59 = arith.constant 0 : index
    %57 = vector.load %arg4[%c1_57, %c0_58, %c0_59] : memref<16x64x128xbf16, #tpu.memory_space<vmem>>, vector<1x64x128xbf16>
    %58 = vector.shape_cast %57 : vector<1x64x128xbf16> to vector<64x128xbf16>
    %cst_60 = arith.constant dense<0.000000e+00> : vector<72x128xf32>
    %59 = tpu.matmul %56, %58, %cst_60 {dimension_numbers = #tpu.dot_dimension_numbers<[1], [0], [0], [1], [0, 0, 1, 1], [], []>} : vector<72x64xbf16>, vector<64x128xbf16>, vector<72x128xf32> -> vector<72x128xf32>
    %60 = arith.addf %54, %59 : vector<72x128xf32>
    %c2_61 = arith.constant 2 : index
    %c0_62 = arith.constant 0 : index
    %c0_63 = arith.constant 0 : index
    %61 = vector.load %arg12[%c2_61, %c0_62, %c0_63] : memref<4x96x64xbf16, #tpu.memory_space<vmem>>, vector<1x72x64xbf16>
    %62 = vector.shape_cast %61 : vector<1x72x64xbf16> to vector<72x64xbf16>
    %c2_64 = arith.constant 2 : index
    %c0_65 = arith.constant 0 : index
    %c0_66 = arith.constant 0 : index
    %63 = vector.load %arg4[%c2_64, %c0_65, %c0_66] : memref<16x64x128xbf16, #tpu.memory_space<vmem>>, vector<1x64x128xbf16>
    %64 = vector.shape_cast %63 : vector<1x64x128xbf16> to vector<64x128xbf16>
    %cst_67 = arith.constant dense<0.000000e+00> : vector<72x128xf32>
    %65 = tpu.matmul %62, %64, %cst_67 {dimension_numbers = #tpu.dot_dimension_numbers<[1], [0], [0], [1], [0, 0, 1, 1], [], []>} : vector<72x64xbf16>, vector<64x128xbf16>, vector<72x128xf32> -> vector<72x128xf32>
    %66 = arith.addf %60, %65 : vector<72x128xf32>
    %c3_68 = arith.constant 3 : index
    %c0_69 = arith.constant 0 : index
    %c0_70 = arith.constant 0 : index
    %67 = vector.load %arg12[%c3_68, %c0_69, %c0_70] : memref<4x96x64xbf16, #tpu.memory_space<vmem>>, vector<1x72x64xbf16>
    %68 = vector.shape_cast %67 : vector<1x72x64xbf16> to vector<72x64xbf16>
    %c3_71 = arith.constant 3 : index
    %c0_72 = arith.constant 0 : index
    %c0_73 = arith.constant 0 : index
    %69 = vector.load %arg4[%c3_71, %c0_72, %c0_73] : memref<16x64x128xbf16, #tpu.memory_space<vmem>>, vector<1x64x128xbf16>
    %70 = vector.shape_cast %69 : vector<1x64x128xbf16> to vector<64x128xbf16>
    %cst_74 = arith.constant dense<0.000000e+00> : vector<72x128xf32>
    %71 = tpu.matmul %68, %70, %cst_74 {dimension_numbers = #tpu.dot_dimension_numbers<[1], [0], [0], [1], [0, 0, 1, 1], [], []>} : vector<72x64xbf16>, vector<64x128xbf16>, vector<72x128xf32> -> vector<72x128xf32>
    %72 = arith.addf %66, %71 : vector<72x128xf32>
    %c0_75 = arith.constant 0 : index
    %c1_76 = arith.constant 1 : index
    %c0_77 = arith.constant 0 : index
    %73 = vector.load %arg12[%c0_75, %c1_76, %c0_77] : memref<4x96x64xbf16, #tpu.memory_space<vmem>>, vector<1x72x64xbf16>
    %74 = vector.shape_cast %73 : vector<1x72x64xbf16> to vector<72x64xbf16>
    %c4 = arith.constant 4 : index
    %c0_78 = arith.constant 0 : index
    %c0_79 = arith.constant 0 : index
    %75 = vector.load %arg4[%c4, %c0_78, %c0_79] : memref<16x64x128xbf16, #tpu.memory_space<vmem>>, vector<1x64x128xbf16>
    %76 = vector.shape_cast %75 : vector<1x64x128xbf16> to vector<64x128xbf16>
    %cst_80 = arith.constant dense<0.000000e+00> : vector<72x128xf32>
    %77 = tpu.matmul %74, %76, %cst_80 {dimension_numbers = #tpu.dot_dimension_numbers<[1], [0], [0], [1], [0, 0, 1, 1], [], []>} : vector<72x64xbf16>, vector<64x128xbf16>, vector<72x128xf32> -> vector<72x128xf32>
    %78 = arith.addf %72, %77 : vector<72x128xf32>
    %c1_81 = arith.constant 1 : index
    %c1_82 = arith.constant 1 : index
    %c0_83 = arith.constant 0 : index
    %79 = vector.load %arg12[%c1_81, %c1_82, %c0_83] : memref<4x96x64xbf16, #tpu.memory_space<vmem>>, vector<1x72x64xbf16>
    %80 = vector.shape_cast %79 : vector<1x72x64xbf16> to vector<72x64xbf16>
    %c5 = arith.constant 5 : index
    %c0_84 = arith.constant 0 : index
    %c0_85 = arith.constant 0 : index
    %81 = vector.load %arg4[%c5, %c0_84, %c0_85] : memref<16x64x128xbf16, #tpu.memory_space<vmem>>, vector<1x64x128xbf16>
    %82 = vector.shape_cast %81 : vector<1x64x128xbf16> to vector<64x128xbf16>
    %cst_86 = arith.constant dense<0.000000e+00> : vector<72x128xf32>
    %83 = tpu.matmul %80, %82, %cst_86 {dimension_numbers = #tpu.dot_dimension_numbers<[1], [0], [0], [1], [0, 0, 1, 1], [], []>} : vector<72x64xbf16>, vector<64x128xbf16>, vector<72x128xf32> -> vector<72x128xf32>
    %84 = arith.addf %78, %83 : vector<72x128xf32>
    %c2_87 = arith.constant 2 : index
    %c1_88 = arith.constant 1 : index
    %c0_89 = arith.constant 0 : index
    %85 = vector.load %arg12[%c2_87, %c1_88, %c0_89] : memref<4x96x64xbf16, #tpu.memory_space<vmem>>, vector<1x72x64xbf16>
    %86 = vector.shape_cast %85 : vector<1x72x64xbf16> to vector<72x64xbf16>
    %c6 = arith.constant 6 : index
    %c0_90 = arith.constant 0 : index
    %c0_91 = arith.constant 0 : index
    %87 = vector.load %arg4[%c6, %c0_90, %c0_91] : memref<16x64x128xbf16, #tpu.memory_space<vmem>>, vector<1x64x128xbf16>
    %88 = vector.shape_cast %87 : vector<1x64x128xbf16> to vector<64x128xbf16>
    %cst_92 = arith.constant dense<0.000000e+00> : vector<72x128xf32>
    %89 = tpu.matmul %86, %88, %cst_92 {dimension_numbers = #tpu.dot_dimension_numbers<[1], [0], [0], [1], [0, 0, 1, 1], [], []>} : vector<72x64xbf16>, vector<64x128xbf16>, vector<72x128xf32> -> vector<72x128xf32>
    %90 = arith.addf %84, %89 : vector<72x128xf32>
    %c3_93 = arith.constant 3 : index
    %c1_94 = arith.constant 1 : index
    %c0_95 = arith.constant 0 : index
    %91 = vector.load %arg12[%c3_93, %c1_94, %c0_95] : memref<4x96x64xbf16, #tpu.memory_space<vmem>>, vector<1x72x64xbf16>
    %92 = vector.shape_cast %91 : vector<1x72x64xbf16> to vector<72x64xbf16>
    %c7 = arith.constant 7 : index
    %c0_96 = arith.constant 0 : index
    %c0_97 = arith.constant 0 : index
    %93 = vector.load %arg4[%c7, %c0_96, %c0_97] : memref<16x64x128xbf16, #tpu.memory_space<vmem>>, vector<1x64x128xbf16>
    %94 = vector.shape_cast %93 : vector<1x64x128xbf16> to vector<64x128xbf16>
    %cst_98 = arith.constant dense<0.000000e+00> : vector<72x128xf32>
    %95 = tpu.matmul %92, %94, %cst_98 {dimension_numbers = #tpu.dot_dimension_numbers<[1], [0], [0], [1], [0, 0, 1, 1], [], []>} : vector<72x64xbf16>, vector<64x128xbf16>, vector<72x128xf32> -> vector<72x128xf32>
    %96 = arith.addf %90, %95 : vector<72x128xf32>
    %c0_99 = arith.constant 0 : index
    %c9 = arith.constant 9 : index
    %c0_100 = arith.constant 0 : index
    %97 = vector.load %arg12[%c0_99, %c9, %c0_100] : memref<4x96x64xbf16, #tpu.memory_space<vmem>>, vector<1x72x64xbf16>
    %98 = vector.shape_cast %97 : vector<1x72x64xbf16> to vector<72x64xbf16>
    %c8 = arith.constant 8 : index
    %c0_101 = arith.constant 0 : index
    %c0_102 = arith.constant 0 : index
    %99 = vector.load %arg4[%c8, %c0_101, %c0_102] : memref<16x64x128xbf16, #tpu.memory_space<vmem>>, vector<1x64x128xbf16>
    %100 = vector.shape_cast %99 : vector<1x64x128xbf16> to vector<64x128xbf16>
    %cst_103 = arith.constant dense<0.000000e+00> : vector<72x128xf32>
    %101 = tpu.matmul %98, %100, %cst_103 {dimension_numbers = #tpu.dot_dimension_numbers<[1], [0], [0], [1], [0, 0, 1, 1], [], []>} : vector<72x64xbf16>, vector<64x128xbf16>, vector<72x128xf32> -> vector<72x128xf32>
    %102 = arith.addf %96, %101 : vector<72x128xf32>
    %c1_104 = arith.constant 1 : index
    %c9_105 = arith.constant 9 : index
    %c0_106 = arith.constant 0 : index
    %103 = vector.load %arg12[%c1_104, %c9_105, %c0_106] : memref<4x96x64xbf16, #tpu.memory_space<vmem>>, vector<1x72x64xbf16>
    %104 = vector.shape_cast %103 : vector<1x72x64xbf16> to vector<72x64xbf16>
    %c9_107 = arith.constant 9 : index
    %c0_108 = arith.constant 0 : index
    %c0_109 = arith.constant 0 : index
    %105 = vector.load %arg4[%c9_107, %c0_108, %c0_109] : memref<16x64x128xbf16, #tpu.memory_space<vmem>>, vector<1x64x128xbf16>
    %106 = vector.shape_cast %105 : vector<1x64x128xbf16> to vector<64x128xbf16>
    %cst_110 = arith.constant dense<0.000000e+00> : vector<72x128xf32>
    %107 = tpu.matmul %104, %106, %cst_110 {dimension_numbers = #tpu.dot_dimension_numbers<[1], [0], [0], [1], [0, 0, 1, 1], [], []>} : vector<72x64xbf16>, vector<64x128xbf16>, vector<72x128xf32> -> vector<72x128xf32>
    %108 = arith.addf %102, %107 : vector<72x128xf32>
    %c2_111 = arith.constant 2 : index
    %c9_112 = arith.constant 9 : index
    %c0_113 = arith.constant 0 : index
    %109 = vector.load %arg12[%c2_111, %c9_112, %c0_113] : memref<4x96x64xbf16, #tpu.memory_space<vmem>>, vector<1x72x64xbf16>
    %110 = vector.shape_cast %109 : vector<1x72x64xbf16> to vector<72x64xbf16>
    %c10 = arith.constant 10 : index
    %c0_114 = arith.constant 0 : index
    %c0_115 = arith.constant 0 : index
    %111 = vector.load %arg4[%c10, %c0_114, %c0_115] : memref<16x64x128xbf16, #tpu.memory_space<vmem>>, vector<1x64x128xbf16>
    %112 = vector.shape_cast %111 : vector<1x64x128xbf16> to vector<64x128xbf16>
    %cst_116 = arith.constant dense<0.000000e+00> : vector<72x128xf32>
    %113 = tpu.matmul %110, %112, %cst_116 {dimension_numbers = #tpu.dot_dimension_numbers<[1], [0], [0], [1], [0, 0, 1, 1], [], []>} : vector<72x64xbf16>, vector<64x128xbf16>, vector<72x128xf32> -> vector<72x128xf32>
    %114 = arith.addf %108, %113 : vector<72x128xf32>
    %c3_117 = arith.constant 3 : index
    %c9_118 = arith.constant 9 : index
    %c0_119 = arith.constant 0 : index
    %115 = vector.load %arg12[%c3_117, %c9_118, %c0_119] : memref<4x96x64xbf16, #tpu.memory_space<vmem>>, vector<1x72x64xbf16>
    %116 = vector.shape_cast %115 : vector<1x72x64xbf16> to vector<72x64xbf16>
    %c11 = arith.constant 11 : index
    %c0_120 = arith.constant 0 : index
    %c0_121 = arith.constant 0 : index
    %117 = vector.load %arg4[%c11, %c0_120, %c0_121] : memref<16x64x128xbf16, #tpu.memory_space<vmem>>, vector<1x64x128xbf16>
    %118 = vector.shape_cast %117 : vector<1x64x128xbf16> to vector<64x128xbf16>
    %cst_122 = arith.constant dense<0.000000e+00> : vector<72x128xf32>
    %119 = tpu.matmul %116, %118, %cst_122 {dimension_numbers = #tpu.dot_dimension_numbers<[1], [0], [0], [1], [0, 0, 1, 1], [], []>} : vector<72x64xbf16>, vector<64x128xbf16>, vector<72x128xf32> -> vector<72x128xf32>
    %120 = arith.addf %114, %119 : vector<72x128xf32>
    %c0_123 = arith.constant 0 : index
    %c10_124 = arith.constant 10 : index
    %c0_125 = arith.constant 0 : index
    %121 = vector.load %arg12[%c0_123, %c10_124, %c0_125] : memref<4x96x64xbf16, #tpu.memory_space<vmem>>, vector<1x72x64xbf16>
    %122 = vector.shape_cast %121 : vector<1x72x64xbf16> to vector<72x64xbf16>
    %c12 = arith.constant 12 : index
    %c0_126 = arith.constant 0 : index
    %c0_127 = arith.constant 0 : index
    %123 = vector.load %arg4[%c12, %c0_126, %c0_127] : memref<16x64x128xbf16, #tpu.memory_space<vmem>>, vector<1x64x128xbf16>
    %124 = vector.shape_cast %123 : vector<1x64x128xbf16> to vector<64x128xbf16>
    %cst_128 = arith.constant dense<0.000000e+00> : vector<72x128xf32>
    %125 = tpu.matmul %122, %124, %cst_128 {dimension_numbers = #tpu.dot_dimension_numbers<[1], [0], [0], [1], [0, 0, 1, 1], [], []>} : vector<72x64xbf16>, vector<64x128xbf16>, vector<72x128xf32> -> vector<72x128xf32>
    %126 = arith.addf %120, %125 : vector<72x128xf32>
    %c1_129 = arith.constant 1 : index
    %c10_130 = arith.constant 10 : index
    %c0_131 = arith.constant 0 : index
    %127 = vector.load %arg12[%c1_129, %c10_130, %c0_131] : memref<4x96x64xbf16, #tpu.memory_space<vmem>>, vector<1x72x64xbf16>
    %128 = vector.shape_cast %127 : vector<1x72x64xbf16> to vector<72x64xbf16>
    %c13 = arith.constant 13 : index
    %c0_132 = arith.constant 0 : index
    %c0_133 = arith.constant 0 : index
    %129 = vector.load %arg4[%c13, %c0_132, %c0_133] : memref<16x64x128xbf16, #tpu.memory_space<vmem>>, vector<1x64x128xbf16>
    %130 = vector.shape_cast %129 : vector<1x64x128xbf16> to vector<64x128xbf16>
    %cst_134 = arith.constant dense<0.000000e+00> : vector<72x128xf32>
    %131 = tpu.matmul %128, %130, %cst_134 {dimension_numbers = #tpu.dot_dimension_numbers<[1], [0], [0], [1], [0, 0, 1, 1], [], []>} : vector<72x64xbf16>, vector<64x128xbf16>, vector<72x128xf32> -> vector<72x128xf32>
    %132 = arith.addf %126, %131 : vector<72x128xf32>
    %c2_135 = arith.constant 2 : index
    %c10_136 = arith.constant 10 : index
    %c0_137 = arith.constant 0 : index
    %133 = vector.load %arg12[%c2_135, %c10_136, %c0_137] : memref<4x96x64xbf16, #tpu.memory_space<vmem>>, vector<1x72x64xbf16>
    %134 = vector.shape_cast %133 : vector<1x72x64xbf16> to vector<72x64xbf16>
    %c14 = arith.constant 14 : index
    %c0_138 = arith.constant 0 : index
    %c0_139 = arith.constant 0 : index
    %135 = vector.load %arg4[%c14, %c0_138, %c0_139] : memref<16x64x128xbf16, #tpu.memory_space<vmem>>, vector<1x64x128xbf16>
    %136 = vector.shape_cast %135 : vector<1x64x128xbf16> to vector<64x128xbf16>
    %cst_140 = arith.constant dense<0.000000e+00> : vector<72x128xf32>
    %137 = tpu.matmul %134, %136, %cst_140 {dimension_numbers = #tpu.dot_dimension_numbers<[1], [0], [0], [1], [0, 0, 1, 1], [], []>} : vector<72x64xbf16>, vector<64x128xbf16>, vector<72x128xf32> -> vector<72x128xf32>
    %138 = arith.addf %132, %137 : vector<72x128xf32>
    %c3_141 = arith.constant 3 : index
    %c10_142 = arith.constant 10 : index
    %c0_143 = arith.constant 0 : index
    %139 = vector.load %arg12[%c3_141, %c10_142, %c0_143] : memref<4x96x64xbf16, #tpu.memory_space<vmem>>, vector<1x72x64xbf16>
    %140 = vector.shape_cast %139 : vector<1x72x64xbf16> to vector<72x64xbf16>
    %c15 = arith.constant 15 : index
    %c0_144 = arith.constant 0 : index
    %c0_145 = arith.constant 0 : index
    %141 = vector.load %arg4[%c15, %c0_144, %c0_145] : memref<16x64x128xbf16, #tpu.memory_space<vmem>>, vector<1x64x128xbf16>
    %142 = vector.shape_cast %141 : vector<1x64x128xbf16> to vector<64x128xbf16>
    %cst_146 = arith.constant dense<0.000000e+00> : vector<72x128xf32>
    %143 = tpu.matmul %140, %142, %cst_146 {dimension_numbers = #tpu.dot_dimension_numbers<[1], [0], [0], [1], [0, 0, 1, 1], [], []>} : vector<72x64xbf16>, vector<64x128xbf16>, vector<72x128xf32> -> vector<72x128xf32>
    %144 = arith.addf %138, %143 : vector<72x128xf32>
    %c0_147 = arith.constant 0 : index
    %c0_148 = arith.constant 0 : index
    %145 = vector.load %arg5[%c0_147, %c0_148] : memref<1x128xf32, #tpu.memory_space<vmem>>, vector<1x128xf32>
    %146 = vector.broadcast %145 : vector<1x128xf32> to vector<72x128xf32>
    %147 = arith.addf %144, %146 : vector<72x128xf32>
    %cst_149 = arith.constant 0.000000e+00 : f32
    %148 = vector.broadcast %cst_149 : f32 to vector<72x128xf32>
    %149 = arith.maximumf %147, %148 : vector<72x128xf32>
    %150 = vector.broadcast %0 : vector<72x1xf32> to vector<72x128xf32>
    %151 = arith.mulf %149, %150 : vector<72x128xf32>
    %152 = arith.truncf %151 : vector<72x128xf32> to vector<72x128xbf16>
    %c0_150 = arith.constant 0 : index
    %c0_151 = arith.constant 0 : index
    %153 = vector.load %arg13[%c0_150, %c0_151] : memref<96x128xbf16, #tpu.memory_space<vmem>>, vector<72x128xbf16>
    tpu.vector_store %arg13[%c0_150, %c0_151], %152 {strides = array<i32>} : memref<96x128xbf16, #tpu.memory_space<vmem>>, vector<72x128xbf16>,
    %cst_152 = arith.constant 0.000000e+00 : bf16
    %154 = vector.broadcast %cst_152 : bf16 to vector<24x128xbf16>
    %c72 = arith.constant 72 : index
    %c0_153 = arith.constant 0 : index
    %155 = vector.load %arg13[%c72, %c0_153] : memref<96x128xbf16, #tpu.memory_space<vmem>>, vector<24x128xbf16>
    tpu.vector_store %arg13[%c72, %c0_153], %154 {strides = array<i32>} : memref<96x128xbf16, #tpu.memory_space<vmem>>, vector<24x128xbf16>,
    %c0_154 = arith.constant 0 : index
    %c0_155 = arith.constant 0 : index
    %156 = vector.load %arg13[%c0_154, %c0_155] : memref<96x128xbf16, #tpu.memory_space<vmem>>, vector<72x128xbf16>
    %c0_156 = arith.constant 0 : index
    %c0_157 = arith.constant 0 : index
    %c0_158 = arith.constant 0 : index
    %157 = vector.load %arg6[%c0_156, %c0_157, %c0_158] : memref<4x128x256xbf16, #tpu.memory_space<vmem>>, vector<1x128x256xbf16>
    %158 = vector.shape_cast %157 : vector<1x128x256xbf16> to vector<128x256xbf16>
    %cst_159 = arith.constant dense<0.000000e+00> : vector<72x256xf32>
    %159 = tpu.matmul %156, %158, %cst_159 {dimension_numbers = #tpu.dot_dimension_numbers<[1], [0], [0], [1], [0, 0, 1, 1], [], []>} : vector<72x128xbf16>, vector<128x256xbf16>, vector<72x256xf32> -> vector<72x256xf32>
    %c1_160 = arith.constant 1 : index
    %c0_161 = arith.constant 0 : index
    %160 = vector.load %arg13[%c1_160, %c0_161] : memref<96x128xbf16, #tpu.memory_space<vmem>>, vector<72x128xbf16>
    %c1_162 = arith.constant 1 : index
    %c0_163 = arith.constant 0 : index
    %c0_164 = arith.constant 0 : index
    %161 = vector.load %arg6[%c1_162, %c0_163, %c0_164] : memref<4x128x256xbf16, #tpu.memory_space<vmem>>, vector<1x128x256xbf16>
    %162 = vector.shape_cast %161 : vector<1x128x256xbf16> to vector<128x256xbf16>
    %cst_165 = arith.constant dense<0.000000e+00> : vector<72x256xf32>
    %163 = tpu.matmul %160, %162, %cst_165 {dimension_numbers = #tpu.dot_dimension_numbers<[1], [0], [0], [1], [0, 0, 1, 1], [], []>} : vector<72x128xbf16>, vector<128x256xbf16>, vector<72x256xf32> -> vector<72x256xf32>
    %164 = arith.addf %159, %163 : vector<72x256xf32>
    %c9_166 = arith.constant 9 : index
    %c0_167 = arith.constant 0 : index
    %165 = vector.load %arg13[%c9_166, %c0_167] : memref<96x128xbf16, #tpu.memory_space<vmem>>, vector<72x128xbf16>
    %c2_168 = arith.constant 2 : index
    %c0_169 = arith.constant 0 : index
    %c0_170 = arith.constant 0 : index
    %166 = vector.load %arg6[%c2_168, %c0_169, %c0_170] : memref<4x128x256xbf16, #tpu.memory_space<vmem>>, vector<1x128x256xbf16>
    %167 = vector.shape_cast %166 : vector<1x128x256xbf16> to vector<128x256xbf16>
    %cst_171 = arith.constant dense<0.000000e+00> : vector<72x256xf32>
    %168 = tpu.matmul %165, %167, %cst_171 {dimension_numbers = #tpu.dot_dimension_numbers<[1], [0], [0], [1], [0, 0, 1, 1], [], []>} : vector<72x128xbf16>, vector<128x256xbf16>, vector<72x256xf32> -> vector<72x256xf32>
    %169 = arith.addf %164, %168 : vector<72x256xf32>
    %c10_172 = arith.constant 10 : index
    %c0_173 = arith.constant 0 : index
    %170 = vector.load %arg13[%c10_172, %c0_173] : memref<96x128xbf16, #tpu.memory_space<vmem>>, vector<72x128xbf16>
    %c3_174 = arith.constant 3 : index
    %c0_175 = arith.constant 0 : index
    %c0_176 = arith.constant 0 : index
    %171 = vector.load %arg6[%c3_174, %c0_175, %c0_176] : memref<4x128x256xbf16, #tpu.memory_space<vmem>>, vector<1x128x256xbf16>
    %172 = vector.shape_cast %171 : vector<1x128x256xbf16> to vector<128x256xbf16>
    %cst_177 = arith.constant dense<0.000000e+00> : vector<72x256xf32>
    %173 = tpu.matmul %170, %172, %cst_177 {dimension_numbers = #tpu.dot_dimension_numbers<[1], [0], [0], [1], [0, 0, 1, 1], [], []>} : vector<72x128xbf16>, vector<128x256xbf16>, vector<72x256xf32> -> vector<72x256xf32>
    %174 = arith.addf %169, %173 : vector<72x256xf32>
    %c0_178 = arith.constant 0 : index
    %c0_179 = arith.constant 0 : index
    %175 = vector.load %arg7[%c0_178, %c0_179] : memref<1x256xf32, #tpu.memory_space<vmem>>, vector<1x256xf32>
    %176 = vector.broadcast %175 : vector<1x256xf32> to vector<72x256xf32>
    %177 = arith.addf %174, %176 : vector<72x256xf32>
    %cst_180 = arith.constant 0.000000e+00 : f32
    %178 = vector.broadcast %cst_180 : f32 to vector<72x256xf32>
    %179 = arith.maximumf %177, %178 : vector<72x256xf32>
    %180 = vector.broadcast %0 : vector<72x1xf32> to vector<72x256xf32>
    %181 = arith.mulf %179, %180 : vector<72x256xf32>
    %cst_181 = arith.constant 0.000000e+00 : bf16
    %182 = vector.broadcast %cst_181 : bf16 to vector<16x256xbf16>
    %c0_182 = arith.constant 0 : index
    %c0_183 = arith.constant 0 : index
    %183 = vector.load %arg14[%c0_182, %c0_183] : memref<112x256xbf16, #tpu.memory_space<vmem>>, vector<16x256xbf16>
    tpu.vector_store %arg14[%c0_182, %c0_183], %182 {strides = array<i32>} : memref<112x256xbf16, #tpu.memory_space<vmem>>, vector<16x256xbf16>,
    %184 = arith.truncf %181 : vector<72x256xf32> to vector<72x256xbf16>
    %c16 = arith.constant 16 : index
    %c0_184 = arith.constant 0 : index
    %185 = vector.load %arg14[%c16, %c0_184] : memref<112x256xbf16, #tpu.memory_space<vmem>>, vector<72x256xbf16>
    tpu.vector_store %arg14[%c16, %c0_184], %184 {strides = array<i32>} : memref<112x256xbf16, #tpu.memory_space<vmem>>, vector<72x256xbf16>,
    %cst_185 = arith.constant 0.000000e+00 : bf16
    %186 = vector.broadcast %cst_185 : bf16 to vector<24x256xbf16>
    %c88 = arith.constant 88 : index
    %c0_186 = arith.constant 0 : index
    %187 = vector.load %arg14[%c88, %c0_186] : memref<112x256xbf16, #tpu.memory_space<vmem>>, vector<24x256xbf16>
    tpu.vector_store %arg14[%c88, %c0_186], %186 {strides = array<i32>} : memref<112x256xbf16, #tpu.memory_space<vmem>>, vector<24x256xbf16>,
    %c6_187 = arith.constant 6 : index
    %c0_188 = arith.constant 0 : index
    %188 = vector.load %arg14[%c6_187, %c0_188] : memref<112x256xbf16, #tpu.memory_space<vmem>>, vector<72x256xbf16>
    %c0_189 = arith.constant 0 : index
    %c0_190 = arith.constant 0 : index
    %c0_191 = arith.constant 0 : index
    %189 = vector.load %arg8[%c0_189, %c0_190, %c0_191] : memref<9x256x128xbf16, #tpu.memory_space<vmem>>, vector<1x256x128xbf16>
    %190 = vector.shape_cast %189 : vector<1x256x128xbf16> to vector<256x128xbf16>
    %cst_192 = arith.constant dense<0.000000e+00> : vector<72x128xf32>
    %191 = tpu.matmul %188, %190, %cst_192 {dimension_numbers = #tpu.dot_dimension_numbers<[1], [0], [0], [1], [0, 0, 1, 1], [], []>} : vector<72x256xbf16>, vector<256x128xbf16>, vector<72x128xf32> -> vector<72x128xf32>
    %c7_193 = arith.constant 7 : index
    %c0_194 = arith.constant 0 : index
    %192 = vector.load %arg14[%c7_193, %c0_194] : memref<112x256xbf16, #tpu.memory_space<vmem>>, vector<72x256xbf16>
    %c1_195 = arith.constant 1 : index
    %c0_196 = arith.constant 0 : index
    %c0_197 = arith.constant 0 : index
    %193 = vector.load %arg8[%c1_195, %c0_196, %c0_197] : memref<9x256x128xbf16, #tpu.memory_space<vmem>>, vector<1x256x128xbf16>
    %194 = vector.shape_cast %193 : vector<1x256x128xbf16> to vector<256x128xbf16>
    %cst_198 = arith.constant dense<0.000000e+00> : vector<72x128xf32>
    %195 = tpu.matmul %192, %194, %cst_198 {dimension_numbers = #tpu.dot_dimension_numbers<[1], [0], [0], [1], [0, 0, 1, 1], [], []>} : vector<72x256xbf16>, vector<256x128xbf16>, vector<72x128xf32> -> vector<72x128xf32>
    %196 = arith.addf %191, %195 : vector<72x128xf32>
    %c8_199 = arith.constant 8 : index
    %c0_200 = arith.constant 0 : index
    %197 = vector.load %arg14[%c8_199, %c0_200] : memref<112x256xbf16, #tpu.memory_space<vmem>>, vector<72x256xbf16>
    %c2_201 = arith.constant 2 : index
    %c0_202 = arith.constant 0 : index
    %c0_203 = arith.constant 0 : index
    %198 = vector.load %arg8[%c2_201, %c0_202, %c0_203] : memref<9x256x128xbf16, #tpu.memory_space<vmem>>, vector<1x256x128xbf16>
    %199 = vector.shape_cast %198 : vector<1x256x128xbf16> to vector<256x128xbf16>
    %cst_204 = arith.constant dense<0.000000e+00> : vector<72x128xf32>
    %200 = tpu.matmul %197, %199, %cst_204 {dimension_numbers = #tpu.dot_dimension_numbers<[1], [0], [0], [1], [0, 0, 1, 1], [], []>} : vector<72x256xbf16>, vector<256x128xbf16>, vector<72x128xf32> -> vector<72x128xf32>
    %201 = arith.addf %196, %200 : vector<72x128xf32>
    %c15_205 = arith.constant 15 : index
    %c0_206 = arith.constant 0 : index
    %202 = vector.load %arg14[%c15_205, %c0_206] : memref<112x256xbf16, #tpu.memory_space<vmem>>, vector<72x256xbf16>
    %c3_207 = arith.constant 3 : index
    %c0_208 = arith.constant 0 : index
    %c0_209 = arith.constant 0 : index
    %203 = vector.load %arg8[%c3_207, %c0_208, %c0_209] : memref<9x256x128xbf16, #tpu.memory_space<vmem>>, vector<1x256x128xbf16>
    %204 = vector.shape_cast %203 : vector<1x256x128xbf16> to vector<256x128xbf16>
    %cst_210 = arith.constant dense<0.000000e+00> : vector<72x128xf32>
    %205 = tpu.matmul %202, %204, %cst_210 {dimension_numbers = #tpu.dot_dimension_numbers<[1], [0], [0], [1], [0, 0, 1, 1], [], []>} : vector<72x256xbf16>, vector<256x128xbf16>, vector<72x128xf32> -> vector<72x128xf32>
    %206 = arith.addf %201, %205 : vector<72x128xf32>
    %c16_211 = arith.constant 16 : index
    %c0_212 = arith.constant 0 : index
    %207 = vector.load %arg14[%c16_211, %c0_212] : memref<112x256xbf16, #tpu.memory_space<vmem>>, vector<72x256xbf16>
    %c4_213 = arith.constant 4 : index
    %c0_214 = arith.constant 0 : index
    %c0_215 = arith.constant 0 : index
    %208 = vector.load %arg8[%c4_213, %c0_214, %c0_215] : memref<9x256x128xbf16, #tpu.memory_space<vmem>>, vector<1x256x128xbf16>
    %209 = vector.shape_cast %208 : vector<1x256x128xbf16> to vector<256x128xbf16>
    %cst_216 = arith.constant dense<0.000000e+00> : vector<72x128xf32>
    %210 = tpu.matmul %207, %209, %cst_216 {dimension_numbers = #tpu.dot_dimension_numbers<[1], [0], [0], [1], [0, 0, 1, 1], [], []>} : vector<72x256xbf16>, vector<256x128xbf16>, vector<72x128xf32> -> vector<72x128xf32>
    %211 = arith.addf %206, %210 : vector<72x128xf32>
    %c17 = arith.constant 17 : index
    %c0_217 = arith.constant 0 : index
    %212 = vector.load %arg14[%c17, %c0_217] : memref<112x256xbf16, #tpu.memory_space<vmem>>, vector<72x256xbf16>
    %c5_218 = arith.constant 5 : index
    %c0_219 = arith.constant 0 : index
    %c0_220 = arith.constant 0 : index
    %213 = vector.load %arg8[%c5_218, %c0_219, %c0_220] : memref<9x256x128xbf16, #tpu.memory_space<vmem>>, vector<1x256x128xbf16>
    %214 = vector.shape_cast %213 : vector<1x256x128xbf16> to vector<256x128xbf16>
    %cst_221 = arith.constant dense<0.000000e+00> : vector<72x128xf32>
    %215 = tpu.matmul %212, %214, %cst_221 {dimension_numbers = #tpu.dot_dimension_numbers<[1], [0], [0], [1], [0, 0, 1, 1], [], []>} : vector<72x256xbf16>, vector<256x128xbf16>, vector<72x128xf32> -> vector<72x128xf32>
    %216 = arith.addf %211, %215 : vector<72x128xf32>
    %c24 = arith.constant 24 : index
    %c0_222 = arith.constant 0 : index
    %217 = vector.load %arg14[%c24, %c0_222] : memref<112x256xbf16, #tpu.memory_space<vmem>>, vector<72x256xbf16>
    %c6_223 = arith.constant 6 : index
    %c0_224 = arith.constant 0 : index
    %c0_225 = arith.constant 0 : index
    %218 = vector.load %arg8[%c6_223, %c0_224, %c0_225] : memref<9x256x128xbf16, #tpu.memory_space<vmem>>, vector<1x256x128xbf16>
    %219 = vector.shape_cast %218 : vector<1x256x128xbf16> to vector<256x128xbf16>
    %cst_226 = arith.constant dense<0.000000e+00> : vector<72x128xf32>
    %220 = tpu.matmul %217, %219, %cst_226 {dimension_numbers = #tpu.dot_dimension_numbers<[1], [0], [0], [1], [0, 0, 1, 1], [], []>} : vector<72x256xbf16>, vector<256x128xbf16>, vector<72x128xf32> -> vector<72x128xf32>
    %221 = arith.addf %216, %220 : vector<72x128xf32>
    %c25 = arith.constant 25 : index
    %c0_227 = arith.constant 0 : index
    %222 = vector.load %arg14[%c25, %c0_227] : memref<112x256xbf16, #tpu.memory_space<vmem>>, vector<72x256xbf16>
    %c7_228 = arith.constant 7 : index
    %c0_229 = arith.constant 0 : index
    %c0_230 = arith.constant 0 : index
    %223 = vector.load %arg8[%c7_228, %c0_229, %c0_230] : memref<9x256x128xbf16, #tpu.memory_space<vmem>>, vector<1x256x128xbf16>
    %224 = vector.shape_cast %223 : vector<1x256x128xbf16> to vector<256x128xbf16>
    %cst_231 = arith.constant dense<0.000000e+00> : vector<72x128xf32>
    %225 = tpu.matmul %222, %224, %cst_231 {dimension_numbers = #tpu.dot_dimension_numbers<[1], [0], [0], [1], [0, 0, 1, 1], [], []>} : vector<72x256xbf16>, vector<256x128xbf16>, vector<72x128xf32> -> vector<72x128xf32>
    %226 = arith.addf %221, %225 : vector<72x128xf32>
    %c26 = arith.constant 26 : index
    %c0_232 = arith.constant 0 : index
    %227 = vector.load %arg14[%c26, %c0_232] : memref<112x256xbf16, #tpu.memory_space<vmem>>, vector<72x256xbf16>
    %c8_233 = arith.constant 8 : index
    %c0_234 = arith.constant 0 : index
    %c0_235 = arith.constant 0 : index
    %228 = vector.load %arg8[%c8_233, %c0_234, %c0_235] : memref<9x256x128xbf16, #tpu.memory_space<vmem>>, vector<1x256x128xbf16>
    %229 = vector.shape_cast %228 : vector<1x256x128xbf16> to vector<256x128xbf16>
    %cst_236 = arith.constant dense<0.000000e+00> : vector<72x128xf32>
    %230 = tpu.matmul %227, %229, %cst_236 {dimension_numbers = #tpu.dot_dimension_numbers<[1], [0], [0], [1], [0, 0, 1, 1], [], []>} : vector<72x256xbf16>, vector<256x128xbf16>, vector<72x128xf32> -> vector<72x128xf32>
    %231 = arith.addf %226, %230 : vector<72x128xf32>
    %c0_237 = arith.constant 0 : index
    %c0_238 = arith.constant 0 : index
    %232 = vector.load %arg9[%c0_237, %c0_238] : memref<1x128xf32, #tpu.memory_space<vmem>>, vector<1x128xf32>
    %233 = vector.broadcast %232 : vector<1x128xf32> to vector<72x128xf32>
    %234 = arith.addf %231, %233 : vector<72x128xf32>
    %c0_239 = arith.constant 0 : index
    %c0_240 = arith.constant 0 : index
    %c0_241 = arith.constant 0 : index
    %235 = vector.load %arg11[%c0_239, %c0_240, %c0_241] : memref<1x72x128xf32, #tpu.memory_space<vmem>>, vector<1x72x128xf32>
    %236 = vector.shape_cast %235 : vector<1x72x128xf32> to vector<72x128xf32>
    %237 = vector.shape_cast %234 : vector<72x128xf32> to vector<1x72x128xf32>
    tpu.vector_store %arg11[%c0_239, %c0_240, %c0_241], %237 {strides = array<i32>} : memref<1x72x128xf32, #tpu.memory_space<vmem>>, vector<1x72x128xf32>,
    return
  }
  func.func @transform_0(%arg0: i32) -> (i32, i32, i32, i32) {
    %c0_i32 = arith.constant 0 : i32
    %c0_i32_0 = arith.constant 0 : i32
    %c0_i32_1 = arith.constant 0 : i32
    %c0_i32_2 = arith.constant 0 : i32
    return %arg0, %c0_i32, %c0_i32_0, %c0_i32_1 : i32, i32, i32, i32
  }
  func.func @transform_1(%arg0: i32) -> (i32, i32) {
    %c0_i32 = arith.constant 0 : i32
    %c0_i32_0 = arith.constant 0 : i32
    %c0_i32_1 = arith.constant 0 : i32
    return %c0_i32, %c0_i32_0 : i32, i32
  }
  func.func @transform_2(%arg0: i32) -> (i32, i32, i32) {
    %c0_i32 = arith.constant 0 : i32
    %c0_i32_0 = arith.constant 0 : i32
    %c0_i32_1 = arith.constant 0 : i32
    %c0_i32_2 = arith.constant 0 : i32
    return %c0_i32, %c0_i32_0, %c0_i32_1 : i32, i32, i32
  }
  func.func @transform_3(%arg0: i32) -> (i32, i32, i32) {
    %c0_i32 = arith.constant 0 : i32
    %c0_i32_0 = arith.constant 0 : i32
    %c0_i32_1 = arith.constant 0 : i32
    %c0_i32_2 = arith.constant 0 : i32
    return %c0_i32, %c0_i32_0, %c0_i32_1 : i32, i32, i32
  }
  func.func @transform_4(%arg0: i32) -> (i32, i32) {
    %c0_i32 = arith.constant 0 : i32
    %c0_i32_0 = arith.constant 0 : i32
    %c0_i32_1 = arith.constant 0 : i32
    return %c0_i32, %c0_i32_0 : i32, i32
  }
  func.func @transform_5(%arg0: i32) -> (i32, i32, i32) {
    %c0_i32 = arith.constant 0 : i32
    %c0_i32_0 = arith.constant 0 : i32
    %c0_i32_1 = arith.constant 0 : i32
    %c0_i32_2 = arith.constant 0 : i32
    return %c0_i32, %c0_i32_0, %c0_i32_1 : i32, i32, i32
  }
  func.func @transform_6(%arg0: i32) -> (i32, i32) {
    %c0_i32 = arith.constant 0 : i32
    %c0_i32_0 = arith.constant 0 : i32
    %c0_i32_1 = arith.constant 0 : i32
    return %c0_i32, %c0_i32_0 : i32, i32
  }
  func.func @transform_7(%arg0: i32) -> (i32, i32, i32) {
    %c0_i32 = arith.constant 0 : i32
    %c0_i32_0 = arith.constant 0 : i32
    %c0_i32_1 = arith.constant 0 : i32
    %c0_i32_2 = arith.constant 0 : i32
    return %c0_i32, %c0_i32_0, %c0_i32_1 : i32, i32, i32
  }
  func.func @transform_8(%arg0: i32) -> (i32, i32) {
    %c0_i32 = arith.constant 0 : i32
    %c0_i32_0 = arith.constant 0 : i32
    %c0_i32_1 = arith.constant 0 : i32
    return %c0_i32, %c0_i32_0 : i32, i32
  }
  func.func @transform_9(%arg0: i32) -> (i32, i32) {
    %c0_i32 = arith.constant 0 : i32
    %c0_i32_0 = arith.constant 0 : i32
    %c0_i32_1 = arith.constant 0 : i32
    return %c0_i32, %c0_i32_0 : i32, i32
  }
  func.func @transform_10(%arg0: i32) -> (i32, i32, i32) {
    %c0_i32 = arith.constant 0 : i32
    %c0_i32_0 = arith.constant 0 : i32
    %c0_i32_1 = arith.constant 0 : i32
    return %arg0, %c0_i32, %c0_i32_0 : i32, i32, i32
  }
}

</mosaic_0001>

<llo_original>
// kernel: _forward.1
$region0: #{_forward.1}
  #allocation0 [shape = 'u32[]', space=smem, size = 0x4, offset = 0x4, fixed_abs, tag = 'smem constant byte address 0x4 - core index']
  #allocation1 [shape = 'u32[144,128]{1,0:T(1,128)}', space=vmem, size = 0x12000, scoped, tag = 'internal scratch']
  #allocation2 [shape = 'bf16[4,96,64]{2,1,0:T(16,128)(2,1)}', space=vmem, size = 0x18000, scoped, tag = 'scratch operand']
  #allocation3 [shape = 'bf16[96,128]{1,0:T(16,128)(2,1)}', space=vmem, size = 0x6000, scoped, tag = 'scratch operand']
  #allocation4 [shape = 'bf16[112,256]{1,0:T(16,128)(2,1)}', space=vmem, size = 0xe000, scoped, tag = 'scratch operand']
  %s0 = inlined_call_operand.vmem [shape: bf16[2,4,96,32], index: 0, kind: input, shape index: {}]
  %s1 = inlined_call_operand.vmem [shape: bf16[32,64], index: 1, kind: input, shape index: {}]
  %s2 = inlined_call_operand.vmem [shape: f32[4,96,64], index: 2, kind: input, shape index: {}]
  %s3 = inlined_call_operand.vmem [shape: bf16[16,64,128], index: 3, kind: input, shape index: {}]
  %s4 = inlined_call_operand.vmem [shape: f32[1,128], index: 4, kind: input, shape index: {}]
  %s5 = inlined_call_operand.vmem [shape: bf16[4,128,256], index: 5, kind: input, shape index: {}]
  %s6 = inlined_call_operand.vmem [shape: f32[1,256], index: 6, kind: input, shape index: {}]
  %s7 = inlined_call_operand.vmem [shape: bf16[9,256,128], index: 7, kind: input, shape index: {}]
  %s8 = inlined_call_operand.vmem [shape: f32[1,128], index: 8, kind: input, shape index: {}]
  %s9 = inlined_call_operand.vmem [shape: f32[72,1], index: 9, kind: input, shape index: {}]
  %s10 = inlined_call_operand.vmem [shape: f32[2,72,128], index: 10, kind: output, shape index: {}]
  %s11 = sld [smem:[#allocation0]]
  $region73: #{_forward.1} parent=0
    _
  %s13 = ssub.s32 1, %s11
  %s14 = scalar_select 0, %s13, %s11
  loop: start=0, step=1, limit=4
  $region2: #{_forward.1} parent=0 // loop_pre_header
    _
  $region3: #{_forward.1} parent=0 // loop_header
    %s16 = sphi 0, %s20
    %p17 = scmp.ge.s32.totalorder %s16, 4
    %s26 = sphi 0, %s28
    %s29 = sphi 0, %s26
    %s30 = sphi 0, %s29
    %s46 = sphi 0, %s30
    %s50 = sphi 0, %s50
    %s52 = sphi 0, %s50
    %s53 = sphi 0, %s52
    %s67 = sphi 0, %s53
    %s71 = sphi 0, %s71
    %s73 = sphi 0, %s71
    %s74 = sphi 0, %s73
    %s88 = sphi 0, %s74
    %s92 = sphi 0, %s92
    %s94 = sphi 0, %s92
    %s95 = sphi 0, %s94
    %s109 = sphi 0, %s95
    %s113 = sphi 0, %s113
    %s115 = sphi 0, %s113
    %s116 = sphi 0, %s115
    %s130 = sphi 0, %s116
    %s134 = sphi 0, %s134
    %s136 = sphi 0, %s134
    %s137 = sphi 0, %s136
    %s151 = sphi 0, %s137
    %s155 = sphi 0, %s155
    %s157 = sphi 0, %s155
    %s158 = sphi 0, %s157
    %s172 = sphi 0, %s158
    %s176 = sphi 0, %s176
    %s178 = sphi 0, %s176
    %s179 = sphi 0, %s178
    %s193 = sphi 0, %s179
    %s197 = sphi 0, %s197
    %s199 = sphi 0, %s197
    %s200 = sphi 0, %s199
    %s214 = sphi 0, %s200
    %s218 = sphi 0, %s218
    %s220 = sphi 0, %s218
    %s221 = sphi 0, %s220
    %s235 = sphi 0, %s221
    %s241 = sphi 0, %s243
    %s244 = sphi 0, %s241
    %s245 = sphi 0, %s244
    %s261 = sphi 0, %s245
  $region4: #{_forward.1} parent=0 // loop_header_branch
    %19 = sbr.rel (%p17) target = $region8
  $region5: #{_forward.1} parent=0 // loop_body
    %s21 = ssub.s32 %s16, 1
    %s22 = ssub.s32 %s16, 2
    %s23 = sadd.s32 %s16, 1
    %s24 = ssub.s32 %s16, %s23
    %p25 = scmp.eq.s32.totalorder %s24, 0
    %s27 = sadd.s32 %s26, 1
    %s28 = scalar_select %p25, %s26, %s27
    %p31 = pneg %p25
    %p32 = scmp.eq.s32.totalorder %s16, 1
    %p33 = por %p31, %p32
    %p34 = scmp.ne.s32.totalorder %s26, %s29
    %p35 = scmp.eq.s32.totalorder %s16, 0
    %p36 = por %p34, %p35
    %p37 = scmp.ne.s32.totalorder %s26, %s29
    %p38 = scmp.eq.s32.totalorder %s21, 1
    %p39 = por %p37, %p38
    %p40 = scmp.ne.s32.totalorder %s29, %s30
    %p41 = scmp.eq.s32.totalorder %s21, 0
    %p42 = por %p40, %p41
    %p43 = scmp.ne.s32.totalorder %s29, %s30
    %p44 = scmp.eq.s32.totalorder %s22, 1
    %p45 = por %p43, %p44
    %p47 = scmp.ne.s32.totalorder %s30, %s46
    %p48 = scmp.eq.s32.totalorder %s22, 0
    %p49 = por %p47, %p48
    %s51 = sadd.s32 %s50, 1
    %p54 = scmp.eq.s32.totalorder %s16, 1
    %p55 = scmp.ne.s32.totalorder %s50, %s52
    %p56 = scmp.eq.s32.totalorder %s16, 0
    %p57 = por %p55, %p56
    %p58 = scmp.ne.s32.totalorder %s50, %s52
    %p59 = scmp.eq.s32.totalorder %s21, 1
    %p60 = por %p58, %p59
    %p61 = scmp.ne.s32.totalorder %s52, %s53
    %p62 = scmp.eq.s32.totalorder %s21, 0
    %p63 = por %p61, %p62
    %p64 = scmp.ne.s32.totalorder %s52, %s53
    %p65 = scmp.eq.s32.totalorder %s22, 1
    %p66 = por %p64, %p65
    %p68 = scmp.ne.s32.totalorder %s53, %s67
    %p69 = scmp.eq.s32.totalorder %s22, 0
    %p70 = por %p68, %p69
    %s72 = sadd.s32 %s71, 1
    %p75 = scmp.eq.s32.totalorder %s16, 1
    %p76 = scmp.ne.s32.totalorder %s71, %s73
    %p77 = scmp.eq.s32.totalorder %s16, 0
    %p78 = por %p76, %p77
    %p79 = scmp.ne.s32.totalorder %s71, %s73
    %p80 = scmp.eq.s32.totalorder %s21, 1
    %p81 = por %p79, %p80
    %p82 = scmp.ne.s32.totalorder %s73, %s74
    %p83 = scmp.eq.s32.totalorder %s21, 0
    %p84 = por %p82, %p83
    %p85 = scmp.ne.s32.totalorder %s73, %s74
    %p86 = scmp.eq.s32.totalorder %s22, 1
    %p87 = por %p85, %p86
    %p89 = scmp.ne.s32.totalorder %s74, %s88
    %p90 = scmp.eq.s32.totalorder %s22, 0
    %p91 = por %p89, %p90
    %s93 = sadd.s32 %s92, 1
    %p96 = scmp.eq.s32.totalorder %s16, 1
    %p97 = scmp.ne.s32.totalorder %s92, %s94
    %p98 = scmp.eq.s32.totalorder %s16, 0
    %p99 = por %p97, %p98
    %p100 = scmp.ne.s32.totalorder %s92, %s94
    %p101 = scmp.eq.s32.totalorder %s21, 1
    %p102 = por %p100, %p101
    %p103 = scmp.ne.s32.totalorder %s94, %s95
    %p104 = scmp.eq.s32.totalorder %s21, 0
    %p105 = por %p103, %p104
    %p106 = scmp.ne.s32.totalorder %s94, %s95
    %p107 = scmp.eq.s32.totalorder %s22, 1
    %p108 = por %p106, %p107
    %p110 = scmp.ne.s32.totalorder %s95, %s109
    %p111 = scmp.eq.s32.totalorder %s22, 0
    %p112 = por %p110, %p111
    %s114 = sadd.s32 %s113, 1
    %p117 = scmp.eq.s32.totalorder %s16, 1
    %p118 = scmp.ne.s32.totalorder %s113, %s115
    %p119 = scmp.eq.s32.totalorder %s16, 0
    %p120 = por %p118, %p119
    %p121 = scmp.ne.s32.totalorder %s113, %s115
    %p122 = scmp.eq.s32.totalorder %s21, 1
    %p123 = por %p121, %p122
    %p124 = scmp.ne.s32.totalorder %s115, %s116
    %p125 = scmp.eq.s32.totalorder %s21, 0
    %p126 = por %p124, %p125
    %p127 = scmp.ne.s32.totalorder %s115, %s116
    %p128 = scmp.eq.s32.totalorder %s22, 1
    %p129 = por %p127, %p128
    %p131 = scmp.ne.s32.totalorder %s116, %s130
    %p132 = scmp.eq.s32.totalorder %s22, 0
    %p133 = por %p131, %p132
    %s135 = sadd.s32 %s134, 1
    %p138 = scmp.eq.s32.totalorder %s16, 1
    %p139 = scmp.ne.s32.totalorder %s134, %s136
    %p140 = scmp.eq.s32.totalorder %s16, 0
    %p141 = por %p139, %p140
    %p142 = scmp.ne.s32.totalorder %s134, %s136
    %p143 = scmp.eq.s32.totalorder %s21, 1
    %p144 = por %p142, %p143
    %p145 = scmp.ne.s32.totalorder %s136, %s137
    %p146 = scmp.eq.s32.totalorder %s21, 0
    %p147 = por %p145, %p146
    %p148 = scmp.ne.s32.totalorder %s136, %s137
    %p149 = scmp.eq.s32.totalorder %s22, 1
    %p150 = por %p148, %p149
    %p152 = scmp.ne.s32.totalorder %s137, %s151
    %p153 = scmp.eq.s32.totalorder %s22, 0
    %p154 = por %p152, %p153
    %s156 = sadd.s32 %s155, 1
    %p159 = scmp.eq.s32.totalorder %s16, 1
    %p160 = scmp.ne.s32.totalorder %s155, %s157
    %p161 = scmp.eq.s32.totalorder %s16, 0
    %p162 = por %p160, %p161
    %p163 = scmp.ne.s32.totalorder %s155, %s157
    %p164 = scmp.eq.s32.totalorder %s21, 1
    %p165 = por %p163, %p164
    %p166 = scmp.ne.s32.totalorder %s157, %s158
    %p167 = scmp.eq.s32.totalorder %s21, 0
    %p168 = por %p166, %p167
    %p169 = scmp.ne.s32.totalorder %s157, %s158
    %p170 = scmp.eq.s32.totalorder %s22, 1
    %p171 = por %p169, %p170
    %p173 = scmp.ne.s32.totalorder %s158, %s172
    %p174 = scmp.eq.s32.totalorder %s22, 0
    %p175 = por %p173, %p174
    %s177 = sadd.s32 %s176, 1
    %p180 = scmp.eq.s32.totalorder %s16, 1
    %p181 = scmp.ne.s32.totalorder %s176, %s178
    %p182 = scmp.eq.s32.totalorder %s16, 0
    %p183 = por %p181, %p182
    %p184 = scmp.ne.s32.totalorder %s176, %s178
    %p185 = scmp.eq.s32.totalorder %s21, 1
    %p186 = por %p184, %p185
    %p187 = scmp.ne.s32.totalorder %s178, %s179
    %p188 = scmp.eq.s32.totalorder %s21, 0
    %p189 = por %p187, %p188
    %p190 = scmp.ne.s32.totalorder %s178, %s179
    %p191 = scmp.eq.s32.totalorder %s22, 1
    %p192 = por %p190, %p191
    %p194 = scmp.ne.s32.totalorder %s179, %s193
    %p195 = scmp.eq.s32.totalorder %s22, 0
    %p196 = por %p194, %p195
    %s198 = sadd.s32 %s197, 1
    %p201 = scmp.eq.s32.totalorder %s16, 1
    %p202 = scmp.ne.s32.totalorder %s197, %s199
    %p203 = scmp.eq.s32.totalorder %s16, 0
    %p204 = por %p202, %p203
    %p205 = scmp.ne.s32.totalorder %s197, %s199
    %p206 = scmp.eq.s32.totalorder %s21, 1
    %p207 = por %p205, %p206
    %p208 = scmp.ne.s32.totalorder %s199, %s200
    %p209 = scmp.eq.s32.totalorder %s21, 0
    %p210 = por %p208, %p209
    %p211 = scmp.ne.s32.totalorder %s199, %s200
    %p212 = scmp.eq.s32.totalorder %s22, 1
    %p213 = por %p211, %p212
    %p215 = scmp.ne.s32.totalorder %s200, %s214
    %p216 = scmp.eq.s32.totalorder %s22, 0
    %p217 = por %p215, %p216
    %s219 = sadd.s32 %s218, 1
    %p222 = scmp.eq.s32.totalorder %s16, 1
    %p223 = scmp.ne.s32.totalorder %s218, %s220
    %p224 = scmp.eq.s32.totalorder %s16, 0
    %p225 = por %p223, %p224
    %p226 = scmp.ne.s32.totalorder %s218, %s220
    %p227 = scmp.eq.s32.totalorder %s21, 1
    %p228 = por %p226, %p227
    %p229 = scmp.ne.s32.totalorder %s220, %s221
    %p230 = scmp.eq.s32.totalorder %s21, 0
    %p231 = por %p229, %p230
    %p232 = scmp.ne.s32.totalorder %s220, %s221
    %p233 = scmp.eq.s32.totalorder %s22, 1
    %p234 = por %p232, %p233
    %p236 = scmp.ne.s32.totalorder %s221, %s235
    %p237 = scmp.eq.s32.totalorder %s22, 0
    %p238 = por %p236, %p237
    %s239 = ssub.s32 %s16, %s23
    %p240 = scmp.eq.s32.totalorder %s239, 0
    %s242 = sadd.s32 %s241, 1
    %s243 = scalar_select %p240, %s241, %s242
    %p246 = pneg %p240
    %p247 = scmp.eq.s32.totalorder %s16, 1
    %p248 = por %p246, %p247
    %p249 = scmp.ne.s32.totalorder %s241, %s244
    %p250 = scmp.eq.s32.totalorder %s16, 0
    %p251 = por %p249, %p250
    %p252 = scmp.ne.s32.totalorder %s241, %s244
    %p253 = scmp.eq.s32.totalorder %s21, 1
    %p254 = por %p252, %p253
    %p255 = scmp.ne.s32.totalorder %s244, %s245
    %p256 = scmp.eq.s32.totalorder %s21, 0
    %p257 = por %p255, %p256
    %p258 = scmp.ne.s32.totalorder %s244, %s245
    %p259 = scmp.eq.s32.totalorder %s22, 1
    %p260 = por %p258, %p259
    %p262 = scmp.ne.s32.totalorder %s245, %s261
    %p263 = scmp.eq.s32.totalorder %s22, 0
    %p264 = por %p262, %p263
    %p265 = scmp.le.s32.totalorder 1, %s16
    %p266 = scmp.lt.s32.totalorder %s16, 3
    %p267 = pnand %p265, %p266
    %p268 = pneg %p267
    // Predicated region
    $region9: #{_forward.1} parent=5 // pred_check
      _
    $region10: #{_forward.1} parent=5 // pred_check_branch
      %270 = sbr.rel (%p267) target = $region12
    $region11: #{_forward.1} parent=5 // pred_region
      %s271 = ssub.s32 %s16, 1
      // Predicated region
      $region13: #{_forward.1} parent=11 // pred_check
        %p272 = pneg %p63
      $region14: #{_forward.1} parent=11 // pred_check_branch
        %274 = sbr.rel (%p272) target = $region16
      $region15: #{_forward.1} parent=11 // pred_region
        _
      $region16: #{_forward.1} parent=11 // pred_fallthru
        _
      // Predicated region
      $region17: #{_forward.1} parent=11 // pred_check
        %p275 = pneg %p84
      $region18: #{_forward.1} parent=11 // pred_check_branch
        %277 = sbr.rel (%p275) target = $region20
      $region19: #{_forward.1} parent=11 // pred_region
        _
      $region20: #{_forward.1} parent=11 // pred_fallthru
        _
      // Predicated region
      $region21: #{_forward.1} parent=11 // pred_check
        %p278 = pneg %p105
      $region22: #{_forward.1} parent=11 // pred_check_branch
        %280 = sbr.rel (%p278) target = $region24
      $region23: #{_forward.1} parent=11 // pred_region
        _
      $region24: #{_forward.1} parent=11 // pred_fallthru
        _
      // Predicated region
      $region25: #{_forward.1} parent=11 // pred_check
        %p281 = pneg %p126
      $region26: #{_forward.1} parent=11 // pred_check_branch
        %283 = sbr.rel (%p281) target = $region28
      $region27: #{_forward.1} parent=11 // pred_region
        _
      $region28: #{_forward.1} parent=11 // pred_fallthru
        _
      // Predicated region
      $region29: #{_forward.1} parent=11 // pred_check
        %p284 = pneg %p147
      $region30: #{_forward.1} parent=11 // pred_check_branch
        %286 = sbr.rel (%p284) target = $region32
      $region31: #{_forward.1} parent=11 // pred_region
        _
      $region32: #{_forward.1} parent=11 // pred_fallthru
        _
      // Predicated region
      $region33: #{_forward.1} parent=11 // pred_check
        %p287 = pneg %p168
      $region34: #{_forward.1} parent=11 // pred_check_branch
        %289 = sbr.rel (%p287) target = $region36
      $region35: #{_forward.1} parent=11 // pred_region
        _
      $region36: #{_forward.1} parent=11 // pred_fallthru
        _
      // Predicated region
      $region37: #{_forward.1} parent=11 // pred_check
        %p290 = pneg %p189
      $region38: #{_forward.1} parent=11 // pred_check_branch
        %292 = sbr.rel (%p290) target = $region40
      $region39: #{_forward.1} parent=11 // pred_region
        _
      $region40: #{_forward.1} parent=11 // pred_fallthru
        _
      // Predicated region
      $region41: #{_forward.1} parent=11 // pred_check
        %p293 = pneg %p210
      $region42: #{_forward.1} parent=11 // pred_check_branch
        %295 = sbr.rel (%p293) target = $region44
      $region43: #{_forward.1} parent=11 // pred_region
        _
      $region44: #{_forward.1} parent=11 // pred_fallthru
        _
      // Predicated region
      $region45: #{_forward.1} parent=11 // pred_check
        %p296 = pneg %p231
      $region46: #{_forward.1} parent=11 // pred_check_branch
        %298 = sbr.rel (%p296) target = $region48
      $region47: #{_forward.1} parent=11 // pred_region
        _
      $region48: #{_forward.1} parent=11 // pred_fallthru
        _
    $region12: #{_forward.1} parent=5 // pred_fallthru
      _
    %p299 = scmp.lt.s32.totalorder %s16, 2
    // Predicated region
    $region49: #{_forward.1} parent=5 // pred_check
      %p300 = pneg %p299
    $region50: #{_forward.1} parent=5 // pred_check_branch
      %302 = sbr.rel (%p300) target = $region52
    $region51: #{_forward.1} parent=5 // pred_region
      // Predicated region
      $region53: #{_forward.1} parent=51 // pred_check
        %p303 = pneg %p36
      $region54: #{_forward.1} parent=51 // pred_check_branch
        %305 = sbr.rel (%p303) target = $region56
      $region55: #{_forward.1} parent=51 // pred_region
        %p306 = scmp.lt.s32.totalorder %s16, 1
        %s307 = scalar_select %p306, %s16, 1
        %s308 = smul.addr %s307, 48
        %s309 = smul.addr %s308, 4
        %s310 = scalar_lea.vmem %s0, %s309
      $region56: #{_forward.1} parent=51 // pred_fallthru
        _
    $region52: #{_forward.1} parent=5 // pred_fallthru
      _
    %p311 = scmp.le.s32.totalorder 1, %s16
    %p312 = scmp.lt.s32.totalorder %s16, 3
    %p313 = pnand %p311, %p312
    %p314 = pneg %p313
    // Predicated region
    $region57: #{_forward.1} parent=5 // pred_check
      _
    $region58: #{_forward.1} parent=5 // pred_check_branch
      %316 = sbr.rel (%p313) target = $region60
    $region59: #{_forward.1} parent=5 // pred_region
      %s317 = ssub.s32 %s16, 1
      %p318 = scmp.lt.s32.totalorder %s21, 1
      %s319 = scalar_select %p318, %s21, 1
      %s320 = smul.addr %s319, 48
      %s321 = smul.addr %s320, 4
      %s322 = scalar_lea.vmem %s0, %s321
      %p323 = pneg %p42
      %p324 = pneg %p39
      %p325 = pneg %p63
      %p326 = pneg %p60
      %p327 = pneg %p84
      %p328 = pneg %p81
      %p329 = pneg %p105
      %p330 = pneg %p102
      %p331 = pneg %p126
      %p332 = pneg %p123
      %p333 = pneg %p147
      %p334 = pneg %p144
      %p335 = pneg %p168
      %p336 = pneg %p165
      %p337 = pneg %p189
      %p338 = pneg %p186
      %p339 = pneg %p210
      %p340 = pneg %p207
      %p341 = pneg %p231
      %p342 = pneg %p228
      %p343 = pneg %p257
      %p344 = pneg %p254
      %p345 = scmp.lt.s32.totalorder %s21, 1
      %s346 = scalar_select %p345, %s21, 1
      %s347 = smul.addr %s346, 9
      %s348 = smul.addr %s347, 8
      %s349 = scalar_lea.vmem %s10, %s348
      %p350 = scmp.lt.s32.totalorder %s21, 1
      %s351 = scalar_select %p350, %s21, 1
      %s352 = smul.addr %s351, 48
      %s353 = smul.addr %s352, 4
      %s354 = scalar_lea.vmem %s0, %s353
      %p355 = scmp.lt.s32.totalorder %s21, 1
      %s356 = scalar_select %p355, %s21, 1
      %s357 = smul.addr %s356, 9
      %s358 = smul.addr %s357, 8
      %s359 = scalar_lea.vmem %s10, %s358
      %v361 = vld [vmem:[%s9] sm:$0xff]
      %v362 = vld [vmem:[%s9 + $0x8] sm:$0xff]
      %v363 = vld [vmem:[%s9 + $0x10] sm:$0xff]
      %v364 = vld [vmem:[%s9 + $0x18] sm:$0xff]
      %v365 = vld [vmem:[%s9 + $0x20] sm:$0xff]
      %v366 = vld [vmem:[%s9 + $0x28] sm:$0xff]
      %v367 = vld [vmem:[%s9 + $0x30] sm:$0xff]
      %v368 = vld [vmem:[%s9 + $0x38] sm:$0xff]
      %v369 = vld [vmem:[%s9 + $0x40] sm:$0xff]
      %v370 = vld [vmem:[%s1] sm:$0xf]
      %v371 = vld [vmem:[%s1 + $0x4] sm:$0xf]
      %v372 = vld [vmem:[%s1 + $0x8] sm:$0xf]
      %v373 = vld [vmem:[%s1 + $0xc] sm:$0xf]
      %v374 = vld [vmem:[%s354] sm:$0xf]
      %v375 = vld [vmem:[%s354 + $0x4] sm:$0xf]
      %v376 = vld [vmem:[%s354 + $0x8] sm:$0xf]
      %v377 = vld [vmem:[%s354 + $0xc] sm:$0xf]
      %v378 = vld [vmem:[%s354 + $0x10] sm:$0xf]
      %v379 = vld [vmem:[%s354 + $0x14] sm:$0xf]
      %v380 = vld [vmem:[%s354 + $0x18] sm:$0xf]
      %v381 = vld [vmem:[%s354 + $0x1c] sm:$0xf]
      %v382 = vld [vmem:[%s354 + $0x20] sm:$0xf]
      %v383 = vld [vmem:[%s354 + $0x24] sm:$0xf]
      %v384 = vld [vmem:[%s354 + $0x28] sm:$0xf]
      %v385 = vld [vmem:[%s354 + $0x2c] sm:$0xf]
      %v386 = vld [vmem:[%s2] sm:$0xff]
      %v387 = vld [vmem:[%s2 + $0x8] sm:$0xff]
      %v388 = vld [vmem:[%s2 + $0x10] sm:$0xff]
      %v389 = vld [vmem:[%s2 + $0x18] sm:$0xff]
      %v390 = vld [vmem:[%s2 + $0x20] sm:$0xff]
      %v391 = vld [vmem:[%s2 + $0x28] sm:$0xff]
      %v392 = vld [vmem:[%s2 + $0x30] sm:$0xff]
      %v393 = vld [vmem:[%s2 + $0x38] sm:$0xff]
      %v394 = vld [vmem:[%s2 + $0x40] sm:$0xff]
      %v395 = vld [vmem:[%s2 + $0x48] sm:$0xff]
      %v396 = vld [vmem:[%s2 + $0x50] sm:$0xff]
      %v397 = vld [vmem:[%s2 + $0x58] sm:$0xff]
      %v410 = vunpack.c.l.b16 %v374
      %v411 = vunpack.c.l.b16 %v375
      %v412 = vunpack.c.l.b16 %v376
      %v413 = vunpack.c.l.b16 %v377
      %v414 = vunpack.c.l.b16 %v378
      %v415 = vunpack.c.l.b16 %v379
      %v416 = vunpack.c.l.b16 %v380
      %v417 = vunpack.c.l.b16 %v381
      %v418 = vunpack.c.l.b16 %v382
      %v419 = vunpack.c.l.b16 %v383
      %v420 = vunpack.c.l.b16 %v384
      %v421 = vunpack.c.l.b16 %v385
      %v422 = vpack.c.b16 %v411, %v410
      %v423 = vpack.c.b16 %v413, %v412
      %v424 = vpack.c.b16 %v415, %v414
      %v425 = vpack.c.b16 %v417, %v416
      %v426 = vpack.c.b16 %v419, %v418
      %v427 = vpack.c.b16 %v421, %v420
      %v432 = vunpack.c.l.b16 %v370
      %v433 = vunpack.c.l.b16 %v371
      %v434 = vunpack.c.l.b16 %v372
      %v435 = vunpack.c.l.b16 %v373
      %v436 = vpack.c.b16 %v433, %v432
      %v437 = vpack.c.b16 %v435, %v434
      %vm440 = vcmask 261120
      %v442 = vsel %vm440, %v422, 0
      %v445 = vsel %vm440, %v423, 0
      %v448 = vsel %vm440, %v424, 0
      %v451 = vsel %vm440, %v425, 0
      %v454 = vsel %vm440, %v426, 0
      %v457 = vsel %vm440, %v427, 0
      %459 = vmatprep.subr.bf16.mxu0 0
      %460 = vmatpush1.bf16.msra.mxu0 %v436
      %461 = vmatprep.subr.bf16.mxu0 0
      %462 = vmatpush1.bf16.msra.mxu0 %v437
      %463 = vmatprep.subr.bf16.mxu0 0
      %464 = vmatpush1.bf16.msra.mxu0 0
      %465 = vmatprep.subr.bf16.mxu0 0
      %466 = vmatpush1.bf16.msra.mxu0 0
      %467 = vmatprep.subr.bf16.mxu0 0
      %468 = vmatpush1.bf16.msra.mxu0 0
      %469 = vmatprep.subr.bf16.mxu0 0
      %470 = vmatpush1.bf16.msra.mxu0 0
      %471 = vmatprep.subr.bf16.mxu0 0
      %472 = vmatpush1.bf16.msra.mxu0 0
      %473 = vmatprep.subr.bf16.mxu0 0
      %474 = vmatpush1.bf16.msra.mxu0 0
      %475 = vmatprep.subr.bf16.mxu0 0
      %476 = vmatpush1.bf16.msra.mxu0 0
      %477 = vmatprep.subr.bf16.mxu0 0
      %478 = vmatpush1.bf16.msra.mxu0 0
      %479 = vmatprep.subr.bf16.mxu0 0
      %480 = vmatpush1.bf16.msra.mxu0 0
      %481 = vmatprep.subr.bf16.mxu0 0
      %482 = vmatpush1.bf16.msra.mxu0 0
      %483 = vmatprep.subr.bf16.mxu0 0
      %484 = vmatpush1.bf16.msra.mxu0 0
      %485 = vmatprep.subr.bf16.mxu0 0
      %486 = vmatpush1.bf16.msra.mxu0 0
      %487 = vmatprep.subr.bf16.mxu0 0
      %488 = vmatpush1.bf16.msra.mxu0 0
      %489 = vmatprep.subr.bf16.mxu0 0
      %490 = vmatpush1.bf16.msra.mxu0 0
      %491 = vmatprep.mubr.bf16.mxu0 0
      %492 = vmatmul.mubr.bf16.gmra.mrb[0].mxu0 %v442
      %v493 = vpop.f32.mrb[0].mxu0
      %v494 = vadd.f32 %v386, %v493
      %v495 = vpop.f32.mrb[0].mxu0
      %v496 = vpop.f32.mrb[0].mxu0
      %v497 = vadd.f32 %v387, %v496
      %v498 = vpop.f32.mrb[0].mxu0
      %499 = vmatprep.mubr.bf16.mxu0 0
      %500 = vmatmul.mubr.bf16.gmra.mrb[0].mxu0 %v445
      %v501 = vpop.f32.mrb[0].mxu0
      %v502 = vadd.f32 %v388, %v501
      %v503 = vpop.f32.mrb[0].mxu0
      %v504 = vpop.f32.mrb[0].mxu0
      %v505 = vadd.f32 %v389, %v504
      %v506 = vpop.f32.mrb[0].mxu0
      %507 = vmatprep.mubr.bf16.mxu0 0
      %508 = vmatmul.mubr.bf16.gmra.mrb[0].mxu0 %v448
      %v509 = vpop.f32.mrb[0].mxu0
      %v510 = vadd.f32 %v390, %v509
      %v511 = vpop.f32.mrb[0].mxu0
      %v512 = vpop.f32.mrb[0].mxu0
      %v513 = vadd.f32 %v391, %v512
      %v514 = vpop.f32.mrb[0].mxu0
      %515 = vmatprep.mubr.bf16.mxu0 0
      %516 = vmatmul.mubr.bf16.gmra.mrb[0].mxu0 %v451
      %v517 = vpop.f32.mrb[0].mxu0
      %v518 = vadd.f32 %v392, %v517
      %v519 = vpop.f32.mrb[0].mxu0
      %v520 = vpop.f32.mrb[0].mxu0
      %v521 = vadd.f32 %v393, %v520
      %v522 = vpop.f32.mrb[0].mxu0
      %523 = vmatprep.mubr.bf16.mxu0 0
      %524 = vmatmul.mubr.bf16.gmra.mrb[0].mxu0 %v454
      %v525 = vpop.f32.mrb[0].mxu0
      %v526 = vadd.f32 %v394, %v525
      %v527 = vpop.f32.mrb[0].mxu0
      %v528 = vpop.f32.mrb[0].mxu0
      %v529 = vadd.f32 %v395, %v528
      %v530 = vpop.f32.mrb[0].mxu0
      %531 = vmatprep.mubr.bf16.mxu0 0
      %532 = vmatmul.mubr.bf16.gmra.mrb[0].mxu0 %v457
      %v533 = vpop.f32.mrb[0].mxu0
      %v534 = vadd.f32 %v396, %v533
      %v535 = vpop.f32.mrb[0].mxu0
      %v536 = vpop.f32.mrb[0].mxu0
      %v537 = vadd.f32 %v397, %v536
      %v538 = vpop.f32.mrb[0].mxu0
      %539 = vdwg.mxu0
      %v540 = vmax.f32 %v494, 0.0
      %v541 = vmax.f32 %v497, 0.0
      %v542 = vmax.f32 %v502, 0.0
      %v543 = vmax.f32 %v505, 0.0
      %v544 = vmax.f32 %v510, 0.0
      %v545 = vmax.f32 %v513, 0.0
      %v546 = vmax.f32 %v518, 0.0
      %v547 = vmax.f32 %v521, 0.0
      %v548 = vmax.f32 %v526, 0.0
      %v549 = vmax.f32 %v529, 0.0
      %v550 = vmax.f32 %v534, 0.0
      %v551 = vmax.f32 %v537, 0.0
      %v552 = vpack.c.bf16 %v541, %v540
      %v553 = vpack.c.bf16 %v543, %v542
      %v554 = vpack.c.bf16 %v545, %v544
      %v555 = vpack.c.bf16 %v547, %v546
      %v556 = vpack.c.bf16 %v549, %v548
      %v557 = vpack.c.bf16 %v551, %v550
      %vm558 = vcmask 523264
      %559 = vst.msk [vmem:[#allocation2] sm:$0xff] %vm558, %v552
      %560 = vst.msk [vmem:[#allocation2 + $0x8] sm:$0xff] %vm558, %v553
      %561 = vst.msk [vmem:[#allocation2 + $0x10] sm:$0xff] %vm558, %v554
      %562 = vst.msk [vmem:[#allocation2 + $0x18] sm:$0xff] %vm558, %v555
      %563 = vst.msk [vmem:[#allocation2 + $0x20] sm:$0xff] %vm558, %v556
      %564 = vst.msk [vmem:[#allocation2 + $0x28] sm:$0xff] %vm558, %v557
      %s565 = scalar_lea.vmem %s354, 48
      %v566 = vld [vmem:[%s565] sm:$0xf]
      %v567 = vld [vmem:[%s565 + $0x4] sm:$0xf]
      %v568 = vld [vmem:[%s565 + $0x8] sm:$0xf]
      %v569 = vld [vmem:[%s565 + $0xc] sm:$0xf]
      %v570 = vld [vmem:[%s565 + $0x10] sm:$0xf]
      %v571 = vld [vmem:[%s565 + $0x14] sm:$0xf]
      %v572 = vld [vmem:[%s565 + $0x18] sm:$0xf]
      %v573 = vld [vmem:[%s565 + $0x1c] sm:$0xf]
      %v574 = vld [vmem:[%s565 + $0x20] sm:$0xf]
      %v575 = vld [vmem:[%s565 + $0x24] sm:$0xf]
      %v576 = vld [vmem:[%s565 + $0x28] sm:$0xf]
      %v577 = vld [vmem:[%s565 + $0x2c] sm:$0xf]
      %s578 = scalar_lea.vmem %s2, 96
      %v579 = vld [vmem:[%s578] sm:$0xff]
      %v580 = vld [vmem:[%s578 + $0x8] sm:$0xff]
      %v581 = vld [vmem:[%s578 + $0x10] sm:$0xff]
      %v582 = vld [vmem:[%s578 + $0x18] sm:$0xff]
      %v583 = vld [vmem:[%s578 + $0x20] sm:$0xff]
      %v584 = vld [vmem:[%s578 + $0x28] sm:$0xff]
      %v585 = vld [vmem:[%s578 + $0x30] sm:$0xff]
      %v586 = vld [vmem:[%s578 + $0x38] sm:$0xff]
      %v587 = vld [vmem:[%s578 + $0x40] sm:$0xff]
      %v588 = vld [vmem:[%s578 + $0x48] sm:$0xff]
      %v589 = vld [vmem:[%s578 + $0x50] sm:$0xff]
      %v590 = vld [vmem:[%s578 + $0x58] sm:$0xff]
      %v603 = vunpack.c.l.b16 %v566
      %v604 = vunpack.c.l.b16 %v567
      %v605 = vunpack.c.l.b16 %v568
      %v606 = vunpack.c.l.b16 %v569
      %v607 = vunpack.c.l.b16 %v570
      %v608 = vunpack.c.l.b16 %v571
      %v609 = vunpack.c.l.b16 %v572
      %v610 = vunpack.c.l.b16 %v573
      %v611 = vunpack.c.l.b16 %v574
      %v612 = vunpack.c.l.b16 %v575
      %v613 = vunpack.c.l.b16 %v576
      %v614 = vunpack.c.l.b16 %v577
      %v615 = vpack.c.b16 %v604, %v603
      %v616 = vpack.c.b16 %v606, %v605
      %v617 = vpack.c.b16 %v608, %v607
      %v618 = vpack.c.b16 %v610, %v609
      %v619 = vpack.c.b16 %v612, %v611
      %v620 = vpack.c.b16 %v614, %v613
      %v622 = vsel %vm440, %v615, 0
      %v625 = vsel %vm440, %v616, 0
      %v628 = vsel %vm440, %v617, 0
      %v631 = vsel %vm440, %v618, 0
      %v634 = vsel %vm440, %v619, 0
      %v637 = vsel %vm440, %v620, 0
      %639 = vmatprep.subr.bf16.mxu0 0
      %640 = vmatpush1.bf16.msra.mxu0 %v436
      %641 = vmatprep.subr.bf16.mxu0 0
      %642 = vmatpush1.bf16.msra.mxu0 %v437
      %643 = vmatprep.subr.bf16.mxu0 0
      %644 = vmatpush1.bf16.msra.mxu0 0
      %645 = vmatprep.subr.bf16.mxu0 0
      %646 = vmatpush1.bf16.msra.mxu0 0
      %647 = vmatprep.subr.bf16.mxu0 0
      %648 = vmatpush1.bf16.msra.mxu0 0
      %649 = vmatprep.subr.bf16.mxu0 0
      %650 = vmatpush1.bf16.msra.mxu0 0
      %651 = vmatprep.subr.bf16.mxu0 0
      %652 = vmatpush1.bf16.msra.mxu0 0
      %653 = vmatprep.subr.bf16.mxu0 0
      %654 = vmatpush1.bf16.msra.mxu0 0
      %655 = vmatprep.subr.bf16.mxu0 0
      %656 = vmatpush1.bf16.msra.mxu0 0
      %657 = vmatprep.subr.bf16.mxu0 0
      %658 = vmatpush1.bf16.msra.mxu0 0
      %659 = vmatprep.subr.bf16.mxu0 0
      %660 = vmatpush1.bf16.msra.mxu0 0
      %661 = vmatprep.subr.bf16.mxu0 0
      %662 = vmatpush1.bf16.msra.mxu0 0
      %663 = vmatprep.subr.bf16.mxu0 0
      %664 = vmatpush1.bf16.msra.mxu0 0
      %665 = vmatprep.subr.bf16.mxu0 0
      %666 = vmatpush1.bf16.msra.mxu0 0
      %667 = vmatprep.subr.bf16.mxu0 0
      %668 = vmatpush1.bf16.msra.mxu0 0
      %669 = vmatprep.subr.bf16.mxu0 0
      %670 = vmatpush1.bf16.msra.mxu0 0
      %671 = vmatprep.mubr.bf16.mxu0 0
      %672 = vmatmul.mubr.bf16.gmra.mrb[0].mxu0 %v622
      %v673 = vpop.f32.mrb[0].mxu0
      %v674 = vadd.f32 %v579, %v673
      %v675 = vpop.f32.mrb[0].mxu0
      %v676 = vpop.f32.mrb[0].mxu0
      %v677 = vadd.f32 %v580, %v676
      %v678 = vpop.f32.mrb[0].mxu0
      %679 = vmatprep.mubr.bf16.mxu0 0
      %680 = vmatmul.mubr.bf16.gmra.mrb[0].mxu0 %v625
      %v681 = vpop.f32.mrb[0].mxu0
      %v682 = vadd.f32 %v581, %v681
      %v683 = vpop.f32.mrb[0].mxu0
      %v684 = vpop.f32.mrb[0].mxu0
      %v685 = vadd.f32 %v582, %v684
      %v686 = vpop.f32.mrb[0].mxu0
      %687 = vmatprep.mubr.bf16.mxu0 0
      %688 = vmatmul.mubr.bf16.gmra.mrb[0].mxu0 %v628
      %v689 = vpop.f32.mrb[0].mxu0
      %v690 = vadd.f32 %v583, %v689
      %v691 = vpop.f32.mrb[0].mxu0
      %v692 = vpop.f32.mrb[0].mxu0
      %v693 = vadd.f32 %v584, %v692
      %v694 = vpop.f32.mrb[0].mxu0
      %695 = vmatprep.mubr.bf16.mxu0 0
      %696 = vmatmul.mubr.bf16.gmra.mrb[0].mxu0 %v631
      %v697 = vpop.f32.mrb[0].mxu0
      %v698 = vadd.f32 %v585, %v697
      %v699 = vpop.f32.mrb[0].mxu0
      %v700 = vpop.f32.mrb[0].mxu0
      %v701 = vadd.f32 %v586, %v700
      %v702 = vpop.f32.mrb[0].mxu0
      %703 = vmatprep.mubr.bf16.mxu0 0
      %704 = vmatmul.mubr.bf16.gmra.mrb[0].mxu0 %v634
      %v705 = vpop.f32.mrb[0].mxu0
      %v706 = vadd.f32 %v587, %v705
      %v707 = vpop.f32.mrb[0].mxu0
      %v708 = vpop.f32.mrb[0].mxu0
      %v709 = vadd.f32 %v588, %v708
      %v710 = vpop.f32.mrb[0].mxu0
      %711 = vmatprep.mubr.bf16.mxu0 0
      %712 = vmatmul.mubr.bf16.gmra.mrb[0].mxu0 %v637
      %v713 = vpop.f32.mrb[0].mxu0
      %v714 = vadd.f32 %v589, %v713
      %v715 = vpop.f32.mrb[0].mxu0
      %v716 = vpop.f32.mrb[0].mxu0
      %v717 = vadd.f32 %v590, %v716
      %v718 = vpop.f32.mrb[0].mxu0
      %719 = vdwg.mxu0
      %v720 = vmax.f32 %v674, 0.0
      %v721 = vmax.f32 %v677, 0.0
      %v722 = vmax.f32 %v682, 0.0
      %v723 = vmax.f32 %v685, 0.0
      %v724 = vmax.f32 %v690, 0.0
      %v725 = vmax.f32 %v693, 0.0
      %v726 = vmax.f32 %v698, 0.0
      %v727 = vmax.f32 %v701, 0.0
      %v728 = vmax.f32 %v706, 0.0
      %v729 = vmax.f32 %v709, 0.0
      %v730 = vmax.f32 %v714, 0.0
      %v731 = vmax.f32 %v717, 0.0
      %v732 = vpack.c.bf16 %v721, %v720
      %v733 = vpack.c.bf16 %v723, %v722
      %v734 = vpack.c.bf16 %v725, %v724
      %v735 = vpack.c.bf16 %v727, %v726
      %v736 = vpack.c.bf16 %v729, %v728
      %v737 = vpack.c.bf16 %v731, %v730
      %s738 = scalar_lea.vmem [#allocation2], 48
      %739 = vst.msk [vmem:[%s738] sm:$0xff] %vm558, %v732
      %740 = vst.msk [vmem:[%s738 + $0x8] sm:$0xff] %vm558, %v733
      %741 = vst.msk [vmem:[%s738 + $0x10] sm:$0xff] %vm558, %v734
      %742 = vst.msk [vmem:[%s738 + $0x18] sm:$0xff] %vm558, %v735
      %743 = vst.msk [vmem:[%s738 + $0x20] sm:$0xff] %vm558, %v736
      %744 = vst.msk [vmem:[%s738 + $0x28] sm:$0xff] %vm558, %v737
      %s745 = scalar_lea.vmem %s354, 96
      %v746 = vld [vmem:[%s745] sm:$0xf]
      %v747 = vld [vmem:[%s745 + $0x4] sm:$0xf]
      %v748 = vld [vmem:[%s745 + $0x8] sm:$0xf]
      %v749 = vld [vmem:[%s745 + $0xc] sm:$0xf]
      %v750 = vld [vmem:[%s745 + $0x10] sm:$0xf]
      %v751 = vld [vmem:[%s745 + $0x14] sm:$0xf]
      %v752 = vld [vmem:[%s745 + $0x18] sm:$0xf]
      %v753 = vld [vmem:[%s745 + $0x1c] sm:$0xf]
      %v754 = vld [vmem:[%s745 + $0x20] sm:$0xf]
      %v755 = vld [vmem:[%s745 + $0x24] sm:$0xf]
      %v756 = vld [vmem:[%s745 + $0x28] sm:$0xf]
      %v757 = vld [vmem:[%s745 + $0x2c] sm:$0xf]
      %s758 = scalar_lea.vmem %s2, 192
      %v759 = vld [vmem:[%s758] sm:$0xff]
      %v760 = vld [vmem:[%s758 + $0x8] sm:$0xff]
      %v761 = vld [vmem:[%s758 + $0x10] sm:$0xff]
      %v762 = vld [vmem:[%s758 + $0x18] sm:$0xff]
      %v763 = vld [vmem:[%s758 + $0x20] sm:$0xff]
      %v764 = vld [vmem:[%s758 + $0x28] sm:$0xff]
      %v765 = vld [vmem:[%s758 + $0x30] sm:$0xff]
      %v766 = vld [vmem:[%s758 + $0x38] sm:$0xff]
      %v767 = vld [vmem:[%s758 + $0x40] sm:$0xff]
      %v768 = vld [vmem:[%s758 + $0x48] sm:$0xff]
      %v769 = vld [vmem:[%s758 + $0x50] sm:$0xff]
      %v770 = vld [vmem:[%s758 + $0x58] sm:$0xff]
      %v783 = vunpack.c.l.b16 %v746
      %v784 = vunpack.c.l.b16 %v747
      %v785 = vunpack.c.l.b16 %v748
      %v786 = vunpack.c.l.b16 %v749
      %v787 = vunpack.c.l.b16 %v750
      %v788 = vunpack.c.l.b16 %v751
      %v789 = vunpack.c.l.b16 %v752
      %v790 = vunpack.c.l.b16 %v753
      %v791 = vunpack.c.l.b16 %v754
      %v792 = vunpack.c.l.b16 %v755
      %v793 = vunpack.c.l.b16 %v756
      %v794 = vunpack.c.l.b16 %v757
      %v795 = vpack.c.b16 %v784, %v783
      %v796 = vpack.c.b16 %v786, %v785
      %v797 = vpack.c.b16 %v788, %v787
      %v798 = vpack.c.b16 %v790, %v789
      %v799 = vpack.c.b16 %v792, %v791
      %v800 = vpack.c.b16 %v794, %v793
      %v802 = vsel %vm440, %v795, 0
      %v805 = vsel %vm440, %v796, 0
      %v808 = vsel %vm440, %v797, 0
      %v811 = vsel %vm440, %v798, 0
      %v814 = vsel %vm440, %v799, 0
      %v817 = vsel %vm440, %v800, 0
      %819 = vmatprep.subr.bf16.mxu0 0
      %820 = vmatpush1.bf16.msra.mxu0 %v436
      %821 = vmatprep.subr.bf16.mxu0 0
      %822 = vmatpush1.bf16.msra.mxu0 %v437
      %823 = vmatprep.subr.bf16.mxu0 0
      %824 = vmatpush1.bf16.msra.mxu0 0
      %825 = vmatprep.subr.bf16.mxu0 0
      %826 = vmatpush1.bf16.msra.mxu0 0
      %827 = vmatprep.subr.bf16.mxu0 0
      %828 = vmatpush1.bf16.msra.mxu0 0
      %829 = vmatprep.subr.bf16.mxu0 0
      %830 = vmatpush1.bf16.msra.mxu0 0
      %831 = vmatprep.subr.bf16.mxu0 0
      %832 = vmatpush1.bf16.msra.mxu0 0
      %833 = vmatprep.subr.bf16.mxu0 0
      %834 = vmatpush1.bf16.msra.mxu0 0
      %835 = vmatprep.subr.bf16.mxu0 0
      %836 = vmatpush1.bf16.msra.mxu0 0
      %837 = vmatprep.subr.bf16.mxu0 0
      %838 = vmatpush1.bf16.msra.mxu0 0
      %839 = vmatprep.subr.bf16.mxu0 0
      %840 = vmatpush1.bf16.msra.mxu0 0
      %841 = vmatprep.subr.bf16.mxu0 0
      %842 = vmatpush1.bf16.msra.mxu0 0
      %843 = vmatprep.subr.bf16.mxu0 0
      %844 = vmatpush1.bf16.msra.mxu0 0
      %845 = vmatprep.subr.bf16.mxu0 0
      %846 = vmatpush1.bf16.msra.mxu0 0
      %847 = vmatprep.subr.bf16.mxu0 0
      %848 = vmatpush1.bf16.msra.mxu0 0
      %849 = vmatprep.subr.bf16.mxu0 0
      %850 = vmatpush1.bf16.msra.mxu0 0
      %851 = vmatprep.mubr.bf16.mxu0 0
      %852 = vmatmul.mubr.bf16.gmra.mrb[0].mxu0 %v802
      %v853 = vpop.f32.mrb[0].mxu0
      %v854 = vadd.f32 %v759, %v853
      %v855 = vpop.f32.mrb[0].mxu0
      %v856 = vpop.f32.mrb[0].mxu0
      %v857 = vadd.f32 %v760, %v856
      %v858 = vpop.f32.mrb[0].mxu0
      %859 = vmatprep.mubr.bf16.mxu0 0
      %860 = vmatmul.mubr.bf16.gmra.mrb[0].mxu0 %v805
      %v861 = vpop.f32.mrb[0].mxu0
      %v862 = vadd.f32 %v761, %v861
      %v863 = vpop.f32.mrb[0].mxu0
      %v864 = vpop.f32.mrb[0].mxu0
      %v865 = vadd.f32 %v762, %v864
      %v866 = vpop.f32.mrb[0].mxu0
      %867 = vmatprep.mubr.bf16.mxu0 0
      %868 = vmatmul.mubr.bf16.gmra.mrb[0].mxu0 %v808
      %v869 = vpop.f32.mrb[0].mxu0
      %v870 = vadd.f32 %v763, %v869
      %v871 = vpop.f32.mrb[0].mxu0
      %v872 = vpop.f32.mrb[0].mxu0
      %v873 = vadd.f32 %v764, %v872
      %v874 = vpop.f32.mrb[0].mxu0
      %875 = vmatprep.mubr.bf16.mxu0 0
      %876 = vmatmul.mubr.bf16.gmra.mrb[0].mxu0 %v811
      %v877 = vpop.f32.mrb[0].mxu0
      %v878 = vadd.f32 %v765, %v877
      %v879 = vpop.f32.mrb[0].mxu0
      %v880 = vpop.f32.mrb[0].mxu0
      %v881 = vadd.f32 %v766, %v880
      %v882 = vpop.f32.mrb[0].mxu0
      %883 = vmatprep.mubr.bf16.mxu0 0
      %884 = vmatmul.mubr.bf16.gmra.mrb[0].mxu0 %v814
      %v885 = vpop.f32.mrb[0].mxu0
      %v886 = vadd.f32 %v767, %v885
      %v887 = vpop.f32.mrb[0].mxu0
      %v888 = vpop.f32.mrb[0].mxu0
      %v889 = vadd.f32 %v768, %v888
      %v890 = vpop.f32.mrb[0].mxu0
      %891 = vmatprep.mubr.bf16.mxu0 0
      %892 = vmatmul.mubr.bf16.gmra.mrb[0].mxu0 %v817
      %v893 = vpop.f32.mrb[0].mxu0
      %v894 = vadd.f32 %v769, %v893
      %v895 = vpop.f32.mrb[0].mxu0
      %v896 = vpop.f32.mrb[0].mxu0
      %v897 = vadd.f32 %v770, %v896
      %v898 = vpop.f32.mrb[0].mxu0
      %899 = vdwg.mxu0
      %v900 = vmax.f32 %v854, 0.0
      %v901 = vmax.f32 %v857, 0.0
      %v902 = vmax.f32 %v862, 0.0
      %v903 = vmax.f32 %v865, 0.0
      %v904 = vmax.f32 %v870, 0.0
      %v905 = vmax.f32 %v873, 0.0
      %v906 = vmax.f32 %v878, 0.0
      %v907 = vmax.f32 %v881, 0.0
      %v908 = vmax.f32 %v886, 0.0
      %v909 = vmax.f32 %v889, 0.0
      %v910 = vmax.f32 %v894, 0.0
      %v911 = vmax.f32 %v897, 0.0
      %v912 = vpack.c.bf16 %v901, %v900
      %v913 = vpack.c.bf16 %v903, %v902
      %v914 = vpack.c.bf16 %v905, %v904
      %v915 = vpack.c.bf16 %v907, %v906
      %v916 = vpack.c.bf16 %v909, %v908
      %v917 = vpack.c.bf16 %v911, %v910
      %s918 = scalar_lea.vmem [#allocation2], 96
      %919 = vst.msk [vmem:[%s918] sm:$0xff] %vm558, %v912
      %920 = vst.msk [vmem:[%s918 + $0x8] sm:$0xff] %vm558, %v913
      %921 = vst.msk [vmem:[%s918 + $0x10] sm:$0xff] %vm558, %v914
      %922 = vst.msk [vmem:[%s918 + $0x18] sm:$0xff] %vm558, %v915
      %923 = vst.msk [vmem:[%s918 + $0x20] sm:$0xff] %vm558, %v916
      %924 = vst.msk [vmem:[%s918 + $0x28] sm:$0xff] %vm558, %v917
      %s925 = scalar_lea.vmem %s354, 144
      %v926 = vld [vmem:[%s925] sm:$0xf]
      %v927 = vld [vmem:[%s925 + $0x4] sm:$0xf]
      %v928 = vld [vmem:[%s925 + $0x8] sm:$0xf]
      %v929 = vld [vmem:[%s925 + $0xc] sm:$0xf]
      %v930 = vld [vmem:[%s925 + $0x10] sm:$0xf]
      %v931 = vld [vmem:[%s925 + $0x14] sm:$0xf]
      %v932 = vld [vmem:[%s925 + $0x18] sm:$0xf]
      %v933 = vld [vmem:[%s925 + $0x1c] sm:$0xf]
      %v934 = vld [vmem:[%s925 + $0x20] sm:$0xf]
      %v935 = vld [vmem:[%s925 + $0x24] sm:$0xf]
      %v936 = vld [vmem:[%s925 + $0x28] sm:$0xf]
      %v937 = vld [vmem:[%s925 + $0x2c] sm:$0xf]
      %s938 = scalar_lea.vmem %s2, 288
      %v939 = vld [vmem:[%s938] sm:$0xff]
      %v940 = vld [vmem:[%s938 + $0x8] sm:$0xff]
      %v941 = vld [vmem:[%s938 + $0x10] sm:$0xff]
      %v942 = vld [vmem:[%s938 + $0x18] sm:$0xff]
      %v943 = vld [vmem:[%s938 + $0x20] sm:$0xff]
      %v944 = vld [vmem:[%s938 + $0x28] sm:$0xff]
      %v945 = vld [vmem:[%s938 + $0x30] sm:$0xff]
      %v946 = vld [vmem:[%s938 + $0x38] sm:$0xff]
      %v947 = vld [vmem:[%s938 + $0x40] sm:$0xff]
      %v948 = vld [vmem:[%s938 + $0x48] sm:$0xff]
      %v949 = vld [vmem:[%s938 + $0x50] sm:$0xff]
      %v950 = vld [vmem:[%s938 + $0x58] sm:$0xff]
      %v963 = vunpack.c.l.b16 %v926
      %v964 = vunpack.c.l.b16 %v927
      %v965 = vunpack.c.l.b16 %v928
      %v966 = vunpack.c.l.b16 %v929
      %v967 = vunpack.c.l.b16 %v930
      %v968 = vunpack.c.l.b16 %v931
      %v969 = vunpack.c.l.b16 %v932
      %v970 = vunpack.c.l.b16 %v933
      %v971 = vunpack.c.l.b16 %v934
      %v972 = vunpack.c.l.b16 %v935
      %v973 = vunpack.c.l.b16 %v936
      %v974 = vunpack.c.l.b16 %v937
      %v975 = vpack.c.b16 %v964, %v963
      %v976 = vpack.c.b16 %v966, %v965
      %v977 = vpack.c.b16 %v968, %v967
      %v978 = vpack.c.b16 %v970, %v969
      %v979 = vpack.c.b16 %v972, %v971
      %v980 = vpack.c.b16 %v974, %v973
      %v982 = vsel %vm440, %v975, 0
      %v985 = vsel %vm440, %v976, 0
      %v988 = vsel %vm440, %v977, 0
      %v991 = vsel %vm440, %v978, 0
      %v994 = vsel %vm440, %v979, 0
      %v997 = vsel %vm440, %v980, 0
      %999 = vmatprep.subr.bf16.mxu0 0
      %1000 = vmatpush1.bf16.msra.mxu0 %v436
      %1001 = vmatprep.subr.bf16.mxu0 0
      %1002 = vmatpush1.bf16.msra.mxu0 %v437
      %1003 = vmatprep.subr.bf16.mxu0 0
      %1004 = vmatpush1.bf16.msra.mxu0 0
      %1005 = vmatprep.subr.bf16.mxu0 0
      %1006 = vmatpush1.bf16.msra.mxu0 0
      %1007 = vmatprep.subr.bf16.mxu0 0
      %1008 = vmatpush1.bf16.msra.mxu0 0
      %1009 = vmatprep.subr.bf16.mxu0 0
      %1010 = vmatpush1.bf16.msra.mxu0 0
      %1011 = vmatprep.subr.bf16.mxu0 0
      %1012 = vmatpush1.bf16.msra.mxu0 0
      %1013 = vmatprep.subr.bf16.mxu0 0
      %1014 = vmatpush1.bf16.msra.mxu0 0
      %1015 = vmatprep.subr.bf16.mxu0 0
      %1016 = vmatpush1.bf16.msra.mxu0 0
      %1017 = vmatprep.subr.bf16.mxu0 0
      %1018 = vmatpush1.bf16.msra.mxu0 0
      %1019 = vmatprep.subr.bf16.mxu0 0
      %1020 = vmatpush1.bf16.msra.mxu0 0
      %1021 = vmatprep.subr.bf16.mxu0 0
      %1022 = vmatpush1.bf16.msra.mxu0 0
      %1023 = vmatprep.subr.bf16.mxu0 0
      %1024 = vmatpush1.bf16.msra.mxu0 0
      %1025 = vmatprep.subr.bf16.mxu0 0
      %1026 = vmatpush1.bf16.msra.mxu0 0
      %1027 = vmatprep.subr.bf16.mxu0 0
      %1028 = vmatpush1.bf16.msra.mxu0 0
      %1029 = vmatprep.subr.bf16.mxu0 0
      %1030 = vmatpush1.bf16.msra.mxu0 0
      %1031 = vmatprep.mubr.bf16.mxu0 0
      %1032 = vmatmul.mubr.bf16.gmra.mrb[0].mxu0 %v982
      %v1033 = vpop.f32.mrb[0].mxu0
      %v1034 = vadd.f32 %v939, %v1033
      %v1035 = vpop.f32.mrb[0].mxu0
      %v1036 = vpop.f32.mrb[0].mxu0
      %v1037 = vadd.f32 %v940, %v1036
      %v1038 = vpop.f32.mrb[0].mxu0
      %1039 = vmatprep.mubr.bf16.mxu0 0
      %1040 = vmatmul.mubr.bf16.gmra.mrb[0].mxu0 %v985
      %v1041 = vpop.f32.mrb[0].mxu0
      %v1042 = vadd.f32 %v941, %v1041
      %v1043 = vpop.f32.mrb[0].mxu0
      %v1044 = vpop.f32.mrb[0].mxu0
      %v1045 = vadd.f32 %v942, %v1044
      %v1046 = vpop.f32.mrb[0].mxu0
      %1047 = vmatprep.mubr.bf16.mxu0 0
      %1048 = vmatmul.mubr.bf16.gmra.mrb[0].mxu0 %v988
      %v1049 = vpop.f32.mrb[0].mxu0
      %v1050 = vadd.f32 %v943, %v1049
      %v1051 = vpop.f32.mrb[0].mxu0
      %v1052 = vpop.f32.mrb[0].mxu0
      %v1053 = vadd.f32 %v944, %v1052
      %v1054 = vpop.f32.mrb[0].mxu0
      %1055 = vmatprep.mubr.bf16.mxu0 0
      %1056 = vmatmul.mubr.bf16.gmra.mrb[0].mxu0 %v991
      %v1057 = vpop.f32.mrb[0].mxu0
      %v1058 = vadd.f32 %v945, %v1057
      %v1059 = vpop.f32.mrb[0].mxu0
      %v1060 = vpop.f32.mrb[0].mxu0
      %v1061 = vadd.f32 %v946, %v1060
      %v1062 = vpop.f32.mrb[0].mxu0
      %1063 = vmatprep.mubr.bf16.mxu0 0
      %1064 = vmatmul.mubr.bf16.gmra.mrb[0].mxu0 %v994
      %v1065 = vpop.f32.mrb[0].mxu0
      %v1066 = vadd.f32 %v947, %v1065
      %v1067 = vpop.f32.mrb[0].mxu0
      %v1068 = vpop.f32.mrb[0].mxu0
      %v1069 = vadd.f32 %v948, %v1068
      %v1070 = vpop.f32.mrb[0].mxu0
      %1071 = vmatprep.mubr.bf16.mxu0 0
      %1072 = vmatmul.mubr.bf16.gmra.mrb[0].mxu0 %v997
      %v1073 = vpop.f32.mrb[0].mxu0
      %v1074 = vadd.f32 %v949, %v1073
      %v1075 = vpop.f32.mrb[0].mxu0
      %v1076 = vpop.f32.mrb[0].mxu0
      %v1077 = vadd.f32 %v950, %v1076
      %v1078 = vpop.f32.mrb[0].mxu0
      %1079 = vdwg.mxu0
      %v1080 = vmax.f32 %v1034, 0.0
      %v1081 = vmax.f32 %v1037, 0.0
      %v1082 = vmax.f32 %v1042, 0.0
      %v1083 = vmax.f32 %v1045, 0.0
      %v1084 = vmax.f32 %v1050, 0.0
      %v1085 = vmax.f32 %v1053, 0.0
      %v1086 = vmax.f32 %v1058, 0.0
      %v1087 = vmax.f32 %v1061, 0.0
      %v1088 = vmax.f32 %v1066, 0.0
      %v1089 = vmax.f32 %v1069, 0.0
      %v1090 = vmax.f32 %v1074, 0.0
      %v1091 = vmax.f32 %v1077, 0.0
      %v1092 = vpack.c.bf16 %v1081, %v1080
      %v1093 = vpack.c.bf16 %v1083, %v1082
      %v1094 = vpack.c.bf16 %v1085, %v1084
      %v1095 = vpack.c.bf16 %v1087, %v1086
      %v1096 = vpack.c.bf16 %v1089, %v1088
      %v1097 = vpack.c.bf16 %v1091, %v1090
      %s1098 = scalar_lea.vmem [#allocation2], 144
      %1099 = vst.msk [vmem:[%s1098] sm:$0xff] %vm558, %v1092
      %1100 = vst.msk [vmem:[%s1098 + $0x8] sm:$0xff] %vm558, %v1093
      %1101 = vst.msk [vmem:[%s1098 + $0x10] sm:$0xff] %vm558, %v1094
      %1102 = vst.msk [vmem:[%s1098 + $0x18] sm:$0xff] %vm558, %v1095
      %1103 = vst.msk [vmem:[%s1098 + $0x20] sm:$0xff] %vm558, %v1096
      %1104 = vst.msk [vmem:[%s1098 + $0x28] sm:$0xff] %vm558, %v1097
      %v1105 = vld [vmem:[#allocation2] sm:$0xff]
      %v1106 = vld [vmem:[#allocation2 + $0x8] sm:$0xff]
      %v1107 = vld [vmem:[#allocation2 + $0x10] sm:$0xff]
      %v1108 = vld [vmem:[#allocation2 + $0x18] sm:$0xff]
      %v1109 = vld [vmem:[#allocation2 + $0x20] sm:$0xf]
      %v1110 = vld [vmem:[%s3] sm:$0xf]
      %v1111 = vld [vmem:[%s3 + $0x4] sm:$0xf]
      %v1112 = vld [vmem:[%s3 + $0x8] sm:$0xf]
      %v1113 = vld [vmem:[%s3 + $0xc] sm:$0xf]
      %v1114 = vld [vmem:[%s3 + $0x10] sm:$0xf]
      %v1115 = vld [vmem:[%s3 + $0x14] sm:$0xf]
      %v1116 = vld [vmem:[%s3 + $0x18] sm:$0xf]
      %v1117 = vld [vmem:[%s3 + $0x1c] sm:$0xf]
      %v1118 = vld [vmem:[%s738] sm:$0xff]
      %v1119 = vld [vmem:[%s738 + $0x8] sm:$0xff]
      %v1120 = vld [vmem:[%s738 + $0x10] sm:$0xff]
      %v1121 = vld [vmem:[%s738 + $0x18] sm:$0xff]
      %v1122 = vld [vmem:[%s738 + $0x20] sm:$0xf]
      %s1123 = scalar_lea.vmem %s3, 32
      %v1124 = vld [vmem:[%s1123] sm:$0xf]
      %v1125 = vld [vmem:[%s1123 + $0x4] sm:$0xf]
      %v1126 = vld [vmem:[%s1123 + $0x8] sm:$0xf]
      %v1127 = vld [vmem:[%s1123 + $0xc] sm:$0xf]
      %v1128 = vld [vmem:[%s1123 + $0x10] sm:$0xf]
      %v1129 = vld [vmem:[%s1123 + $0x14] sm:$0xf]
      %v1130 = vld [vmem:[%s1123 + $0x18] sm:$0xf]
      %v1131 = vld [vmem:[%s1123 + $0x1c] sm:$0xf]
      %v1140 = vunpack.c.l.b16 %v1124
      %v1141 = vunpack.c.l.b16 %v1125
      %v1142 = vunpack.c.l.b16 %v1126
      %v1143 = vunpack.c.l.b16 %v1127
      %v1144 = vunpack.c.l.b16 %v1128
      %v1145 = vunpack.c.l.b16 %v1129
      %v1146 = vunpack.c.l.b16 %v1130
      %v1147 = vunpack.c.l.b16 %v1131
      %v1148 = vpack.c.b16 %v1141, %v1140
      %v1149 = vpack.c.b16 %v1143, %v1142
      %v1150 = vpack.c.b16 %v1145, %v1144
      %v1151 = vpack.c.b16 %v1147, %v1146
      %v1157 = vsel %vm558, %v1118, 0
      %v1160 = vsel %vm558, %v1119, 0
      %v1163 = vsel %vm558, %v1120, 0
      %v1166 = vsel %vm558, %v1121, 0
      %v1169 = vsel %vm558, %v1122, 0
      %1171 = vmatprep.subr.bf16.mxu0 0
      %1172 = vmatpush1.bf16.msra.mxu0 %v1148
      %1173 = vmatprep.subr.bf16.mxu0 0
      %1174 = vmatpush1.bf16.msra.mxu0 %v1149
      %1175 = vmatprep.subr.bf16.mxu0 0
      %1176 = vmatpush1.bf16.msra.mxu0 %v1150
      %1177 = vmatprep.subr.bf16.mxu0 0
      %1178 = vmatpush1.bf16.msra.mxu0 %v1151
      %1179 = vmatprep.subr.bf16.mxu0 0
      %1180 = vmatpush1.bf16.msra.mxu0 0
      %1181 = vmatprep.subr.bf16.mxu0 0
      %1182 = vmatpush1.bf16.msra.mxu0 0
      %1183 = vmatprep.subr.bf16.mxu0 0
      %1184 = vmatpush1.bf16.msra.mxu0 0
      %1185 = vmatprep.subr.bf16.mxu0 0
      %1186 = vmatpush1.bf16.msra.mxu0 0
      %1187 = vmatprep.subr.bf16.mxu0 0
      %1188 = vmatpush1.bf16.msra.mxu0 0
      %1189 = vmatprep.subr.bf16.mxu0 0
      %1190 = vmatpush1.bf16.msra.mxu0 0
      %1191 = vmatprep.subr.bf16.mxu0 0
      %1192 = vmatpush1.bf16.msra.mxu0 0
      %1193 = vmatprep.subr.bf16.mxu0 0
      %1194 = vmatpush1.bf16.msra.mxu0 0
      %1195 = vmatprep.subr.bf16.mxu0 0
      %1196 = vmatpush1.bf16.msra.mxu0 0
      %1197 = vmatprep.subr.bf16.mxu0 0
      %1198 = vmatpush1.bf16.msra.mxu0 0
      %1199 = vmatprep.subr.bf16.mxu0 0
      %1200 = vmatpush1.bf16.msra.mxu0 0
      %1201 = vmatprep.subr.bf16.mxu0 0
      %1202 = vmatpush1.bf16.msra.mxu0 0
      %1203 = vmatprep.mubr.bf16.mxu0 0
      %1204 = vmatmul.mubr.bf16.gmra.mrb[0].mxu0 %v1157
      %v1205 = vpop.f32.mrb[0].mxu0
      %v1206 = vadd.f32 0.0, %v1205
      %v1207 = vpop.f32.mrb[0].mxu0
      %v1208 = vpop.f32.mrb[0].mxu0
      %v1209 = vadd.f32 0.0, %v1208
      %v1210 = vpop.f32.mrb[0].mxu0
      %1211 = vmatprep.mubr.bf16.mxu0 0
      %1212 = vmatmul.mubr.bf16.gmra.mrb[0].mxu0 %v1160
      %v1213 = vpop.f32.mrb[0].mxu0
      %v1214 = vadd.f32 0.0, %v1213
      %v1215 = vpop.f32.mrb[0].mxu0
      %v1216 = vpop.f32.mrb[0].mxu0
      %v1217 = vadd.f32 0.0, %v1216
      %v1218 = vpop.f32.mrb[0].mxu0
      %1219 = vmatprep.mubr.bf16.mxu0 0
      %1220 = vmatmul.mubr.bf16.gmra.mrb[0].mxu0 %v1163
      %v1221 = vpop.f32.mrb[0].mxu0
      %v1222 = vadd.f32 0.0, %v1221
      %v1223 = vpop.f32.mrb[0].mxu0
      %v1224 = vpop.f32.mrb[0].mxu0
      %v1225 = vadd.f32 0.0, %v1224
      %v1226 = vpop.f32.mrb[0].mxu0
      %1227 = vmatprep.mubr.bf16.mxu0 0
      %1228 = vmatmul.mubr.bf16.gmra.mrb[0].mxu0 %v1166
      %v1229 = vpop.f32.mrb[0].mxu0
      %v1230 = vadd.f32 0.0, %v1229
      %v1231 = vpop.f32.mrb[0].mxu0
      %v1232 = vpop.f32.mrb[0].mxu0
      %v1233 = vadd.f32 0.0, %v1232
      %v1234 = vpop.f32.mrb[0].mxu0
      %1235 = vmatprep.mubr.bf16.mxu0 0
      %1236 = vmatmul.mubr.bf16.gmra.mrb[0].mxu0 %v1169
      %v1237 = vpop.f32.mrb[0].mxu0
      %v1238 = vadd.f32 0.0, %v1237
      %v1239 = vpop.f32.mrb[0].mxu0
      %v1240 = vpop.f32.mrb[0].mxu0
      %v1241 = vpop.f32.mrb[0].mxu0
      %1242 = vdwg.mxu0
      %v1251 = vunpack.c.l.b16 %v1110
      %v1252 = vunpack.c.l.b16 %v1111
      %v1253 = vunpack.c.l.b16 %v1112
      %v1254 = vunpack.c.l.b16 %v1113
      %v1255 = vunpack.c.l.b16 %v1114
      %v1256 = vunpack.c.l.b16 %v1115
      %v1257 = vunpack.c.l.b16 %v1116
      %v1258 = vunpack.c.l.b16 %v1117
      %v1259 = vpack.c.b16 %v1252, %v1251
      %v1260 = vpack.c.b16 %v1254, %v1253
      %v1261 = vpack.c.b16 %v1256, %v1255
      %v1262 = vpack.c.b16 %v1258, %v1257
      %v1268 = vsel %vm558, %v1105, 0
      %v1271 = vsel %vm558, %v1106, 0
      %v1274 = vsel %vm558, %v1107, 0
      %v1277 = vsel %vm558, %v1108, 0
      %v1280 = vsel %vm558, %v1109, 0
      %1282 = vmatprep.subr.bf16.mxu0 0
      %1283 = vmatpush1.bf16.msra.mxu0 %v1259
      %1284 = vmatprep.subr.bf16.mxu0 0
      %1285 = vmatpush1.bf16.msra.mxu0 %v1260
      %1286 = vmatprep.subr.bf16.mxu0 0
      %1287 = vmatpush1.bf16.msra.mxu0 %v1261
      %1288 = vmatprep.subr.bf16.mxu0 0
      %1289 = vmatpush1.bf16.msra.mxu0 %v1262
      %1290 = vmatprep.subr.bf16.mxu0 0
      %1291 = vmatpush1.bf16.msra.mxu0 0
      %1292 = vmatprep.subr.bf16.mxu0 0
      %1293 = vmatpush1.bf16.msra.mxu0 0
      %1294 = vmatprep.subr.bf16.mxu0 0
      %1295 = vmatpush1.bf16.msra.mxu0 0
      %1296 = vmatprep.subr.bf16.mxu0 0
      %1297 = vmatpush1.bf16.msra.mxu0 0
      %1298 = vmatprep.subr.bf16.mxu0 0
      %1299 = vmatpush1.bf16.msra.mxu0 0
      %1300 = vmatprep.subr.bf16.mxu0 0
      %1301 = vmatpush1.bf16.msra.mxu0 0
      %1302 = vmatprep.subr.bf16.mxu0 0
      %1303 = vmatpush1.bf16.msra.mxu0 0
      %1304 = vmatprep.subr.bf16.mxu0 0
      %1305 = vmatpush1.bf16.msra.mxu0 0
      %1306 = vmatprep.subr.bf16.mxu0 0
      %1307 = vmatpush1.bf16.msra.mxu0 0
      %1308 = vmatprep.subr.bf16.mxu0 0
      %1309 = vmatpush1.bf16.msra.mxu0 0
      %1310 = vmatprep.subr.bf16.mxu0 0
      %1311 = vmatpush1.bf16.msra.mxu0 0
      %1312 = vmatprep.subr.bf16.mxu0 0
      %1313 = vmatpush1.bf16.msra.mxu0 0
      %1314 = vmatprep.mubr.bf16.mxu0 0
      %1315 = vmatmul.mubr.bf16.gmra.mrb[0].mxu0 %v1268
      %v1316 = vpop.f32.mrb[0].mxu0
      %v1317 = vadd.f32 %v1206, %v1316
      %v1318 = vpop.f32.mrb[0].mxu0
      %v1319 = vpop.f32.mrb[0].mxu0
      %v1320 = vadd.f32 %v1209, %v1319
      %v1321 = vpop.f32.mrb[0].mxu0
      %1322 = vmatprep.mubr.bf16.mxu0 0
      %1323 = vmatmul.mubr.bf16.gmra.mrb[0].mxu0 %v1271
      %v1324 = vpop.f32.mrb[0].mxu0
      %v1325 = vadd.f32 %v1214, %v1324
      %v1326 = vpop.f32.mrb[0].mxu0
      %v1327 = vpop.f32.mrb[0].mxu0
      %v1328 = vadd.f32 %v1217, %v1327
      %v1329 = vpop.f32.mrb[0].mxu0
      %1330 = vmatprep.mubr.bf16.mxu0 0
      %1331 = vmatmul.mubr.bf16.gmra.mrb[0].mxu0 %v1274
      %v1332 = vpop.f32.mrb[0].mxu0
      %v1333 = vadd.f32 %v1222, %v1332
      %v1334 = vpop.f32.mrb[0].mxu0
      %v1335 = vpop.f32.mrb[0].mxu0
      %v1336 = vadd.f32 %v1225, %v1335
      %v1337 = vpop.f32.mrb[0].mxu0
      %1338 = vmatprep.mubr.bf16.mxu0 0
      %1339 = vmatmul.mubr.bf16.gmra.mrb[0].mxu0 %v1277
      %v1340 = vpop.f32.mrb[0].mxu0
      %v1341 = vadd.f32 %v1230, %v1340
      %v1342 = vpop.f32.mrb[0].mxu0
      %v1343 = vpop.f32.mrb[0].mxu0
      %v1344 = vadd.f32 %v1233, %v1343
      %v1345 = vpop.f32.mrb[0].mxu0
      %1346 = vmatprep.mubr.bf16.mxu0 0
      %1347 = vmatmul.mubr.bf16.gmra.mrb[0].mxu0 %v1280
      %v1348 = vpop.f32.mrb[0].mxu0
      %v1349 = vadd.f32 %v1238, %v1348
      %v1350 = vpop.f32.mrb[0].mxu0
      %v1351 = vpop.f32.mrb[0].mxu0
      %v1352 = vpop.f32.mrb[0].mxu0
      %1353 = vdwg.mxu0
      %v1354 = vld [vmem:[%s918] sm:$0xff]
      %v1355 = vld [vmem:[%s918 + $0x8] sm:$0xff]
      %v1356 = vld [vmem:[%s918 + $0x10] sm:$0xff]
      %v1357 = vld [vmem:[%s918 + $0x18] sm:$0xff]
      %v1358 = vld [vmem:[%s918 + $0x20] sm:$0xf]
      %s1359 = scalar_lea.vmem %s3, 64
      %v1360 = vld [vmem:[%s1359] sm:$0xf]
      %v1361 = vld [vmem:[%s1359 + $0x4] sm:$0xf]
      %v1362 = vld [vmem:[%s1359 + $0x8] sm:$0xf]
      %v1363 = vld [vmem:[%s1359 + $0xc] sm:$0xf]
      %v1364 = vld [vmem:[%s1359 + $0x10] sm:$0xf]
      %v1365 = vld [vmem:[%s1359 + $0x14] sm:$0xf]
      %v1366 = vld [vmem:[%s1359 + $0x18] sm:$0xf]
      %v1367 = vld [vmem:[%s1359 + $0x1c] sm:$0xf]
      %v1376 = vunpack.c.l.b16 %v1360
      %v1377 = vunpack.c.l.b16 %v1361
      %v1378 = vunpack.c.l.b16 %v1362
      %v1379 = vunpack.c.l.b16 %v1363
      %v1380 = vunpack.c.l.b16 %v1364
      %v1381 = vunpack.c.l.b16 %v1365
      %v1382 = vunpack.c.l.b16 %v1366
      %v1383 = vunpack.c.l.b16 %v1367
      %v1384 = vpack.c.b16 %v1377, %v1376
      %v1385 = vpack.c.b16 %v1379, %v1378
      %v1386 = vpack.c.b16 %v1381, %v1380
      %v1387 = vpack.c.b16 %v1383, %v1382
      %v1393 = vsel %vm558, %v1354, 0
      %v1396 = vsel %vm558, %v1355, 0
      %v1399 = vsel %vm558, %v1356, 0
      %v1402 = vsel %vm558, %v1357, 0
      %v1405 = vsel %vm558, %v1358, 0
      %1407 = vmatprep.subr.bf16.mxu0 0
      %1408 = vmatpush1.bf16.msra.mxu0 %v1384
      %1409 = vmatprep.subr.bf16.mxu0 0
      %1410 = vmatpush1.bf16.msra.mxu0 %v1385
      %1411 = vmatprep.subr.bf16.mxu0 0
      %1412 = vmatpush1.bf16.msra.mxu0 %v1386
      %1413 = vmatprep.subr.bf16.mxu0 0
      %1414 = vmatpush1.bf16.msra.mxu0 %v1387
      %1415 = vmatprep.subr.bf16.mxu0 0
      %1416 = vmatpush1.bf16.msra.mxu0 0
      %1417 = vmatprep.subr.bf16.mxu0 0
      %1418 = vmatpush1.bf16.msra.mxu0 0
      %1419 = vmatprep.subr.bf16.mxu0 0
      %1420 = vmatpush1.bf16.msra.mxu0 0
      %1421 = vmatprep.subr.bf16.mxu0 0
      %1422 = vmatpush1.bf16.msra.mxu0 0
      %1423 = vmatprep.subr.bf16.mxu0 0
      %1424 = vmatpush1.bf16.msra.mxu0 0
      %1425 = vmatprep.subr.bf16.mxu0 0
      %1426 = vmatpush1.bf16.msra.mxu0 0
      %1427 = vmatprep.subr.bf16.mxu0 0
      %1428 = vmatpush1.bf16.msra.mxu0 0
      %1429 = vmatprep.subr.bf16.mxu0 0
      %1430 = vmatpush1.bf16.msra.mxu0 0
      %1431 = vmatprep.subr.bf16.mxu0 0
      %1432 = vmatpush1.bf16.msra.mxu0 0
      %1433 = vmatprep.subr.bf16.mxu0 0
      %1434 = vmatpush1.bf16.msra.mxu0 0
      %1435 = vmatprep.subr.bf16.mxu0 0
      %1436 = vmatpush1.bf16.msra.mxu0 0
      %1437 = vmatprep.subr.bf16.mxu0 0
      %1438 = vmatpush1.bf16.msra.mxu0 0
      %1439 = vmatprep.mubr.bf16.mxu0 0
      %1440 = vmatmul.mubr.bf16.gmra.mrb[0].mxu0 %v1393
      %v1441 = vpop.f32.mrb[0].mxu0
      %v1442 = vadd.f32 0.0, %v1441
      %v1443 = vpop.f32.mrb[0].mxu0
      %v1444 = vpop.f32.mrb[0].mxu0
      %v1445 = vadd.f32 0.0, %v1444
      %v1446 = vpop.f32.mrb[0].mxu0
      %1447 = vmatprep.mubr.bf16.mxu0 0
      %1448 = vmatmul.mubr.bf16.gmra.mrb[0].mxu0 %v1396
      %v1449 = vpop.f32.mrb[0].mxu0
      %v1450 = vadd.f32 0.0, %v1449
      %v1451 = vpop.f32.mrb[0].mxu0
      %v1452 = vpop.f32.mrb[0].mxu0
      %v1453 = vadd.f32 0.0, %v1452
      %v1454 = vpop.f32.mrb[0].mxu0
      %1455 = vmatprep.mubr.bf16.mxu0 0
      %1456 = vmatmul.mubr.bf16.gmra.mrb[0].mxu0 %v1399
      %v1457 = vpop.f32.mrb[0].mxu0
      %v1458 = vadd.f32 0.0, %v1457
      %v1459 = vpop.f32.mrb[0].mxu0
      %v1460 = vpop.f32.mrb[0].mxu0
      %v1461 = vadd.f32 0.0, %v1460
      %v1462 = vpop.f32.mrb[0].mxu0
      %1463 = vmatprep.mubr.bf16.mxu0 0
      %1464 = vmatmul.mubr.bf16.gmra.mrb[0].mxu0 %v1402
      %v1465 = vpop.f32.mrb[0].mxu0
      %v1466 = vadd.f32 0.0, %v1465
      %v1467 = vpop.f32.mrb[0].mxu0
      %v1468 = vpop.f32.mrb[0].mxu0
      %v1469 = vadd.f32 0.0, %v1468
      %v1470 = vpop.f32.mrb[0].mxu0
      %1471 = vmatprep.mubr.bf16.mxu0 0
      %1472 = vmatmul.mubr.bf16.gmra.mrb[0].mxu0 %v1405
      %v1473 = vpop.f32.mrb[0].mxu0
      %v1474 = vadd.f32 0.0, %v1473
      %v1475 = vpop.f32.mrb[0].mxu0
      %v1476 = vpop.f32.mrb[0].mxu0
      %v1477 = vpop.f32.mrb[0].mxu0
      %1478 = vdwg.mxu0
      %v1479 = vadd.f32 %v1317, %v1442
      %v1480 = vadd.f32 %v1320, %v1445
      %v1481 = vadd.f32 %v1325, %v1450
      %v1482 = vadd.f32 %v1328, %v1453
      %v1483 = vadd.f32 %v1333, %v1458
      %v1484 = vadd.f32 %v1336, %v1461
      %v1485 = vadd.f32 %v1341, %v1466
      %v1486 = vadd.f32 %v1344, %v1469
      %v1487 = vadd.f32 %v1349, %v1474
      %v1488 = vld [vmem:[%s1098] sm:$0xff]
      %v1489 = vld [vmem:[%s1098 + $0x8] sm:$0xff]
      %v1490 = vld [vmem:[%s1098 + $0x10] sm:$0xff]
      %v1491 = vld [vmem:[%s1098 + $0x18] sm:$0xff]
      %v1492 = vld [vmem:[%s1098 + $0x20] sm:$0xf]
      %s1493 = scalar_lea.vmem %s3, 96
      %v1494 = vld [vmem:[%s1493] sm:$0xf]
      %v1495 = vld [vmem:[%s1493 + $0x4] sm:$0xf]
      %v1496 = vld [vmem:[%s1493 + $0x8] sm:$0xf]
      %v1497 = vld [vmem:[%s1493 + $0xc] sm:$0xf]
      %v1498 = vld [vmem:[%s1493 + $0x10] sm:$0xf]
      %v1499 = vld [vmem:[%s1493 + $0x14] sm:$0xf]
      %v1500 = vld [vmem:[%s1493 + $0x18] sm:$0xf]
      %v1501 = vld [vmem:[%s1493 + $0x1c] sm:$0xf]
      %v1510 = vunpack.c.l.b16 %v1494
      %v1511 = vunpack.c.l.b16 %v1495
      %v1512 = vunpack.c.l.b16 %v1496
      %v1513 = vunpack.c.l.b16 %v1497
      %v1514 = vunpack.c.l.b16 %v1498
      %v1515 = vunpack.c.l.b16 %v1499
      %v1516 = vunpack.c.l.b16 %v1500
      %v1517 = vunpack.c.l.b16 %v1501
      %v1518 = vpack.c.b16 %v1511, %v1510
      %v1519 = vpack.c.b16 %v1513, %v1512
      %v1520 = vpack.c.b16 %v1515, %v1514
      %v1521 = vpack.c.b16 %v1517, %v1516
      %v1527 = vsel %vm558, %v1488, 0
      %v1530 = vsel %vm558, %v1489, 0
      %v1533 = vsel %vm558, %v1490, 0
      %v1536 = vsel %vm558, %v1491, 0
      %v1539 = vsel %vm558, %v1492, 0
      %1541 = vmatprep.subr.bf16.mxu0 0
      %1542 = vmatpush1.bf16.msra.mxu0 %v1518
      %1543 = vmatprep.subr.bf16.mxu0 0
      %1544 = vmatpush1.bf16.msra.mxu0 %v1519
      %1545 = vmatprep.subr.bf16.mxu0 0
      %1546 = vmatpush1.bf16.msra.mxu0 %v1520
      %1547 = vmatprep.subr.bf16.mxu0 0
      %1548 = vmatpush1.bf16.msra.mxu0 %v1521
      %1549 = vmatprep.subr.bf16.mxu0 0
      %1550 = vmatpush1.bf16.msra.mxu0 0
      %1551 = vmatprep.subr.bf16.mxu0 0
      %1552 = vmatpush1.bf16.msra.mxu0 0
      %1553 = vmatprep.subr.bf16.mxu0 0
      %1554 = vmatpush1.bf16.msra.mxu0 0
      %1555 = vmatprep.subr.bf16.mxu0 0
      %1556 = vmatpush1.bf16.msra.mxu0 0
      %1557 = vmatprep.subr.bf16.mxu0 0
      %1558 = vmatpush1.bf16.msra.mxu0 0
      %1559 = vmatprep.subr.bf16.mxu0 0
      %1560 = vmatpush1.bf16.msra.mxu0 0
      %1561 = vmatprep.subr.bf16.mxu0 0
      %1562 = vmatpush1.bf16.msra.mxu0 0
      %1563 = vmatprep.subr.bf16.mxu0 0
      %1564 = vmatpush1.bf16.msra.mxu0 0
      %1565 = vmatprep.subr.bf16.mxu0 0
      %1566 = vmatpush1.bf16.msra.mxu0 0
      %1567 = vmatprep.subr.bf16.mxu0 0
      %1568 = vmatpush1.bf16.msra.mxu0 0
      %1569 = vmatprep.subr.bf16.mxu0 0
      %1570 = vmatpush1.bf16.msra.mxu0 0
      %1571 = vmatprep.subr.bf16.mxu0 0
      %1572 = vmatpush1.bf16.msra.mxu0 0
      %1573 = vmatprep.mubr.bf16.mxu0 0
      %1574 = vmatmul.mubr.bf16.gmra.mrb[0].mxu0 %v1527
      %v1575 = vpop.f32.mrb[0].mxu0
      %v1576 = vadd.f32 0.0, %v1575
      %v1577 = vpop.f32.mrb[0].mxu0
      %v1578 = vpop.f32.mrb[0].mxu0
      %v1579 = vadd.f32 0.0, %v1578
      %v1580 = vpop.f32.mrb[0].mxu0
      %1581 = vmatprep.mubr.bf16.mxu0 0
      %1582 = vmatmul.mubr.bf16.gmra.mrb[0].mxu0 %v1530
      %v1583 = vpop.f32.mrb[0].mxu0
      %v1584 = vadd.f32 0.0, %v1583
      %v1585 = vpop.f32.mrb[0].mxu0
      %v1586 = vpop.f32.mrb[0].mxu0
      %v1587 = vadd.f32 0.0, %v1586
      %v1588 = vpop.f32.mrb[0].mxu0
      %1589 = vmatprep.mubr.bf16.mxu0 0
      %1590 = vmatmul.mubr.bf16.gmra.mrb[0].mxu0 %v1533
      %v1591 = vpop.f32.mrb[0].mxu0
      %v1592 = vadd.f32 0.0, %v1591
      %v1593 = vpop.f32.mrb[0].mxu0
      %v1594 = vpop.f32.mrb[0].mxu0
      %v1595 = vadd.f32 0.0, %v1594
      %v1596 = vpop.f32.mrb[0].mxu0
      %1597 = vmatprep.mubr.bf16.mxu0 0
      %1598 = vmatmul.mubr.bf16.gmra.mrb[0].mxu0 %v1536
      %v1599 = vpop.f32.mrb[0].mxu0
      %v1600 = vadd.f32 0.0, %v1599
      %v1601 = vpop.f32.mrb[0].mxu0
      %v1602 = vpop.f32.mrb[0].mxu0
      %v1603 = vadd.f32 0.0, %v1602
      %v1604 = vpop.f32.mrb[0].mxu0
      %1605 = vmatprep.mubr.bf16.mxu0 0
      %1606 = vmatmul.mubr.bf16.gmra.mrb[0].mxu0 %v1539
      %v1607 = vpop.f32.mrb[0].mxu0
      %v1608 = vadd.f32 0.0, %v1607
      %v1609 = vpop.f32.mrb[0].mxu0
      %v1610 = vpop.f32.mrb[0].mxu0
      %v1611 = vpop.f32.mrb[0].mxu0
      %1612 = vdwg.mxu0
      %v1613 = vadd.f32 %v1479, %v1576
      %v1614 = vadd.f32 %v1480, %v1579
      %v1615 = vadd.f32 %v1481, %v1584
      %v1616 = vadd.f32 %v1482, %v1587
      %v1617 = vadd.f32 %v1483, %v1592
      %v1618 = vadd.f32 %v1484, %v1595
      %v1619 = vadd.f32 %v1485, %v1600
      %v1620 = vadd.f32 %v1486, %v1603
      %v1621 = vadd.f32 %v1487, %v1608
      %v1622 = vld [vmem:[#allocation2 + $0x20] sm:$0x1f]
      %s1623 = scalar_lea.vmem %s3, 128
      %v1624 = vld [vmem:[%s1623] sm:$0xf]
      %v1625 = vld [vmem:[%s1623 + $0x4] sm:$0xf]
      %v1626 = vld [vmem:[%s1623 + $0x8] sm:$0xf]
      %v1627 = vld [vmem:[%s1623 + $0xc] sm:$0xf]
      %v1628 = vld [vmem:[%s1623 + $0x10] sm:$0xf]
      %v1629 = vld [vmem:[%s1623 + $0x14] sm:$0xf]
      %v1630 = vld [vmem:[%s1623 + $0x18] sm:$0xf]
      %v1631 = vld [vmem:[%s1623 + $0x1c] sm:$0xf]
      %vm1632 = vsmask.f32 7424
      %v1633 = vshrl.u32 %v1105, 16
      %v1635 = vshll.u32 %v1105, 16
      %v1637 = vrot.slane %v1635, 1
      %v1638 = vor.u32 %v1633, %v1637
      %v1639 = vshll.u32 %v1106, 16
      %v1641 = vrot.slane %v1639, 1
      %v1642 = vsel %vm1632, %v1638, %v1641
      %v1643 = vshrl.u32 %v1106, 16
      %v1645 = vor.u32 %v1643, %v1641
      %v1646 = vshll.u32 %v1107, 16
      %v1648 = vrot.slane %v1646, 1
      %v1649 = vsel %vm1632, %v1645, %v1648
      %v1650 = vshrl.u32 %v1107, 16
      %v1652 = vor.u32 %v1650, %v1648
      %v1653 = vshll.u32 %v1108, 16
      %v1655 = vrot.slane %v1653, 1
      %v1656 = vsel %vm1632, %v1652, %v1655
      %v1657 = vshrl.u32 %v1108, 16
      %v1659 = vor.u32 %v1657, %v1655
      %v1661 = vshll.u32 %v1622, 16
      %v1663 = vrot.slane %v1661, 1
      %v1664 = vsel %vm1632, %v1659, %v1663
      %v1665 = vshrl.u32 %v1622, 16
      %v1667 = vor.u32 %v1665, %v1663
      %v1676 = vunpack.c.l.b16 %v1624
      %v1677 = vunpack.c.l.b16 %v1625
      %v1678 = vunpack.c.l.b16 %v1626
      %v1679 = vunpack.c.l.b16 %v1627
      %v1680 = vunpack.c.l.b16 %v1628
      %v1681 = vunpack.c.l.b16 %v1629
      %v1682 = vunpack.c.l.b16 %v1630
      %v1683 = vunpack.c.l.b16 %v1631
      %v1684 = vpack.c.b16 %v1677, %v1676
      %v1685 = vpack.c.b16 %v1679, %v1678
      %v1686 = vpack.c.b16 %v1681, %v1680
      %v1687 = vpack.c.b16 %v1683, %v1682
      %v1693 = vsel %vm558, %v1642, 0
      %v1696 = vsel %vm558, %v1649, 0
      %v1699 = vsel %vm558, %v1656, 0
      %v1702 = vsel %vm558, %v1664, 0
      %v1705 = vsel %vm558, %v1667, 0
      %1707 = vmatprep.subr.bf16.mxu0 0
      %1708 = vmatpush1.bf16.msra.mxu0 %v1684
      %1709 = vmatprep.subr.bf16.mxu0 0
      %1710 = vmatpush1.bf16.msra.mxu0 %v1685
      %1711 = vmatprep.subr.bf16.mxu0 0
      %1712 = vmatpush1.bf16.msra.mxu0 %v1686
      %1713 = vmatprep.subr.bf16.mxu0 0
      %1714 = vmatpush1.bf16.msra.mxu0 %v1687
      %1715 = vmatprep.subr.bf16.mxu0 0
      %1716 = vmatpush1.bf16.msra.mxu0 0
      %1717 = vmatprep.subr.bf16.mxu0 0
      %1718 = vmatpush1.bf16.msra.mxu0 0
      %1719 = vmatprep.subr.bf16.mxu0 0
      %1720 = vmatpush1.bf16.msra.mxu0 0
      %1721 = vmatprep.subr.bf16.mxu0 0
      %1722 = vmatpush1.bf16.msra.mxu0 0
      %1723 = vmatprep.subr.bf16.mxu0 0
      %1724 = vmatpush1.bf16.msra.mxu0 0
      %1725 = vmatprep.subr.bf16.mxu0 0
      %1726 = vmatpush1.bf16.msra.mxu0 0
      %1727 = vmatprep.subr.bf16.mxu0 0
      %1728 = vmatpush1.bf16.msra.mxu0 0
      %1729 = vmatprep.subr.bf16.mxu0 0
      %1730 = vmatpush1.bf16.msra.mxu0 0
      %1731 = vmatprep.subr.bf16.mxu0 0
      %1732 = vmatpush1.bf16.msra.mxu0 0
      %1733 = vmatprep.subr.bf16.mxu0 0
      %1734 = vmatpush1.bf16.msra.mxu0 0
      %1735 = vmatprep.subr.bf16.mxu0 0
      %1736 = vmatpush1.bf16.msra.mxu0 0
      %1737 = vmatprep.subr.bf16.mxu0 0
      %1738 = vmatpush1.bf16.msra.mxu0 0
      %1739 = vmatprep.mubr.bf16.mxu0 0
      %1740 = vmatmul.mubr.bf16.gmra.mrb[0].mxu0 %v1693
      %v1741 = vpop.f32.mrb[0].mxu0
      %v1742 = vadd.f32 0.0, %v1741
      %v1743 = vpop.f32.mrb[0].mxu0
      %v1744 = vpop.f32.mrb[0].mxu0
      %v1745 = vadd.f32 0.0, %v1744
      %v1746 = vpop.f32.mrb[0].mxu0
      %1747 = vmatprep.mubr.bf16.mxu0 0
      %1748 = vmatmul.mubr.bf16.gmra.mrb[0].mxu0 %v1696
      %v1749 = vpop.f32.mrb[0].mxu0
      %v1750 = vadd.f32 0.0, %v1749
      %v1751 = vpop.f32.mrb[0].mxu0
      %v1752 = vpop.f32.mrb[0].mxu0
      %v1753 = vadd.f32 0.0, %v1752
      %v1754 = vpop.f32.mrb[0].mxu0
      %1755 = vmatprep.mubr.bf16.mxu0 0
      %1756 = vmatmul.mubr.bf16.gmra.mrb[0].mxu0 %v1699
      %v1757 = vpop.f32.mrb[0].mxu0
      %v1758 = vadd.f32 0.0, %v1757
      %v1759 = vpop.f32.mrb[0].mxu0
      %v1760 = vpop.f32.mrb[0].mxu0
      %v1761 = vadd.f32 0.0, %v1760
      %v1762 = vpop.f32.mrb[0].mxu0
      %1763 = vmatprep.mubr.bf16.mxu0 0
      %1764 = vmatmul.mubr.bf16.gmra.mrb[0].mxu0 %v1702
      %v1765 = vpop.f32.mrb[0].mxu0
      %v1766 = vadd.f32 0.0, %v1765
      %v1767 = vpop.f32.mrb[0].mxu0
      %v1768 = vpop.f32.mrb[0].mxu0
      %v1769 = vadd.f32 0.0, %v1768
      %v1770 = vpop.f32.mrb[0].mxu0
      %1771 = vmatprep.mubr.bf16.mxu0 0
      %1772 = vmatmul.mubr.bf16.gmra.mrb[0].mxu0 %v1705
      %v1773 = vpop.f32.mrb[0].mxu0
      %v1774 = vadd.f32 0.0, %v1773
      %v1775 = vpop.f32.mrb[0].mxu0
      %v1776 = vpop.f32.mrb[0].mxu0
      %v1777 = vpop.f32.mrb[0].mxu0
      %1778 = vdwg.mxu0
      %v1779 = vadd.f32 %v1613, %v1742
      %v1780 = vadd.f32 %v1614, %v1745
      %v1781 = vadd.f32 %v1615, %v1750
      %v1782 = vadd.f32 %v1616, %v1753
      %v1783 = vadd.f32 %v1617, %v1758
      %v1784 = vadd.f32 %v1618, %v1761
      %v1785 = vadd.f32 %v1619, %v1766
      %v1786 = vadd.f32 %v1620, %v1769
      %v1787 = vadd.f32 %v1621, %v1774
      %v1788 = vld [vmem:[%s738 + $0x20] sm:$0x1f]
      %s1789 = scalar_lea.vmem %s3, 160
      %v1790 = vld [vmem:[%s1789] sm:$0xf]
      %v1791 = vld [vmem:[%s1789 + $0x4] sm:$0xf]
      %v1792 = vld [vmem:[%s1789 + $0x8] sm:$0xf]
      %v1793 = vld [vmem:[%s1789 + $0xc] sm:$0xf]
      %v1794 = vld [vmem:[%s1789 + $0x10] sm:$0xf]
      %v1795 = vld [vmem:[%s1789 + $0x14] sm:$0xf]
      %v1796 = vld [vmem:[%s1789 + $0x18] sm:$0xf]
      %v1797 = vld [vmem:[%s1789 + $0x1c] sm:$0xf]
      %v1798 = vshrl.u32 %v1118, 16
      %v1800 = vshll.u32 %v1118, 16
      %v1802 = vrot.slane %v1800, 1
      %v1803 = vor.u32 %v1798, %v1802
      %v1804 = vshll.u32 %v1119, 16
      %v1806 = vrot.slane %v1804, 1
      %v1807 = vsel %vm1632, %v1803, %v1806
      %v1808 = vshrl.u32 %v1119, 16
      %v1810 = vor.u32 %v1808, %v1806
      %v1811 = vshll.u32 %v1120, 16
      %v1813 = vrot.slane %v1811, 1
      %v1814 = vsel %vm1632, %v1810, %v1813
      %v1815 = vshrl.u32 %v1120, 16
      %v1817 = vor.u32 %v1815, %v1813
      %v1818 = vshll.u32 %v1121, 16
      %v1820 = vrot.slane %v1818, 1
      %v1821 = vsel %vm1632, %v1817, %v1820
      %v1822 = vshrl.u32 %v1121, 16
      %v1824 = vor.u32 %v1822, %v1820
      %v1826 = vshll.u32 %v1788, 16
      %v1828 = vrot.slane %v1826, 1
      %v1829 = vsel %vm1632, %v1824, %v1828
      %v1830 = vshrl.u32 %v1788, 16
      %v1832 = vor.u32 %v1830, %v1828
      %v1841 = vunpack.c.l.b16 %v1790
      %v1842 = vunpack.c.l.b16 %v1791
      %v1843 = vunpack.c.l.b16 %v1792
      %v1844 = vunpack.c.l.b16 %v1793
      %v1845 = vunpack.c.l.b16 %v1794
      %v1846 = vunpack.c.l.b16 %v1795
      %v1847 = vunpack.c.l.b16 %v1796
      %v1848 = vunpack.c.l.b16 %v1797
      %v1849 = vpack.c.b16 %v1842, %v1841
      %v1850 = vpack.c.b16 %v1844, %v1843
      %v1851 = vpack.c.b16 %v1846, %v1845
      %v1852 = vpack.c.b16 %v1848, %v1847
      %v1858 = vsel %vm558, %v1807, 0
      %v1861 = vsel %vm558, %v1814, 0
      %v1864 = vsel %vm558, %v1821, 0
      %v1867 = vsel %vm558, %v1829, 0
      %v1870 = vsel %vm558, %v1832, 0
      %1872 = vmatprep.subr.bf16.mxu0 0
      %1873 = vmatpush1.bf16.msra.mxu0 %v1849
      %1874 = vmatprep.subr.bf16.mxu0 0
      %1875 = vmatpush1.bf16.msra.mxu0 %v1850
      %1876 = vmatprep.subr.bf16.mxu0 0
      %1877 = vmatpush1.bf16.msra.mxu0 %v1851
      %1878 = vmatprep.subr.bf16.mxu0 0
      %1879 = vmatpush1.bf16.msra.mxu0 %v1852
      %1880 = vmatprep.subr.bf16.mxu0 0
      %1881 = vmatpush1.bf16.msra.mxu0 0
      %1882 = vmatprep.subr.bf16.mxu0 0
      %1883 = vmatpush1.bf16.msra.mxu0 0
      %1884 = vmatprep.subr.bf16.mxu0 0
      %1885 = vmatpush1.bf16.msra.mxu0 0
      %1886 = vmatprep.subr.bf16.mxu0 0
      %1887 = vmatpush1.bf16.msra.mxu0 0
      %1888 = vmatprep.subr.bf16.mxu0 0
      %1889 = vmatpush1.bf16.msra.mxu0 0
      %1890 = vmatprep.subr.bf16.mxu0 0
      %1891 = vmatpush1.bf16.msra.mxu0 0
      %1892 = vmatprep.subr.bf16.mxu0 0
      %1893 = vmatpush1.bf16.msra.mxu0 0
      %1894 = vmatprep.subr.bf16.mxu0 0
      %1895 = vmatpush1.bf16.msra.mxu0 0
      %1896 = vmatprep.subr.bf16.mxu0 0
      %1897 = vmatpush1.bf16.msra.mxu0 0
      %1898 = vmatprep.subr.bf16.mxu0 0
      %1899 = vmatpush1.bf16.msra.mxu0 0
      %1900 = vmatprep.subr.bf16.mxu0 0
      %1901 = vmatpush1.bf16.msra.mxu0 0
      %1902 = vmatprep.subr.bf16.mxu0 0
      %1903 = vmatpush1.bf16.msra.mxu0 0
      %1904 = vmatprep.mubr.bf16.mxu0 0
      %1905 = vmatmul.mubr.bf16.gmra.mrb[0].mxu0 %v1858
      %v1906 = vpop.f32.mrb[0].mxu0
      %v1907 = vadd.f32 0.0, %v1906
      %v1908 = vpop.f32.mrb[0].mxu0
      %v1909 = vpop.f32.mrb[0].mxu0
      %v1910 = vadd.f32 0.0, %v1909
      %v1911 = vpop.f32.mrb[0].mxu0
      %1912 = vmatprep.mubr.bf16.mxu0 0
      %1913 = vmatmul.mubr.bf16.gmra.mrb[0].mxu0 %v1861
      %v1914 = vpop.f32.mrb[0].mxu0
      %v1915 = vadd.f32 0.0, %v1914
      %v1916 = vpop.f32.mrb[0].mxu0
      %v1917 = vpop.f32.mrb[0].mxu0
      %v1918 = vadd.f32 0.0, %v1917
      %v1919 = vpop.f32.mrb[0].mxu0
      %1920 = vmatprep.mubr.bf16.mxu0 0
      %1921 = vmatmul.mubr.bf16.gmra.mrb[0].mxu0 %v1864
      %v1922 = vpop.f32.mrb[0].mxu0
      %v1923 = vadd.f32 0.0, %v1922
      %v1924 = vpop.f32.mrb[0].mxu0
      %v1925 = vpop.f32.mrb[0].mxu0
      %v1926 = vadd.f32 0.0, %v1925
      %v1927 = vpop.f32.mrb[0].mxu0
      %1928 = vmatprep.mubr.bf16.mxu0 0
      %1929 = vmatmul.mubr.bf16.gmra.mrb[0].mxu0 %v1867
      %v1930 = vpop.f32.mrb[0].mxu0
      %v1931 = vadd.f32 0.0, %v1930
      %v1932 = vpop.f32.mrb[0].mxu0
      %v1933 = vpop.f32.mrb[0].mxu0
      %v1934 = vadd.f32 0.0, %v1933
      %v1935 = vpop.f32.mrb[0].mxu0
      %1936 = vmatprep.mubr.bf16.mxu0 0
      %1937 = vmatmul.mubr.bf16.gmra.mrb[0].mxu0 %v1870
      %v1938 = vpop.f32.mrb[0].mxu0
      %v1939 = vadd.f32 0.0, %v1938
      %v1940 = vpop.f32.mrb[0].mxu0
      %v1941 = vpop.f32.mrb[0].mxu0
      %v1942 = vpop.f32.mrb[0].mxu0
      %1943 = vdwg.mxu0
      %v1944 = vadd.f32 %v1779, %v1907
      %v1945 = vadd.f32 %v1780, %v1910
      %v1946 = vadd.f32 %v1781, %v1915
      %v1947 = vadd.f32 %v1782, %v1918
      %v1948 = vadd.f32 %v1783, %v1923
      %v1949 = vadd.f32 %v1784, %v1926
      %v1950 = vadd.f32 %v1785, %v1931
      %v1951 = vadd.f32 %v1786, %v1934
      %v1952 = vadd.f32 %v1787, %v1939
      %v1953 = vld [vmem:[%s918 + $0x20] sm:$0x1f]
      %s1954 = scalar_lea.vmem %s3, 192
      %v1955 = vld [vmem:[%s1954] sm:$0xf]
      %v1956 = vld [vmem:[%s1954 + $0x4] sm:$0xf]
      %v1957 = vld [vmem:[%s1954 + $0x8] sm:$0xf]
      %v1958 = vld [vmem:[%s1954 + $0xc] sm:$0xf]
      %v1959 = vld [vmem:[%s1954 + $0x10] sm:$0xf]
      %v1960 = vld [vmem:[%s1954 + $0x14] sm:$0xf]
      %v1961 = vld [vmem:[%s1954 + $0x18] sm:$0xf]
      %v1962 = vld [vmem:[%s1954 + $0x1c] sm:$0xf]
      %v1963 = vshrl.u32 %v1354, 16
      %v1965 = vshll.u32 %v1354, 16
      %v1967 = vrot.slane %v1965, 1
      %v1968 = vor.u32 %v1963, %v1967
      %v1969 = vshll.u32 %v1355, 16
      %v1971 = vrot.slane %v1969, 1
      %v1972 = vsel %vm1632, %v1968, %v1971
      %v1973 = vshrl.u32 %v1355, 16
      %v1975 = vor.u32 %v1973, %v1971
      %v1976 = vshll.u32 %v1356, 16
      %v1978 = vrot.slane %v1976, 1
      %v1979 = vsel %vm1632, %v1975, %v1978
      %v1980 = vshrl.u32 %v1356, 16
      %v1982 = vor.u32 %v1980, %v1978
      %v1983 = vshll.u32 %v1357, 16
      %v1985 = vrot.slane %v1983, 1
      %v1986 = vsel %vm1632, %v1982, %v1985
      %v1987 = vshrl.u32 %v1357, 16
      %v1989 = vor.u32 %v1987, %v1985
      %v1991 = vshll.u32 %v1953, 16
      %v1993 = vrot.slane %v1991, 1
      %v1994 = vsel %vm1632, %v1989, %v1993
      %v1995 = vshrl.u32 %v1953, 16
      %v1997 = vor.u32 %v1995, %v1993
      %v2006 = vunpack.c.l.b16 %v1955
      %v2007 = vunpack.c.l.b16 %v1956
      %v2008 = vunpack.c.l.b16 %v1957
      %v2009 = vunpack.c.l.b16 %v1958
      %v2010 = vunpack.c.l.b16 %v1959
      %v2011 = vunpack.c.l.b16 %v1960
      %v2012 = vunpack.c.l.b16 %v1961
      %v2013 = vunpack.c.l.b16 %v1962
      %v2014 = vpack.c.b16 %v2007, %v2006
      %v2015 = vpack.c.b16 %v2009, %v2008
      %v2016 = vpack.c.b16 %v2011, %v2010
      %v2017 = vpack.c.b16 %v2013, %v2012
      %v2023 = vsel %vm558, %v1972, 0
      %v2026 = vsel %vm558, %v1979, 0
      %v2029 = vsel %vm558, %v1986, 0
      %v2032 = vsel %vm558, %v1994, 0
      %v2035 = vsel %vm558, %v1997, 0
      %2037 = vmatprep.subr.bf16.mxu0 0
      %2038 = vmatpush1.bf16.msra.mxu0 %v2014
      %2039 = vmatprep.subr.bf16.mxu0 0
      %2040 = vmatpush1.bf16.msra.mxu0 %v2015
      %2041 = vmatprep.subr.bf16.mxu0 0
      %2042 = vmatpush1.bf16.msra.mxu0 %v2016
      %2043 = vmatprep.subr.bf16.mxu0 0
      %2044 = vmatpush1.bf16.msra.mxu0 %v2017
      %2045 = vmatprep.subr.bf16.mxu0 0
      %2046 = vmatpush1.bf16.msra.mxu0 0
      %2047 = vmatprep.subr.bf16.mxu0 0
      %2048 = vmatpush1.bf16.msra.mxu0 0
      %2049 = vmatprep.subr.bf16.mxu0 0
      %2050 = vmatpush1.bf16.msra.mxu0 0
      %2051 = vmatprep.subr.bf16.mxu0 0
      %2052 = vmatpush1.bf16.msra.mxu0 0
      %2053 = vmatprep.subr.bf16.mxu0 0
      %2054 = vmatpush1.bf16.msra.mxu0 0
      %2055 = vmatprep.subr.bf16.mxu0 0
      %2056 = vmatpush1.bf16.msra.mxu0 0
      %2057 = vmatprep.subr.bf16.mxu0 0
      %2058 = vmatpush1.bf16.msra.mxu0 0
      %2059 = vmatprep.subr.bf16.mxu0 0
      %2060 = vmatpush1.bf16.msra.mxu0 0
      %2061 = vmatprep.subr.bf16.mxu0 0
      %2062 = vmatpush1.bf16.msra.mxu0 0
      %2063 = vmatprep.subr.bf16.mxu0 0
      %2064 = vmatpush1.bf16.msra.mxu0 0
      %2065 = vmatprep.subr.bf16.mxu0 0
      %2066 = vmatpush1.bf16.msra.mxu0 0
      %2067 = vmatprep.subr.bf16.mxu0 0
      %2068 = vmatpush1.bf16.msra.mxu0 0
      %2069 = vmatprep.mubr.bf16.mxu0 0
      %2070 = vmatmul.mubr.bf16.gmra.mrb[0].mxu0 %v2023
      %v2071 = vpop.f32.mrb[0].mxu0
      %v2072 = vadd.f32 0.0, %v2071
      %v2073 = vpop.f32.mrb[0].mxu0
      %v2074 = vpop.f32.mrb[0].mxu0
      %v2075 = vadd.f32 0.0, %v2074
      %v2076 = vpop.f32.mrb[0].mxu0
      %2077 = vmatprep.mubr.bf16.mxu0 0
      %2078 = vmatmul.mubr.bf16.gmra.mrb[0].mxu0 %v2026
      %v2079 = vpop.f32.mrb[0].mxu0
      %v2080 = vadd.f32 0.0, %v2079
      %v2081 = vpop.f32.mrb[0].mxu0
      %v2082 = vpop.f32.mrb[0].mxu0
      %v2083 = vadd.f32 0.0, %v2082
      %v2084 = vpop.f32.mrb[0].mxu0
      %2085 = vmatprep.mubr.bf16.mxu0 0
      %2086 = vmatmul.mubr.bf16.gmra.mrb[0].mxu0 %v2029
      %v2087 = vpop.f32.mrb[0].mxu0
      %v2088 = vadd.f32 0.0, %v2087
      %v2089 = vpop.f32.mrb[0].mxu0
      %v2090 = vpop.f32.mrb[0].mxu0
      %v2091 = vadd.f32 0.0, %v2090
      %v2092 = vpop.f32.mrb[0].mxu0
      %2093 = vmatprep.mubr.bf16.mxu0 0
      %2094 = vmatmul.mubr.bf16.gmra.mrb[0].mxu0 %v2032
      %v2095 = vpop.f32.mrb[0].mxu0
      %v2096 = vadd.f32 0.0, %v2095
      %v2097 = vpop.f32.mrb[0].mxu0
      %v2098 = vpop.f32.mrb[0].mxu0
      %v2099 = vadd.f32 0.0, %v2098
      %v2100 = vpop.f32.mrb[0].mxu0
      %2101 = vmatprep.mubr.bf16.mxu0 0
      %2102 = vmatmul.mubr.bf16.gmra.mrb[0].mxu0 %v2035
      %v2103 = vpop.f32.mrb[0].mxu0
      %v2104 = vadd.f32 0.0, %v2103
      %v2105 = vpop.f32.mrb[0].mxu0
      %v2106 = vpop.f32.mrb[0].mxu0
      %v2107 = vpop.f32.mrb[0].mxu0
      %2108 = vdwg.mxu0
      %v2109 = vadd.f32 %v1944, %v2072
      %v2110 = vadd.f32 %v1945, %v2075
      %v2111 = vadd.f32 %v1946, %v2080
      %v2112 = vadd.f32 %v1947, %v2083
      %v2113 = vadd.f32 %v1948, %v2088
      %v2114 = vadd.f32 %v1949, %v2091
      %v2115 = vadd.f32 %v1950, %v2096
      %v2116 = vadd.f32 %v1951, %v2099
      %v2117 = vadd.f32 %v1952, %v2104
      %v2118 = vld [vmem:[%s1098 + $0x20] sm:$0x1f]
      %s2119 = scalar_lea.vmem %s3, 224
      %v2120 = vld [vmem:[%s2119] sm:$0xf]
      %v2121 = vld [vmem:[%s2119 + $0x4] sm:$0xf]
      %v2122 = vld [vmem:[%s2119 + $0x8] sm:$0xf]
      %v2123 = vld [vmem:[%s2119 + $0xc] sm:$0xf]
      %v2124 = vld [vmem:[%s2119 + $0x10] sm:$0xf]
      %v2125 = vld [vmem:[%s2119 + $0x14] sm:$0xf]
      %v2126 = vld [vmem:[%s2119 + $0x18] sm:$0xf]
      %v2127 = vld [vmem:[%s2119 + $0x1c] sm:$0xf]
      %v2128 = vshrl.u32 %v1488, 16
      %v2130 = vshll.u32 %v1488, 16
      %v2132 = vrot.slane %v2130, 1
      %v2133 = vor.u32 %v2128, %v2132
      %v2134 = vshll.u32 %v1489, 16
      %v2136 = vrot.slane %v2134, 1
      %v2137 = vsel %vm1632, %v2133, %v2136
      %v2138 = vshrl.u32 %v1489, 16
      %v2140 = vor.u32 %v2138, %v2136
      %v2141 = vshll.u32 %v1490, 16
      %v2143 = vrot.slane %v2141, 1
      %v2144 = vsel %vm1632, %v2140, %v2143
      %v2145 = vshrl.u32 %v1490, 16
      %v2147 = vor.u32 %v2145, %v2143
      %v2148 = vshll.u32 %v1491, 16
      %v2150 = vrot.slane %v2148, 1
      %v2151 = vsel %vm1632, %v2147, %v2150
      %v2152 = vshrl.u32 %v1491, 16
      %v2154 = vor.u32 %v2152, %v2150
      %v2156 = vshll.u32 %v2118, 16
      %v2158 = vrot.slane %v2156, 1
      %v2159 = vsel %vm1632, %v2154, %v2158
      %v2160 = vshrl.u32 %v2118, 16
      %v2162 = vor.u32 %v2160, %v2158
      %v2171 = vunpack.c.l.b16 %v2120
      %v2172 = vunpack.c.l.b16 %v2121
      %v2173 = vunpack.c.l.b16 %v2122
      %v2174 = vunpack.c.l.b16 %v2123
      %v2175 = vunpack.c.l.b16 %v2124
      %v2176 = vunpack.c.l.b16 %v2125
      %v2177 = vunpack.c.l.b16 %v2126
      %v2178 = vunpack.c.l.b16 %v2127
      %v2179 = vpack.c.b16 %v2172, %v2171
      %v2180 = vpack.c.b16 %v2174, %v2173
      %v2181 = vpack.c.b16 %v2176, %v2175
      %v2182 = vpack.c.b16 %v2178, %v2177
      %v2188 = vsel %vm558, %v2137, 0
      %v2191 = vsel %vm558, %v2144, 0
      %v2194 = vsel %vm558, %v2151, 0
      %v2197 = vsel %vm558, %v2159, 0
      %v2200 = vsel %vm558, %v2162, 0
      %2202 = vmatprep.subr.bf16.mxu0 0
      %2203 = vmatpush1.bf16.msra.mxu0 %v2179
      %2204 = vmatprep.subr.bf16.mxu0 0
      %2205 = vmatpush1.bf16.msra.mxu0 %v2180
      %2206 = vmatprep.subr.bf16.mxu0 0
      %2207 = vmatpush1.bf16.msra.mxu0 %v2181
      %2208 = vmatprep.subr.bf16.mxu0 0
      %2209 = vmatpush1.bf16.msra.mxu0 %v2182
      %2210 = vmatprep.subr.bf16.mxu0 0
      %2211 = vmatpush1.bf16.msra.mxu0 0
      %2212 = vmatprep.subr.bf16.mxu0 0
      %2213 = vmatpush1.bf16.msra.mxu0 0
      %2214 = vmatprep.subr.bf16.mxu0 0
      %2215 = vmatpush1.bf16.msra.mxu0 0
      %2216 = vmatprep.subr.bf16.mxu0 0
      %2217 = vmatpush1.bf16.msra.mxu0 0
      %2218 = vmatprep.subr.bf16.mxu0 0
      %2219 = vmatpush1.bf16.msra.mxu0 0
      %2220 = vmatprep.subr.bf16.mxu0 0
      %2221 = vmatpush1.bf16.msra.mxu0 0
      %2222 = vmatprep.subr.bf16.mxu0 0
      %2223 = vmatpush1.bf16.msra.mxu0 0
      %2224 = vmatprep.subr.bf16.mxu0 0
      %2225 = vmatpush1.bf16.msra.mxu0 0
      %2226 = vmatprep.subr.bf16.mxu0 0
      %2227 = vmatpush1.bf16.msra.mxu0 0
      %2228 = vmatprep.subr.bf16.mxu0 0
      %2229 = vmatpush1.bf16.msra.mxu0 0
      %2230 = vmatprep.subr.bf16.mxu0 0
      %2231 = vmatpush1.bf16.msra.mxu0 0
      %2232 = vmatprep.subr.bf16.mxu0 0
      %2233 = vmatpush1.bf16.msra.mxu0 0
      %2234 = vmatprep.mubr.bf16.mxu0 0
      %2235 = vmatmul.mubr.bf16.gmra.mrb[0].mxu0 %v2188
      %v2236 = vpop.f32.mrb[0].mxu0
      %v2237 = vadd.f32 0.0, %v2236
      %v2238 = vpop.f32.mrb[0].mxu0
      %v2239 = vpop.f32.mrb[0].mxu0
      %v2240 = vadd.f32 0.0, %v2239
      %v2241 = vpop.f32.mrb[0].mxu0
      %2242 = vmatprep.mubr.bf16.mxu0 0
      %2243 = vmatmul.mubr.bf16.gmra.mrb[0].mxu0 %v2191
      %v2244 = vpop.f32.mrb[0].mxu0
      %v2245 = vadd.f32 0.0, %v2244
      %v2246 = vpop.f32.mrb[0].mxu0
      %v2247 = vpop.f32.mrb[0].mxu0
      %v2248 = vadd.f32 0.0, %v2247
      %v2249 = vpop.f32.mrb[0].mxu0
      %2250 = vmatprep.mubr.bf16.mxu0 0
      %2251 = vmatmul.mubr.bf16.gmra.mrb[0].mxu0 %v2194
      %v2252 = vpop.f32.mrb[0].mxu0
      %v2253 = vadd.f32 0.0, %v2252
      %v2254 = vpop.f32.mrb[0].mxu0
      %v2255 = vpop.f32.mrb[0].mxu0
      %v2256 = vadd.f32 0.0, %v2255
      %v2257 = vpop.f32.mrb[0].mxu0
      %2258 = vmatprep.mubr.bf16.mxu0 0
      %2259 = vmatmul.mubr.bf16.gmra.mrb[0].mxu0 %v2197
      %v2260 = vpop.f32.mrb[0].mxu0
      %v2261 = vadd.f32 0.0, %v2260
      %v2262 = vpop.f32.mrb[0].mxu0
      %v2263 = vpop.f32.mrb[0].mxu0
      %v2264 = vadd.f32 0.0, %v2263
      %v2265 = vpop.f32.mrb[0].mxu0
      %2266 = vmatprep.mubr.bf16.mxu0 0
      %2267 = vmatmul.mubr.bf16.gmra.mrb[0].mxu0 %v2200
      %v2268 = vpop.f32.mrb[0].mxu0
      %v2269 = vadd.f32 0.0, %v2268
      %v2270 = vpop.f32.mrb[0].mxu0
      %v2271 = vpop.f32.mrb[0].mxu0
      %v2272 = vpop.f32.mrb[0].mxu0
      %2273 = vdwg.mxu0
      %v2274 = vadd.f32 %v2109, %v2237
      %v2275 = vadd.f32 %v2110, %v2240
      %v2276 = vadd.f32 %v2111, %v2245
      %v2277 = vadd.f32 %v2112, %v2248
      %v2278 = vadd.f32 %v2113, %v2253
      %v2279 = vadd.f32 %v2114, %v2256
      %v2280 = vadd.f32 %v2115, %v2261
      %v2281 = vadd.f32 %v2116, %v2264
      %v2282 = vadd.f32 %v2117, %v2269
      %v2283 = vld [vmem:[#allocation2] sm:$0xf0]
      %v2284 = vld [vmem:[#allocation2 + $0x8] sm:$0xff]
      %v2285 = vld [vmem:[#allocation2 + $0x10] sm:$0xff]
      %v2286 = vld [vmem:[#allocation2 + $0x18] sm:$0xff]
      %v2287 = vld [vmem:[#allocation2 + $0x20] sm:$0xff]
      %v2288 = vld [vmem:[#allocation2 + $0x28] sm:$0x1]
      %s2289 = scalar_lea.vmem %s3, 256
      %v2290 = vld [vmem:[%s2289] sm:$0xf]
      %v2291 = vld [vmem:[%s2289 + $0x4] sm:$0xf]
      %v2292 = vld [vmem:[%s2289 + $0x8] sm:$0xf]
      %v2293 = vld [vmem:[%s2289 + $0xc] sm:$0xf]
      %v2294 = vld [vmem:[%s2289 + $0x10] sm:$0xf]
      %v2295 = vld [vmem:[%s2289 + $0x14] sm:$0xf]
      %v2296 = vld [vmem:[%s2289 + $0x18] sm:$0xf]
      %v2297 = vld [vmem:[%s2289 + $0x1c] sm:$0xf]
      %vm2298 = vsmask.f32 3328
      %v2300 = vshrl.u32 %v2283, 16
      %v2302 = vrot.slane %v2300, 4
      %v2303 = vshll.u32 %v2283, 16
      %v2305 = vrot.slane %v2303, 5
      %v2306 = vor.u32 %v2302, %v2305
      %v2308 = vshrl.u32 %v2284, 16
      %v2310 = vrot.slane %v2308, 4
      %v2311 = vshll.u32 %v2284, 16
      %v2313 = vrot.slane %v2311, 5
      %v2314 = vor.u32 %v2310, %v2313
      %v2315 = vsel %vm2298, %v2306, %v2314
      %v2317 = vshrl.u32 %v2285, 16
      %v2319 = vrot.slane %v2317, 4
      %v2320 = vshll.u32 %v2285, 16
      %v2322 = vrot.slane %v2320, 5
      %v2323 = vor.u32 %v2319, %v2322
      %v2324 = vsel %vm2298, %v2314, %v2323
      %v2326 = vshrl.u32 %v2286, 16
      %v2328 = vrot.slane %v2326, 4
      %v2329 = vshll.u32 %v2286, 16
      %v2331 = vrot.slane %v2329, 5
      %v2332 = vor.u32 %v2328, %v2331
      %v2333 = vsel %vm2298, %v2323, %v2332
      %v2335 = vshrl.u32 %v2287, 16
      %v2337 = vrot.slane %v2335, 4
      %v2338 = vshll.u32 %v2287, 16
      %v2340 = vrot.slane %v2338, 5
      %v2341 = vor.u32 %v2337, %v2340
      %v2342 = vsel %vm2298, %v2332, %v2341
      %v2344 = vshll.u32 %v2288, 16
      %v2346 = vrot.slane %v2344, 5
      %v2347 = vsel %vm2298, %v2341, %v2346
      %v2356 = vunpack.c.l.b16 %v2290
      %v2357 = vunpack.c.l.b16 %v2291
      %v2358 = vunpack.c.l.b16 %v2292
      %v2359 = vunpack.c.l.b16 %v2293
      %v2360 = vunpack.c.l.b16 %v2294
      %v2361 = vunpack.c.l.b16 %v2295
      %v2362 = vunpack.c.l.b16 %v2296
      %v2363 = vunpack.c.l.b16 %v2297
      %v2364 = vpack.c.b16 %v2357, %v2356
      %v2365 = vpack.c.b16 %v2359, %v2358
      %v2366 = vpack.c.b16 %v2361, %v2360
      %v2367 = vpack.c.b16 %v2363, %v2362
      %v2373 = vsel %vm558, %v2315, 0
      %v2376 = vsel %vm558, %v2324, 0
      %v2379 = vsel %vm558, %v2333, 0
      %v2382 = vsel %vm558, %v2342, 0
      %v2385 = vsel %vm558, %v2347, 0
      %2387 = vmatprep.subr.bf16.mxu0 0
      %2388 = vmatpush1.bf16.msra.mxu0 %v2364
      %2389 = vmatprep.subr.bf16.mxu0 0
      %2390 = vmatpush1.bf16.msra.mxu0 %v2365
      %2391 = vmatprep.subr.bf16.mxu0 0
      %2392 = vmatpush1.bf16.msra.mxu0 %v2366
      %2393 = vmatprep.subr.bf16.mxu0 0
      %2394 = vmatpush1.bf16.msra.mxu0 %v2367
      %2395 = vmatprep.subr.bf16.mxu0 0
      %2396 = vmatpush1.bf16.msra.mxu0 0
      %2397 = vmatprep.subr.bf16.mxu0 0
      %2398 = vmatpush1.bf16.msra.mxu0 0
      %2399 = vmatprep.subr.bf16.mxu0 0
      %2400 = vmatpush1.bf16.msra.mxu0 0
      %2401 = vmatprep.subr.bf16.mxu0 0
      %2402 = vmatpush1.bf16.msra.mxu0 0
      %2403 = vmatprep.subr.bf16.mxu0 0
      %2404 = vmatpush1.bf16.msra.mxu0 0
      %2405 = vmatprep.subr.bf16.mxu0 0
      %2406 = vmatpush1.bf16.msra.mxu0 0
      %2407 = vmatprep.subr.bf16.mxu0 0
      %2408 = vmatpush1.bf16.msra.mxu0 0
      %2409 = vmatprep.subr.bf16.mxu0 0
      %2410 = vmatpush1.bf16.msra.mxu0 0
      %2411 = vmatprep.subr.bf16.mxu0 0
      %2412 = vmatpush1.bf16.msra.mxu0 0
      %2413 = vmatprep.subr.bf16.mxu0 0
      %2414 = vmatpush1.bf16.msra.mxu0 0
      %2415 = vmatprep.subr.bf16.mxu0 0
      %2416 = vmatpush1.bf16.msra.mxu0 0
      %2417 = vmatprep.subr.bf16.mxu0 0
      %2418 = vmatpush1.bf16.msra.mxu0 0
      %2419 = vmatprep.mubr.bf16.mxu0 0
      %2420 = vmatmul.mubr.bf16.gmra.mrb[0].mxu0 %v2373
      %v2421 = vpop.f32.mrb[0].mxu0
      %v2422 = vadd.f32 0.0, %v2421
      %v2423 = vpop.f32.mrb[0].mxu0
      %v2424 = vpop.f32.mrb[0].mxu0
      %v2425 = vadd.f32 0.0, %v2424
      %v2426 = vpop.f32.mrb[0].mxu0
      %2427 = vmatprep.mubr.bf16.mxu0 0
      %2428 = vmatmul.mubr.bf16.gmra.mrb[0].mxu0 %v2376
      %v2429 = vpop.f32.mrb[0].mxu0
      %v2430 = vadd.f32 0.0, %v2429
      %v2431 = vpop.f32.mrb[0].mxu0
      %v2432 = vpop.f32.mrb[0].mxu0
      %v2433 = vadd.f32 0.0, %v2432
      %v2434 = vpop.f32.mrb[0].mxu0
      %2435 = vmatprep.mubr.bf16.mxu0 0
      %2436 = vmatmul.mubr.bf16.gmra.mrb[0].mxu0 %v2379
      %v2437 = vpop.f32.mrb[0].mxu0
      %v2438 = vadd.f32 0.0, %v2437
      %v2439 = vpop.f32.mrb[0].mxu0
      %v2440 = vpop.f32.mrb[0].mxu0
      %v2441 = vadd.f32 0.0, %v2440
      %v2442 = vpop.f32.mrb[0].mxu0
      %2443 = vmatprep.mubr.bf16.mxu0 0
      %2444 = vmatmul.mubr.bf16.gmra.mrb[0].mxu0 %v2382
      %v2445 = vpop.f32.mrb[0].mxu0
      %v2446 = vadd.f32 0.0, %v2445
      %v2447 = vpop.f32.mrb[0].mxu0
      %v2448 = vpop.f32.mrb[0].mxu0
      %v2449 = vadd.f32 0.0, %v2448
      %v2450 = vpop.f32.mrb[0].mxu0
      %2451 = vmatprep.mubr.bf16.mxu0 0
      %2452 = vmatmul.mubr.bf16.gmra.mrb[0].mxu0 %v2385
      %v2453 = vpop.f32.mrb[0].mxu0
      %v2454 = vadd.f32 0.0, %v2453
      %v2455 = vpop.f32.mrb[0].mxu0
      %v2456 = vpop.f32.mrb[0].mxu0
      %v2457 = vpop.f32.mrb[0].mxu0
      %2458 = vdwg.mxu0
      %v2459 = vadd.f32 %v2274, %v2422
      %v2460 = vadd.f32 %v2275, %v2425
      %v2461 = vadd.f32 %v2276, %v2430
      %v2462 = vadd.f32 %v2277, %v2433
      %v2463 = vadd.f32 %v2278, %v2438
      %v2464 = vadd.f32 %v2279, %v2441
      %v2465 = vadd.f32 %v2280, %v2446
      %v2466 = vadd.f32 %v2281, %v2449
      %v2467 = vadd.f32 %v2282, %v2454
      %v2468 = vld [vmem:[%s738] sm:$0xf0]
      %v2469 = vld [vmem:[%s738 + $0x8] sm:$0xff]
      %v2470 = vld [vmem:[%s738 + $0x10] sm:$0xff]
      %v2471 = vld [vmem:[%s738 + $0x18] sm:$0xff]
      %v2472 = vld [vmem:[%s738 + $0x20] sm:$0xff]
      %v2473 = vld [vmem:[%s738 + $0x28] sm:$0x1]
      %s2474 = scalar_lea.vmem %s3, 288
      %v2475 = vld [vmem:[%s2474] sm:$0xf]
      %v2476 = vld [vmem:[%s2474 + $0x4] sm:$0xf]
      %v2477 = vld [vmem:[%s2474 + $0x8] sm:$0xf]
      %v2478 = vld [vmem:[%s2474 + $0xc] sm:$0xf]
      %v2479 = vld [vmem:[%s2474 + $0x10] sm:$0xf]
      %v2480 = vld [vmem:[%s2474 + $0x14] sm:$0xf]
      %v2481 = vld [vmem:[%s2474 + $0x18] sm:$0xf]
      %v2482 = vld [vmem:[%s2474 + $0x1c] sm:$0xf]
      %v2484 = vshrl.u32 %v2468, 16
      %v2486 = vrot.slane %v2484, 4
      %v2487 = vshll.u32 %v2468, 16
      %v2489 = vrot.slane %v2487, 5
      %v2490 = vor.u32 %v2486, %v2489
      %v2492 = vshrl.u32 %v2469, 16
      %v2494 = vrot.slane %v2492, 4
      %v2495 = vshll.u32 %v2469, 16
      %v2497 = vrot.slane %v2495, 5
      %v2498 = vor.u32 %v2494, %v2497
      %v2499 = vsel %vm2298, %v2490, %v2498
      %v2501 = vshrl.u32 %v2470, 16
      %v2503 = vrot.slane %v2501, 4
      %v2504 = vshll.u32 %v2470, 16
      %v2506 = vrot.slane %v2504, 5
      %v2507 = vor.u32 %v2503, %v2506
      %v2508 = vsel %vm2298, %v2498, %v2507
      %v2510 = vshrl.u32 %v2471, 16
      %v2512 = vrot.slane %v2510, 4
      %v2513 = vshll.u32 %v2471, 16
      %v2515 = vrot.slane %v2513, 5
      %v2516 = vor.u32 %v2512, %v2515
      %v2517 = vsel %vm2298, %v2507, %v2516
      %v2519 = vshrl.u32 %v2472, 16
      %v2521 = vrot.slane %v2519, 4
      %v2522 = vshll.u32 %v2472, 16
      %v2524 = vrot.slane %v2522, 5
      %v2525 = vor.u32 %v2521, %v2524
      %v2526 = vsel %vm2298, %v2516, %v2525
      %v2528 = vshll.u32 %v2473, 16
      %v2530 = vrot.slane %v2528, 5
      %v2531 = vsel %vm2298, %v2525, %v2530
      %v2540 = vunpack.c.l.b16 %v2475
      %v2541 = vunpack.c.l.b16 %v2476
      %v2542 = vunpack.c.l.b16 %v2477
      %v2543 = vunpack.c.l.b16 %v2478
      %v2544 = vunpack.c.l.b16 %v2479
      %v2545 = vunpack.c.l.b16 %v2480
      %v2546 = vunpack.c.l.b16 %v2481
      %v2547 = vunpack.c.l.b16 %v2482
      %v2548 = vpack.c.b16 %v2541, %v2540
      %v2549 = vpack.c.b16 %v2543, %v2542
      %v2550 = vpack.c.b16 %v2545, %v2544
      %v2551 = vpack.c.b16 %v2547, %v2546
      %v2557 = vsel %vm558, %v2499, 0
      %v2560 = vsel %vm558, %v2508, 0
      %v2563 = vsel %vm558, %v2517, 0
      %v2566 = vsel %vm558, %v2526, 0
      %v2569 = vsel %vm558, %v2531, 0
      %2571 = vmatprep.subr.bf16.mxu0 0
      %2572 = vmatpush1.bf16.msra.mxu0 %v2548
      %2573 = vmatprep.subr.bf16.mxu0 0
      %2574 = vmatpush1.bf16.msra.mxu0 %v2549
      %2575 = vmatprep.subr.bf16.mxu0 0
      %2576 = vmatpush1.bf16.msra.mxu0 %v2550
      %2577 = vmatprep.subr.bf16.mxu0 0
      %2578 = vmatpush1.bf16.msra.mxu0 %v2551
      %2579 = vmatprep.subr.bf16.mxu0 0
      %2580 = vmatpush1.bf16.msra.mxu0 0
      %2581 = vmatprep.subr.bf16.mxu0 0
      %2582 = vmatpush1.bf16.msra.mxu0 0
      %2583 = vmatprep.subr.bf16.mxu0 0
      %2584 = vmatpush1.bf16.msra.mxu0 0
      %2585 = vmatprep.subr.bf16.mxu0 0
      %2586 = vmatpush1.bf16.msra.mxu0 0
      %2587 = vmatprep.subr.bf16.mxu0 0
      %2588 = vmatpush1.bf16.msra.mxu0 0
      %2589 = vmatprep.subr.bf16.mxu0 0
      %2590 = vmatpush1.bf16.msra.mxu0 0
      %2591 = vmatprep.subr.bf16.mxu0 0
      %2592 = vmatpush1.bf16.msra.mxu0 0
      %2593 = vmatprep.subr.bf16.mxu0 0
      %2594 = vmatpush1.bf16.msra.mxu0 0
      %2595 = vmatprep.subr.bf16.mxu0 0
      %2596 = vmatpush1.bf16.msra.mxu0 0
      %2597 = vmatprep.subr.bf16.mxu0 0
      %2598 = vmatpush1.bf16.msra.mxu0 0
      %2599 = vmatprep.subr.bf16.mxu0 0
      %2600 = vmatpush1.bf16.msra.mxu0 0
      %2601 = vmatprep.subr.bf16.mxu0 0
      %2602 = vmatpush1.bf16.msra.mxu0 0
      %2603 = vmatprep.mubr.bf16.mxu0 0
      %2604 = vmatmul.mubr.bf16.gmra.mrb[0].mxu0 %v2557
      %v2605 = vpop.f32.mrb[0].mxu0
      %v2606 = vadd.f32 0.0, %v2605
      %v2607 = vpop.f32.mrb[0].mxu0
      %v2608 = vpop.f32.mrb[0].mxu0
      %v2609 = vadd.f32 0.0, %v2608
      %v2610 = vpop.f32.mrb[0].mxu0
      %2611 = vmatprep.mubr.bf16.mxu0 0
      %2612 = vmatmul.mubr.bf16.gmra.mrb[0].mxu0 %v2560
      %v2613 = vpop.f32.mrb[0].mxu0
      %v2614 = vadd.f32 0.0, %v2613
      %v2615 = vpop.f32.mrb[0].mxu0
      %v2616 = vpop.f32.mrb[0].mxu0
      %v2617 = vadd.f32 0.0, %v2616
      %v2618 = vpop.f32.mrb[0].mxu0
      %2619 = vmatprep.mubr.bf16.mxu0 0
      %2620 = vmatmul.mubr.bf16.gmra.mrb[0].mxu0 %v2563
      %v2621 = vpop.f32.mrb[0].mxu0
      %v2622 = vadd.f32 0.0, %v2621
      %v2623 = vpop.f32.mrb[0].mxu0
      %v2624 = vpop.f32.mrb[0].mxu0
      %v2625 = vadd.f32 0.0, %v2624
      %v2626 = vpop.f32.mrb[0].mxu0
      %2627 = vmatprep.mubr.bf16.mxu0 0
      %2628 = vmatmul.mubr.bf16.gmra.mrb[0].mxu0 %v2566
      %v2629 = vpop.f32.mrb[0].mxu0
      %v2630 = vadd.f32 0.0, %v2629
      %v2631 = vpop.f32.mrb[0].mxu0
      %v2632 = vpop.f32.mrb[0].mxu0
      %v2633 = vadd.f32 0.0, %v2632
      %v2634 = vpop.f32.mrb[0].mxu0
      %2635 = vmatprep.mubr.bf16.mxu0 0
      %2636 = vmatmul.mubr.bf16.gmra.mrb[0].mxu0 %v2569
      %v2637 = vpop.f32.mrb[0].mxu0
      %v2638 = vadd.f32 0.0, %v2637
      %v2639 = vpop.f32.mrb[0].mxu0
      %v2640 = vpop.f32.mrb[0].mxu0
      %v2641 = vpop.f32.mrb[0].mxu0
      %2642 = vdwg.mxu0
      %v2643 = vadd.f32 %v2459, %v2606
      %v2644 = vadd.f32 %v2460, %v2609
      %v2645 = vadd.f32 %v2461, %v2614
      %v2646 = vadd.f32 %v2462, %v2617
      %v2647 = vadd.f32 %v2463, %v2622
      %v2648 = vadd.f32 %v2464, %v2625
      %v2649 = vadd.f32 %v2465, %v2630
      %v2650 = vadd.f32 %v2466, %v2633
      %v2651 = vadd.f32 %v2467, %v2638
      %v2652 = vld [vmem:[%s918] sm:$0xf0]
      %v2653 = vld [vmem:[%s918 + $0x8] sm:$0xff]
      %v2654 = vld [vmem:[%s918 + $0x10] sm:$0xff]
      %v2655 = vld [vmem:[%s918 + $0x18] sm:$0xff]
      %v2656 = vld [vmem:[%s918 + $0x20] sm:$0xff]
      %v2657 = vld [vmem:[%s918 + $0x28] sm:$0x1]
      %s2658 = scalar_lea.vmem %s3, 320
      %v2659 = vld [vmem:[%s2658] sm:$0xf]
      %v2660 = vld [vmem:[%s2658 + $0x4] sm:$0xf]
      %v2661 = vld [vmem:[%s2658 + $0x8] sm:$0xf]
      %v2662 = vld [vmem:[%s2658 + $0xc] sm:$0xf]
      %v2663 = vld [vmem:[%s2658 + $0x10] sm:$0xf]
      %v2664 = vld [vmem:[%s2658 + $0x14] sm:$0xf]
      %v2665 = vld [vmem:[%s2658 + $0x18] sm:$0xf]
      %v2666 = vld [vmem:[%s2658 + $0x1c] sm:$0xf]
      %v2668 = vshrl.u32 %v2652, 16
      %v2670 = vrot.slane %v2668, 4
      %v2671 = vshll.u32 %v2652, 16
      %v2673 = vrot.slane %v2671, 5
      %v2674 = vor.u32 %v2670, %v2673
      %v2676 = vshrl.u32 %v2653, 16
      %v2678 = vrot.slane %v2676, 4
      %v2679 = vshll.u32 %v2653, 16
      %v2681 = vrot.slane %v2679, 5
      %v2682 = vor.u32 %v2678, %v2681
      %v2683 = vsel %vm2298, %v2674, %v2682
      %v2685 = vshrl.u32 %v2654, 16
      %v2687 = vrot.slane %v2685, 4
      %v2688 = vshll.u32 %v2654, 16
      %v2690 = vrot.slane %v2688, 5
      %v2691 = vor.u32 %v2687, %v2690
      %v2692 = vsel %vm2298, %v2682, %v2691
      %v2694 = vshrl.u32 %v2655, 16
      %v2696 = vrot.slane %v2694, 4
      %v2697 = vshll.u32 %v2655, 16
      %v2699 = vrot.slane %v2697, 5
      %v2700 = vor.u32 %v2696, %v2699
      %v2701 = vsel %vm2298, %v2691, %v2700
      %v2703 = vshrl.u32 %v2656, 16
      %v2705 = vrot.slane %v2703, 4
      %v2706 = vshll.u32 %v2656, 16
      %v2708 = vrot.slane %v2706, 5
      %v2709 = vor.u32 %v2705, %v2708
      %v2710 = vsel %vm2298, %v2700, %v2709
      %v2712 = vshll.u32 %v2657, 16
      %v2714 = vrot.slane %v2712, 5
      %v2715 = vsel %vm2298, %v2709, %v2714
      %v2724 = vunpack.c.l.b16 %v2659
      %v2725 = vunpack.c.l.b16 %v2660
      %v2726 = vunpack.c.l.b16 %v2661
      %v2727 = vunpack.c.l.b16 %v2662
      %v2728 = vunpack.c.l.b16 %v2663
      %v2729 = vunpack.c.l.b16 %v2664
      %v2730 = vunpack.c.l.b16 %v2665
      %v2731 = vunpack.c.l.b16 %v2666
      %v2732 = vpack.c.b16 %v2725, %v2724
      %v2733 = vpack.c.b16 %v2727, %v2726
      %v2734 = vpack.c.b16 %v2729, %v2728
      %v2735 = vpack.c.b16 %v2731, %v2730
      %v2741 = vsel %vm558, %v2683, 0
      %v2744 = vsel %vm558, %v2692, 0
      %v2747 = vsel %vm558, %v2701, 0
      %v2750 = vsel %vm558, %v2710, 0
      %v2753 = vsel %vm558, %v2715, 0
      %2755 = vmatprep.subr.bf16.mxu0 0
      %2756 = vmatpush1.bf16.msra.mxu0 %v2732
      %2757 = vmatprep.subr.bf16.mxu0 0
      %2758 = vmatpush1.bf16.msra.mxu0 %v2733
      %2759 = vmatprep.subr.bf16.mxu0 0
      %2760 = vmatpush1.bf16.msra.mxu0 %v2734
      %2761 = vmatprep.subr.bf16.mxu0 0
      %2762 = vmatpush1.bf16.msra.mxu0 %v2735
      %2763 = vmatprep.subr.bf16.mxu0 0
      %2764 = vmatpush1.bf16.msra.mxu0 0
      %2765 = vmatprep.subr.bf16.mxu0 0
      %2766 = vmatpush1.bf16.msra.mxu0 0
      %2767 = vmatprep.subr.bf16.mxu0 0
      %2768 = vmatpush1.bf16.msra.mxu0 0
      %2769 = vmatprep.subr.bf16.mxu0 0
      %2770 = vmatpush1.bf16.msra.mxu0 0
      %2771 = vmatprep.subr.bf16.mxu0 0
      %2772 = vmatpush1.bf16.msra.mxu0 0
      %2773 = vmatprep.subr.bf16.mxu0 0
      %2774 = vmatpush1.bf16.msra.mxu0 0
      %2775 = vmatprep.subr.bf16.mxu0 0
      %2776 = vmatpush1.bf16.msra.mxu0 0
      %2777 = vmatprep.subr.bf16.mxu0 0
      %2778 = vmatpush1.bf16.msra.mxu0 0
      %2779 = vmatprep.subr.bf16.mxu0 0
      %2780 = vmatpush1.bf16.msra.mxu0 0
      %2781 = vmatprep.subr.bf16.mxu0 0
      %2782 = vmatpush1.bf16.msra.mxu0 0
      %2783 = vmatprep.subr.bf16.mxu0 0
      %2784 = vmatpush1.bf16.msra.mxu0 0
      %2785 = vmatprep.subr.bf16.mxu0 0
      %2786 = vmatpush1.bf16.msra.mxu0 0
      %2787 = vmatprep.mubr.bf16.mxu0 0
      %2788 = vmatmul.mubr.bf16.gmra.mrb[0].mxu0 %v2741
      %v2789 = vpop.f32.mrb[0].mxu0
      %v2790 = vadd.f32 0.0, %v2789
      %v2791 = vpop.f32.mrb[0].mxu0
      %v2792 = vpop.f32.mrb[0].mxu0
      %v2793 = vadd.f32 0.0, %v2792
      %v2794 = vpop.f32.mrb[0].mxu0
      %2795 = vmatprep.mubr.bf16.mxu0 0
      %2796 = vmatmul.mubr.bf16.gmra.mrb[0].mxu0 %v2744
      %v2797 = vpop.f32.mrb[0].mxu0
      %v2798 = vadd.f32 0.0, %v2797
      %v2799 = vpop.f32.mrb[0].mxu0
      %v2800 = vpop.f32.mrb[0].mxu0
      %v2801 = vadd.f32 0.0, %v2800
      %v2802 = vpop.f32.mrb[0].mxu0
      %2803 = vmatprep.mubr.bf16.mxu0 0
      %2804 = vmatmul.mubr.bf16.gmra.mrb[0].mxu0 %v2747
      %v2805 = vpop.f32.mrb[0].mxu0
      %v2806 = vadd.f32 0.0, %v2805
      %v2807 = vpop.f32.mrb[0].mxu0
      %v2808 = vpop.f32.mrb[0].mxu0
      %v2809 = vadd.f32 0.0, %v2808
      %v2810 = vpop.f32.mrb[0].mxu0
      %2811 = vmatprep.mubr.bf16.mxu0 0
      %2812 = vmatmul.mubr.bf16.gmra.mrb[0].mxu0 %v2750
      %v2813 = vpop.f32.mrb[0].mxu0
      %v2814 = vadd.f32 0.0, %v2813
      %v2815 = vpop.f32.mrb[0].mxu0
      %v2816 = vpop.f32.mrb[0].mxu0
      %v2817 = vadd.f32 0.0, %v2816
      %v2818 = vpop.f32.mrb[0].mxu0
      %2819 = vmatprep.mubr.bf16.mxu0 0
      %2820 = vmatmul.mubr.bf16.gmra.mrb[0].mxu0 %v2753
      %v2821 = vpop.f32.mrb[0].mxu0
      %v2822 = vadd.f32 0.0, %v2821
      %v2823 = vpop.f32.mrb[0].mxu0
      %v2824 = vpop.f32.mrb[0].mxu0
      %v2825 = vpop.f32.mrb[0].mxu0
      %2826 = vdwg.mxu0
      %v2827 = vadd.f32 %v2643, %v2790
      %v2828 = vadd.f32 %v2644, %v2793
      %v2829 = vadd.f32 %v2645, %v2798
      %v2830 = vadd.f32 %v2646, %v2801
      %v2831 = vadd.f32 %v2647, %v2806
      %v2832 = vadd.f32 %v2648, %v2809
      %v2833 = vadd.f32 %v2649, %v2814
      %v2834 = vadd.f32 %v2650, %v2817
      %v2835 = vadd.f32 %v2651, %v2822
      %v2836 = vld [vmem:[%s1098] sm:$0xf0]
      %v2837 = vld [vmem:[%s1098 + $0x8] sm:$0xff]
      %v2838 = vld [vmem:[%s1098 + $0x10] sm:$0xff]
      %v2839 = vld [vmem:[%s1098 + $0x18] sm:$0xff]
      %v2840 = vld [vmem:[%s1098 + $0x20] sm:$0xff]
      %v2841 = vld [vmem:[%s1098 + $0x28] sm:$0x1]
      %s2842 = scalar_lea.vmem %s3, 352
      %v2843 = vld [vmem:[%s2842] sm:$0xf]
      %v2844 = vld [vmem:[%s2842 + $0x4] sm:$0xf]
      %v2845 = vld [vmem:[%s2842 + $0x8] sm:$0xf]
      %v2846 = vld [vmem:[%s2842 + $0xc] sm:$0xf]
      %v2847 = vld [vmem:[%s2842 + $0x10] sm:$0xf]
      %v2848 = vld [vmem:[%s2842 + $0x14] sm:$0xf]
      %v2849 = vld [vmem:[%s2842 + $0x18] sm:$0xf]
      %v2850 = vld [vmem:[%s2842 + $0x1c] sm:$0xf]
      %v2852 = vshrl.u32 %v2836, 16
      %v2854 = vrot.slane %v2852, 4
      %v2855 = vshll.u32 %v2836, 16
      %v2857 = vrot.slane %v2855, 5
      %v2858 = vor.u32 %v2854, %v2857
      %v2860 = vshrl.u32 %v2837, 16
      %v2862 = vrot.slane %v2860, 4
      %v2863 = vshll.u32 %v2837, 16
      %v2865 = vrot.slane %v2863, 5
      %v2866 = vor.u32 %v2862, %v2865
      %v2867 = vsel %vm2298, %v2858, %v2866
      %v2869 = vshrl.u32 %v2838, 16
      %v2871 = vrot.slane %v2869, 4
      %v2872 = vshll.u32 %v2838, 16
      %v2874 = vrot.slane %v2872, 5
      %v2875 = vor.u32 %v2871, %v2874
      %v2876 = vsel %vm2298, %v2866, %v2875
      %v2878 = vshrl.u32 %v2839, 16
      %v2880 = vrot.slane %v2878, 4
      %v2881 = vshll.u32 %v2839, 16
      %v2883 = vrot.slane %v2881, 5
      %v2884 = vor.u32 %v2880, %v2883
      %v2885 = vsel %vm2298, %v2875, %v2884
      %v2887 = vshrl.u32 %v2840, 16
      %v2889 = vrot.slane %v2887, 4
      %v2890 = vshll.u32 %v2840, 16
      %v2892 = vrot.slane %v2890, 5
      %v2893 = vor.u32 %v2889, %v2892
      %v2894 = vsel %vm2298, %v2884, %v2893
      %v2896 = vshll.u32 %v2841, 16
      %v2898 = vrot.slane %v2896, 5
      %v2899 = vsel %vm2298, %v2893, %v2898
      %v2908 = vunpack.c.l.b16 %v2843
      %v2909 = vunpack.c.l.b16 %v2844
      %v2910 = vunpack.c.l.b16 %v2845
      %v2911 = vunpack.c.l.b16 %v2846
      %v2912 = vunpack.c.l.b16 %v2847
      %v2913 = vunpack.c.l.b16 %v2848
      %v2914 = vunpack.c.l.b16 %v2849
      %v2915 = vunpack.c.l.b16 %v2850
      %v2916 = vpack.c.b16 %v2909, %v2908
      %v2917 = vpack.c.b16 %v2911, %v2910
      %v2918 = vpack.c.b16 %v2913, %v2912
      %v2919 = vpack.c.b16 %v2915, %v2914
      %v2925 = vsel %vm558, %v2867, 0
      %v2928 = vsel %vm558, %v2876, 0
      %v2931 = vsel %vm558, %v2885, 0
      %v2934 = vsel %vm558, %v2894, 0
      %v2937 = vsel %vm558, %v2899, 0
      %2939 = vmatprep.subr.bf16.mxu0 0
      %2940 = vmatpush1.bf16.msra.mxu0 %v2916
      %2941 = vmatprep.subr.bf16.mxu0 0
      %2942 = vmatpush1.bf16.msra.mxu0 %v2917
      %2943 = vmatprep.subr.bf16.mxu0 0
      %2944 = vmatpush1.bf16.msra.mxu0 %v2918
      %2945 = vmatprep.subr.bf16.mxu0 0
      %2946 = vmatpush1.bf16.msra.mxu0 %v2919
      %2947 = vmatprep.subr.bf16.mxu0 0
      %2948 = vmatpush1.bf16.msra.mxu0 0
      %2949 = vmatprep.subr.bf16.mxu0 0
      %2950 = vmatpush1.bf16.msra.mxu0 0
      %2951 = vmatprep.subr.bf16.mxu0 0
      %2952 = vmatpush1.bf16.msra.mxu0 0
      %2953 = vmatprep.subr.bf16.mxu0 0
      %2954 = vmatpush1.bf16.msra.mxu0 0
      %2955 = vmatprep.subr.bf16.mxu0 0
      %2956 = vmatpush1.bf16.msra.mxu0 0
      %2957 = vmatprep.subr.bf16.mxu0 0
      %2958 = vmatpush1.bf16.msra.mxu0 0
      %2959 = vmatprep.subr.bf16.mxu0 0
      %2960 = vmatpush1.bf16.msra.mxu0 0
      %2961 = vmatprep.subr.bf16.mxu0 0
      %2962 = vmatpush1.bf16.msra.mxu0 0
      %2963 = vmatprep.subr.bf16.mxu0 0
      %2964 = vmatpush1.bf16.msra.mxu0 0
      %2965 = vmatprep.subr.bf16.mxu0 0
      %2966 = vmatpush1.bf16.msra.mxu0 0
      %2967 = vmatprep.subr.bf16.mxu0 0
      %2968 = vmatpush1.bf16.msra.mxu0 0
      %2969 = vmatprep.subr.bf16.mxu0 0
      %2970 = vmatpush1.bf16.msra.mxu0 0
      %2971 = vmatprep.mubr.bf16.mxu0 0
      %2972 = vmatmul.mubr.bf16.gmra.mrb[0].mxu0 %v2925
      %v2973 = vpop.f32.mrb[0].mxu0
      %v2974 = vadd.f32 0.0, %v2973
      %v2975 = vpop.f32.mrb[0].mxu0
      %v2976 = vpop.f32.mrb[0].mxu0
      %v2977 = vadd.f32 0.0, %v2976
      %v2978 = vpop.f32.mrb[0].mxu0
      %2979 = vmatprep.mubr.bf16.mxu0 0
      %2980 = vmatmul.mubr.bf16.gmra.mrb[0].mxu0 %v2928
      %v2981 = vpop.f32.mrb[0].mxu0
      %v2982 = vadd.f32 0.0, %v2981
      %v2983 = vpop.f32.mrb[0].mxu0
      %v2984 = vpop.f32.mrb[0].mxu0
      %v2985 = vadd.f32 0.0, %v2984
      %v2986 = vpop.f32.mrb[0].mxu0
      %2987 = vmatprep.mubr.bf16.mxu0 0
      %2988 = vmatmul.mubr.bf16.gmra.mrb[0].mxu0 %v2931
      %v2989 = vpop.f32.mrb[0].mxu0
      %v2990 = vadd.f32 0.0, %v2989
      %v2991 = vpop.f32.mrb[0].mxu0
      %v2992 = vpop.f32.mrb[0].mxu0
      %v2993 = vadd.f32 0.0, %v2992
      %v2994 = vpop.f32.mrb[0].mxu0
      %2995 = vmatprep.mubr.bf16.mxu0 0
      %2996 = vmatmul.mubr.bf16.gmra.mrb[0].mxu0 %v2934
      %v2997 = vpop.f32.mrb[0].mxu0
      %v2998 = vadd.f32 0.0, %v2997
      %v2999 = vpop.f32.mrb[0].mxu0
      %v3000 = vpop.f32.mrb[0].mxu0
      %v3001 = vadd.f32 0.0, %v3000
      %v3002 = vpop.f32.mrb[0].mxu0
      %3003 = vmatprep.mubr.bf16.mxu0 0
      %3004 = vmatmul.mubr.bf16.gmra.mrb[0].mxu0 %v2937
      %v3005 = vpop.f32.mrb[0].mxu0
      %v3006 = vadd.f32 0.0, %v3005
      %v3007 = vpop.f32.mrb[0].mxu0
      %v3008 = vpop.f32.mrb[0].mxu0
      %v3009 = vpop.f32.mrb[0].mxu0
      %3010 = vdwg.mxu0
      %v3011 = vadd.f32 %v2827, %v2974
      %v3012 = vadd.f32 %v2828, %v2977
      %v3013 = vadd.f32 %v2829, %v2982
      %v3014 = vadd.f32 %v2830, %v2985
      %v3015 = vadd.f32 %v2831, %v2990
      %v3016 = vadd.f32 %v2832, %v2993
      %v3017 = vadd.f32 %v2833, %v2998
      %v3018 = vadd.f32 %v2834, %v3001
      %v3019 = vadd.f32 %v2835, %v3006
      %v3020 = vld [vmem:[#allocation2] sm:$0xe0]
      %s3021 = scalar_lea.vmem %s3, 384
      %v3022 = vld [vmem:[%s3021] sm:$0xf]
      %v3023 = vld [vmem:[%s3021 + $0x4] sm:$0xf]
      %v3024 = vld [vmem:[%s3021 + $0x8] sm:$0xf]
      %v3025 = vld [vmem:[%s3021 + $0xc] sm:$0xf]
      %v3026 = vld [vmem:[%s3021 + $0x10] sm:$0xf]
      %v3027 = vld [vmem:[%s3021 + $0x14] sm:$0xf]
      %v3028 = vld [vmem:[%s3021 + $0x18] sm:$0xf]
      %v3029 = vld [vmem:[%s3021 + $0x1c] sm:$0xf]
      %vm3036 = vcmask 1042432
      %v3037 = vrot.slane %v3020, 5
      %v3038 = vrot.slane %v2284, 5
      %v3039 = vsel %vm3036, %v3037, %v3038
      %v3040 = vrot.slane %v2285, 5
      %v3041 = vsel %vm3036, %v3038, %v3040
      %v3042 = vrot.slane %v2286, 5
      %v3043 = vsel %vm3036, %v3040, %v3042
      %v3044 = vrot.slane %v2287, 5
      %v3045 = vsel %vm3036, %v3042, %v3044
      %v3046 = vrot.slane %v2288, 5
      %v3047 = vsel %vm3036, %v3044, %v3046
      %v3056 = vunpack.c.l.b16 %v3022
      %v3057 = vunpack.c.l.b16 %v3023
      %v3058 = vunpack.c.l.b16 %v3024
      %v3059 = vunpack.c.l.b16 %v3025
      %v3060 = vunpack.c.l.b16 %v3026
      %v3061 = vunpack.c.l.b16 %v3027
      %v3062 = vunpack.c.l.b16 %v3028
      %v3063 = vunpack.c.l.b16 %v3029
      %v3064 = vpack.c.b16 %v3057, %v3056
      %v3065 = vpack.c.b16 %v3059, %v3058
      %v3066 = vpack.c.b16 %v3061, %v3060
      %v3067 = vpack.c.b16 %v3063, %v3062
      %v3073 = vsel %vm558, %v3039, 0
      %v3076 = vsel %vm558, %v3041, 0
      %v3079 = vsel %vm558, %v3043, 0
      %v3082 = vsel %vm558, %v3045, 0
      %v3085 = vsel %vm558, %v3047, 0
      %3087 = vmatprep.subr.bf16.mxu0 0
      %3088 = vmatpush1.bf16.msra.mxu0 %v3064
      %3089 = vmatprep.subr.bf16.mxu0 0
      %3090 = vmatpush1.bf16.msra.mxu0 %v3065
      %3091 = vmatprep.subr.bf16.mxu0 0
      %3092 = vmatpush1.bf16.msra.mxu0 %v3066
      %3093 = vmatprep.subr.bf16.mxu0 0
      %3094 = vmatpush1.bf16.msra.mxu0 %v3067
      %3095 = vmatprep.subr.bf16.mxu0 0
      %3096 = vmatpush1.bf16.msra.mxu0 0
      %3097 = vmatprep.subr.bf16.mxu0 0
      %3098 = vmatpush1.bf16.msra.mxu0 0
      %3099 = vmatprep.subr.bf16.mxu0 0
      %3100 = vmatpush1.bf16.msra.mxu0 0
      %3101 = vmatprep.subr.bf16.mxu0 0
      %3102 = vmatpush1.bf16.msra.mxu0 0
      %3103 = vmatprep.subr.bf16.mxu0 0
      %3104 = vmatpush1.bf16.msra.mxu0 0
      %3105 = vmatprep.subr.bf16.mxu0 0
      %3106 = vmatpush1.bf16.msra.mxu0 0
      %3107 = vmatprep.subr.bf16.mxu0 0
      %3108 = vmatpush1.bf16.msra.mxu0 0
      %3109 = vmatprep.subr.bf16.mxu0 0
      %3110 = vmatpush1.bf16.msra.mxu0 0
      %3111 = vmatprep.subr.bf16.mxu0 0
      %3112 = vmatpush1.bf16.msra.mxu0 0
      %3113 = vmatprep.subr.bf16.mxu0 0
      %3114 = vmatpush1.bf16.msra.mxu0 0
      %3115 = vmatprep.subr.bf16.mxu0 0
      %3116 = vmatpush1.bf16.msra.mxu0 0
      %3117 = vmatprep.subr.bf16.mxu0 0
      %3118 = vmatpush1.bf16.msra.mxu0 0
      %3119 = vmatprep.mubr.bf16.mxu0 0
      %3120 = vmatmul.mubr.bf16.gmra.mrb[0].mxu0 %v3073
      %v3121 = vpop.f32.mrb[0].mxu0
      %v3122 = vadd.f32 0.0, %v3121
      %v3123 = vpop.f32.mrb[0].mxu0
      %v3124 = vpop.f32.mrb[0].mxu0
      %v3125 = vadd.f32 0.0, %v3124
      %v3126 = vpop.f32.mrb[0].mxu0
      %3127 = vmatprep.mubr.bf16.mxu0 0
      %3128 = vmatmul.mubr.bf16.gmra.mrb[0].mxu0 %v3076
      %v3129 = vpop.f32.mrb[0].mxu0
      %v3130 = vadd.f32 0.0, %v3129
      %v3131 = vpop.f32.mrb[0].mxu0
      %v3132 = vpop.f32.mrb[0].mxu0
      %v3133 = vadd.f32 0.0, %v3132
      %v3134 = vpop.f32.mrb[0].mxu0
      %3135 = vmatprep.mubr.bf16.mxu0 0
      %3136 = vmatmul.mubr.bf16.gmra.mrb[0].mxu0 %v3079
      %v3137 = vpop.f32.mrb[0].mxu0
      %v3138 = vadd.f32 0.0, %v3137
      %v3139 = vpop.f32.mrb[0].mxu0
      %v3140 = vpop.f32.mrb[0].mxu0
      %v3141 = vadd.f32 0.0, %v3140
      %v3142 = vpop.f32.mrb[0].mxu0
      %3143 = vmatprep.mubr.bf16.mxu0 0
      %3144 = vmatmul.mubr.bf16.gmra.mrb[0].mxu0 %v3082
      %v3145 = vpop.f32.mrb[0].mxu0
      %v3146 = vadd.f32 0.0, %v3145
      %v3147 = vpop.f32.mrb[0].mxu0
      %v3148 = vpop.f32.mrb[0].mxu0
      %v3149 = vadd.f32 0.0, %v3148
      %v3150 = vpop.f32.mrb[0].mxu0
      %3151 = vmatprep.mubr.bf16.mxu0 0
      %3152 = vmatmul.mubr.bf16.gmra.mrb[0].mxu0 %v3085
      %v3153 = vpop.f32.mrb[0].mxu0
      %v3154 = vadd.f32 0.0, %v3153
      %v3155 = vpop.f32.mrb[0].mxu0
      %v3156 = vpop.f32.mrb[0].mxu0
      %v3157 = vpop.f32.mrb[0].mxu0
      %3158 = vdwg.mxu0
      %v3159 = vadd.f32 %v3011, %v3122
      %v3160 = vadd.f32 %v3012, %v3125
      %v3161 = vadd.f32 %v3013, %v3130
      %v3162 = vadd.f32 %v3014, %v3133
      %v3163 = vadd.f32 %v3015, %v3138
      %v3164 = vadd.f32 %v3016, %v3141
      %v3165 = vadd.f32 %v3017, %v3146
      %v3166 = vadd.f32 %v3018, %v3149
      %v3167 = vadd.f32 %v3019, %v3154
      %v3168 = vld [vmem:[%s738] sm:$0xe0]
      %s3169 = scalar_lea.vmem %s3, 416
      %v3170 = vld [vmem:[%s3169] sm:$0xf]
      %v3171 = vld [vmem:[%s3169 + $0x4] sm:$0xf]
      %v3172 = vld [vmem:[%s3169 + $0x8] sm:$0xf]
      %v3173 = vld [vmem:[%s3169 + $0xc] sm:$0xf]
      %v3174 = vld [vmem:[%s3169 + $0x10] sm:$0xf]
      %v3175 = vld [vmem:[%s3169 + $0x14] sm:$0xf]
      %v3176 = vld [vmem:[%s3169 + $0x18] sm:$0xf]
      %v3177 = vld [vmem:[%s3169 + $0x1c] sm:$0xf]
      %v3184 = vrot.slane %v3168, 5
      %v3185 = vrot.slane %v2469, 5
      %v3186 = vsel %vm3036, %v3184, %v3185
      %v3187 = vrot.slane %v2470, 5
      %v3188 = vsel %vm3036, %v3185, %v3187
      %v3189 = vrot.slane %v2471, 5
      %v3190 = vsel %vm3036, %v3187, %v3189
      %v3191 = vrot.slane %v2472, 5
      %v3192 = vsel %vm3036, %v3189, %v3191
      %v3193 = vrot.slane %v2473, 5
      %v3194 = vsel %vm3036, %v3191, %v3193
      %v3203 = vunpack.c.l.b16 %v3170
      %v3204 = vunpack.c.l.b16 %v3171
      %v3205 = vunpack.c.l.b16 %v3172
      %v3206 = vunpack.c.l.b16 %v3173
      %v3207 = vunpack.c.l.b16 %v3174
      %v3208 = vunpack.c.l.b16 %v3175
      %v3209 = vunpack.c.l.b16 %v3176
      %v3210 = vunpack.c.l.b16 %v3177
      %v3211 = vpack.c.b16 %v3204, %v3203
      %v3212 = vpack.c.b16 %v3206, %v3205
      %v3213 = vpack.c.b16 %v3208, %v3207
      %v3214 = vpack.c.b16 %v3210, %v3209
      %v3220 = vsel %vm558, %v3186, 0
      %v3223 = vsel %vm558, %v3188, 0
      %v3226 = vsel %vm558, %v3190, 0
      %v3229 = vsel %vm558, %v3192, 0
      %v3232 = vsel %vm558, %v3194, 0
      %3234 = vmatprep.subr.bf16.mxu0 0
      %3235 = vmatpush1.bf16.msra.mxu0 %v3211
      %3236 = vmatprep.subr.bf16.mxu0 0
      %3237 = vmatpush1.bf16.msra.mxu0 %v3212
      %3238 = vmatprep.subr.bf16.mxu0 0
      %3239 = vmatpush1.bf16.msra.mxu0 %v3213
      %3240 = vmatprep.subr.bf16.mxu0 0
      %3241 = vmatpush1.bf16.msra.mxu0 %v3214
      %3242 = vmatprep.subr.bf16.mxu0 0
      %3243 = vmatpush1.bf16.msra.mxu0 0
      %3244 = vmatprep.subr.bf16.mxu0 0
      %3245 = vmatpush1.bf16.msra.mxu0 0
      %3246 = vmatprep.subr.bf16.mxu0 0
      %3247 = vmatpush1.bf16.msra.mxu0 0
      %3248 = vmatprep.subr.bf16.mxu0 0
      %3249 = vmatpush1.bf16.msra.mxu0 0
      %3250 = vmatprep.subr.bf16.mxu0 0
      %3251 = vmatpush1.bf16.msra.mxu0 0
      %3252 = vmatprep.subr.bf16.mxu0 0
      %3253 = vmatpush1.bf16.msra.mxu0 0
      %3254 = vmatprep.subr.bf16.mxu0 0
      %3255 = vmatpush1.bf16.msra.mxu0 0
      %3256 = vmatprep.subr.bf16.mxu0 0
      %3257 = vmatpush1.bf16.msra.mxu0 0
      %3258 = vmatprep.subr.bf16.mxu0 0
      %3259 = vmatpush1.bf16.msra.mxu0 0
      %3260 = vmatprep.subr.bf16.mxu0 0
      %3261 = vmatpush1.bf16.msra.mxu0 0
      %3262 = vmatprep.subr.bf16.mxu0 0
      %3263 = vmatpush1.bf16.msra.mxu0 0
      %3264 = vmatprep.subr.bf16.mxu0 0
      %3265 = vmatpush1.bf16.msra.mxu0 0
      %3266 = vmatprep.mubr.bf16.mxu0 0
      %3267 = vmatmul.mubr.bf16.gmra.mrb[0].mxu0 %v3220
      %v3268 = vpop.f32.mrb[0].mxu0
      %v3269 = vadd.f32 0.0, %v3268
      %v3270 = vpop.f32.mrb[0].mxu0
      %v3271 = vpop.f32.mrb[0].mxu0
      %v3272 = vadd.f32 0.0, %v3271
      %v3273 = vpop.f32.mrb[0].mxu0
      %3274 = vmatprep.mubr.bf16.mxu0 0
      %3275 = vmatmul.mubr.bf16.gmra.mrb[0].mxu0 %v3223
      %v3276 = vpop.f32.mrb[0].mxu0
      %v3277 = vadd.f32 0.0, %v3276
      %v3278 = vpop.f32.mrb[0].mxu0
      %v3279 = vpop.f32.mrb[0].mxu0
      %v3280 = vadd.f32 0.0, %v3279
      %v3281 = vpop.f32.mrb[0].mxu0
      %3282 = vmatprep.mubr.bf16.mxu0 0
      %3283 = vmatmul.mubr.bf16.gmra.mrb[0].mxu0 %v3226
      %v3284 = vpop.f32.mrb[0].mxu0
      %v3285 = vadd.f32 0.0, %v3284
      %v3286 = vpop.f32.mrb[0].mxu0
      %v3287 = vpop.f32.mrb[0].mxu0
      %v3288 = vadd.f32 0.0, %v3287
      %v3289 = vpop.f32.mrb[0].mxu0
      %3290 = vmatprep.mubr.bf16.mxu0 0
      %3291 = vmatmul.mubr.bf16.gmra.mrb[0].mxu0 %v3229
      %v3292 = vpop.f32.mrb[0].mxu0
      %v3293 = vadd.f32 0.0, %v3292
      %v3294 = vpop.f32.mrb[0].mxu0
      %v3295 = vpop.f32.mrb[0].mxu0
      %v3296 = vadd.f32 0.0, %v3295
      %v3297 = vpop.f32.mrb[0].mxu0
      %3298 = vmatprep.mubr.bf16.mxu0 0
      %3299 = vmatmul.mubr.bf16.gmra.mrb[0].mxu0 %v3232
      %v3300 = vpop.f32.mrb[0].mxu0
      %v3301 = vadd.f32 0.0, %v3300
      %v3302 = vpop.f32.mrb[0].mxu0
      %v3303 = vpop.f32.mrb[0].mxu0
      %v3304 = vpop.f32.mrb[0].mxu0
      %3305 = vdwg.mxu0
      %v3306 = vadd.f32 %v3159, %v3269
      %v3307 = vadd.f32 %v3160, %v3272
      %v3308 = vadd.f32 %v3161, %v3277
      %v3309 = vadd.f32 %v3162, %v3280
      %v3310 = vadd.f32 %v3163, %v3285
      %v3311 = vadd.f32 %v3164, %v3288
      %v3312 = vadd.f32 %v3165, %v3293
      %v3313 = vadd.f32 %v3166, %v3296
      %v3314 = vadd.f32 %v3167, %v3301
      %v3315 = vld [vmem:[%s918] sm:$0xe0]
      %s3316 = scalar_lea.vmem %s3, 448
      %v3317 = vld [vmem:[%s3316] sm:$0xf]
      %v3318 = vld [vmem:[%s3316 + $0x4] sm:$0xf]
      %v3319 = vld [vmem:[%s3316 + $0x8] sm:$0xf]
      %v3320 = vld [vmem:[%s3316 + $0xc] sm:$0xf]
      %v3321 = vld [vmem:[%s3316 + $0x10] sm:$0xf]
      %v3322 = vld [vmem:[%s3316 + $0x14] sm:$0xf]
      %v3323 = vld [vmem:[%s3316 + $0x18] sm:$0xf]
      %v3324 = vld [vmem:[%s3316 + $0x1c] sm:$0xf]
      %v3331 = vrot.slane %v3315, 5
      %v3332 = vrot.slane %v2653, 5
      %v3333 = vsel %vm3036, %v3331, %v3332
      %v3334 = vrot.slane %v2654, 5
      %v3335 = vsel %vm3036, %v3332, %v3334
      %v3336 = vrot.slane %v2655, 5
      %v3337 = vsel %vm3036, %v3334, %v3336
      %v3338 = vrot.slane %v2656, 5
      %v3339 = vsel %vm3036, %v3336, %v3338
      %v3340 = vrot.slane %v2657, 5
      %v3341 = vsel %vm3036, %v3338, %v3340
      %v3350 = vunpack.c.l.b16 %v3317
      %v3351 = vunpack.c.l.b16 %v3318
      %v3352 = vunpack.c.l.b16 %v3319
      %v3353 = vunpack.c.l.b16 %v3320
      %v3354 = vunpack.c.l.b16 %v3321
      %v3355 = vunpack.c.l.b16 %v3322
      %v3356 = vunpack.c.l.b16 %v3323
      %v3357 = vunpack.c.l.b16 %v3324
      %v3358 = vpack.c.b16 %v3351, %v3350
      %v3359 = vpack.c.b16 %v3353, %v3352
      %v3360 = vpack.c.b16 %v3355, %v3354
      %v3361 = vpack.c.b16 %v3357, %v3356
      %v3367 = vsel %vm558, %v3333, 0
      %v3370 = vsel %vm558, %v3335, 0
      %v3373 = vsel %vm558, %v3337, 0
      %v3376 = vsel %vm558, %v3339, 0
      %v3379 = vsel %vm558, %v3341, 0
      %3381 = vmatprep.subr.bf16.mxu0 0
      %3382 = vmatpush1.bf16.msra.mxu0 %v3358
      %3383 = vmatprep.subr.bf16.mxu0 0
      %3384 = vmatpush1.bf16.msra.mxu0 %v3359
      %3385 = vmatprep.subr.bf16.mxu0 0
      %3386 = vmatpush1.bf16.msra.mxu0 %v3360
      %3387 = vmatprep.subr.bf16.mxu0 0
      %3388 = vmatpush1.bf16.msra.mxu0 %v3361
      %3389 = vmatprep.subr.bf16.mxu0 0
      %3390 = vmatpush1.bf16.msra.mxu0 0
      %3391 = vmatprep.subr.bf16.mxu0 0
      %3392 = vmatpush1.bf16.msra.mxu0 0
      %3393 = vmatprep.subr.bf16.mxu0 0
      %3394 = vmatpush1.bf16.msra.mxu0 0
      %3395 = vmatprep.subr.bf16.mxu0 0
      %3396 = vmatpush1.bf16.msra.mxu0 0
      %3397 = vmatprep.subr.bf16.mxu0 0
      %3398 = vmatpush1.bf16.msra.mxu0 0
      %3399 = vmatprep.subr.bf16.mxu0 0
      %3400 = vmatpush1.bf16.msra.mxu0 0
      %3401 = vmatprep.subr.bf16.mxu0 0
      %3402 = vmatpush1.bf16.msra.mxu0 0
      %3403 = vmatprep.subr.bf16.mxu0 0
      %3404 = vmatpush1.bf16.msra.mxu0 0
      %3405 = vmatprep.subr.bf16.mxu0 0
      %3406 = vmatpush1.bf16.msra.mxu0 0
      %3407 = vmatprep.subr.bf16.mxu0 0
      %3408 = vmatpush1.bf16.msra.mxu0 0
      %3409 = vmatprep.subr.bf16.mxu0 0
      %3410 = vmatpush1.bf16.msra.mxu0 0
      %3411 = vmatprep.subr.bf16.mxu0 0
      %3412 = vmatpush1.bf16.msra.mxu0 0
      %3413 = vmatprep.mubr.bf16.mxu0 0
      %3414 = vmatmul.mubr.bf16.gmra.mrb[0].mxu0 %v3367
      %v3415 = vpop.f32.mrb[0].mxu0
      %v3416 = vadd.f32 0.0, %v3415
      %v3417 = vpop.f32.mrb[0].mxu0
      %v3418 = vpop.f32.mrb[0].mxu0
      %v3419 = vadd.f32 0.0, %v3418
      %v3420 = vpop.f32.mrb[0].mxu0
      %3421 = vmatprep.mubr.bf16.mxu0 0
      %3422 = vmatmul.mubr.bf16.gmra.mrb[0].mxu0 %v3370
      %v3423 = vpop.f32.mrb[0].mxu0
      %v3424 = vadd.f32 0.0, %v3423
      %v3425 = vpop.f32.mrb[0].mxu0
      %v3426 = vpop.f32.mrb[0].mxu0
      %v3427 = vadd.f32 0.0, %v3426
      %v3428 = vpop.f32.mrb[0].mxu0
      %3429 = vmatprep.mubr.bf16.mxu0 0
      %3430 = vmatmul.mubr.bf16.gmra.mrb[0].mxu0 %v3373
      %v3431 = vpop.f32.mrb[0].mxu0
      %v3432 = vadd.f32 0.0, %v3431
      %v3433 = vpop.f32.mrb[0].mxu0
      %v3434 = vpop.f32.mrb[0].mxu0
      %v3435 = vadd.f32 0.0, %v3434
      %v3436 = vpop.f32.mrb[0].mxu0
      %3437 = vmatprep.mubr.bf16.mxu0 0
      %3438 = vmatmul.mubr.bf16.gmra.mrb[0].mxu0 %v3376
      %v3439 = vpop.f32.mrb[0].mxu0
      %v3440 = vadd.f32 0.0, %v3439
      %v3441 = vpop.f32.mrb[0].mxu0
      %v3442 = vpop.f32.mrb[0].mxu0
      %v3443 = vadd.f32 0.0, %v3442
      %v3444 = vpop.f32.mrb[0].mxu0
      %3445 = vmatprep.mubr.bf16.mxu0 0
      %3446 = vmatmul.mubr.bf16.gmra.mrb[0].mxu0 %v3379
      %v3447 = vpop.f32.mrb[0].mxu0
      %v3448 = vadd.f32 0.0, %v3447
      %v3449 = vpop.f32.mrb[0].mxu0
      %v3450 = vpop.f32.mrb[0].mxu0
      %v3451 = vpop.f32.mrb[0].mxu0
      %3452 = vdwg.mxu0
      %v3453 = vadd.f32 %v3306, %v3416
      %v3454 = vadd.f32 %v3307, %v3419
      %v3455 = vadd.f32 %v3308, %v3424
      %v3456 = vadd.f32 %v3309, %v3427
      %v3457 = vadd.f32 %v3310, %v3432
      %v3458 = vadd.f32 %v3311, %v3435
      %v3459 = vadd.f32 %v3312, %v3440
      %v3460 = vadd.f32 %v3313, %v3443
      %v3461 = vadd.f32 %v3314, %v3448
      %v3462 = vld [vmem:[%s1098] sm:$0xe0]
      %s3463 = scalar_lea.vmem %s3, 480
      %v3464 = vld [vmem:[%s3463] sm:$0xf]
      %v3465 = vld [vmem:[%s3463 + $0x4] sm:$0xf]
      %v3466 = vld [vmem:[%s3463 + $0x8] sm:$0xf]
      %v3467 = vld [vmem:[%s3463 + $0xc] sm:$0xf]
      %v3468 = vld [vmem:[%s3463 + $0x10] sm:$0xf]
      %v3469 = vld [vmem:[%s3463 + $0x14] sm:$0xf]
      %v3470 = vld [vmem:[%s3463 + $0x18] sm:$0xf]
      %v3471 = vld [vmem:[%s3463 + $0x1c] sm:$0xf]
      %v3478 = vrot.slane %v3462, 5
      %v3479 = vrot.slane %v2837, 5
      %v3480 = vsel %vm3036, %v3478, %v3479
      %v3481 = vrot.slane %v2838, 5
      %v3482 = vsel %vm3036, %v3479, %v3481
      %v3483 = vrot.slane %v2839, 5
      %v3484 = vsel %vm3036, %v3481, %v3483
      %v3485 = vrot.slane %v2840, 5
      %v3486 = vsel %vm3036, %v3483, %v3485
      %v3487 = vrot.slane %v2841, 5
      %v3488 = vsel %vm3036, %v3485, %v3487
      %v3497 = vunpack.c.l.b16 %v3464
      %v3498 = vunpack.c.l.b16 %v3465
      %v3499 = vunpack.c.l.b16 %v3466
      %v3500 = vunpack.c.l.b16 %v3467
      %v3501 = vunpack.c.l.b16 %v3468
      %v3502 = vunpack.c.l.b16 %v3469
      %v3503 = vunpack.c.l.b16 %v3470
      %v3504 = vunpack.c.l.b16 %v3471
      %v3505 = vpack.c.b16 %v3498, %v3497
      %v3506 = vpack.c.b16 %v3500, %v3499
      %v3507 = vpack.c.b16 %v3502, %v3501
      %v3508 = vpack.c.b16 %v3504, %v3503
      %v3514 = vsel %vm558, %v3480, 0
      %v3517 = vsel %vm558, %v3482, 0
      %v3520 = vsel %vm558, %v3484, 0
      %v3523 = vsel %vm558, %v3486, 0
      %v3526 = vsel %vm558, %v3488, 0
      %3528 = vmatprep.subr.bf16.mxu0 0
      %3529 = vmatpush1.bf16.msra.mxu0 %v3505
      %3530 = vmatprep.subr.bf16.mxu0 0
      %3531 = vmatpush1.bf16.msra.mxu0 %v3506
      %3532 = vmatprep.subr.bf16.mxu0 0
      %3533 = vmatpush1.bf16.msra.mxu0 %v3507
      %3534 = vmatprep.subr.bf16.mxu0 0
      %3535 = vmatpush1.bf16.msra.mxu0 %v3508
      %3536 = vmatprep.subr.bf16.mxu0 0
      %3537 = vmatpush1.bf16.msra.mxu0 0
      %3538 = vmatprep.subr.bf16.mxu0 0
      %3539 = vmatpush1.bf16.msra.mxu0 0
      %3540 = vmatprep.subr.bf16.mxu0 0
      %3541 = vmatpush1.bf16.msra.mxu0 0
      %3542 = vmatprep.subr.bf16.mxu0 0
      %3543 = vmatpush1.bf16.msra.mxu0 0
      %3544 = vmatprep.subr.bf16.mxu0 0
      %3545 = vmatpush1.bf16.msra.mxu0 0
      %3546 = vmatprep.subr.bf16.mxu0 0
      %3547 = vmatpush1.bf16.msra.mxu0 0
      %3548 = vmatprep.subr.bf16.mxu0 0
      %3549 = vmatpush1.bf16.msra.mxu0 0
      %3550 = vmatprep.subr.bf16.mxu0 0
      %3551 = vmatpush1.bf16.msra.mxu0 0
      %3552 = vmatprep.subr.bf16.mxu0 0
      %3553 = vmatpush1.bf16.msra.mxu0 0
      %3554 = vmatprep.subr.bf16.mxu0 0
      %3555 = vmatpush1.bf16.msra.mxu0 0
      %3556 = vmatprep.subr.bf16.mxu0 0
      %3557 = vmatpush1.bf16.msra.mxu0 0
      %3558 = vmatprep.subr.bf16.mxu0 0
      %3559 = vmatpush1.bf16.msra.mxu0 0
      %3560 = vmatprep.mubr.bf16.mxu0 0
      %3561 = vmatmul.mubr.bf16.gmra.mrb[0].mxu0 %v3514
      %v3562 = vpop.f32.mrb[0].mxu0
      %v3563 = vadd.f32 0.0, %v3562
      %v3564 = vpop.f32.mrb[0].mxu0
      %v3565 = vpop.f32.mrb[0].mxu0
      %v3566 = vadd.f32 0.0, %v3565
      %v3567 = vpop.f32.mrb[0].mxu0
      %3568 = vmatprep.mubr.bf16.mxu0 0
      %3569 = vmatmul.mubr.bf16.gmra.mrb[0].mxu0 %v3517
      %v3570 = vpop.f32.mrb[0].mxu0
      %v3571 = vadd.f32 0.0, %v3570
      %v3572 = vpop.f32.mrb[0].mxu0
      %v3573 = vpop.f32.mrb[0].mxu0
      %v3574 = vadd.f32 0.0, %v3573
      %v3575 = vpop.f32.mrb[0].mxu0
      %3576 = vmatprep.mubr.bf16.mxu0 0
      %3577 = vmatmul.mubr.bf16.gmra.mrb[0].mxu0 %v3520
      %v3578 = vpop.f32.mrb[0].mxu0
      %v3579 = vadd.f32 0.0, %v3578
      %v3580 = vpop.f32.mrb[0].mxu0
      %v3581 = vpop.f32.mrb[0].mxu0
      %v3582 = vadd.f32 0.0, %v3581
      %v3583 = vpop.f32.mrb[0].mxu0
      %3584 = vmatprep.mubr.bf16.mxu0 0
      %3585 = vmatmul.mubr.bf16.gmra.mrb[0].mxu0 %v3523
      %v3586 = vpop.f32.mrb[0].mxu0
      %v3587 = vadd.f32 0.0, %v3586
      %v3588 = vpop.f32.mrb[0].mxu0
      %v3589 = vpop.f32.mrb[0].mxu0
      %v3590 = vadd.f32 0.0, %v3589
      %v3591 = vpop.f32.mrb[0].mxu0
      %3592 = vmatprep.mubr.bf16.mxu0 0
      %3593 = vmatmul.mubr.bf16.gmra.mrb[0].mxu0 %v3526
      %v3594 = vpop.f32.mrb[0].mxu0
      %v3595 = vadd.f32 0.0, %v3594
      %v3596 = vpop.f32.mrb[0].mxu0
      %v3597 = vpop.f32.mrb[0].mxu0
      %v3598 = vpop.f32.mrb[0].mxu0
      %3599 = vdwg.mxu0
      %v3600 = vadd.f32 %v3453, %v3563
      %v3601 = vadd.f32 %v3454, %v3566
      %v3602 = vadd.f32 %v3455, %v3571
      %v3603 = vadd.f32 %v3456, %v3574
      %v3604 = vadd.f32 %v3457, %v3579
      %v3605 = vadd.f32 %v3458, %v3582
      %v3606 = vadd.f32 %v3459, %v3587
      %v3607 = vadd.f32 %v3460, %v3590
      %v3608 = vadd.f32 %v3461, %v3595
      %v3609 = vld [vmem:[%s4] sm:$0x1]
      %v3611 = vlaneseq
      %v3612 = vshrl.u32 %v3611, 7
      %v3613 = vsub.s32 0, %v3612
      %v3614 = vrot.slane %v3609, %v3613
      %v3616 = vadd.f32 %v3600, %v3614
      %v3617 = vadd.f32 %v3601, %v3614
      %v3618 = vadd.f32 %v3602, %v3614
      %v3619 = vadd.f32 %v3603, %v3614
      %v3620 = vadd.f32 %v3604, %v3614
      %v3621 = vadd.f32 %v3605, %v3614
      %v3622 = vadd.f32 %v3606, %v3614
      %v3623 = vadd.f32 %v3607, %v3614
      %v3624 = vadd.f32 %v3608, %v3614
      %v3625 = vmax.f32 %v3616, 0.0
      %v3626 = vmax.f32 %v3617, 0.0
      %v3627 = vmax.f32 %v3618, 0.0
      %v3628 = vmax.f32 %v3619, 0.0
      %v3629 = vmax.f32 %v3620, 0.0
      %v3630 = vmax.f32 %v3621, 0.0
      %v3631 = vmax.f32 %v3622, 0.0
      %v3632 = vmax.f32 %v3623, 0.0
      %v3633 = vmax.f32 %v3624, 0.0
      %3635 = vset.pattern.permute.xlu0 0
      %3636 = vperm.xlu0 %3635, %v361
      %v3637 = vpop.permute.xlu0 %3636
      %3640 = vset.pattern.permute.xlu0 0
      %3641 = vperm.xlu0 %3640, %v362
      %v3642 = vpop.permute.xlu0 %3641
      %3645 = vset.pattern.permute.xlu0 0
      %3646 = vperm.xlu0 %3645, %v363
      %v3647 = vpop.permute.xlu0 %3646
      %3650 = vset.pattern.permute.xlu0 0
      %3651 = vperm.xlu0 %3650, %v364
      %v3652 = vpop.permute.xlu0 %3651
      %3655 = vset.pattern.permute.xlu0 0
      %3656 = vperm.xlu0 %3655, %v365
      %v3657 = vpop.permute.xlu0 %3656
      %3660 = vset.pattern.permute.xlu0 0
      %3661 = vperm.xlu0 %3660, %v366
      %v3662 = vpop.permute.xlu0 %3661
      %3665 = vset.pattern.permute.xlu0 0
      %3666 = vperm.xlu0 %3665, %v367
      %v3667 = vpop.permute.xlu0 %3666
      %3670 = vset.pattern.permute.xlu0 0
      %3671 = vperm.xlu0 %3670, %v368
      %v3672 = vpop.permute.xlu0 %3671
      %3675 = vset.pattern.permute.xlu0 0
      %3676 = vperm.xlu0 %3675, %v369
      %v3677 = vpop.permute.xlu0 %3676
      %v3679 = vmul.f32 %v3625, %v3637
      %v3680 = vmul.f32 %v3626, %v3642
      %v3681 = vmul.f32 %v3627, %v3647
      %v3682 = vmul.f32 %v3628, %v3652
      %v3683 = vmul.f32 %v3629, %v3657
      %v3684 = vmul.f32 %v3630, %v3662
      %v3685 = vmul.f32 %v3631, %v3667
      %v3686 = vmul.f32 %v3632, %v3672
      %v3687 = vmul.f32 %v3633, %v3677
      %v3688 = vpack.c.bf16 %v3680, %v3679
      %v3689 = vpack.c.bf16 %v3682, %v3681
      %v3690 = vpack.c.bf16 %v3684, %v3683
      %v3691 = vpack.c.bf16 %v3686, %v3685
      %v3692 = vpack.c.bf16 %v3687, %v3687
      %3693 = vst [vmem:[#allocation3] sm:$0xff] %v3688
      %3694 = vst [vmem:[#allocation3 + $0x8] sm:$0xff] %v3689
      %3695 = vst [vmem:[#allocation3 + $0x10] sm:$0xff] %v3690
      %3696 = vst [vmem:[#allocation3 + $0x18] sm:$0xff] %v3691
      %3697 = vst [vmem:[#allocation3 + $0x20] sm:$0xf] %v3692
      %3698 = vst [vmem:[#allocation3 + $0x20] sm:$0xf0] 0
      %3699 = vst [vmem:[#allocation3 + $0x28] sm:$0xff] 0
      %v3700 = vld [vmem:[#allocation3] sm:$0xff]
      %v3701 = vld [vmem:[#allocation3 + $0x8] sm:$0xff]
      %v3702 = vld [vmem:[#allocation3 + $0x10] sm:$0xff]
      %v3703 = vld [vmem:[#allocation3 + $0x18] sm:$0xff]
      %v3704 = vld [vmem:[#allocation3 + $0x20] sm:$0xf]
      %v3705 = vld [vmem:[%s5] sm:$0xff]
      %v3706 = vld [vmem:[%s5 + $0x8] sm:$0xff]
      %v3707 = vld [vmem:[%s5 + $0x10] sm:$0xff]
      %v3708 = vld [vmem:[%s5 + $0x18] sm:$0xff]
      %v3709 = vld [vmem:[%s5 + $0x20] sm:$0xff]
      %v3710 = vld [vmem:[%s5 + $0x28] sm:$0xff]
      %v3711 = vld [vmem:[%s5 + $0x30] sm:$0xff]
      %v3712 = vld [vmem:[%s5 + $0x38] sm:$0xff]
      %v3713 = vld [vmem:[%s5 + $0x40] sm:$0xff]
      %v3714 = vld [vmem:[%s5 + $0x48] sm:$0xff]
      %v3715 = vld [vmem:[%s5 + $0x50] sm:$0xff]
      %v3716 = vld [vmem:[%s5 + $0x58] sm:$0xff]
      %v3717 = vld [vmem:[%s5 + $0x60] sm:$0xff]
      %v3718 = vld [vmem:[%s5 + $0x68] sm:$0xff]
      %v3719 = vld [vmem:[%s5 + $0x70] sm:$0xff]
      %v3720 = vld [vmem:[%s5 + $0x78] sm:$0xff]
      %v3721 = vld [vmem:[#allocation3 + $0x20] sm:$0x1f]
      %s3722 = scalar_lea.vmem %s5, 128
      %v3723 = vld [vmem:[%s3722] sm:$0xff]
      %v3724 = vld [vmem:[%s3722 + $0x8] sm:$0xff]
      %v3725 = vld [vmem:[%s3722 + $0x10] sm:$0xff]
      %v3726 = vld [vmem:[%s3722 + $0x18] sm:$0xff]
      %v3727 = vld [vmem:[%s3722 + $0x20] sm:$0xff]
      %v3728 = vld [vmem:[%s3722 + $0x28] sm:$0xff]
      %v3729 = vld [vmem:[%s3722 + $0x30] sm:$0xff]
      %v3730 = vld [vmem:[%s3722 + $0x38] sm:$0xff]
      %v3731 = vld [vmem:[%s3722 + $0x40] sm:$0xff]
      %v3732 = vld [vmem:[%s3722 + $0x48] sm:$0xff]
      %v3733 = vld [vmem:[%s3722 + $0x50] sm:$0xff]
      %v3734 = vld [vmem:[%s3722 + $0x58] sm:$0xff]
      %v3735 = vld [vmem:[%s3722 + $0x60] sm:$0xff]
      %v3736 = vld [vmem:[%s3722 + $0x68] sm:$0xff]
      %v3737 = vld [vmem:[%s3722 + $0x70] sm:$0xff]
      %v3738 = vld [vmem:[%s3722 + $0x78] sm:$0xff]
      %v3740 = vshrl.u32 %v3700, 16
      %v3742 = vshll.u32 %v3700, 16
      %v3744 = vrot.slane %v3742, 1
      %v3745 = vor.u32 %v3740, %v3744
      %v3747 = vshll.u32 %v3701, 16
      %v3749 = vrot.slane %v3747, 1
      %v3750 = vsel %vm1632, %v3745, %v3749
      %v3751 = vshrl.u32 %v3701, 16
      %v3753 = vor.u32 %v3751, %v3749
      %v3755 = vshll.u32 %v3702, 16
      %v3757 = vrot.slane %v3755, 1
      %v3758 = vsel %vm1632, %v3753, %v3757
      %v3759 = vshrl.u32 %v3702, 16
      %v3761 = vor.u32 %v3759, %v3757
      %v3763 = vshll.u32 %v3703, 16
      %v3765 = vrot.slane %v3763, 1
      %v3766 = vsel %vm1632, %v3761, %v3765
      %v3767 = vshrl.u32 %v3703, 16
      %v3769 = vor.u32 %v3767, %v3765
      %v3771 = vshll.u32 %v3721, 16
      %v3773 = vrot.slane %v3771, 1
      %v3774 = vsel %vm1632, %v3769, %v3773
      %v3775 = vshrl.u32 %v3721, 16
      %v3777 = vor.u32 %v3775, %v3773
      %v3799 = vunpack.c.l.b16 %v3723
      %v3800 = vunpack.c.h.b16 %v3723
      %v3801 = vunpack.c.l.b16 %v3724
      %v3802 = vunpack.c.h.b16 %v3724
      %v3803 = vunpack.c.l.b16 %v3725
      %v3804 = vunpack.c.h.b16 %v3725
      %v3805 = vunpack.c.l.b16 %v3726
      %v3806 = vunpack.c.h.b16 %v3726
      %v3807 = vunpack.c.l.b16 %v3727
      %v3808 = vunpack.c.h.b16 %v3727
      %v3809 = vunpack.c.l.b16 %v3728
      %v3810 = vunpack.c.h.b16 %v3728
      %v3811 = vunpack.c.l.b16 %v3729
      %v3812 = vunpack.c.h.b16 %v3729
      %v3813 = vunpack.c.l.b16 %v3730
      %v3814 = vunpack.c.h.b16 %v3730
      %v3815 = vunpack.c.l.b16 %v3731
      %v3816 = vunpack.c.h.b16 %v3731
      %v3817 = vunpack.c.l.b16 %v3732
      %v3818 = vunpack.c.h.b16 %v3732
      %v3819 = vunpack.c.l.b16 %v3733
      %v3820 = vunpack.c.h.b16 %v3733
      %v3821 = vunpack.c.l.b16 %v3734
      %v3822 = vunpack.c.h.b16 %v3734
      %v3823 = vunpack.c.l.b16 %v3735
      %v3824 = vunpack.c.h.b16 %v3735
      %v3825 = vunpack.c.l.b16 %v3736
      %v3826 = vunpack.c.h.b16 %v3736
      %v3827 = vunpack.c.l.b16 %v3737
      %v3828 = vunpack.c.h.b16 %v3737
      %v3829 = vunpack.c.l.b16 %v3738
      %v3830 = vunpack.c.h.b16 %v3738
      %v3831 = vpack.c.b16 %v3801, %v3799
      %v3832 = vpack.c.b16 %v3802, %v3800
      %v3833 = vpack.c.b16 %v3805, %v3803
      %v3834 = vpack.c.b16 %v3806, %v3804
      %v3835 = vpack.c.b16 %v3809, %v3807
      %v3836 = vpack.c.b16 %v3810, %v3808
      %v3837 = vpack.c.b16 %v3813, %v3811
      %v3838 = vpack.c.b16 %v3814, %v3812
      %v3839 = vpack.c.b16 %v3817, %v3815
      %v3840 = vpack.c.b16 %v3818, %v3816
      %v3841 = vpack.c.b16 %v3821, %v3819
      %v3842 = vpack.c.b16 %v3822, %v3820
      %v3843 = vpack.c.b16 %v3825, %v3823
      %v3844 = vpack.c.b16 %v3826, %v3824
      %v3845 = vpack.c.b16 %v3829, %v3827
      %v3846 = vpack.c.b16 %v3830, %v3828
      %3863 = vmatprep.subr.bf16.mxu0 %v3832
      %3864 = vmatpush1.bf16.msra.mxu0 %v3831
      %3865 = vmatprep.subr.bf16.mxu0 %v3834
      %3866 = vmatpush1.bf16.msra.mxu0 %v3833
      %3867 = vmatprep.subr.bf16.mxu0 %v3836
      %3868 = vmatpush1.bf16.msra.mxu0 %v3835
      %3869 = vmatprep.subr.bf16.mxu0 %v3838
      %3870 = vmatpush1.bf16.msra.mxu0 %v3837
      %3871 = vmatprep.subr.bf16.mxu0 %v3840
      %3872 = vmatpush1.bf16.msra.mxu0 %v3839
      %3873 = vmatprep.subr.bf16.mxu0 %v3842
      %3874 = vmatpush1.bf16.msra.mxu0 %v3841
      %3875 = vmatprep.subr.bf16.mxu0 %v3844
      %3876 = vmatpush1.bf16.msra.mxu0 %v3843
      %3877 = vmatprep.subr.bf16.mxu0 %v3846
      %3878 = vmatpush1.bf16.msra.mxu0 %v3845
      %3879 = vmatprep.subr.bf16.mxu0 0
      %3880 = vmatpush1.bf16.msra.mxu0 0
      %3881 = vmatprep.subr.bf16.mxu0 0
      %3882 = vmatpush1.bf16.msra.mxu0 0
      %3883 = vmatprep.subr.bf16.mxu0 0
      %3884 = vmatpush1.bf16.msra.mxu0 0
      %3885 = vmatprep.subr.bf16.mxu0 0
      %3886 = vmatpush1.bf16.msra.mxu0 0
      %3887 = vmatprep.subr.bf16.mxu0 0
      %3888 = vmatpush1.bf16.msra.mxu0 0
      %3889 = vmatprep.subr.bf16.mxu0 0
      %3890 = vmatpush1.bf16.msra.mxu0 0
      %3891 = vmatprep.subr.bf16.mxu0 0
      %3892 = vmatpush1.bf16.msra.mxu0 0
      %3893 = vmatprep.subr.bf16.mxu0 0
      %3894 = vmatpush1.bf16.msra.mxu0 0
      %3895 = vmatprep.mubr.bf16.mxu0 0
      %3896 = vmatmul.mubr.bf16.gmra.mrb[0].mxu0 %v3750
      %v3897 = vpop.f32.mrb[0].mxu0
      %v3898 = vadd.f32 0.0, %v3897
      %v3899 = vpop.f32.mrb[0].mxu0
      %v3900 = vadd.f32 0.0, %v3899
      %v3901 = vpop.f32.mrb[0].mxu0
      %v3902 = vadd.f32 0.0, %v3901
      %v3903 = vpop.f32.mrb[0].mxu0
      %v3904 = vadd.f32 0.0, %v3903
      %3905 = vmatprep.mubr.bf16.mxu0 0
      %3906 = vmatmul.mubr.bf16.gmra.mrb[0].mxu0 %v3758
      %v3907 = vpop.f32.mrb[0].mxu0
      %v3908 = vadd.f32 0.0, %v3907
      %v3909 = vpop.f32.mrb[0].mxu0
      %v3910 = vadd.f32 0.0, %v3909
      %v3911 = vpop.f32.mrb[0].mxu0
      %v3912 = vadd.f32 0.0, %v3911
      %v3913 = vpop.f32.mrb[0].mxu0
      %v3914 = vadd.f32 0.0, %v3913
      %3915 = vmatprep.mubr.bf16.mxu0 0
      %3916 = vmatmul.mubr.bf16.gmra.mrb[0].mxu0 %v3766
      %v3917 = vpop.f32.mrb[0].mxu0
      %v3918 = vadd.f32 0.0, %v3917
      %v3919 = vpop.f32.mrb[0].mxu0
      %v3920 = vadd.f32 0.0, %v3919
      %v3921 = vpop.f32.mrb[0].mxu0
      %v3922 = vadd.f32 0.0, %v3921
      %v3923 = vpop.f32.mrb[0].mxu0
      %v3924 = vadd.f32 0.0, %v3923
      %3925 = vmatprep.mubr.bf16.mxu0 0
      %3926 = vmatmul.mubr.bf16.gmra.mrb[0].mxu0 %v3774
      %v3927 = vpop.f32.mrb[0].mxu0
      %v3928 = vadd.f32 0.0, %v3927
      %v3929 = vpop.f32.mrb[0].mxu0
      %v3930 = vadd.f32 0.0, %v3929
      %v3931 = vpop.f32.mrb[0].mxu0
      %v3932 = vadd.f32 0.0, %v3931
      %v3933 = vpop.f32.mrb[0].mxu0
      %v3934 = vadd.f32 0.0, %v3933
      %3935 = vmatprep.mubr.bf16.mxu0 0
      %3936 = vmatmul.mubr.bf16.gmra.mrb[0].mxu0 %v3777
      %v3937 = vpop.f32.mrb[0].mxu0
      %v3938 = vadd.f32 0.0, %v3937
      %v3939 = vpop.f32.mrb[0].mxu0
      %v3940 = vadd.f32 0.0, %v3939
      %v3941 = vpop.f32.mrb[0].mxu0
      %v3942 = vpop.f32.mrb[0].mxu0
      %3943 = vdwg.mxu0
      %v3960 = vunpack.c.l.b16 %v3705
      %v3961 = vunpack.c.h.b16 %v3705
      %v3962 = vunpack.c.l.b16 %v3706
      %v3963 = vunpack.c.h.b16 %v3706
      %v3964 = vunpack.c.l.b16 %v3707
      %v3965 = vunpack.c.h.b16 %v3707
      %v3966 = vunpack.c.l.b16 %v3708
      %v3967 = vunpack.c.h.b16 %v3708
      %v3968 = vunpack.c.l.b16 %v3709
      %v3969 = vunpack.c.h.b16 %v3709
      %v3970 = vunpack.c.l.b16 %v3710
      %v3971 = vunpack.c.h.b16 %v3710
      %v3972 = vunpack.c.l.b16 %v3711
      %v3973 = vunpack.c.h.b16 %v3711
      %v3974 = vunpack.c.l.b16 %v3712
      %v3975 = vunpack.c.h.b16 %v3712
      %v3976 = vunpack.c.l.b16 %v3713
      %v3977 = vunpack.c.h.b16 %v3713
      %v3978 = vunpack.c.l.b16 %v3714
      %v3979 = vunpack.c.h.b16 %v3714
      %v3980 = vunpack.c.l.b16 %v3715
      %v3981 = vunpack.c.h.b16 %v3715
      %v3982 = vunpack.c.l.b16 %v3716
      %v3983 = vunpack.c.h.b16 %v3716
      %v3984 = vunpack.c.l.b16 %v3717
      %v3985 = vunpack.c.h.b16 %v3717
      %v3986 = vunpack.c.l.b16 %v3718
      %v3987 = vunpack.c.h.b16 %v3718
      %v3988 = vunpack.c.l.b16 %v3719
      %v3989 = vunpack.c.h.b16 %v3719
      %v3990 = vunpack.c.l.b16 %v3720
      %v3991 = vunpack.c.h.b16 %v3720
      %v3992 = vpack.c.b16 %v3962, %v3960
      %v3993 = vpack.c.b16 %v3963, %v3961
      %v3994 = vpack.c.b16 %v3966, %v3964
      %v3995 = vpack.c.b16 %v3967, %v3965
      %v3996 = vpack.c.b16 %v3970, %v3968
      %v3997 = vpack.c.b16 %v3971, %v3969
      %v3998 = vpack.c.b16 %v3974, %v3972
      %v3999 = vpack.c.b16 %v3975, %v3973
      %v4000 = vpack.c.b16 %v3978, %v3976
      %v4001 = vpack.c.b16 %v3979, %v3977
      %v4002 = vpack.c.b16 %v3982, %v3980
      %v4003 = vpack.c.b16 %v3983, %v3981
      %v4004 = vpack.c.b16 %v3986, %v3984
      %v4005 = vpack.c.b16 %v3987, %v3985
      %v4006 = vpack.c.b16 %v3990, %v3988
      %v4007 = vpack.c.b16 %v3991, %v3989
      %4024 = vmatprep.subr.bf16.mxu0 %v3993
      %4025 = vmatpush1.bf16.msra.mxu0 %v3992
      %4026 = vmatprep.subr.bf16.mxu0 %v3995
      %4027 = vmatpush1.bf16.msra.mxu0 %v3994
      %4028 = vmatprep.subr.bf16.mxu0 %v3997
      %4029 = vmatpush1.bf16.msra.mxu0 %v3996
      %4030 = vmatprep.subr.bf16.mxu0 %v3999
      %4031 = vmatpush1.bf16.msra.mxu0 %v3998
      %4032 = vmatprep.subr.bf16.mxu0 %v4001
      %4033 = vmatpush1.bf16.msra.mxu0 %v4000
      %4034 = vmatprep.subr.bf16.mxu0 %v4003
      %4035 = vmatpush1.bf16.msra.mxu0 %v4002
      %4036 = vmatprep.subr.bf16.mxu0 %v4005
      %4037 = vmatpush1.bf16.msra.mxu0 %v4004
      %4038 = vmatprep.subr.bf16.mxu0 %v4007
      %4039 = vmatpush1.bf16.msra.mxu0 %v4006
      %4040 = vmatprep.subr.bf16.mxu0 0
      %4041 = vmatpush1.bf16.msra.mxu0 0
      %4042 = vmatprep.subr.bf16.mxu0 0
      %4043 = vmatpush1.bf16.msra.mxu0 0
      %4044 = vmatprep.subr.bf16.mxu0 0
      %4045 = vmatpush1.bf16.msra.mxu0 0
      %4046 = vmatprep.subr.bf16.mxu0 0
      %4047 = vmatpush1.bf16.msra.mxu0 0
      %4048 = vmatprep.subr.bf16.mxu0 0
      %4049 = vmatpush1.bf16.msra.mxu0 0
      %4050 = vmatprep.subr.bf16.mxu0 0
      %4051 = vmatpush1.bf16.msra.mxu0 0
      %4052 = vmatprep.subr.bf16.mxu0 0
      %4053 = vmatpush1.bf16.msra.mxu0 0
      %4054 = vmatprep.subr.bf16.mxu0 0
      %4055 = vmatpush1.bf16.msra.mxu0 0
      %4056 = vmatprep.mubr.bf16.mxu0 0
      %4057 = vmatmul.mubr.bf16.gmra.mrb[0].mxu0 %v3700
      %v4058 = vpop.f32.mrb[0].mxu0
      %v4059 = vadd.f32 %v3898, %v4058
      %v4060 = vpop.f32.mrb[0].mxu0
      %v4061 = vadd.f32 %v3900, %v4060
      %v4062 = vpop.f32.mrb[0].mxu0
      %v4063 = vadd.f32 %v3902, %v4062
      %v4064 = vpop.f32.mrb[0].mxu0
      %v4065 = vadd.f32 %v3904, %v4064
      %4066 = vmatprep.mubr.bf16.mxu0 0
      %4067 = vmatmul.mubr.bf16.gmra.mrb[0].mxu0 %v3701
      %v4068 = vpop.f32.mrb[0].mxu0
      %v4069 = vadd.f32 %v3908, %v4068
      %v4070 = vpop.f32.mrb[0].mxu0
      %v4071 = vadd.f32 %v3910, %v4070
      %v4072 = vpop.f32.mrb[0].mxu0
      %v4073 = vadd.f32 %v3912, %v4072
      %v4074 = vpop.f32.mrb[0].mxu0
      %v4075 = vadd.f32 %v3914, %v4074
      %4076 = vmatprep.mubr.bf16.mxu0 0
      %4077 = vmatmul.mubr.bf16.gmra.mrb[0].mxu0 %v3702
      %v4078 = vpop.f32.mrb[0].mxu0
      %v4079 = vadd.f32 %v3918, %v4078
      %v4080 = vpop.f32.mrb[0].mxu0
      %v4081 = vadd.f32 %v3920, %v4080
      %v4082 = vpop.f32.mrb[0].mxu0
      %v4083 = vadd.f32 %v3922, %v4082
      %v4084 = vpop.f32.mrb[0].mxu0
      %v4085 = vadd.f32 %v3924, %v4084
      %4086 = vmatprep.mubr.bf16.mxu0 0
      %4087 = vmatmul.mubr.bf16.gmra.mrb[0].mxu0 %v3703
      %v4088 = vpop.f32.mrb[0].mxu0
      %v4089 = vadd.f32 %v3928, %v4088
      %v4090 = vpop.f32.mrb[0].mxu0
      %v4091 = vadd.f32 %v3930, %v4090
      %v4092 = vpop.f32.mrb[0].mxu0
      %v4093 = vadd.f32 %v3932, %v4092
      %v4094 = vpop.f32.mrb[0].mxu0
      %v4095 = vadd.f32 %v3934, %v4094
      %4096 = vmatprep.mubr.bf16.mxu0 0
      %4097 = vmatmul.mubr.bf16.gmra.mrb[0].mxu0 %v3704
      %v4098 = vpop.f32.mrb[0].mxu0
      %v4099 = vadd.f32 %v3938, %v4098
      %v4100 = vpop.f32.mrb[0].mxu0
      %v4101 = vadd.f32 %v3940, %v4100
      %v4102 = vpop.f32.mrb[0].mxu0
      %v4103 = vpop.f32.mrb[0].mxu0
      %4104 = vdwg.mxu0
      %v4105 = vld [vmem:[#allocation3] sm:$0xf0]
      %v4106 = vld [vmem:[#allocation3 + $0x8] sm:$0xff]
      %v4107 = vld [vmem:[#allocation3 + $0x10] sm:$0xff]
      %v4108 = vld [vmem:[#allocation3 + $0x18] sm:$0xff]
      %v4109 = vld [vmem:[#allocation3 + $0x20] sm:$0xff]
      %v4110 = vld [vmem:[#allocation3 + $0x28] sm:$0x1]
      %s4111 = scalar_lea.vmem %s5, 256
      %v4112 = vld [vmem:[%s4111] sm:$0xff]
      %v4113 = vld [vmem:[%s4111 + $0x8] sm:$0xff]
      %v4114 = vld [vmem:[%s4111 + $0x10] sm:$0xff]
      %v4115 = vld [vmem:[%s4111 + $0x18] sm:$0xff]
      %v4116 = vld [vmem:[%s4111 + $0x20] sm:$0xff]
      %v4117 = vld [vmem:[%s4111 + $0x28] sm:$0xff]
      %v4118 = vld [vmem:[%s4111 + $0x30] sm:$0xff]
      %v4119 = vld [vmem:[%s4111 + $0x38] sm:$0xff]
      %v4120 = vld [vmem:[%s4111 + $0x40] sm:$0xff]
      %v4121 = vld [vmem:[%s4111 + $0x48] sm:$0xff]
      %v4122 = vld [vmem:[%s4111 + $0x50] sm:$0xff]
      %v4123 = vld [vmem:[%s4111 + $0x58] sm:$0xff]
      %v4124 = vld [vmem:[%s4111 + $0x60] sm:$0xff]
      %v4125 = vld [vmem:[%s4111 + $0x68] sm:$0xff]
      %v4126 = vld [vmem:[%s4111 + $0x70] sm:$0xff]
      %v4127 = vld [vmem:[%s4111 + $0x78] sm:$0xff]
      %v4129 = vshrl.u32 %v4105, 16
      %v4131 = vrot.slane %v4129, 4
      %v4132 = vshll.u32 %v4105, 16
      %v4134 = vrot.slane %v4132, 5
      %v4135 = vor.u32 %v4131, %v4134
      %v4137 = vshrl.u32 %v4106, 16
      %v4139 = vrot.slane %v4137, 4
      %v4140 = vshll.u32 %v4106, 16
      %v4142 = vrot.slane %v4140, 5
      %v4143 = vor.u32 %v4139, %v4142
      %v4144 = vsel %vm2298, %v4135, %v4143
      %v4146 = vshrl.u32 %v4107, 16
      %v4148 = vrot.slane %v4146, 4
      %v4149 = vshll.u32 %v4107, 16
      %v4151 = vrot.slane %v4149, 5
      %v4152 = vor.u32 %v4148, %v4151
      %v4153 = vsel %vm2298, %v4143, %v4152
      %v4155 = vshrl.u32 %v4108, 16
      %v4157 = vrot.slane %v4155, 4
      %v4158 = vshll.u32 %v4108, 16
      %v4160 = vrot.slane %v4158, 5
      %v4161 = vor.u32 %v4157, %v4160
      %v4162 = vsel %vm2298, %v4152, %v4161
      %v4164 = vshrl.u32 %v4109, 16
      %v4166 = vrot.slane %v4164, 4
      %v4167 = vshll.u32 %v4109, 16
      %v4169 = vrot.slane %v4167, 5
      %v4170 = vor.u32 %v4166, %v4169
      %v4171 = vsel %vm2298, %v4161, %v4170
      %v4173 = vshll.u32 %v4110, 16
      %v4175 = vrot.slane %v4173, 5
      %v4176 = vsel %vm2298, %v4170, %v4175
      %v4198 = vunpack.c.l.b16 %v4112
      %v4199 = vunpack.c.h.b16 %v4112
      %v4200 = vunpack.c.l.b16 %v4113
      %v4201 = vunpack.c.h.b16 %v4113
      %v4202 = vunpack.c.l.b16 %v4114
      %v4203 = vunpack.c.h.b16 %v4114
      %v4204 = vunpack.c.l.b16 %v4115
      %v4205 = vunpack.c.h.b16 %v4115
      %v4206 = vunpack.c.l.b16 %v4116
      %v4207 = vunpack.c.h.b16 %v4116
      %v4208 = vunpack.c.l.b16 %v4117
      %v4209 = vunpack.c.h.b16 %v4117
      %v4210 = vunpack.c.l.b16 %v4118
      %v4211 = vunpack.c.h.b16 %v4118
      %v4212 = vunpack.c.l.b16 %v4119
      %v4213 = vunpack.c.h.b16 %v4119
      %v4214 = vunpack.c.l.b16 %v4120
      %v4215 = vunpack.c.h.b16 %v4120
      %v4216 = vunpack.c.l.b16 %v4121
      %v4217 = vunpack.c.h.b16 %v4121
      %v4218 = vunpack.c.l.b16 %v4122
      %v4219 = vunpack.c.h.b16 %v4122
      %v4220 = vunpack.c.l.b16 %v4123
      %v4221 = vunpack.c.h.b16 %v4123
      %v4222 = vunpack.c.l.b16 %v4124
      %v4223 = vunpack.c.h.b16 %v4124
      %v4224 = vunpack.c.l.b16 %v4125
      %v4225 = vunpack.c.h.b16 %v4125
      %v4226 = vunpack.c.l.b16 %v4126
      %v4227 = vunpack.c.h.b16 %v4126
      %v4228 = vunpack.c.l.b16 %v4127
      %v4229 = vunpack.c.h.b16 %v4127
      %v4230 = vpack.c.b16 %v4200, %v4198
      %v4231 = vpack.c.b16 %v4201, %v4199
      %v4232 = vpack.c.b16 %v4204, %v4202
      %v4233 = vpack.c.b16 %v4205, %v4203
      %v4234 = vpack.c.b16 %v4208, %v4206
      %v4235 = vpack.c.b16 %v4209, %v4207
      %v4236 = vpack.c.b16 %v4212, %v4210
      %v4237 = vpack.c.b16 %v4213, %v4211
      %v4238 = vpack.c.b16 %v4216, %v4214
      %v4239 = vpack.c.b16 %v4217, %v4215
      %v4240 = vpack.c.b16 %v4220, %v4218
      %v4241 = vpack.c.b16 %v4221, %v4219
      %v4242 = vpack.c.b16 %v4224, %v4222
      %v4243 = vpack.c.b16 %v4225, %v4223
      %v4244 = vpack.c.b16 %v4228, %v4226
      %v4245 = vpack.c.b16 %v4229, %v4227
      %4262 = vmatprep.subr.bf16.mxu0 %v4231
      %4263 = vmatpush1.bf16.msra.mxu0 %v4230
      %4264 = vmatprep.subr.bf16.mxu0 %v4233
      %4265 = vmatpush1.bf16.msra.mxu0 %v4232
      %4266 = vmatprep.subr.bf16.mxu0 %v4235
      %4267 = vmatpush1.bf16.msra.mxu0 %v4234
      %4268 = vmatprep.subr.bf16.mxu0 %v4237
      %4269 = vmatpush1.bf16.msra.mxu0 %v4236
      %4270 = vmatprep.subr.bf16.mxu0 %v4239
      %4271 = vmatpush1.bf16.msra.mxu0 %v4238
      %4272 = vmatprep.subr.bf16.mxu0 %v4241
      %4273 = vmatpush1.bf16.msra.mxu0 %v4240
      %4274 = vmatprep.subr.bf16.mxu0 %v4243
      %4275 = vmatpush1.bf16.msra.mxu0 %v4242
      %4276 = vmatprep.subr.bf16.mxu0 %v4245
      %4277 = vmatpush1.bf16.msra.mxu0 %v4244
      %4278 = vmatprep.subr.bf16.mxu0 0
      %4279 = vmatpush1.bf16.msra.mxu0 0
      %4280 = vmatprep.subr.bf16.mxu0 0
      %4281 = vmatpush1.bf16.msra.mxu0 0
      %4282 = vmatprep.subr.bf16.mxu0 0
      %4283 = vmatpush1.bf16.msra.mxu0 0
      %4284 = vmatprep.subr.bf16.mxu0 0
      %4285 = vmatpush1.bf16.msra.mxu0 0
      %4286 = vmatprep.subr.bf16.mxu0 0
      %4287 = vmatpush1.bf16.msra.mxu0 0
      %4288 = vmatprep.subr.bf16.mxu0 0
      %4289 = vmatpush1.bf16.msra.mxu0 0
      %4290 = vmatprep.subr.bf16.mxu0 0
      %4291 = vmatpush1.bf16.msra.mxu0 0
      %4292 = vmatprep.subr.bf16.mxu0 0
      %4293 = vmatpush1.bf16.msra.mxu0 0
      %4294 = vmatprep.mubr.bf16.mxu0 0
      %4295 = vmatmul.mubr.bf16.gmra.mrb[0].mxu0 %v4144
      %v4296 = vpop.f32.mrb[0].mxu0
      %v4297 = vadd.f32 0.0, %v4296
      %v4298 = vpop.f32.mrb[0].mxu0
      %v4299 = vadd.f32 0.0, %v4298
      %v4300 = vpop.f32.mrb[0].mxu0
      %v4301 = vadd.f32 0.0, %v4300
      %v4302 = vpop.f32.mrb[0].mxu0
      %v4303 = vadd.f32 0.0, %v4302
      %4304 = vmatprep.mubr.bf16.mxu0 0
      %4305 = vmatmul.mubr.bf16.gmra.mrb[0].mxu0 %v4153
      %v4306 = vpop.f32.mrb[0].mxu0
      %v4307 = vadd.f32 0.0, %v4306
      %v4308 = vpop.f32.mrb[0].mxu0
      %v4309 = vadd.f32 0.0, %v4308
      %v4310 = vpop.f32.mrb[0].mxu0
      %v4311 = vadd.f32 0.0, %v4310
      %v4312 = vpop.f32.mrb[0].mxu0
      %v4313 = vadd.f32 0.0, %v4312
      %4314 = vmatprep.mubr.bf16.mxu0 0
      %4315 = vmatmul.mubr.bf16.gmra.mrb[0].mxu0 %v4162
      %v4316 = vpop.f32.mrb[0].mxu0
      %v4317 = vadd.f32 0.0, %v4316
      %v4318 = vpop.f32.mrb[0].mxu0
      %v4319 = vadd.f32 0.0, %v4318
      %v4320 = vpop.f32.mrb[0].mxu0
      %v4321 = vadd.f32 0.0, %v4320
      %v4322 = vpop.f32.mrb[0].mxu0
      %v4323 = vadd.f32 0.0, %v4322
      %4324 = vmatprep.mubr.bf16.mxu0 0
      %4325 = vmatmul.mubr.bf16.gmra.mrb[0].mxu0 %v4171
      %v4326 = vpop.f32.mrb[0].mxu0
      %v4327 = vadd.f32 0.0, %v4326
      %v4328 = vpop.f32.mrb[0].mxu0
      %v4329 = vadd.f32 0.0, %v4328
      %v4330 = vpop.f32.mrb[0].mxu0
      %v4331 = vadd.f32 0.0, %v4330
      %v4332 = vpop.f32.mrb[0].mxu0
      %v4333 = vadd.f32 0.0, %v4332
      %4334 = vmatprep.mubr.bf16.mxu0 0
      %4335 = vmatmul.mubr.bf16.gmra.mrb[0].mxu0 %v4176
      %v4336 = vpop.f32.mrb[0].mxu0
      %v4337 = vadd.f32 0.0, %v4336
      %v4338 = vpop.f32.mrb[0].mxu0
      %v4339 = vadd.f32 0.0, %v4338
      %v4340 = vpop.f32.mrb[0].mxu0
      %v4341 = vpop.f32.mrb[0].mxu0
      %4342 = vdwg.mxu0
      %v4343 = vadd.f32 %v4059, %v4297
      %v4344 = vadd.f32 %v4061, %v4299
      %v4345 = vadd.f32 %v4063, %v4301
      %v4346 = vadd.f32 %v4065, %v4303
      %v4347 = vadd.f32 %v4069, %v4307
      %v4348 = vadd.f32 %v4071, %v4309
      %v4349 = vadd.f32 %v4073, %v4311
      %v4350 = vadd.f32 %v4075, %v4313
      %v4351 = vadd.f32 %v4079, %v4317
      %v4352 = vadd.f32 %v4081, %v4319
      %v4353 = vadd.f32 %v4083, %v4321
      %v4354 = vadd.f32 %v4085, %v4323
      %v4355 = vadd.f32 %v4089, %v4327
      %v4356 = vadd.f32 %v4091, %v4329
      %v4357 = vadd.f32 %v4093, %v4331
      %v4358 = vadd.f32 %v4095, %v4333
      %v4359 = vadd.f32 %v4099, %v4337
      %v4360 = vadd.f32 %v4101, %v4339
      %v4361 = vld [vmem:[#allocation3] sm:$0xe0]
      %s4362 = scalar_lea.vmem %s5, 384
      %v4363 = vld [vmem:[%s4362] sm:$0xff]
      %v4364 = vld [vmem:[%s4362 + $0x8] sm:$0xff]
      %v4365 = vld [vmem:[%s4362 + $0x10] sm:$0xff]
      %v4366 = vld [vmem:[%s4362 + $0x18] sm:$0xff]
      %v4367 = vld [vmem:[%s4362 + $0x20] sm:$0xff]
      %v4368 = vld [vmem:[%s4362 + $0x28] sm:$0xff]
      %v4369 = vld [vmem:[%s4362 + $0x30] sm:$0xff]
      %v4370 = vld [vmem:[%s4362 + $0x38] sm:$0xff]
      %v4371 = vld [vmem:[%s4362 + $0x40] sm:$0xff]
      %v4372 = vld [vmem:[%s4362 + $0x48] sm:$0xff]
      %v4373 = vld [vmem:[%s4362 + $0x50] sm:$0xff]
      %v4374 = vld [vmem:[%s4362 + $0x58] sm:$0xff]
      %v4375 = vld [vmem:[%s4362 + $0x60] sm:$0xff]
      %v4376 = vld [vmem:[%s4362 + $0x68] sm:$0xff]
      %v4377 = vld [vmem:[%s4362 + $0x70] sm:$0xff]
      %v4378 = vld [vmem:[%s4362 + $0x78] sm:$0xff]
      %v4385 = vrot.slane %v4361, 5
      %v4386 = vrot.slane %v4106, 5
      %v4387 = vsel %vm3036, %v4385, %v4386
      %v4388 = vrot.slane %v4107, 5
      %v4389 = vsel %vm3036, %v4386, %v4388
      %v4390 = vrot.slane %v4108, 5
      %v4391 = vsel %vm3036, %v4388, %v4390
      %v4392 = vrot.slane %v4109, 5
      %v4393 = vsel %vm3036, %v4390, %v4392
      %v4394 = vrot.slane %v4110, 5
      %v4395 = vsel %vm3036, %v4392, %v4394
      %v4417 = vunpack.c.l.b16 %v4363
      %v4418 = vunpack.c.h.b16 %v4363
      %v4419 = vunpack.c.l.b16 %v4364
      %v4420 = vunpack.c.h.b16 %v4364
      %v4421 = vunpack.c.l.b16 %v4365
      %v4422 = vunpack.c.h.b16 %v4365
      %v4423 = vunpack.c.l.b16 %v4366
      %v4424 = vunpack.c.h.b16 %v4366
      %v4425 = vunpack.c.l.b16 %v4367
      %v4426 = vunpack.c.h.b16 %v4367
      %v4427 = vunpack.c.l.b16 %v4368
      %v4428 = vunpack.c.h.b16 %v4368
      %v4429 = vunpack.c.l.b16 %v4369
      %v4430 = vunpack.c.h.b16 %v4369
      %v4431 = vunpack.c.l.b16 %v4370
      %v4432 = vunpack.c.h.b16 %v4370
      %v4433 = vunpack.c.l.b16 %v4371
      %v4434 = vunpack.c.h.b16 %v4371
      %v4435 = vunpack.c.l.b16 %v4372
      %v4436 = vunpack.c.h.b16 %v4372
      %v4437 = vunpack.c.l.b16 %v4373
      %v4438 = vunpack.c.h.b16 %v4373
      %v4439 = vunpack.c.l.b16 %v4374
      %v4440 = vunpack.c.h.b16 %v4374
      %v4441 = vunpack.c.l.b16 %v4375
      %v4442 = vunpack.c.h.b16 %v4375
      %v4443 = vunpack.c.l.b16 %v4376
      %v4444 = vunpack.c.h.b16 %v4376
      %v4445 = vunpack.c.l.b16 %v4377
      %v4446 = vunpack.c.h.b16 %v4377
      %v4447 = vunpack.c.l.b16 %v4378
      %v4448 = vunpack.c.h.b16 %v4378
      %v4449 = vpack.c.b16 %v4419, %v4417
      %v4450 = vpack.c.b16 %v4420, %v4418
      %v4451 = vpack.c.b16 %v4423, %v4421
      %v4452 = vpack.c.b16 %v4424, %v4422
      %v4453 = vpack.c.b16 %v4427, %v4425
      %v4454 = vpack.c.b16 %v4428, %v4426
      %v4455 = vpack.c.b16 %v4431, %v4429
      %v4456 = vpack.c.b16 %v4432, %v4430
      %v4457 = vpack.c.b16 %v4435, %v4433
      %v4458 = vpack.c.b16 %v4436, %v4434
      %v4459 = vpack.c.b16 %v4439, %v4437
      %v4460 = vpack.c.b16 %v4440, %v4438
      %v4461 = vpack.c.b16 %v4443, %v4441
      %v4462 = vpack.c.b16 %v4444, %v4442
      %v4463 = vpack.c.b16 %v4447, %v4445
      %v4464 = vpack.c.b16 %v4448, %v4446
      %4481 = vmatprep.subr.bf16.mxu0 %v4450
      %4482 = vmatpush1.bf16.msra.mxu0 %v4449
      %4483 = vmatprep.subr.bf16.mxu0 %v4452
      %4484 = vmatpush1.bf16.msra.mxu0 %v4451
      %4485 = vmatprep.subr.bf16.mxu0 %v4454
      %4486 = vmatpush1.bf16.msra.mxu0 %v4453
      %4487 = vmatprep.subr.bf16.mxu0 %v4456
      %4488 = vmatpush1.bf16.msra.mxu0 %v4455
      %4489 = vmatprep.subr.bf16.mxu0 %v4458
      %4490 = vmatpush1.bf16.msra.mxu0 %v4457
      %4491 = vmatprep.subr.bf16.mxu0 %v4460
      %4492 = vmatpush1.bf16.msra.mxu0 %v4459
      %4493 = vmatprep.subr.bf16.mxu0 %v4462
      %4494 = vmatpush1.bf16.msra.mxu0 %v4461
      %4495 = vmatprep.subr.bf16.mxu0 %v4464
      %4496 = vmatpush1.bf16.msra.mxu0 %v4463
      %4497 = vmatprep.subr.bf16.mxu0 0
      %4498 = vmatpush1.bf16.msra.mxu0 0
      %4499 = vmatprep.subr.bf16.mxu0 0
      %4500 = vmatpush1.bf16.msra.mxu0 0
      %4501 = vmatprep.subr.bf16.mxu0 0
      %4502 = vmatpush1.bf16.msra.mxu0 0
      %4503 = vmatprep.subr.bf16.mxu0 0
      %4504 = vmatpush1.bf16.msra.mxu0 0
      %4505 = vmatprep.subr.bf16.mxu0 0
      %4506 = vmatpush1.bf16.msra.mxu0 0
      %4507 = vmatprep.subr.bf16.mxu0 0
      %4508 = vmatpush1.bf16.msra.mxu0 0
      %4509 = vmatprep.subr.bf16.mxu0 0
      %4510 = vmatpush1.bf16.msra.mxu0 0
      %4511 = vmatprep.subr.bf16.mxu0 0
      %4512 = vmatpush1.bf16.msra.mxu0 0
      %4513 = vmatprep.mubr.bf16.mxu0 0
      %4514 = vmatmul.mubr.bf16.gmra.mrb[0].mxu0 %v4387
      %v4515 = vpop.f32.mrb[0].mxu0
      %v4516 = vadd.f32 0.0, %v4515
      %v4517 = vpop.f32.mrb[0].mxu0
      %v4518 = vadd.f32 0.0, %v4517
      %v4519 = vpop.f32.mrb[0].mxu0
      %v4520 = vadd.f32 0.0, %v4519
      %v4521 = vpop.f32.mrb[0].mxu0
      %v4522 = vadd.f32 0.0, %v4521
      %4523 = vmatprep.mubr.bf16.mxu0 0
      %4524 = vmatmul.mubr.bf16.gmra.mrb[0].mxu0 %v4389
      %v4525 = vpop.f32.mrb[0].mxu0
      %v4526 = vadd.f32 0.0, %v4525
      %v4527 = vpop.f32.mrb[0].mxu0
      %v4528 = vadd.f32 0.0, %v4527
      %v4529 = vpop.f32.mrb[0].mxu0
      %v4530 = vadd.f32 0.0, %v4529
      %v4531 = vpop.f32.mrb[0].mxu0
      %v4532 = vadd.f32 0.0, %v4531
      %4533 = vmatprep.mubr.bf16.mxu0 0
      %4534 = vmatmul.mubr.bf16.gmra.mrb[0].mxu0 %v4391
      %v4535 = vpop.f32.mrb[0].mxu0
      %v4536 = vadd.f32 0.0, %v4535
      %v4537 = vpop.f32.mrb[0].mxu0
      %v4538 = vadd.f32 0.0, %v4537
      %v4539 = vpop.f32.mrb[0].mxu0
      %v4540 = vadd.f32 0.0, %v4539
      %v4541 = vpop.f32.mrb[0].mxu0
      %v4542 = vadd.f32 0.0, %v4541
      %4543 = vmatprep.mubr.bf16.mxu0 0
      %4544 = vmatmul.mubr.bf16.gmra.mrb[0].mxu0 %v4393
      %v4545 = vpop.f32.mrb[0].mxu0
      %v4546 = vadd.f32 0.0, %v4545
      %v4547 = vpop.f32.mrb[0].mxu0
      %v4548 = vadd.f32 0.0, %v4547
      %v4549 = vpop.f32.mrb[0].mxu0
      %v4550 = vadd.f32 0.0, %v4549
      %v4551 = vpop.f32.mrb[0].mxu0
      %v4552 = vadd.f32 0.0, %v4551
      %4553 = vmatprep.mubr.bf16.mxu0 0
      %4554 = vmatmul.mubr.bf16.gmra.mrb[0].mxu0 %v4395
      %v4555 = vpop.f32.mrb[0].mxu0
      %v4556 = vadd.f32 0.0, %v4555
      %v4557 = vpop.f32.mrb[0].mxu0
      %v4558 = vadd.f32 0.0, %v4557
      %v4559 = vpop.f32.mrb[0].mxu0
      %v4560 = vpop.f32.mrb[0].mxu0
      %4561 = vdwg.mxu0
      %v4562 = vadd.f32 %v4343, %v4516
      %v4563 = vadd.f32 %v4344, %v4518
      %v4564 = vadd.f32 %v4345, %v4520
      %v4565 = vadd.f32 %v4346, %v4522
      %v4566 = vadd.f32 %v4347, %v4526
      %v4567 = vadd.f32 %v4348, %v4528
      %v4568 = vadd.f32 %v4349, %v4530
      %v4569 = vadd.f32 %v4350, %v4532
      %v4570 = vadd.f32 %v4351, %v4536
      %v4571 = vadd.f32 %v4352, %v4538
      %v4572 = vadd.f32 %v4353, %v4540
      %v4573 = vadd.f32 %v4354, %v4542
      %v4574 = vadd.f32 %v4355, %v4546
      %v4575 = vadd.f32 %v4356, %v4548
      %v4576 = vadd.f32 %v4357, %v4550
      %v4577 = vadd.f32 %v4358, %v4552
      %v4578 = vadd.f32 %v4359, %v4556
      %v4579 = vadd.f32 %v4360, %v4558
      %v4580 = vld [vmem:[%s6] sm:$0x3]
      %v4582 = vlaneseq
      %v4583 = vshrl.u32 %v4582, 7
      %v4584 = vsub.s32 0, %v4583
      %v4585 = vrot.slane %v4580, %v4584
      %v4586 = vlaneseq
      %v4587 = vshrl.u32 %v4586, 7
      %v4588 = vsub.s32 1, %v4587
      %v4589 = vrot.slane %v4580, %v4588
      %v4592 = vadd.f32 %v4562, %v4585
      %v4593 = vadd.f32 %v4563, %v4589
      %v4594 = vadd.f32 %v4564, %v4585
      %v4595 = vadd.f32 %v4565, %v4589
      %v4596 = vadd.f32 %v4566, %v4585
      %v4597 = vadd.f32 %v4567, %v4589
      %v4598 = vadd.f32 %v4568, %v4585
      %v4599 = vadd.f32 %v4569, %v4589
      %v4600 = vadd.f32 %v4570, %v4585
      %v4601 = vadd.f32 %v4571, %v4589
      %v4602 = vadd.f32 %v4572, %v4585
      %v4603 = vadd.f32 %v4573, %v4589
      %v4604 = vadd.f32 %v4574, %v4585
      %v4605 = vadd.f32 %v4575, %v4589
      %v4606 = vadd.f32 %v4576, %v4585
      %v4607 = vadd.f32 %v4577, %v4589
      %v4608 = vadd.f32 %v4578, %v4585
      %v4609 = vadd.f32 %v4579, %v4589
      %v4610 = vmax.f32 %v4592, 0.0
      %v4611 = vmax.f32 %v4593, 0.0
      %v4612 = vmax.f32 %v4594, 0.0
      %v4613 = vmax.f32 %v4595, 0.0
      %v4614 = vmax.f32 %v4596, 0.0
      %v4615 = vmax.f32 %v4597, 0.0
      %v4616 = vmax.f32 %v4598, 0.0
      %v4617 = vmax.f32 %v4599, 0.0
      %v4618 = vmax.f32 %v4600, 0.0
      %v4619 = vmax.f32 %v4601, 0.0
      %v4620 = vmax.f32 %v4602, 0.0
      %v4621 = vmax.f32 %v4603, 0.0
      %v4622 = vmax.f32 %v4604, 0.0
      %v4623 = vmax.f32 %v4605, 0.0
      %v4624 = vmax.f32 %v4606, 0.0
      %v4625 = vmax.f32 %v4607, 0.0
      %v4626 = vmax.f32 %v4608, 0.0
      %v4627 = vmax.f32 %v4609, 0.0
      %v4628 = vmul.f32 %v4610, %v3637
      %v4629 = vmul.f32 %v4611, %v3637
      %v4630 = vmul.f32 %v4612, %v3642
      %v4631 = vmul.f32 %v4613, %v3642
      %v4632 = vmul.f32 %v4614, %v3647
      %v4633 = vmul.f32 %v4615, %v3647
      %v4634 = vmul.f32 %v4616, %v3652
      %v4635 = vmul.f32 %v4617, %v3652
      %v4636 = vmul.f32 %v4618, %v3657
      %v4637 = vmul.f32 %v4619, %v3657
      %v4638 = vmul.f32 %v4620, %v3662
      %v4639 = vmul.f32 %v4621, %v3662
      %v4640 = vmul.f32 %v4622, %v3667
      %v4641 = vmul.f32 %v4623, %v3667
      %v4642 = vmul.f32 %v4624, %v3672
      %v4643 = vmul.f32 %v4625, %v3672
      %v4644 = vmul.f32 %v4626, %v3677
      %v4645 = vmul.f32 %v4627, %v3677
      %4646 = vst [vmem:[#allocation4] sm:$0xff] 0
      %4647 = vst [vmem:[#allocation4 + $0x8] sm:$0xff] 0
      %v4648 = vpack.c.bf16 %v4630, %v4628
      %v4649 = vpack.c.bf16 %v4631, %v4629
      %v4650 = vpack.c.bf16 %v4634, %v4632
      %v4651 = vpack.c.bf16 %v4635, %v4633
      %v4652 = vpack.c.bf16 %v4638, %v4636
      %v4653 = vpack.c.bf16 %v4639, %v4637
      %v4654 = vpack.c.bf16 %v4642, %v4640
      %v4655 = vpack.c.bf16 %v4643, %v4641
      %v4656 = vpack.c.bf16 %v4644, %v4644
      %v4657 = vpack.c.bf16 %v4645, %v4645
      %4658 = vst [vmem:[#allocation4 + $0x10] sm:$0xff] %v4648
      %4659 = vst [vmem:[#allocation4 + $0x18] sm:$0xff] %v4649
      %4660 = vst [vmem:[#allocation4 + $0x20] sm:$0xff] %v4650
      %4661 = vst [vmem:[#allocation4 + $0x28] sm:$0xff] %v4651
      %4662 = vst [vmem:[#allocation4 + $0x30] sm:$0xff] %v4652
      %4663 = vst [vmem:[#allocation4 + $0x38] sm:$0xff] %v4653
      %4664 = vst [vmem:[#allocation4 + $0x40] sm:$0xff] %v4654
      %4665 = vst [vmem:[#allocation4 + $0x48] sm:$0xff] %v4655
      %4666 = vst [vmem:[#allocation4 + $0x50] sm:$0xf] %v4656
      %4667 = vst [vmem:[#allocation4 + $0x58] sm:$0xf] %v4657
      %4668 = vst [vmem:[#allocation4 + $0x50] sm:$0xf0] 0
      %4669 = vst [vmem:[#allocation4 + $0x58] sm:$0xf0] 0
      %4670 = vst [vmem:[#allocation4 + $0x60] sm:$0xff] 0
      %4671 = vst [vmem:[#allocation4 + $0x68] sm:$0xff] 0
      %v4672 = vld [vmem:[#allocation4] sm:$0xf8]
      %v4673 = vld [vmem:[#allocation4 + $0x8] sm:$0xf8]
      %v4674 = vld [vmem:[#allocation4 + $0x10] sm:$0xff]
      %v4675 = vld [vmem:[#allocation4 + $0x18] sm:$0xff]
      %v4676 = vld [vmem:[#allocation4 + $0x20] sm:$0xff]
      %v4677 = vld [vmem:[#allocation4 + $0x28] sm:$0xff]
      %v4678 = vld [vmem:[#allocation4 + $0x30] sm:$0xff]
      %v4679 = vld [vmem:[#allocation4 + $0x38] sm:$0xff]
      %v4680 = vld [vmem:[#allocation4 + $0x40] sm:$0x7f]
      %v4681 = vld [vmem:[#allocation4 + $0x48] sm:$0x7f]
      %v4682 = vld [vmem:[%s7] sm:$0xf]
      %v4683 = vld [vmem:[%s7 + $0x4] sm:$0xf]
      %v4684 = vld [vmem:[%s7 + $0x8] sm:$0xf]
      %v4685 = vld [vmem:[%s7 + $0xc] sm:$0xf]
      %v4686 = vld [vmem:[%s7 + $0x10] sm:$0xf]
      %v4687 = vld [vmem:[%s7 + $0x14] sm:$0xf]
      %v4688 = vld [vmem:[%s7 + $0x18] sm:$0xf]
      %v4689 = vld [vmem:[%s7 + $0x1c] sm:$0xf]
      %v4690 = vld [vmem:[%s7 + $0x20] sm:$0xf]
      %v4691 = vld [vmem:[%s7 + $0x24] sm:$0xf]
      %v4692 = vld [vmem:[%s7 + $0x28] sm:$0xf]
      %v4693 = vld [vmem:[%s7 + $0x2c] sm:$0xf]
      %v4694 = vld [vmem:[%s7 + $0x30] sm:$0xf]
      %v4695 = vld [vmem:[%s7 + $0x34] sm:$0xf]
      %v4696 = vld [vmem:[%s7 + $0x38] sm:$0xf]
      %v4697 = vld [vmem:[%s7 + $0x3c] sm:$0xf]
      %v4698 = vld [vmem:[%s7 + $0x40] sm:$0xf]
      %v4699 = vld [vmem:[%s7 + $0x44] sm:$0xf]
      %v4700 = vld [vmem:[%s7 + $0x48] sm:$0xf]
      %v4701 = vld [vmem:[%s7 + $0x4c] sm:$0xf]
      %v4702 = vld [vmem:[%s7 + $0x50] sm:$0xf]
      %v4703 = vld [vmem:[%s7 + $0x54] sm:$0xf]
      %v4704 = vld [vmem:[%s7 + $0x58] sm:$0xf]
      %v4705 = vld [vmem:[%s7 + $0x5c] sm:$0xf]
      %v4706 = vld [vmem:[%s7 + $0x60] sm:$0xf]
      %v4707 = vld [vmem:[%s7 + $0x64] sm:$0xf]
      %v4708 = vld [vmem:[%s7 + $0x68] sm:$0xf]
      %v4709 = vld [vmem:[%s7 + $0x6c] sm:$0xf]
      %v4710 = vld [vmem:[%s7 + $0x70] sm:$0xf]
      %v4711 = vld [vmem:[%s7 + $0x74] sm:$0xf]
      %v4712 = vld [vmem:[%s7 + $0x78] sm:$0xf]
      %v4713 = vld [vmem:[%s7 + $0x7c] sm:$0xf]
      %v4714 = vld [vmem:[#allocation4 + $0x40] sm:$0xff]
      %v4715 = vld [vmem:[#allocation4 + $0x48] sm:$0xff]
      %s4716 = scalar_lea.vmem %s7, 128
      %v4717 = vld [vmem:[%s4716] sm:$0xf]
      %v4718 = vld [vmem:[%s4716 + $0x4] sm:$0xf]
      %v4719 = vld [vmem:[%s4716 + $0x8] sm:$0xf]
      %v4720 = vld [vmem:[%s4716 + $0xc] sm:$0xf]
      %v4721 = vld [vmem:[%s4716 + $0x10] sm:$0xf]
      %v4722 = vld [vmem:[%s4716 + $0x14] sm:$0xf]
      %v4723 = vld [vmem:[%s4716 + $0x18] sm:$0xf]
      %v4724 = vld [vmem:[%s4716 + $0x1c] sm:$0xf]
      %v4725 = vld [vmem:[%s4716 + $0x20] sm:$0xf]
      %v4726 = vld [vmem:[%s4716 + $0x24] sm:$0xf]
      %v4727 = vld [vmem:[%s4716 + $0x28] sm:$0xf]
      %v4728 = vld [vmem:[%s4716 + $0x2c] sm:$0xf]
      %v4729 = vld [vmem:[%s4716 + $0x30] sm:$0xf]
      %v4730 = vld [vmem:[%s4716 + $0x34] sm:$0xf]
      %v4731 = vld [vmem:[%s4716 + $0x38] sm:$0xf]
      %v4732 = vld [vmem:[%s4716 + $0x3c] sm:$0xf]
      %v4733 = vld [vmem:[%s4716 + $0x40] sm:$0xf]
      %v4734 = vld [vmem:[%s4716 + $0x44] sm:$0xf]
      %v4735 = vld [vmem:[%s4716 + $0x48] sm:$0xf]
      %v4736 = vld [vmem:[%s4716 + $0x4c] sm:$0xf]
      %v4737 = vld [vmem:[%s4716 + $0x50] sm:$0xf]
      %v4738 = vld [vmem:[%s4716 + $0x54] sm:$0xf]
      %v4739 = vld [vmem:[%s4716 + $0x58] sm:$0xf]
      %v4740 = vld [vmem:[%s4716 + $0x5c] sm:$0xf]
      %v4741 = vld [vmem:[%s4716 + $0x60] sm:$0xf]
      %v4742 = vld [vmem:[%s4716 + $0x64] sm:$0xf]
      %v4743 = vld [vmem:[%s4716 + $0x68] sm:$0xf]
      %v4744 = vld [vmem:[%s4716 + $0x6c] sm:$0xf]
      %v4745 = vld [vmem:[%s4716 + $0x70] sm:$0xf]
      %v4746 = vld [vmem:[%s4716 + $0x74] sm:$0xf]
      %v4747 = vld [vmem:[%s4716 + $0x78] sm:$0xf]
      %v4748 = vld [vmem:[%s4716 + $0x7c] sm:$0xf]
      %vm4749 = vsmask.f32 4352
      %v4751 = vshrl.u32 %v4672, 16
      %v4753 = vrot.slane %v4751, 3
      %v4754 = vshll.u32 %v4672, 16
      %v4756 = vrot.slane %v4754, 4
      %v4757 = vor.u32 %v4753, %v4756
      %v4759 = vshrl.u32 %v4674, 16
      %v4761 = vrot.slane %v4759, 3
      %v4762 = vshll.u32 %v4674, 16
      %v4764 = vrot.slane %v4762, 4
      %v4765 = vor.u32 %v4761, %v4764
      %v4766 = vsel %vm4749, %v4757, %v4765
      %v4768 = vshrl.u32 %v4673, 16
      %v4770 = vrot.slane %v4768, 3
      %v4771 = vshll.u32 %v4673, 16
      %v4773 = vrot.slane %v4771, 4
      %v4774 = vor.u32 %v4770, %v4773
      %v4776 = vshrl.u32 %v4675, 16
      %v4778 = vrot.slane %v4776, 3
      %v4779 = vshll.u32 %v4675, 16
      %v4781 = vrot.slane %v4779, 4
      %v4782 = vor.u32 %v4778, %v4781
      %v4783 = vsel %vm4749, %v4774, %v4782
      %v4785 = vshrl.u32 %v4676, 16
      %v4787 = vrot.slane %v4785, 3
      %v4788 = vshll.u32 %v4676, 16
      %v4790 = vrot.slane %v4788, 4
      %v4791 = vor.u32 %v4787, %v4790
      %v4792 = vsel %vm4749, %v4765, %v4791
      %v4794 = vshrl.u32 %v4677, 16
      %v4796 = vrot.slane %v4794, 3
      %v4797 = vshll.u32 %v4677, 16
      %v4799 = vrot.slane %v4797, 4
      %v4800 = vor.u32 %v4796, %v4799
      %v4801 = vsel %vm4749, %v4782, %v4800
      %v4803 = vshrl.u32 %v4678, 16
      %v4805 = vrot.slane %v4803, 3
      %v4806 = vshll.u32 %v4678, 16
      %v4808 = vrot.slane %v4806, 4
      %v4809 = vor.u32 %v4805, %v4808
      %v4810 = vsel %vm4749, %v4791, %v4809
      %v4812 = vshrl.u32 %v4679, 16
      %v4814 = vrot.slane %v4812, 3
      %v4815 = vshll.u32 %v4679, 16
      %v4817 = vrot.slane %v4815, 4
      %v4818 = vor.u32 %v4814, %v4817
      %v4819 = vsel %vm4749, %v4800, %v4818
      %v4821 = vshrl.u32 %v4714, 16
      %v4823 = vrot.slane %v4821, 3
      %v4824 = vshll.u32 %v4714, 16
      %v4826 = vrot.slane %v4824, 4
      %v4827 = vor.u32 %v4823, %v4826
      %v4828 = vsel %vm4749, %v4809, %v4827
      %v4830 = vshrl.u32 %v4715, 16
      %v4832 = vrot.slane %v4830, 3
      %v4833 = vshll.u32 %v4715, 16
      %v4835 = vrot.slane %v4833, 4
      %v4836 = vor.u32 %v4832, %v4835
      %v4837 = vsel %vm4749, %v4818, %v4836
      %v4880 = vunpack.c.l.b16 %v4717
      %v4881 = vunpack.c.l.b16 %v4718
      %v4882 = vunpack.c.l.b16 %v4719
      %v4883 = vunpack.c.l.b16 %v4720
      %v4884 = vunpack.c.l.b16 %v4721
      %v4885 = vunpack.c.l.b16 %v4722
      %v4886 = vunpack.c.l.b16 %v4723
      %v4887 = vunpack.c.l.b16 %v4724
      %v4888 = vunpack.c.l.b16 %v4725
      %v4889 = vunpack.c.l.b16 %v4726
      %v4890 = vunpack.c.l.b16 %v4727
      %v4891 = vunpack.c.l.b16 %v4728
      %v4892 = vunpack.c.l.b16 %v4729
      %v4893 = vunpack.c.l.b16 %v4730
      %v4894 = vunpack.c.l.b16 %v4731
      %v4895 = vunpack.c.l.b16 %v4732
      %v4896 = vunpack.c.l.b16 %v4733
      %v4897 = vunpack.c.l.b16 %v4734
      %v4898 = vunpack.c.l.b16 %v4735
      %v4899 = vunpack.c.l.b16 %v4736
      %v4900 = vunpack.c.l.b16 %v4737
      %v4901 = vunpack.c.l.b16 %v4738
      %v4902 = vunpack.c.l.b16 %v4739
      %v4903 = vunpack.c.l.b16 %v4740
      %v4904 = vunpack.c.l.b16 %v4741
      %v4905 = vunpack.c.l.b16 %v4742
      %v4906 = vunpack.c.l.b16 %v4743
      %v4907 = vunpack.c.l.b16 %v4744
      %v4908 = vunpack.c.l.b16 %v4745
      %v4909 = vunpack.c.l.b16 %v4746
      %v4910 = vunpack.c.l.b16 %v4747
      %v4911 = vunpack.c.l.b16 %v4748
      %v4912 = vpack.c.b16 %v4881, %v4880
      %v4913 = vpack.c.b16 %v4883, %v4882
      %v4914 = vpack.c.b16 %v4885, %v4884
      %v4915 = vpack.c.b16 %v4887, %v4886
      %v4916 = vpack.c.b16 %v4889, %v4888
      %v4917 = vpack.c.b16 %v4891, %v4890
      %v4918 = vpack.c.b16 %v4893, %v4892
      %v4919 = vpack.c.b16 %v4895, %v4894
      %v4920 = vpack.c.b16 %v4897, %v4896
      %v4921 = vpack.c.b16 %v4899, %v4898
      %v4922 = vpack.c.b16 %v4901, %v4900
      %v4923 = vpack.c.b16 %v4903, %v4902
      %v4924 = vpack.c.b16 %v4905, %v4904
      %v4925 = vpack.c.b16 %v4907, %v4906
      %v4926 = vpack.c.b16 %v4909, %v4908
      %v4927 = vpack.c.b16 %v4911, %v4910
      %4944 = vmatprep.subr.bf16.mxu0 0
      %4945 = vmatpush1.bf16.msra.mxu0 %v4912
      %4946 = vmatprep.subr.bf16.mxu0 0
      %4947 = vmatpush1.bf16.msra.mxu0 %v4913
      %4948 = vmatprep.subr.bf16.mxu0 0
      %4949 = vmatpush1.bf16.msra.mxu0 %v4914
      %4950 = vmatprep.subr.bf16.mxu0 0
      %4951 = vmatpush1.bf16.msra.mxu0 %v4915
      %4952 = vmatprep.subr.bf16.mxu0 0
      %4953 = vmatpush1.bf16.msra.mxu0 %v4916
      %4954 = vmatprep.subr.bf16.mxu0 0
      %4955 = vmatpush1.bf16.msra.mxu0 %v4917
      %4956 = vmatprep.subr.bf16.mxu0 0
      %4957 = vmatpush1.bf16.msra.mxu0 %v4918
      %4958 = vmatprep.subr.bf16.mxu0 0
      %4959 = vmatpush1.bf16.msra.mxu0 %v4919
      %4960 = vmatprep.subr.bf16.mxu0 0
      %4961 = vmatpush1.bf16.msra.mxu0 %v4920
      %4962 = vmatprep.subr.bf16.mxu0 0
      %4963 = vmatpush1.bf16.msra.mxu0 %v4921
      %4964 = vmatprep.subr.bf16.mxu0 0
      %4965 = vmatpush1.bf16.msra.mxu0 %v4922
      %4966 = vmatprep.subr.bf16.mxu0 0
      %4967 = vmatpush1.bf16.msra.mxu0 %v4923
      %4968 = vmatprep.subr.bf16.mxu0 0
      %4969 = vmatpush1.bf16.msra.mxu0 %v4924
      %4970 = vmatprep.subr.bf16.mxu0 0
      %4971 = vmatpush1.bf16.msra.mxu0 %v4925
      %4972 = vmatprep.subr.bf16.mxu0 0
      %4973 = vmatpush1.bf16.msra.mxu0 %v4926
      %4974 = vmatprep.subr.bf16.mxu0 0
      %4975 = vmatpush1.bf16.msra.mxu0 %v4927
      %4976 = vmatprep.mubr.bf16.mxu0 %v4783
      %4977 = vmatmul.mubr.bf16.gmra.mrb[0].mxu0 %v4766
      %v4978 = vpop.f32.mrb[0].mxu0
      %v4979 = vadd.f32 0.0, %v4978
      %v4980 = vpop.f32.mrb[0].mxu0
      %v4981 = vpop.f32.mrb[0].mxu0
      %v4982 = vadd.f32 0.0, %v4981
      %v4983 = vpop.f32.mrb[0].mxu0
      %4984 = vmatprep.mubr.bf16.mxu0 %v4801
      %4985 = vmatmul.mubr.bf16.gmra.mrb[0].mxu0 %v4792
      %v4986 = vpop.f32.mrb[0].mxu0
      %v4987 = vadd.f32 0.0, %v4986
      %v4988 = vpop.f32.mrb[0].mxu0
      %v4989 = vpop.f32.mrb[0].mxu0
      %v4990 = vadd.f32 0.0, %v4989
      %v4991 = vpop.f32.mrb[0].mxu0
      %4992 = vmatprep.mubr.bf16.mxu0 %v4819
      %4993 = vmatmul.mubr.bf16.gmra.mrb[0].mxu0 %v4810
      %v4994 = vpop.f32.mrb[0].mxu0
      %v4995 = vadd.f32 0.0, %v4994
      %v4996 = vpop.f32.mrb[0].mxu0
      %v4997 = vpop.f32.mrb[0].mxu0
      %v4998 = vadd.f32 0.0, %v4997
      %v4999 = vpop.f32.mrb[0].mxu0
      %5000 = vmatprep.mubr.bf16.mxu0 %v4837
      %5001 = vmatmul.mubr.bf16.gmra.mrb[0].mxu0 %v4828
      %v5002 = vpop.f32.mrb[0].mxu0
      %v5003 = vadd.f32 0.0, %v5002
      %v5004 = vpop.f32.mrb[0].mxu0
      %v5005 = vpop.f32.mrb[0].mxu0
      %v5006 = vadd.f32 0.0, %v5005
      %v5007 = vpop.f32.mrb[0].mxu0
      %5008 = vmatprep.mubr.bf16.mxu0 %v4836
      %5009 = vmatmul.mubr.bf16.gmra.mrb[0].mxu0 %v4827
      %v5010 = vpop.f32.mrb[0].mxu0
      %v5011 = vadd.f32 0.0, %v5010
      %v5012 = vpop.f32.mrb[0].mxu0
      %v5013 = vpop.f32.mrb[0].mxu0
      %v5014 = vpop.f32.mrb[0].mxu0
      %5015 = vdwg.mxu0
      %vm5026 = vcmask 1044480
      %v5027 = vrot.slane %v4672, 3
      %v5028 = vrot.slane %v4674, 3
      %v5029 = vsel %vm5026, %v5027, %v5028
      %v5030 = vrot.slane %v4673, 3
      %v5031 = vrot.slane %v4675, 3
      %v5032 = vsel %vm5026, %v5030, %v5031
      %v5033 = vrot.slane %v4676, 3
      %v5034 = vsel %vm5026, %v5028, %v5033
      %v5035 = vrot.slane %v4677, 3
      %v5036 = vsel %vm5026, %v5031, %v5035
      %v5037 = vrot.slane %v4678, 3
      %v5038 = vsel %vm5026, %v5033, %v5037
      %v5039 = vrot.slane %v4679, 3
      %v5040 = vsel %vm5026, %v5035, %v5039
      %v5041 = vrot.slane %v4680, 3
      %v5042 = vsel %vm5026, %v5037, %v5041
      %v5043 = vrot.slane %v4681, 3
      %v5044 = vsel %vm5026, %v5039, %v5043
      %v5087 = vunpack.c.l.b16 %v4682
      %v5088 = vunpack.c.l.b16 %v4683
      %v5089 = vunpack.c.l.b16 %v4684
      %v5090 = vunpack.c.l.b16 %v4685
      %v5091 = vunpack.c.l.b16 %v4686
      %v5092 = vunpack.c.l.b16 %v4687
      %v5093 = vunpack.c.l.b16 %v4688
      %v5094 = vunpack.c.l.b16 %v4689
      %v5095 = vunpack.c.l.b16 %v4690
      %v5096 = vunpack.c.l.b16 %v4691
      %v5097 = vunpack.c.l.b16 %v4692
      %v5098 = vunpack.c.l.b16 %v4693
      %v5099 = vunpack.c.l.b16 %v4694
      %v5100 = vunpack.c.l.b16 %v4695
      %v5101 = vunpack.c.l.b16 %v4696
      %v5102 = vunpack.c.l.b16 %v4697
      %v5103 = vunpack.c.l.b16 %v4698
      %v5104 = vunpack.c.l.b16 %v4699
      %v5105 = vunpack.c.l.b16 %v4700
      %v5106 = vunpack.c.l.b16 %v4701
      %v5107 = vunpack.c.l.b16 %v4702
      %v5108 = vunpack.c.l.b16 %v4703
      %v5109 = vunpack.c.l.b16 %v4704
      %v5110 = vunpack.c.l.b16 %v4705
      %v5111 = vunpack.c.l.b16 %v4706
      %v5112 = vunpack.c.l.b16 %v4707
      %v5113 = vunpack.c.l.b16 %v4708
      %v5114 = vunpack.c.l.b16 %v4709
      %v5115 = vunpack.c.l.b16 %v4710
      %v5116 = vunpack.c.l.b16 %v4711
      %v5117 = vunpack.c.l.b16 %v4712
      %v5118 = vunpack.c.l.b16 %v4713
      %v5119 = vpack.c.b16 %v5088, %v5087
      %v5120 = vpack.c.b16 %v5090, %v5089
      %v5121 = vpack.c.b16 %v5092, %v5091
      %v5122 = vpack.c.b16 %v5094, %v5093
      %v5123 = vpack.c.b16 %v5096, %v5095
      %v5124 = vpack.c.b16 %v5098, %v5097
      %v5125 = vpack.c.b16 %v5100, %v5099
      %v5126 = vpack.c.b16 %v5102, %v5101
      %v5127 = vpack.c.b16 %v5104, %v5103
      %v5128 = vpack.c.b16 %v5106, %v5105
      %v5129 = vpack.c.b16 %v5108, %v5107
      %v5130 = vpack.c.b16 %v5110, %v5109
      %v5131 = vpack.c.b16 %v5112, %v5111
      %v5132 = vpack.c.b16 %v5114, %v5113
      %v5133 = vpack.c.b16 %v5116, %v5115
      %v5134 = vpack.c.b16 %v5118, %v5117
      %5151 = vmatprep.subr.bf16.mxu0 0
      %5152 = vmatpush1.bf16.msra.mxu0 %v5119
      %5153 = vmatprep.subr.bf16.mxu0 0
      %5154 = vmatpush1.bf16.msra.mxu0 %v5120
      %5155 = vmatprep.subr.bf16.mxu0 0
      %5156 = vmatpush1.bf16.msra.mxu0 %v5121
      %5157 = vmatprep.subr.bf16.mxu0 0
      %5158 = vmatpush1.bf16.msra.mxu0 %v5122
      %5159 = vmatprep.subr.bf16.mxu0 0
      %5160 = vmatpush1.bf16.msra.mxu0 %v5123
      %5161 = vmatprep.subr.bf16.mxu0 0
      %5162 = vmatpush1.bf16.msra.mxu0 %v5124
      %5163 = vmatprep.subr.bf16.mxu0 0
      %5164 = vmatpush1.bf16.msra.mxu0 %v5125
      %5165 = vmatprep.subr.bf16.mxu0 0
      %5166 = vmatpush1.bf16.msra.mxu0 %v5126
      %5167 = vmatprep.subr.bf16.mxu0 0
      %5168 = vmatpush1.bf16.msra.mxu0 %v5127
      %5169 = vmatprep.subr.bf16.mxu0 0
      %5170 = vmatpush1.bf16.msra.mxu0 %v5128
      %5171 = vmatprep.subr.bf16.mxu0 0
      %5172 = vmatpush1.bf16.msra.mxu0 %v5129
      %5173 = vmatprep.subr.bf16.mxu0 0
      %5174 = vmatpush1.bf16.msra.mxu0 %v5130
      %5175 = vmatprep.subr.bf16.mxu0 0
      %5176 = vmatpush1.bf16.msra.mxu0 %v5131
      %5177 = vmatprep.subr.bf16.mxu0 0
      %5178 = vmatpush1.bf16.msra.mxu0 %v5132
      %5179 = vmatprep.subr.bf16.mxu0 0
      %5180 = vmatpush1.bf16.msra.mxu0 %v5133
      %5181 = vmatprep.subr.bf16.mxu0 0
      %5182 = vmatpush1.bf16.msra.mxu0 %v5134
      %5183 = vmatprep.mubr.bf16.mxu0 %v5032
      %5184 = vmatmul.mubr.bf16.gmra.mrb[0].mxu0 %v5029
      %v5185 = vpop.f32.mrb[0].mxu0
      %v5186 = vadd.f32 %v4979, %v5185
      %v5187 = vpop.f32.mrb[0].mxu0
      %v5188 = vpop.f32.mrb[0].mxu0
      %v5189 = vadd.f32 %v4982, %v5188
      %v5190 = vpop.f32.mrb[0].mxu0
      %5191 = vmatprep.mubr.bf16.mxu0 %v5036
      %5192 = vmatmul.mubr.bf16.gmra.mrb[0].mxu0 %v5034
      %v5193 = vpop.f32.mrb[0].mxu0
      %v5194 = vadd.f32 %v4987, %v5193
      %v5195 = vpop.f32.mrb[0].mxu0
      %v5196 = vpop.f32.mrb[0].mxu0
      %v5197 = vadd.f32 %v4990, %v5196
      %v5198 = vpop.f32.mrb[0].mxu0
      %5199 = vmatprep.mubr.bf16.mxu0 %v5040
      %5200 = vmatmul.mubr.bf16.gmra.mrb[0].mxu0 %v5038
      %v5201 = vpop.f32.mrb[0].mxu0
      %v5202 = vadd.f32 %v4995, %v5201
      %v5203 = vpop.f32.mrb[0].mxu0
      %v5204 = vpop.f32.mrb[0].mxu0
      %v5205 = vadd.f32 %v4998, %v5204
      %v5206 = vpop.f32.mrb[0].mxu0
      %5207 = vmatprep.mubr.bf16.mxu0 %v5044
      %5208 = vmatmul.mubr.bf16.gmra.mrb[0].mxu0 %v5042
      %v5209 = vpop.f32.mrb[0].mxu0
      %v5210 = vadd.f32 %v5003, %v5209
      %v5211 = vpop.f32.mrb[0].mxu0
      %v5212 = vpop.f32.mrb[0].mxu0
      %v5213 = vadd.f32 %v5006, %v5212
      %v5214 = vpop.f32.mrb[0].mxu0
      %5215 = vmatprep.mubr.bf16.mxu0 %v5043
      %5216 = vmatmul.mubr.bf16.gmra.mrb[0].mxu0 %v5041
      %v5217 = vpop.f32.mrb[0].mxu0
      %v5218 = vadd.f32 %v5011, %v5217
      %v5219 = vpop.f32.mrb[0].mxu0
      %v5220 = vpop.f32.mrb[0].mxu0
      %v5221 = vpop.f32.mrb[0].mxu0
      %5222 = vdwg.mxu0
      %v5223 = vld [vmem:[#allocation4] sm:$0xf0]
      %v5224 = vld [vmem:[#allocation4 + $0x8] sm:$0xf0]
      %s5225 = scalar_lea.vmem %s7, 256
      %v5226 = vld [vmem:[%s5225] sm:$0xf]
      %v5227 = vld [vmem:[%s5225 + $0x4] sm:$0xf]
      %v5228 = vld [vmem:[%s5225 + $0x8] sm:$0xf]
      %v5229 = vld [vmem:[%s5225 + $0xc] sm:$0xf]
      %v5230 = vld [vmem:[%s5225 + $0x10] sm:$0xf]
      %v5231 = vld [vmem:[%s5225 + $0x14] sm:$0xf]
      %v5232 = vld [vmem:[%s5225 + $0x18] sm:$0xf]
      %v5233 = vld [vmem:[%s5225 + $0x1c] sm:$0xf]
      %v5234 = vld [vmem:[%s5225 + $0x20] sm:$0xf]
      %v5235 = vld [vmem:[%s5225 + $0x24] sm:$0xf]
      %v5236 = vld [vmem:[%s5225 + $0x28] sm:$0xf]
      %v5237 = vld [vmem:[%s5225 + $0x2c] sm:$0xf]
      %v5238 = vld [vmem:[%s5225 + $0x30] sm:$0xf]
      %v5239 = vld [vmem:[%s5225 + $0x34] sm:$0xf]
      %v5240 = vld [vmem:[%s5225 + $0x38] sm:$0xf]
      %v5241 = vld [vmem:[%s5225 + $0x3c] sm:$0xf]
      %v5242 = vld [vmem:[%s5225 + $0x40] sm:$0xf]
      %v5243 = vld [vmem:[%s5225 + $0x44] sm:$0xf]
      %v5244 = vld [vmem:[%s5225 + $0x48] sm:$0xf]
      %v5245 = vld [vmem:[%s5225 + $0x4c] sm:$0xf]
      %v5246 = vld [vmem:[%s5225 + $0x50] sm:$0xf]
      %v5247 = vld [vmem:[%s5225 + $0x54] sm:$0xf]
      %v5248 = vld [vmem:[%s5225 + $0x58] sm:$0xf]
      %v5249 = vld [vmem:[%s5225 + $0x5c] sm:$0xf]
      %v5250 = vld [vmem:[%s5225 + $0x60] sm:$0xf]
      %v5251 = vld [vmem:[%s5225 + $0x64] sm:$0xf]
      %v5252 = vld [vmem:[%s5225 + $0x68] sm:$0xf]
      %v5253 = vld [vmem:[%s5225 + $0x6c] sm:$0xf]
      %v5254 = vld [vmem:[%s5225 + $0x70] sm:$0xf]
      %v5255 = vld [vmem:[%s5225 + $0x74] sm:$0xf]
      %v5256 = vld [vmem:[%s5225 + $0x78] sm:$0xf]
      %v5257 = vld [vmem:[%s5225 + $0x7c] sm:$0xf]
      %vm5262 = vcmask 1043456
      %v5263 = vrot.slane %v5223, 4
      %v5264 = vrot.slane %v4674, 4
      %v5265 = vsel %vm5262, %v5263, %v5264
      %v5266 = vrot.slane %v5224, 4
      %v5267 = vrot.slane %v4675, 4
      %v5268 = vsel %vm5262, %v5266, %v5267
      %v5269 = vrot.slane %v4676, 4
      %v5270 = vsel %vm5262, %v5264, %v5269
      %v5271 = vrot.slane %v4677, 4
      %v5272 = vsel %vm5262, %v5267, %v5271
      %v5273 = vrot.slane %v4678, 4
      %v5274 = vsel %vm5262, %v5269, %v5273
      %v5275 = vrot.slane %v4679, 4
      %v5276 = vsel %vm5262, %v5271, %v5275
      %v5277 = vrot.slane %v4714, 4
      %v5278 = vsel %vm5262, %v5273, %v5277
      %v5279 = vrot.slane %v4715, 4
      %v5280 = vsel %vm5262, %v5275, %v5279
      %v5323 = vunpack.c.l.b16 %v5226
      %v5324 = vunpack.c.l.b16 %v5227
      %v5325 = vunpack.c.l.b16 %v5228
      %v5326 = vunpack.c.l.b16 %v5229
      %v5327 = vunpack.c.l.b16 %v5230
      %v5328 = vunpack.c.l.b16 %v5231
      %v5329 = vunpack.c.l.b16 %v5232
      %v5330 = vunpack.c.l.b16 %v5233
      %v5331 = vunpack.c.l.b16 %v5234
      %v5332 = vunpack.c.l.b16 %v5235
      %v5333 = vunpack.c.l.b16 %v5236
      %v5334 = vunpack.c.l.b16 %v5237
      %v5335 = vunpack.c.l.b16 %v5238
      %v5336 = vunpack.c.l.b16 %v5239
      %v5337 = vunpack.c.l.b16 %v5240
      %v5338 = vunpack.c.l.b16 %v5241
      %v5339 = vunpack.c.l.b16 %v5242
      %v5340 = vunpack.c.l.b16 %v5243
      %v5341 = vunpack.c.l.b16 %v5244
      %v5342 = vunpack.c.l.b16 %v5245
      %v5343 = vunpack.c.l.b16 %v5246
      %v5344 = vunpack.c.l.b16 %v5247
      %v5345 = vunpack.c.l.b16 %v5248
      %v5346 = vunpack.c.l.b16 %v5249
      %v5347 = vunpack.c.l.b16 %v5250
      %v5348 = vunpack.c.l.b16 %v5251
      %v5349 = vunpack.c.l.b16 %v5252
      %v5350 = vunpack.c.l.b16 %v5253
      %v5351 = vunpack.c.l.b16 %v5254
      %v5352 = vunpack.c.l.b16 %v5255
      %v5353 = vunpack.c.l.b16 %v5256
      %v5354 = vunpack.c.l.b16 %v5257
      %v5355 = vpack.c.b16 %v5324, %v5323
      %v5356 = vpack.c.b16 %v5326, %v5325
      %v5357 = vpack.c.b16 %v5328, %v5327
      %v5358 = vpack.c.b16 %v5330, %v5329
      %v5359 = vpack.c.b16 %v5332, %v5331
      %v5360 = vpack.c.b16 %v5334, %v5333
      %v5361 = vpack.c.b16 %v5336, %v5335
      %v5362 = vpack.c.b16 %v5338, %v5337
      %v5363 = vpack.c.b16 %v5340, %v5339
      %v5364 = vpack.c.b16 %v5342, %v5341
      %v5365 = vpack.c.b16 %v5344, %v5343
      %v5366 = vpack.c.b16 %v5346, %v5345
      %v5367 = vpack.c.b16 %v5348, %v5347
      %v5368 = vpack.c.b16 %v5350, %v5349
      %v5369 = vpack.c.b16 %v5352, %v5351
      %v5370 = vpack.c.b16 %v5354, %v5353
      %5387 = vmatprep.subr.bf16.mxu0 0
      %5388 = vmatpush1.bf16.msra.mxu0 %v5355
      %5389 = vmatprep.subr.bf16.mxu0 0
      %5390 = vmatpush1.bf16.msra.mxu0 %v5356
      %5391 = vmatprep.subr.bf16.mxu0 0
      %5392 = vmatpush1.bf16.msra.mxu0 %v5357
      %5393 = vmatprep.subr.bf16.mxu0 0
      %5394 = vmatpush1.bf16.msra.mxu0 %v5358
      %5395 = vmatprep.subr.bf16.mxu0 0
      %5396 = vmatpush1.bf16.msra.mxu0 %v5359
      %5397 = vmatprep.subr.bf16.mxu0 0
      %5398 = vmatpush1.bf16.msra.mxu0 %v5360
      %5399 = vmatprep.subr.bf16.mxu0 0
      %5400 = vmatpush1.bf16.msra.mxu0 %v5361
      %5401 = vmatprep.subr.bf16.mxu0 0
      %5402 = vmatpush1.bf16.msra.mxu0 %v5362
      %5403 = vmatprep.subr.bf16.mxu0 0
      %5404 = vmatpush1.bf16.msra.mxu0 %v5363
      %5405 = vmatprep.subr.bf16.mxu0 0
      %5406 = vmatpush1.bf16.msra.mxu0 %v5364
      %5407 = vmatprep.subr.bf16.mxu0 0
      %5408 = vmatpush1.bf16.msra.mxu0 %v5365
      %5409 = vmatprep.subr.bf16.mxu0 0
      %5410 = vmatpush1.bf16.msra.mxu0 %v5366
      %5411 = vmatprep.subr.bf16.mxu0 0
      %5412 = vmatpush1.bf16.msra.mxu0 %v5367
      %5413 = vmatprep.subr.bf16.mxu0 0
      %5414 = vmatpush1.bf16.msra.mxu0 %v5368
      %5415 = vmatprep.subr.bf16.mxu0 0
      %5416 = vmatpush1.bf16.msra.mxu0 %v5369
      %5417 = vmatprep.subr.bf16.mxu0 0
      %5418 = vmatpush1.bf16.msra.mxu0 %v5370
      %5419 = vmatprep.mubr.bf16.mxu0 %v5268
      %5420 = vmatmul.mubr.bf16.gmra.mrb[0].mxu0 %v5265
      %v5421 = vpop.f32.mrb[0].mxu0
      %v5422 = vadd.f32 0.0, %v5421
      %v5423 = vpop.f32.mrb[0].mxu0
      %v5424 = vpop.f32.mrb[0].mxu0
      %v5425 = vadd.f32 0.0, %v5424
      %v5426 = vpop.f32.mrb[0].mxu0
      %5427 = vmatprep.mubr.bf16.mxu0 %v5272
      %5428 = vmatmul.mubr.bf16.gmra.mrb[0].mxu0 %v5270
      %v5429 = vpop.f32.mrb[0].mxu0
      %v5430 = vadd.f32 0.0, %v5429
      %v5431 = vpop.f32.mrb[0].mxu0
      %v5432 = vpop.f32.mrb[0].mxu0
      %v5433 = vadd.f32 0.0, %v5432
      %v5434 = vpop.f32.mrb[0].mxu0
      %5435 = vmatprep.mubr.bf16.mxu0 %v5276
      %5436 = vmatmul.mubr.bf16.gmra.mrb[0].mxu0 %v5274
      %v5437 = vpop.f32.mrb[0].mxu0
      %v5438 = vadd.f32 0.0, %v5437
      %v5439 = vpop.f32.mrb[0].mxu0
      %v5440 = vpop.f32.mrb[0].mxu0
      %v5441 = vadd.f32 0.0, %v5440
      %v5442 = vpop.f32.mrb[0].mxu0
      %5443 = vmatprep.mubr.bf16.mxu0 %v5280
      %5444 = vmatmul.mubr.bf16.gmra.mrb[0].mxu0 %v5278
      %v5445 = vpop.f32.mrb[0].mxu0
      %v5446 = vadd.f32 0.0, %v5445
      %v5447 = vpop.f32.mrb[0].mxu0
      %v5448 = vpop.f32.mrb[0].mxu0
      %v5449 = vadd.f32 0.0, %v5448
      %v5450 = vpop.f32.mrb[0].mxu0
      %5451 = vmatprep.mubr.bf16.mxu0 %v5279
      %5452 = vmatmul.mubr.bf16.gmra.mrb[0].mxu0 %v5277
      %v5453 = vpop.f32.mrb[0].mxu0
      %v5454 = vadd.f32 0.0, %v5453
      %v5455 = vpop.f32.mrb[0].mxu0
      %v5456 = vpop.f32.mrb[0].mxu0
      %v5457 = vpop.f32.mrb[0].mxu0
      %5458 = vdwg.mxu0
      %v5459 = vadd.f32 %v5186, %v5422
      %v5460 = vadd.f32 %v5189, %v5425
      %v5461 = vadd.f32 %v5194, %v5430
      %v5462 = vadd.f32 %v5197, %v5433
      %v5463 = vadd.f32 %v5202, %v5438
      %v5464 = vadd.f32 %v5205, %v5441
      %v5465 = vadd.f32 %v5210, %v5446
      %v5466 = vadd.f32 %v5213, %v5449
      %v5467 = vadd.f32 %v5218, %v5454
      %v5468 = vld [vmem:[#allocation4] sm:$0x80]
      %v5469 = vld [vmem:[#allocation4 + $0x8] sm:$0x80]
      %v5470 = vld [vmem:[#allocation4 + $0x10] sm:$0xff]
      %v5471 = vld [vmem:[#allocation4 + $0x18] sm:$0xff]
      %v5472 = vld [vmem:[#allocation4 + $0x20] sm:$0xff]
      %v5473 = vld [vmem:[#allocation4 + $0x28] sm:$0xff]
      %v5474 = vld [vmem:[#allocation4 + $0x30] sm:$0xff]
      %v5475 = vld [vmem:[#allocation4 + $0x38] sm:$0xff]
      %v5476 = vld [vmem:[#allocation4 + $0x40] sm:$0xff]
      %v5477 = vld [vmem:[#allocation4 + $0x48] sm:$0xff]
      %v5478 = vld [vmem:[#allocation4 + $0x50] sm:$0xf]
      %v5479 = vld [vmem:[#allocation4 + $0x58] sm:$0xf]
      %s5480 = scalar_lea.vmem %s7, 384
      %v5481 = vld [vmem:[%s5480] sm:$0xf]
      %v5482 = vld [vmem:[%s5480 + $0x4] sm:$0xf]
      %v5483 = vld [vmem:[%s5480 + $0x8] sm:$0xf]
      %v5484 = vld [vmem:[%s5480 + $0xc] sm:$0xf]
      %v5485 = vld [vmem:[%s5480 + $0x10] sm:$0xf]
      %v5486 = vld [vmem:[%s5480 + $0x14] sm:$0xf]
      %v5487 = vld [vmem:[%s5480 + $0x18] sm:$0xf]
      %v5488 = vld [vmem:[%s5480 + $0x1c] sm:$0xf]
      %v5489 = vld [vmem:[%s5480 + $0x20] sm:$0xf]
      %v5490 = vld [vmem:[%s5480 + $0x24] sm:$0xf]
      %v5491 = vld [vmem:[%s5480 + $0x28] sm:$0xf]
      %v5492 = vld [vmem:[%s5480 + $0x2c] sm:$0xf]
      %v5493 = vld [vmem:[%s5480 + $0x30] sm:$0xf]
      %v5494 = vld [vmem:[%s5480 + $0x34] sm:$0xf]
      %v5495 = vld [vmem:[%s5480 + $0x38] sm:$0xf]
      %v5496 = vld [vmem:[%s5480 + $0x3c] sm:$0xf]
      %v5497 = vld [vmem:[%s5480 + $0x40] sm:$0xf]
      %v5498 = vld [vmem:[%s5480 + $0x44] sm:$0xf]
      %v5499 = vld [vmem:[%s5480 + $0x48] sm:$0xf]
      %v5500 = vld [vmem:[%s5480 + $0x4c] sm:$0xf]
      %v5501 = vld [vmem:[%s5480 + $0x50] sm:$0xf]
      %v5502 = vld [vmem:[%s5480 + $0x54] sm:$0xf]
      %v5503 = vld [vmem:[%s5480 + $0x58] sm:$0xf]
      %v5504 = vld [vmem:[%s5480 + $0x5c] sm:$0xf]
      %v5505 = vld [vmem:[%s5480 + $0x60] sm:$0xf]
      %v5506 = vld [vmem:[%s5480 + $0x64] sm:$0xf]
      %v5507 = vld [vmem:[%s5480 + $0x68] sm:$0xf]
      %v5508 = vld [vmem:[%s5480 + $0x6c] sm:$0xf]
      %v5509 = vld [vmem:[%s5480 + $0x70] sm:$0xf]
      %v5510 = vld [vmem:[%s5480 + $0x74] sm:$0xf]
      %v5511 = vld [vmem:[%s5480 + $0x78] sm:$0xf]
      %v5512 = vld [vmem:[%s5480 + $0x7c] sm:$0xf]
      %vm5513 = vsmask.f32 256
      %v5515 = vshrl.u32 %v5468, 16
      %v5517 = vrot.slane %v5515, 7
      %v5519 = vshrl.u32 %v5470, 16
      %v5521 = vrot.slane %v5519, 7
      %v5522 = vshll.u32 %v5470, 16
      %v5524 = vor.u32 %v5521, %v5522
      %v5525 = vsel %vm5513, %v5517, %v5524
      %v5527 = vshrl.u32 %v5469, 16
      %v5529 = vrot.slane %v5527, 7
      %v5531 = vshrl.u32 %v5471, 16
      %v5533 = vrot.slane %v5531, 7
      %v5534 = vshll.u32 %v5471, 16
      %v5536 = vor.u32 %v5533, %v5534
      %v5537 = vsel %vm5513, %v5529, %v5536
      %v5539 = vshrl.u32 %v5472, 16
      %v5541 = vrot.slane %v5539, 7
      %v5542 = vshll.u32 %v5472, 16
      %v5544 = vor.u32 %v5541, %v5542
      %v5545 = vsel %vm5513, %v5521, %v5544
      %v5547 = vshrl.u32 %v5473, 16
      %v5549 = vrot.slane %v5547, 7
      %v5550 = vshll.u32 %v5473, 16
      %v5552 = vor.u32 %v5549, %v5550
      %v5553 = vsel %vm5513, %v5533, %v5552
      %v5555 = vshrl.u32 %v5474, 16
      %v5557 = vrot.slane %v5555, 7
      %v5558 = vshll.u32 %v5474, 16
      %v5560 = vor.u32 %v5557, %v5558
      %v5561 = vsel %vm5513, %v5541, %v5560
      %v5563 = vshrl.u32 %v5475, 16
      %v5565 = vrot.slane %v5563, 7
      %v5566 = vshll.u32 %v5475, 16
      %v5568 = vor.u32 %v5565, %v5566
      %v5569 = vsel %vm5513, %v5549, %v5568
      %v5571 = vshrl.u32 %v5476, 16
      %v5573 = vrot.slane %v5571, 7
      %v5574 = vshll.u32 %v5476, 16
      %v5576 = vor.u32 %v5573, %v5574
      %v5577 = vsel %vm5513, %v5557, %v5576
      %v5579 = vshrl.u32 %v5477, 16
      %v5581 = vrot.slane %v5579, 7
      %v5582 = vshll.u32 %v5477, 16
      %v5584 = vor.u32 %v5581, %v5582
      %v5585 = vsel %vm5513, %v5565, %v5584
      %v5587 = vshrl.u32 %v5478, 16
      %v5589 = vrot.slane %v5587, 7
      %v5590 = vshll.u32 %v5478, 16
      %v5592 = vor.u32 %v5589, %v5590
      %v5593 = vsel %vm5513, %v5573, %v5592
      %v5595 = vshrl.u32 %v5479, 16
      %v5597 = vrot.slane %v5595, 7
      %v5598 = vshll.u32 %v5479, 16
      %v5600 = vor.u32 %v5597, %v5598
      %v5601 = vsel %vm5513, %v5581, %v5600
      %v5644 = vunpack.c.l.b16 %v5481
      %v5645 = vunpack.c.l.b16 %v5482
      %v5646 = vunpack.c.l.b16 %v5483
      %v5647 = vunpack.c.l.b16 %v5484
      %v5648 = vunpack.c.l.b16 %v5485
      %v5649 = vunpack.c.l.b16 %v5486
      %v5650 = vunpack.c.l.b16 %v5487
      %v5651 = vunpack.c.l.b16 %v5488
      %v5652 = vunpack.c.l.b16 %v5489
      %v5653 = vunpack.c.l.b16 %v5490
      %v5654 = vunpack.c.l.b16 %v5491
      %v5655 = vunpack.c.l.b16 %v5492
      %v5656 = vunpack.c.l.b16 %v5493
      %v5657 = vunpack.c.l.b16 %v5494
      %v5658 = vunpack.c.l.b16 %v5495
      %v5659 = vunpack.c.l.b16 %v5496
      %v5660 = vunpack.c.l.b16 %v5497
      %v5661 = vunpack.c.l.b16 %v5498
      %v5662 = vunpack.c.l.b16 %v5499
      %v5663 = vunpack.c.l.b16 %v5500
      %v5664 = vunpack.c.l.b16 %v5501
      %v5665 = vunpack.c.l.b16 %v5502
      %v5666 = vunpack.c.l.b16 %v5503
      %v5667 = vunpack.c.l.b16 %v5504
      %v5668 = vunpack.c.l.b16 %v5505
      %v5669 = vunpack.c.l.b16 %v5506
      %v5670 = vunpack.c.l.b16 %v5507
      %v5671 = vunpack.c.l.b16 %v5508
      %v5672 = vunpack.c.l.b16 %v5509
      %v5673 = vunpack.c.l.b16 %v5510
      %v5674 = vunpack.c.l.b16 %v5511
      %v5675 = vunpack.c.l.b16 %v5512
      %v5676 = vpack.c.b16 %v5645, %v5644
      %v5677 = vpack.c.b16 %v5647, %v5646
      %v5678 = vpack.c.b16 %v5649, %v5648
      %v5679 = vpack.c.b16 %v5651, %v5650
      %v5680 = vpack.c.b16 %v5653, %v5652
      %v5681 = vpack.c.b16 %v5655, %v5654
      %v5682 = vpack.c.b16 %v5657, %v5656
      %v5683 = vpack.c.b16 %v5659, %v5658
      %v5684 = vpack.c.b16 %v5661, %v5660
      %v5685 = vpack.c.b16 %v5663, %v5662
      %v5686 = vpack.c.b16 %v5665, %v5664
      %v5687 = vpack.c.b16 %v5667, %v5666
      %v5688 = vpack.c.b16 %v5669, %v5668
      %v5689 = vpack.c.b16 %v5671, %v5670
      %v5690 = vpack.c.b16 %v5673, %v5672
      %v5691 = vpack.c.b16 %v5675, %v5674
      %5708 = vmatprep.subr.bf16.mxu0 0
      %5709 = vmatpush1.bf16.msra.mxu0 %v5676
      %5710 = vmatprep.subr.bf16.mxu0 0
      %5711 = vmatpush1.bf16.msra.mxu0 %v5677
      %5712 = vmatprep.subr.bf16.mxu0 0
      %5713 = vmatpush1.bf16.msra.mxu0 %v5678
      %5714 = vmatprep.subr.bf16.mxu0 0
      %5715 = vmatpush1.bf16.msra.mxu0 %v5679
      %5716 = vmatprep.subr.bf16.mxu0 0
      %5717 = vmatpush1.bf16.msra.mxu0 %v5680
      %5718 = vmatprep.subr.bf16.mxu0 0
      %5719 = vmatpush1.bf16.msra.mxu0 %v5681
      %5720 = vmatprep.subr.bf16.mxu0 0
      %5721 = vmatpush1.bf16.msra.mxu0 %v5682
      %5722 = vmatprep.subr.bf16.mxu0 0
      %5723 = vmatpush1.bf16.msra.mxu0 %v5683
      %5724 = vmatprep.subr.bf16.mxu0 0
      %5725 = vmatpush1.bf16.msra.mxu0 %v5684
      %5726 = vmatprep.subr.bf16.mxu0 0
      %5727 = vmatpush1.bf16.msra.mxu0 %v5685
      %5728 = vmatprep.subr.bf16.mxu0 0
      %5729 = vmatpush1.bf16.msra.mxu0 %v5686
      %5730 = vmatprep.subr.bf16.mxu0 0
      %5731 = vmatpush1.bf16.msra.mxu0 %v5687
      %5732 = vmatprep.subr.bf16.mxu0 0
      %5733 = vmatpush1.bf16.msra.mxu0 %v5688
      %5734 = vmatprep.subr.bf16.mxu0 0
      %5735 = vmatpush1.bf16.msra.mxu0 %v5689
      %5736 = vmatprep.subr.bf16.mxu0 0
      %5737 = vmatpush1.bf16.msra.mxu0 %v5690
      %5738 = vmatprep.subr.bf16.mxu0 0
      %5739 = vmatpush1.bf16.msra.mxu0 %v5691
      %5740 = vmatprep.mubr.bf16.mxu0 %v5537
      %5741 = vmatmul.mubr.bf16.gmra.mrb[0].mxu0 %v5525
      %v5742 = vpop.f32.mrb[0].mxu0
      %v5743 = vadd.f32 0.0, %v5742
      %v5744 = vpop.f32.mrb[0].mxu0
      %v5745 = vpop.f32.mrb[0].mxu0
      %v5746 = vadd.f32 0.0, %v5745
      %v5747 = vpop.f32.mrb[0].mxu0
      %5748 = vmatprep.mubr.bf16.mxu0 %v5553
      %5749 = vmatmul.mubr.bf16.gmra.mrb[0].mxu0 %v5545
      %v5750 = vpop.f32.mrb[0].mxu0
      %v5751 = vadd.f32 0.0, %v5750
      %v5752 = vpop.f32.mrb[0].mxu0
      %v5753 = vpop.f32.mrb[0].mxu0
      %v5754 = vadd.f32 0.0, %v5753
      %v5755 = vpop.f32.mrb[0].mxu0
      %5756 = vmatprep.mubr.bf16.mxu0 %v5569
      %5757 = vmatmul.mubr.bf16.gmra.mrb[0].mxu0 %v5561
      %v5758 = vpop.f32.mrb[0].mxu0
      %v5759 = vadd.f32 0.0, %v5758
      %v5760 = vpop.f32.mrb[0].mxu0
      %v5761 = vpop.f32.mrb[0].mxu0
      %v5762 = vadd.f32 0.0, %v5761
      %v5763 = vpop.f32.mrb[0].mxu0
      %5764 = vmatprep.mubr.bf16.mxu0 %v5585
      %5765 = vmatmul.mubr.bf16.gmra.mrb[0].mxu0 %v5577
      %v5766 = vpop.f32.mrb[0].mxu0
      %v5767 = vadd.f32 0.0, %v5766
      %v5768 = vpop.f32.mrb[0].mxu0
      %v5769 = vpop.f32.mrb[0].mxu0
      %v5770 = vadd.f32 0.0, %v5769
      %v5771 = vpop.f32.mrb[0].mxu0
      %5772 = vmatprep.mubr.bf16.mxu0 %v5601
      %5773 = vmatmul.mubr.bf16.gmra.mrb[0].mxu0 %v5593
      %v5774 = vpop.f32.mrb[0].mxu0
      %v5775 = vadd.f32 0.0, %v5774
      %v5776 = vpop.f32.mrb[0].mxu0
      %v5777 = vpop.f32.mrb[0].mxu0
      %v5778 = vpop.f32.mrb[0].mxu0
      %5779 = vdwg.mxu0
      %v5780 = vadd.f32 %v5459, %v5743
      %v5781 = vadd.f32 %v5460, %v5746
      %v5782 = vadd.f32 %v5461, %v5751
      %v5783 = vadd.f32 %v5462, %v5754
      %v5784 = vadd.f32 %v5463, %v5759
      %v5785 = vadd.f32 %v5464, %v5762
      %v5786 = vadd.f32 %v5465, %v5767
      %v5787 = vadd.f32 %v5466, %v5770
      %v5788 = vadd.f32 %v5467, %v5775
      %s5789 = scalar_lea.vmem %s7, 512
      %v5790 = vld [vmem:[%s5789] sm:$0xf]
      %v5791 = vld [vmem:[%s5789 + $0x4] sm:$0xf]
      %v5792 = vld [vmem:[%s5789 + $0x8] sm:$0xf]
      %v5793 = vld [vmem:[%s5789 + $0xc] sm:$0xf]
      %v5794 = vld [vmem:[%s5789 + $0x10] sm:$0xf]
      %v5795 = vld [vmem:[%s5789 + $0x14] sm:$0xf]
      %v5796 = vld [vmem:[%s5789 + $0x18] sm:$0xf]
      %v5797 = vld [vmem:[%s5789 + $0x1c] sm:$0xf]
      %v5798 = vld [vmem:[%s5789 + $0x20] sm:$0xf]
      %v5799 = vld [vmem:[%s5789 + $0x24] sm:$0xf]
      %v5800 = vld [vmem:[%s5789 + $0x28] sm:$0xf]
      %v5801 = vld [vmem:[%s5789 + $0x2c] sm:$0xf]
      %v5802 = vld [vmem:[%s5789 + $0x30] sm:$0xf]
      %v5803 = vld [vmem:[%s5789 + $0x34] sm:$0xf]
      %v5804 = vld [vmem:[%s5789 + $0x38] sm:$0xf]
      %v5805 = vld [vmem:[%s5789 + $0x3c] sm:$0xf]
      %v5806 = vld [vmem:[%s5789 + $0x40] sm:$0xf]
      %v5807 = vld [vmem:[%s5789 + $0x44] sm:$0xf]
      %v5808 = vld [vmem:[%s5789 + $0x48] sm:$0xf]
      %v5809 = vld [vmem:[%s5789 + $0x4c] sm:$0xf]
      %v5810 = vld [vmem:[%s5789 + $0x50] sm:$0xf]
      %v5811 = vld [vmem:[%s5789 + $0x54] sm:$0xf]
      %v5812 = vld [vmem:[%s5789 + $0x58] sm:$0xf]
      %v5813 = vld [vmem:[%s5789 + $0x5c] sm:$0xf]
      %v5814 = vld [vmem:[%s5789 + $0x60] sm:$0xf]
      %v5815 = vld [vmem:[%s5789 + $0x64] sm:$0xf]
      %v5816 = vld [vmem:[%s5789 + $0x68] sm:$0xf]
      %v5817 = vld [vmem:[%s5789 + $0x6c] sm:$0xf]
      %v5818 = vld [vmem:[%s5789 + $0x70] sm:$0xf]
      %v5819 = vld [vmem:[%s5789 + $0x74] sm:$0xf]
      %v5820 = vld [vmem:[%s5789 + $0x78] sm:$0xf]
      %v5821 = vld [vmem:[%s5789 + $0x7c] sm:$0xf]
      %v5854 = vunpack.c.l.b16 %v5790
      %v5855 = vunpack.c.l.b16 %v5791
      %v5856 = vunpack.c.l.b16 %v5792
      %v5857 = vunpack.c.l.b16 %v5793
      %v5858 = vunpack.c.l.b16 %v5794
      %v5859 = vunpack.c.l.b16 %v5795
      %v5860 = vunpack.c.l.b16 %v5796
      %v5861 = vunpack.c.l.b16 %v5797
      %v5862 = vunpack.c.l.b16 %v5798
      %v5863 = vunpack.c.l.b16 %v5799
      %v5864 = vunpack.c.l.b16 %v5800
      %v5865 = vunpack.c.l.b16 %v5801
      %v5866 = vunpack.c.l.b16 %v5802
      %v5867 = vunpack.c.l.b16 %v5803
      %v5868 = vunpack.c.l.b16 %v5804
      %v5869 = vunpack.c.l.b16 %v5805
      %v5870 = vunpack.c.l.b16 %v5806
      %v5871 = vunpack.c.l.b16 %v5807
      %v5872 = vunpack.c.l.b16 %v5808
      %v5873 = vunpack.c.l.b16 %v5809
      %v5874 = vunpack.c.l.b16 %v5810
      %v5875 = vunpack.c.l.b16 %v5811
      %v5876 = vunpack.c.l.b16 %v5812
      %v5877 = vunpack.c.l.b16 %v5813
      %v5878 = vunpack.c.l.b16 %v5814
      %v5879 = vunpack.c.l.b16 %v5815
      %v5880 = vunpack.c.l.b16 %v5816
      %v5881 = vunpack.c.l.b16 %v5817
      %v5882 = vunpack.c.l.b16 %v5818
      %v5883 = vunpack.c.l.b16 %v5819
      %v5884 = vunpack.c.l.b16 %v5820
      %v5885 = vunpack.c.l.b16 %v5821
      %v5886 = vpack.c.b16 %v5855, %v5854
      %v5887 = vpack.c.b16 %v5857, %v5856
      %v5888 = vpack.c.b16 %v5859, %v5858
      %v5889 = vpack.c.b16 %v5861, %v5860
      %v5890 = vpack.c.b16 %v5863, %v5862
      %v5891 = vpack.c.b16 %v5865, %v5864
      %v5892 = vpack.c.b16 %v5867, %v5866
      %v5893 = vpack.c.b16 %v5869, %v5868
      %v5894 = vpack.c.b16 %v5871, %v5870
      %v5895 = vpack.c.b16 %v5873, %v5872
      %v5896 = vpack.c.b16 %v5875, %v5874
      %v5897 = vpack.c.b16 %v5877, %v5876
      %v5898 = vpack.c.b16 %v5879, %v5878
      %v5899 = vpack.c.b16 %v5881, %v5880
      %v5900 = vpack.c.b16 %v5883, %v5882
      %v5901 = vpack.c.b16 %v5885, %v5884
      %5918 = vmatprep.subr.bf16.mxu0 0
      %5919 = vmatpush1.bf16.msra.mxu0 %v5886
      %5920 = vmatprep.subr.bf16.mxu0 0
      %5921 = vmatpush1.bf16.msra.mxu0 %v5887
      %5922 = vmatprep.subr.bf16.mxu0 0
      %5923 = vmatpush1.bf16.msra.mxu0 %v5888
      %5924 = vmatprep.subr.bf16.mxu0 0
      %5925 = vmatpush1.bf16.msra.mxu0 %v5889
      %5926 = vmatprep.subr.bf16.mxu0 0
      %5927 = vmatpush1.bf16.msra.mxu0 %v5890
      %5928 = vmatprep.subr.bf16.mxu0 0
      %5929 = vmatpush1.bf16.msra.mxu0 %v5891
      %5930 = vmatprep.subr.bf16.mxu0 0
      %5931 = vmatpush1.bf16.msra.mxu0 %v5892
      %5932 = vmatprep.subr.bf16.mxu0 0
      %5933 = vmatpush1.bf16.msra.mxu0 %v5893
      %5934 = vmatprep.subr.bf16.mxu0 0
      %5935 = vmatpush1.bf16.msra.mxu0 %v5894
      %5936 = vmatprep.subr.bf16.mxu0 0
      %5937 = vmatpush1.bf16.msra.mxu0 %v5895
      %5938 = vmatprep.subr.bf16.mxu0 0
      %5939 = vmatpush1.bf16.msra.mxu0 %v5896
      %5940 = vmatprep.subr.bf16.mxu0 0
      %5941 = vmatpush1.bf16.msra.mxu0 %v5897
      %5942 = vmatprep.subr.bf16.mxu0 0
      %5943 = vmatpush1.bf16.msra.mxu0 %v5898
      %5944 = vmatprep.subr.bf16.mxu0 0
      %5945 = vmatpush1.bf16.msra.mxu0 %v5899
      %5946 = vmatprep.subr.bf16.mxu0 0
      %5947 = vmatpush1.bf16.msra.mxu0 %v5900
      %5948 = vmatprep.subr.bf16.mxu0 0
      %5949 = vmatpush1.bf16.msra.mxu0 %v5901
      %5950 = vmatprep.mubr.bf16.mxu0 %v5471
      %5951 = vmatmul.mubr.bf16.gmra.mrb[0].mxu0 %v5470
      %v5952 = vpop.f32.mrb[0].mxu0
      %v5953 = vadd.f32 0.0, %v5952
      %v5954 = vpop.f32.mrb[0].mxu0
      %v5955 = vpop.f32.mrb[0].mxu0
      %v5956 = vadd.f32 0.0, %v5955
      %v5957 = vpop.f32.mrb[0].mxu0
      %5958 = vmatprep.mubr.bf16.mxu0 %v5473
      %5959 = vmatmul.mubr.bf16.gmra.mrb[0].mxu0 %v5472
      %v5960 = vpop.f32.mrb[0].mxu0
      %v5961 = vadd.f32 0.0, %v5960
      %v5962 = vpop.f32.mrb[0].mxu0
      %v5963 = vpop.f32.mrb[0].mxu0
      %v5964 = vadd.f32 0.0, %v5963
      %v5965 = vpop.f32.mrb[0].mxu0
      %5966 = vmatprep.mubr.bf16.mxu0 %v5475
      %5967 = vmatmul.mubr.bf16.gmra.mrb[0].mxu0 %v5474
      %v5968 = vpop.f32.mrb[0].mxu0
      %v5969 = vadd.f32 0.0, %v5968
      %v5970 = vpop.f32.mrb[0].mxu0
      %v5971 = vpop.f32.mrb[0].mxu0
      %v5972 = vadd.f32 0.0, %v5971
      %v5973 = vpop.f32.mrb[0].mxu0
      %5974 = vmatprep.mubr.bf16.mxu0 %v5477
      %5975 = vmatmul.mubr.bf16.gmra.mrb[0].mxu0 %v5476
      %v5976 = vpop.f32.mrb[0].mxu0
      %v5977 = vadd.f32 0.0, %v5976
      %v5978 = vpop.f32.mrb[0].mxu0
      %v5979 = vpop.f32.mrb[0].mxu0
      %v5980 = vadd.f32 0.0, %v5979
      %v5981 = vpop.f32.mrb[0].mxu0
      %5982 = vmatprep.mubr.bf16.mxu0 %v5479
      %5983 = vmatmul.mubr.bf16.gmra.mrb[0].mxu0 %v5478
      %v5984 = vpop.f32.mrb[0].mxu0
      %v5985 = vadd.f32 0.0, %v5984
      %v5986 = vpop.f32.mrb[0].mxu0
      %v5987 = vpop.f32.mrb[0].mxu0
      %v5988 = vpop.f32.mrb[0].mxu0
      %5989 = vdwg.mxu0
      %v5990 = vadd.f32 %v5780, %v5953
      %v5991 = vadd.f32 %v5781, %v5956
      %v5992 = vadd.f32 %v5782, %v5961
      %v5993 = vadd.f32 %v5783, %v5964
      %v5994 = vadd.f32 %v5784, %v5969
      %v5995 = vadd.f32 %v5785, %v5972
      %v5996 = vadd.f32 %v5786, %v5977
      %v5997 = vadd.f32 %v5787, %v5980
      %v5998 = vadd.f32 %v5788, %v5985
      %v5999 = vld [vmem:[#allocation4 + $0x50] sm:$0x1f]
      %v6000 = vld [vmem:[#allocation4 + $0x58] sm:$0x1f]
      %s6001 = scalar_lea.vmem %s7, 640
      %v6002 = vld [vmem:[%s6001] sm:$0xf]
      %v6003 = vld [vmem:[%s6001 + $0x4] sm:$0xf]
      %v6004 = vld [vmem:[%s6001 + $0x8] sm:$0xf]
      %v6005 = vld [vmem:[%s6001 + $0xc] sm:$0xf]
      %v6006 = vld [vmem:[%s6001 + $0x10] sm:$0xf]
      %v6007 = vld [vmem:[%s6001 + $0x14] sm:$0xf]
      %v6008 = vld [vmem:[%s6001 + $0x18] sm:$0xf]
      %v6009 = vld [vmem:[%s6001 + $0x1c] sm:$0xf]
      %v6010 = vld [vmem:[%s6001 + $0x20] sm:$0xf]
      %v6011 = vld [vmem:[%s6001 + $0x24] sm:$0xf]
      %v6012 = vld [vmem:[%s6001 + $0x28] sm:$0xf]
      %v6013 = vld [vmem:[%s6001 + $0x2c] sm:$0xf]
      %v6014 = vld [vmem:[%s6001 + $0x30] sm:$0xf]
      %v6015 = vld [vmem:[%s6001 + $0x34] sm:$0xf]
      %v6016 = vld [vmem:[%s6001 + $0x38] sm:$0xf]
      %v6017 = vld [vmem:[%s6001 + $0x3c] sm:$0xf]
      %v6018 = vld [vmem:[%s6001 + $0x40] sm:$0xf]
      %v6019 = vld [vmem:[%s6001 + $0x44] sm:$0xf]
      %v6020 = vld [vmem:[%s6001 + $0x48] sm:$0xf]
      %v6021 = vld [vmem:[%s6001 + $0x4c] sm:$0xf]
      %v6022 = vld [vmem:[%s6001 + $0x50] sm:$0xf]
      %v6023 = vld [vmem:[%s6001 + $0x54] sm:$0xf]
      %v6024 = vld [vmem:[%s6001 + $0x58] sm:$0xf]
      %v6025 = vld [vmem:[%s6001 + $0x5c] sm:$0xf]
      %v6026 = vld [vmem:[%s6001 + $0x60] sm:$0xf]
      %v6027 = vld [vmem:[%s6001 + $0x64] sm:$0xf]
      %v6028 = vld [vmem:[%s6001 + $0x68] sm:$0xf]
      %v6029 = vld [vmem:[%s6001 + $0x6c] sm:$0xf]
      %v6030 = vld [vmem:[%s6001 + $0x70] sm:$0xf]
      %v6031 = vld [vmem:[%s6001 + $0x74] sm:$0xf]
      %v6032 = vld [vmem:[%s6001 + $0x78] sm:$0xf]
      %v6033 = vld [vmem:[%s6001 + $0x7c] sm:$0xf]
      %v6034 = vrot.slane %v5522, 1
      %v6035 = vor.u32 %v5519, %v6034
      %v6036 = vrot.slane %v5542, 1
      %v6037 = vsel %vm1632, %v6035, %v6036
      %v6038 = vrot.slane %v5534, 1
      %v6039 = vor.u32 %v5531, %v6038
      %v6040 = vrot.slane %v5550, 1
      %v6041 = vsel %vm1632, %v6039, %v6040
      %v6042 = vor.u32 %v5539, %v6036
      %v6043 = vrot.slane %v5558, 1
      %v6044 = vsel %vm1632, %v6042, %v6043
      %v6045 = vor.u32 %v5547, %v6040
      %v6046 = vrot.slane %v5566, 1
      %v6047 = vsel %vm1632, %v6045, %v6046
      %v6048 = vor.u32 %v5555, %v6043
      %v6049 = vrot.slane %v5574, 1
      %v6050 = vsel %vm1632, %v6048, %v6049
      %v6051 = vor.u32 %v5563, %v6046
      %v6052 = vrot.slane %v5582, 1
      %v6053 = vsel %vm1632, %v6051, %v6052
      %v6054 = vor.u32 %v5571, %v6049
      %v6056 = vshll.u32 %v5999, 16
      %v6058 = vrot.slane %v6056, 1
      %v6059 = vsel %vm1632, %v6054, %v6058
      %v6060 = vor.u32 %v5579, %v6052
      %v6062 = vshll.u32 %v6000, 16
      %v6064 = vrot.slane %v6062, 1
      %v6065 = vsel %vm1632, %v6060, %v6064
      %v6066 = vshrl.u32 %v5999, 16
      %v6068 = vor.u32 %v6066, %v6058
      %v6069 = vshrl.u32 %v6000, 16
      %v6071 = vor.u32 %v6069, %v6064
      %v6114 = vunpack.c.l.b16 %v6002
      %v6115 = vunpack.c.l.b16 %v6003
      %v6116 = vunpack.c.l.b16 %v6004
      %v6117 = vunpack.c.l.b16 %v6005
      %v6118 = vunpack.c.l.b16 %v6006
      %v6119 = vunpack.c.l.b16 %v6007
      %v6120 = vunpack.c.l.b16 %v6008
      %v6121 = vunpack.c.l.b16 %v6009
      %v6122 = vunpack.c.l.b16 %v6010
      %v6123 = vunpack.c.l.b16 %v6011
      %v6124 = vunpack.c.l.b16 %v6012
      %v6125 = vunpack.c.l.b16 %v6013
      %v6126 = vunpack.c.l.b16 %v6014
      %v6127 = vunpack.c.l.b16 %v6015
      %v6128 = vunpack.c.l.b16 %v6016
      %v6129 = vunpack.c.l.b16 %v6017
      %v6130 = vunpack.c.l.b16 %v6018
      %v6131 = vunpack.c.l.b16 %v6019
      %v6132 = vunpack.c.l.b16 %v6020
      %v6133 = vunpack.c.l.b16 %v6021
      %v6134 = vunpack.c.l.b16 %v6022
      %v6135 = vunpack.c.l.b16 %v6023
      %v6136 = vunpack.c.l.b16 %v6024
      %v6137 = vunpack.c.l.b16 %v6025
      %v6138 = vunpack.c.l.b16 %v6026
      %v6139 = vunpack.c.l.b16 %v6027
      %v6140 = vunpack.c.l.b16 %v6028
      %v6141 = vunpack.c.l.b16 %v6029
      %v6142 = vunpack.c.l.b16 %v6030
      %v6143 = vunpack.c.l.b16 %v6031
      %v6144 = vunpack.c.l.b16 %v6032
      %v6145 = vunpack.c.l.b16 %v6033
      %v6146 = vpack.c.b16 %v6115, %v6114
      %v6147 = vpack.c.b16 %v6117, %v6116
      %v6148 = vpack.c.b16 %v6119, %v6118
      %v6149 = vpack.c.b16 %v6121, %v6120
      %v6150 = vpack.c.b16 %v6123, %v6122
      %v6151 = vpack.c.b16 %v6125, %v6124
      %v6152 = vpack.c.b16 %v6127, %v6126
      %v6153 = vpack.c.b16 %v6129, %v6128
      %v6154 = vpack.c.b16 %v6131, %v6130
      %v6155 = vpack.c.b16 %v6133, %v6132
      %v6156 = vpack.c.b16 %v6135, %v6134
      %v6157 = vpack.c.b16 %v6137, %v6136
      %v6158 = vpack.c.b16 %v6139, %v6138
      %v6159 = vpack.c.b16 %v6141, %v6140
      %v6160 = vpack.c.b16 %v6143, %v6142
      %v6161 = vpack.c.b16 %v6145, %v6144
      %6178 = vmatprep.subr.bf16.mxu0 0
      %6179 = vmatpush1.bf16.msra.mxu0 %v6146
      %6180 = vmatprep.subr.bf16.mxu0 0
      %6181 = vmatpush1.bf16.msra.mxu0 %v6147
      %6182 = vmatprep.subr.bf16.mxu0 0
      %6183 = vmatpush1.bf16.msra.mxu0 %v6148
      %6184 = vmatprep.subr.bf16.mxu0 0
      %6185 = vmatpush1.bf16.msra.mxu0 %v6149
      %6186 = vmatprep.subr.bf16.mxu0 0
      %6187 = vmatpush1.bf16.msra.mxu0 %v6150
      %6188 = vmatprep.subr.bf16.mxu0 0
      %6189 = vmatpush1.bf16.msra.mxu0 %v6151
      %6190 = vmatprep.subr.bf16.mxu0 0
      %6191 = vmatpush1.bf16.msra.mxu0 %v6152
      %6192 = vmatprep.subr.bf16.mxu0 0
      %6193 = vmatpush1.bf16.msra.mxu0 %v6153
      %6194 = vmatprep.subr.bf16.mxu0 0
      %6195 = vmatpush1.bf16.msra.mxu0 %v6154
      %6196 = vmatprep.subr.bf16.mxu0 0
      %6197 = vmatpush1.bf16.msra.mxu0 %v6155
      %6198 = vmatprep.subr.bf16.mxu0 0
      %6199 = vmatpush1.bf16.msra.mxu0 %v6156
      %6200 = vmatprep.subr.bf16.mxu0 0
      %6201 = vmatpush1.bf16.msra.mxu0 %v6157
      %6202 = vmatprep.subr.bf16.mxu0 0
      %6203 = vmatpush1.bf16.msra.mxu0 %v6158
      %6204 = vmatprep.subr.bf16.mxu0 0
      %6205 = vmatpush1.bf16.msra.mxu0 %v6159
      %6206 = vmatprep.subr.bf16.mxu0 0
      %6207 = vmatpush1.bf16.msra.mxu0 %v6160
      %6208 = vmatprep.subr.bf16.mxu0 0
      %6209 = vmatpush1.bf16.msra.mxu0 %v6161
      %6210 = vmatprep.mubr.bf16.mxu0 %v6041
      %6211 = vmatmul.mubr.bf16.gmra.mrb[0].mxu0 %v6037
      %v6212 = vpop.f32.mrb[0].mxu0
      %v6213 = vadd.f32 0.0, %v6212
      %v6214 = vpop.f32.mrb[0].mxu0
      %v6215 = vpop.f32.mrb[0].mxu0
      %v6216 = vadd.f32 0.0, %v6215
      %v6217 = vpop.f32.mrb[0].mxu0
      %6218 = vmatprep.mubr.bf16.mxu0 %v6047
      %6219 = vmatmul.mubr.bf16.gmra.mrb[0].mxu0 %v6044
      %v6220 = vpop.f32.mrb[0].mxu0
      %v6221 = vadd.f32 0.0, %v6220
      %v6222 = vpop.f32.mrb[0].mxu0
      %v6223 = vpop.f32.mrb[0].mxu0
      %v6224 = vadd.f32 0.0, %v6223
      %v6225 = vpop.f32.mrb[0].mxu0
      %6226 = vmatprep.mubr.bf16.mxu0 %v6053
      %6227 = vmatmul.mubr.bf16.gmra.mrb[0].mxu0 %v6050
      %v6228 = vpop.f32.mrb[0].mxu0
      %v6229 = vadd.f32 0.0, %v6228
      %v6230 = vpop.f32.mrb[0].mxu0
      %v6231 = vpop.f32.mrb[0].mxu0
      %v6232 = vadd.f32 0.0, %v6231
      %v6233 = vpop.f32.mrb[0].mxu0
      %6234 = vmatprep.mubr.bf16.mxu0 %v6065
      %6235 = vmatmul.mubr.bf16.gmra.mrb[0].mxu0 %v6059
      %v6236 = vpop.f32.mrb[0].mxu0
      %v6237 = vadd.f32 0.0, %v6236
      %v6238 = vpop.f32.mrb[0].mxu0
      %v6239 = vpop.f32.mrb[0].mxu0
      %v6240 = vadd.f32 0.0, %v6239
      %v6241 = vpop.f32.mrb[0].mxu0
      %6242 = vmatprep.mubr.bf16.mxu0 %v6071
      %6243 = vmatmul.mubr.bf16.gmra.mrb[0].mxu0 %v6068
      %v6244 = vpop.f32.mrb[0].mxu0
      %v6245 = vadd.f32 0.0, %v6244
      %v6246 = vpop.f32.mrb[0].mxu0
      %v6247 = vpop.f32.mrb[0].mxu0
      %v6248 = vpop.f32.mrb[0].mxu0
      %6249 = vdwg.mxu0
      %v6250 = vadd.f32 %v5990, %v6213
      %v6251 = vadd.f32 %v5991, %v6216
      %v6252 = vadd.f32 %v5992, %v6221
      %v6253 = vadd.f32 %v5993, %v6224
      %v6254 = vadd.f32 %v5994, %v6229
      %v6255 = vadd.f32 %v5995, %v6232
      %v6256 = vadd.f32 %v5996, %v6237
      %v6257 = vadd.f32 %v5997, %v6240
      %v6258 = vadd.f32 %v5998, %v6245
      %v6259 = vld [vmem:[#allocation4 + $0x10] sm:$0xf0]
      %v6260 = vld [vmem:[#allocation4 + $0x18] sm:$0xf0]
      %v6261 = vld [vmem:[#allocation4 + $0x50] sm:$0xff]
      %v6262 = vld [vmem:[#allocation4 + $0x58] sm:$0xff]
      %s6263 = scalar_lea.vmem %s7, 768
      %v6264 = vld [vmem:[%s6263] sm:$0xf]
      %v6265 = vld [vmem:[%s6263 + $0x4] sm:$0xf]
      %v6266 = vld [vmem:[%s6263 + $0x8] sm:$0xf]
      %v6267 = vld [vmem:[%s6263 + $0xc] sm:$0xf]
      %v6268 = vld [vmem:[%s6263 + $0x10] sm:$0xf]
      %v6269 = vld [vmem:[%s6263 + $0x14] sm:$0xf]
      %v6270 = vld [vmem:[%s6263 + $0x18] sm:$0xf]
      %v6271 = vld [vmem:[%s6263 + $0x1c] sm:$0xf]
      %v6272 = vld [vmem:[%s6263 + $0x20] sm:$0xf]
      %v6273 = vld [vmem:[%s6263 + $0x24] sm:$0xf]
      %v6274 = vld [vmem:[%s6263 + $0x28] sm:$0xf]
      %v6275 = vld [vmem:[%s6263 + $0x2c] sm:$0xf]
      %v6276 = vld [vmem:[%s6263 + $0x30] sm:$0xf]
      %v6277 = vld [vmem:[%s6263 + $0x34] sm:$0xf]
      %v6278 = vld [vmem:[%s6263 + $0x38] sm:$0xf]
      %v6279 = vld [vmem:[%s6263 + $0x3c] sm:$0xf]
      %v6280 = vld [vmem:[%s6263 + $0x40] sm:$0xf]
      %v6281 = vld [vmem:[%s6263 + $0x44] sm:$0xf]
      %v6282 = vld [vmem:[%s6263 + $0x48] sm:$0xf]
      %v6283 = vld [vmem:[%s6263 + $0x4c] sm:$0xf]
      %v6284 = vld [vmem:[%s6263 + $0x50] sm:$0xf]
      %v6285 = vld [vmem:[%s6263 + $0x54] sm:$0xf]
      %v6286 = vld [vmem:[%s6263 + $0x58] sm:$0xf]
      %v6287 = vld [vmem:[%s6263 + $0x5c] sm:$0xf]
      %v6288 = vld [vmem:[%s6263 + $0x60] sm:$0xf]
      %v6289 = vld [vmem:[%s6263 + $0x64] sm:$0xf]
      %v6290 = vld [vmem:[%s6263 + $0x68] sm:$0xf]
      %v6291 = vld [vmem:[%s6263 + $0x6c] sm:$0xf]
      %v6292 = vld [vmem:[%s6263 + $0x70] sm:$0xf]
      %v6293 = vld [vmem:[%s6263 + $0x74] sm:$0xf]
      %v6294 = vld [vmem:[%s6263 + $0x78] sm:$0xf]
      %v6295 = vld [vmem:[%s6263 + $0x7c] sm:$0xf]
      %v6306 = vrot.slane %v6259, 4
      %v6307 = vrot.slane %v5472, 4
      %v6308 = vsel %vm5262, %v6306, %v6307
      %v6309 = vrot.slane %v6260, 4
      %v6310 = vrot.slane %v5473, 4
      %v6311 = vsel %vm5262, %v6309, %v6310
      %v6312 = vrot.slane %v5474, 4
      %v6313 = vsel %vm5262, %v6307, %v6312
      %v6314 = vrot.slane %v5475, 4
      %v6315 = vsel %vm5262, %v6310, %v6314
      %v6316 = vrot.slane %v5476, 4
      %v6317 = vsel %vm5262, %v6312, %v6316
      %v6318 = vrot.slane %v5477, 4
      %v6319 = vsel %vm5262, %v6314, %v6318
      %v6320 = vrot.slane %v6261, 4
      %v6321 = vsel %vm5262, %v6316, %v6320
      %v6322 = vrot.slane %v6262, 4
      %v6323 = vsel %vm5262, %v6318, %v6322
      %v6366 = vunpack.c.l.b16 %v6264
      %v6367 = vunpack.c.l.b16 %v6265
      %v6368 = vunpack.c.l.b16 %v6266
      %v6369 = vunpack.c.l.b16 %v6267
      %v6370 = vunpack.c.l.b16 %v6268
      %v6371 = vunpack.c.l.b16 %v6269
      %v6372 = vunpack.c.l.b16 %v6270
      %v6373 = vunpack.c.l.b16 %v6271
      %v6374 = vunpack.c.l.b16 %v6272
      %v6375 = vunpack.c.l.b16 %v6273
      %v6376 = vunpack.c.l.b16 %v6274
      %v6377 = vunpack.c.l.b16 %v6275
      %v6378 = vunpack.c.l.b16 %v6276
      %v6379 = vunpack.c.l.b16 %v6277
      %v6380 = vunpack.c.l.b16 %v6278
      %v6381 = vunpack.c.l.b16 %v6279
      %v6382 = vunpack.c.l.b16 %v6280
      %v6383 = vunpack.c.l.b16 %v6281
      %v6384 = vunpack.c.l.b16 %v6282
      %v6385 = vunpack.c.l.b16 %v6283
      %v6386 = vunpack.c.l.b16 %v6284
      %v6387 = vunpack.c.l.b16 %v6285
      %v6388 = vunpack.c.l.b16 %v6286
      %v6389 = vunpack.c.l.b16 %v6287
      %v6390 = vunpack.c.l.b16 %v6288
      %v6391 = vunpack.c.l.b16 %v6289
      %v6392 = vunpack.c.l.b16 %v6290
      %v6393 = vunpack.c.l.b16 %v6291
      %v6394 = vunpack.c.l.b16 %v6292
      %v6395 = vunpack.c.l.b16 %v6293
      %v6396 = vunpack.c.l.b16 %v6294
      %v6397 = vunpack.c.l.b16 %v6295
      %v6398 = vpack.c.b16 %v6367, %v6366
      %v6399 = vpack.c.b16 %v6369, %v6368
      %v6400 = vpack.c.b16 %v6371, %v6370
      %v6401 = vpack.c.b16 %v6373, %v6372
      %v6402 = vpack.c.b16 %v6375, %v6374
      %v6403 = vpack.c.b16 %v6377, %v6376
      %v6404 = vpack.c.b16 %v6379, %v6378
      %v6405 = vpack.c.b16 %v6381, %v6380
      %v6406 = vpack.c.b16 %v6383, %v6382
      %v6407 = vpack.c.b16 %v6385, %v6384
      %v6408 = vpack.c.b16 %v6387, %v6386
      %v6409 = vpack.c.b16 %v6389, %v6388
      %v6410 = vpack.c.b16 %v6391, %v6390
      %v6411 = vpack.c.b16 %v6393, %v6392
      %v6412 = vpack.c.b16 %v6395, %v6394
      %v6413 = vpack.c.b16 %v6397, %v6396
      %6430 = vmatprep.subr.bf16.mxu0 0
      %6431 = vmatpush1.bf16.msra.mxu0 %v6398
      %6432 = vmatprep.subr.bf16.mxu0 0
      %6433 = vmatpush1.bf16.msra.mxu0 %v6399
      %6434 = vmatprep.subr.bf16.mxu0 0
      %6435 = vmatpush1.bf16.msra.mxu0 %v6400
      %6436 = vmatprep.subr.bf16.mxu0 0
      %6437 = vmatpush1.bf16.msra.mxu0 %v6401
      %6438 = vmatprep.subr.bf16.mxu0 0
      %6439 = vmatpush1.bf16.msra.mxu0 %v6402
      %6440 = vmatprep.subr.bf16.mxu0 0
      %6441 = vmatpush1.bf16.msra.mxu0 %v6403
      %6442 = vmatprep.subr.bf16.mxu0 0
      %6443 = vmatpush1.bf16.msra.mxu0 %v6404
      %6444 = vmatprep.subr.bf16.mxu0 0
      %6445 = vmatpush1.bf16.msra.mxu0 %v6405
      %6446 = vmatprep.subr.bf16.mxu0 0
      %6447 = vmatpush1.bf16.msra.mxu0 %v6406
      %6448 = vmatprep.subr.bf16.mxu0 0
      %6449 = vmatpush1.bf16.msra.mxu0 %v6407
      %6450 = vmatprep.subr.bf16.mxu0 0
      %6451 = vmatpush1.bf16.msra.mxu0 %v6408
      %6452 = vmatprep.subr.bf16.mxu0 0
      %6453 = vmatpush1.bf16.msra.mxu0 %v6409
      %6454 = vmatprep.subr.bf16.mxu0 0
      %6455 = vmatpush1.bf16.msra.mxu0 %v6410
      %6456 = vmatprep.subr.bf16.mxu0 0
      %6457 = vmatpush1.bf16.msra.mxu0 %v6411
      %6458 = vmatprep.subr.bf16.mxu0 0
      %6459 = vmatpush1.bf16.msra.mxu0 %v6412
      %6460 = vmatprep.subr.bf16.mxu0 0
      %6461 = vmatpush1.bf16.msra.mxu0 %v6413
      %6462 = vmatprep.mubr.bf16.mxu0 %v6311
      %6463 = vmatmul.mubr.bf16.gmra.mrb[0].mxu0 %v6308
      %v6464 = vpop.f32.mrb[0].mxu0
      %v6465 = vadd.f32 0.0, %v6464
      %v6466 = vpop.f32.mrb[0].mxu0
      %v6467 = vpop.f32.mrb[0].mxu0
      %v6468 = vadd.f32 0.0, %v6467
      %v6469 = vpop.f32.mrb[0].mxu0
      %6470 = vmatprep.mubr.bf16.mxu0 %v6315
      %6471 = vmatmul.mubr.bf16.gmra.mrb[0].mxu0 %v6313
      %v6472 = vpop.f32.mrb[0].mxu0
      %v6473 = vadd.f32 0.0, %v6472
      %v6474 = vpop.f32.mrb[0].mxu0
      %v6475 = vpop.f32.mrb[0].mxu0
      %v6476 = vadd.f32 0.0, %v6475
      %v6477 = vpop.f32.mrb[0].mxu0
      %6478 = vmatprep.mubr.bf16.mxu0 %v6319
      %6479 = vmatmul.mubr.bf16.gmra.mrb[0].mxu0 %v6317
      %v6480 = vpop.f32.mrb[0].mxu0
      %v6481 = vadd.f32 0.0, %v6480
      %v6482 = vpop.f32.mrb[0].mxu0
      %v6483 = vpop.f32.mrb[0].mxu0
      %v6484 = vadd.f32 0.0, %v6483
      %v6485 = vpop.f32.mrb[0].mxu0
      %6486 = vmatprep.mubr.bf16.mxu0 %v6323
      %6487 = vmatmul.mubr.bf16.gmra.mrb[0].mxu0 %v6321
      %v6488 = vpop.f32.mrb[0].mxu0
      %v6489 = vadd.f32 0.0, %v6488
      %v6490 = vpop.f32.mrb[0].mxu0
      %v6491 = vpop.f32.mrb[0].mxu0
      %v6492 = vadd.f32 0.0, %v6491
      %v6493 = vpop.f32.mrb[0].mxu0
      %6494 = vmatprep.mubr.bf16.mxu0 %v6322
      %6495 = vmatmul.mubr.bf16.gmra.mrb[0].mxu0 %v6320
      %v6496 = vpop.f32.mrb[0].mxu0
      %v6497 = vadd.f32 0.0, %v6496
      %v6498 = vpop.f32.mrb[0].mxu0
      %v6499 = vpop.f32.mrb[0].mxu0
      %v6500 = vpop.f32.mrb[0].mxu0
      %6501 = vdwg.mxu0
      %v6502 = vadd.f32 %v6250, %v6465
      %v6503 = vadd.f32 %v6251, %v6468
      %v6504 = vadd.f32 %v6252, %v6473
      %v6505 = vadd.f32 %v6253, %v6476
      %v6506 = vadd.f32 %v6254, %v6481
      %v6507 = vadd.f32 %v6255, %v6484
      %v6508 = vadd.f32 %v6256, %v6489
      %v6509 = vadd.f32 %v6257, %v6492
      %v6510 = vadd.f32 %v6258, %v6497
      %v6511 = vld [vmem:[#allocation4 + $0x10] sm:$0xf0]
      %v6512 = vld [vmem:[#allocation4 + $0x18] sm:$0xf0]
      %v6513 = vld [vmem:[#allocation4 + $0x20] sm:$0xff]
      %v6514 = vld [vmem:[#allocation4 + $0x28] sm:$0xff]
      %v6515 = vld [vmem:[#allocation4 + $0x30] sm:$0xff]
      %v6516 = vld [vmem:[#allocation4 + $0x38] sm:$0xff]
      %v6517 = vld [vmem:[#allocation4 + $0x40] sm:$0xff]
      %v6518 = vld [vmem:[#allocation4 + $0x48] sm:$0xff]
      %v6519 = vld [vmem:[#allocation4 + $0x50] sm:$0xff]
      %v6520 = vld [vmem:[#allocation4 + $0x58] sm:$0xff]
      %v6521 = vld [vmem:[#allocation4 + $0x60] sm:$0x1]
      %v6522 = vld [vmem:[#allocation4 + $0x68] sm:$0x1]
      %s6523 = scalar_lea.vmem %s7, 896
      %v6524 = vld [vmem:[%s6523] sm:$0xf]
      %v6525 = vld [vmem:[%s6523 + $0x4] sm:$0xf]
      %v6526 = vld [vmem:[%s6523 + $0x8] sm:$0xf]
      %v6527 = vld [vmem:[%s6523 + $0xc] sm:$0xf]
      %v6528 = vld [vmem:[%s6523 + $0x10] sm:$0xf]
      %v6529 = vld [vmem:[%s6523 + $0x14] sm:$0xf]
      %v6530 = vld [vmem:[%s6523 + $0x18] sm:$0xf]
      %v6531 = vld [vmem:[%s6523 + $0x1c] sm:$0xf]
      %v6532 = vld [vmem:[%s6523 + $0x20] sm:$0xf]
      %v6533 = vld [vmem:[%s6523 + $0x24] sm:$0xf]
      %v6534 = vld [vmem:[%s6523 + $0x28] sm:$0xf]
      %v6535 = vld [vmem:[%s6523 + $0x2c] sm:$0xf]
      %v6536 = vld [vmem:[%s6523 + $0x30] sm:$0xf]
      %v6537 = vld [vmem:[%s6523 + $0x34] sm:$0xf]
      %v6538 = vld [vmem:[%s6523 + $0x38] sm:$0xf]
      %v6539 = vld [vmem:[%s6523 + $0x3c] sm:$0xf]
      %v6540 = vld [vmem:[%s6523 + $0x40] sm:$0xf]
      %v6541 = vld [vmem:[%s6523 + $0x44] sm:$0xf]
      %v6542 = vld [vmem:[%s6523 + $0x48] sm:$0xf]
      %v6543 = vld [vmem:[%s6523 + $0x4c] sm:$0xf]
      %v6544 = vld [vmem:[%s6523 + $0x50] sm:$0xf]
      %v6545 = vld [vmem:[%s6523 + $0x54] sm:$0xf]
      %v6546 = vld [vmem:[%s6523 + $0x58] sm:$0xf]
      %v6547 = vld [vmem:[%s6523 + $0x5c] sm:$0xf]
      %v6548 = vld [vmem:[%s6523 + $0x60] sm:$0xf]
      %v6549 = vld [vmem:[%s6523 + $0x64] sm:$0xf]
      %v6550 = vld [vmem:[%s6523 + $0x68] sm:$0xf]
      %v6551 = vld [vmem:[%s6523 + $0x6c] sm:$0xf]
      %v6552 = vld [vmem:[%s6523 + $0x70] sm:$0xf]
      %v6553 = vld [vmem:[%s6523 + $0x74] sm:$0xf]
      %v6554 = vld [vmem:[%s6523 + $0x78] sm:$0xf]
      %v6555 = vld [vmem:[%s6523 + $0x7c] sm:$0xf]
      %v6557 = vshrl.u32 %v6511, 16
      %v6559 = vrot.slane %v6557, 4
      %v6560 = vshll.u32 %v6511, 16
      %v6562 = vrot.slane %v6560, 5
      %v6563 = vor.u32 %v6559, %v6562
      %v6565 = vshrl.u32 %v6513, 16
      %v6567 = vrot.slane %v6565, 4
      %v6568 = vshll.u32 %v6513, 16
      %v6570 = vrot.slane %v6568, 5
      %v6571 = vor.u32 %v6567, %v6570
      %v6572 = vsel %vm2298, %v6563, %v6571
      %v6574 = vshrl.u32 %v6512, 16
      %v6576 = vrot.slane %v6574, 4
      %v6577 = vshll.u32 %v6512, 16
      %v6579 = vrot.slane %v6577, 5
      %v6580 = vor.u32 %v6576, %v6579
      %v6582 = vshrl.u32 %v6514, 16
      %v6584 = vrot.slane %v6582, 4
      %v6585 = vshll.u32 %v6514, 16
      %v6587 = vrot.slane %v6585, 5
      %v6588 = vor.u32 %v6584, %v6587
      %v6589 = vsel %vm2298, %v6580, %v6588
      %v6591 = vshrl.u32 %v6515, 16
      %v6593 = vrot.slane %v6591, 4
      %v6594 = vshll.u32 %v6515, 16
      %v6596 = vrot.slane %v6594, 5
      %v6597 = vor.u32 %v6593, %v6596
      %v6598 = vsel %vm2298, %v6571, %v6597
      %v6600 = vshrl.u32 %v6516, 16
      %v6602 = vrot.slane %v6600, 4
      %v6603 = vshll.u32 %v6516, 16
      %v6605 = vrot.slane %v6603, 5
      %v6606 = vor.u32 %v6602, %v6605
      %v6607 = vsel %vm2298, %v6588, %v6606
      %v6609 = vshrl.u32 %v6517, 16
      %v6611 = vrot.slane %v6609, 4
      %v6612 = vshll.u32 %v6517, 16
      %v6614 = vrot.slane %v6612, 5
      %v6615 = vor.u32 %v6611, %v6614
      %v6616 = vsel %vm2298, %v6597, %v6615
      %v6618 = vshrl.u32 %v6518, 16
      %v6620 = vrot.slane %v6618, 4
      %v6621 = vshll.u32 %v6518, 16
      %v6623 = vrot.slane %v6621, 5
      %v6624 = vor.u32 %v6620, %v6623
      %v6625 = vsel %vm2298, %v6606, %v6624
      %v6627 = vshrl.u32 %v6519, 16
      %v6629 = vrot.slane %v6627, 4
      %v6630 = vshll.u32 %v6519, 16
      %v6632 = vrot.slane %v6630, 5
      %v6633 = vor.u32 %v6629, %v6632
      %v6634 = vsel %vm2298, %v6615, %v6633
      %v6636 = vshrl.u32 %v6520, 16
      %v6638 = vrot.slane %v6636, 4
      %v6639 = vshll.u32 %v6520, 16
      %v6641 = vrot.slane %v6639, 5
      %v6642 = vor.u32 %v6638, %v6641
      %v6643 = vsel %vm2298, %v6624, %v6642
      %v6645 = vshll.u32 %v6521, 16
      %v6647 = vrot.slane %v6645, 5
      %v6648 = vsel %vm2298, %v6633, %v6647
      %v6650 = vshll.u32 %v6522, 16
      %v6652 = vrot.slane %v6650, 5
      %v6653 = vsel %vm2298, %v6642, %v6652
      %v6696 = vunpack.c.l.b16 %v6524
      %v6697 = vunpack.c.l.b16 %v6525
      %v6698 = vunpack.c.l.b16 %v6526
      %v6699 = vunpack.c.l.b16 %v6527
      %v6700 = vunpack.c.l.b16 %v6528
      %v6701 = vunpack.c.l.b16 %v6529
      %v6702 = vunpack.c.l.b16 %v6530
      %v6703 = vunpack.c.l.b16 %v6531
      %v6704 = vunpack.c.l.b16 %v6532
      %v6705 = vunpack.c.l.b16 %v6533
      %v6706 = vunpack.c.l.b16 %v6534
      %v6707 = vunpack.c.l.b16 %v6535
      %v6708 = vunpack.c.l.b16 %v6536
      %v6709 = vunpack.c.l.b16 %v6537
      %v6710 = vunpack.c.l.b16 %v6538
      %v6711 = vunpack.c.l.b16 %v6539
      %v6712 = vunpack.c.l.b16 %v6540
      %v6713 = vunpack.c.l.b16 %v6541
      %v6714 = vunpack.c.l.b16 %v6542
      %v6715 = vunpack.c.l.b16 %v6543
      %v6716 = vunpack.c.l.b16 %v6544
      %v6717 = vunpack.c.l.b16 %v6545
      %v6718 = vunpack.c.l.b16 %v6546
      %v6719 = vunpack.c.l.b16 %v6547
      %v6720 = vunpack.c.l.b16 %v6548
      %v6721 = vunpack.c.l.b16 %v6549
      %v6722 = vunpack.c.l.b16 %v6550
      %v6723 = vunpack.c.l.b16 %v6551
      %v6724 = vunpack.c.l.b16 %v6552
      %v6725 = vunpack.c.l.b16 %v6553
      %v6726 = vunpack.c.l.b16 %v6554
      %v6727 = vunpack.c.l.b16 %v6555
      %v6728 = vpack.c.b16 %v6697, %v6696
      %v6729 = vpack.c.b16 %v6699, %v6698
      %v6730 = vpack.c.b16 %v6701, %v6700
      %v6731 = vpack.c.b16 %v6703, %v6702
      %v6732 = vpack.c.b16 %v6705, %v6704
      %v6733 = vpack.c.b16 %v6707, %v6706
      %v6734 = vpack.c.b16 %v6709, %v6708
      %v6735 = vpack.c.b16 %v6711, %v6710
      %v6736 = vpack.c.b16 %v6713, %v6712
      %v6737 = vpack.c.b16 %v6715, %v6714
      %v6738 = vpack.c.b16 %v6717, %v6716
      %v6739 = vpack.c.b16 %v6719, %v6718
      %v6740 = vpack.c.b16 %v6721, %v6720
      %v6741 = vpack.c.b16 %v6723, %v6722
      %v6742 = vpack.c.b16 %v6725, %v6724
      %v6743 = vpack.c.b16 %v6727, %v6726
      %6760 = vmatprep.subr.bf16.mxu0 0
      %6761 = vmatpush1.bf16.msra.mxu0 %v6728
      %6762 = vmatprep.subr.bf16.mxu0 0
      %6763 = vmatpush1.bf16.msra.mxu0 %v6729
      %6764 = vmatprep.subr.bf16.mxu0 0
      %6765 = vmatpush1.bf16.msra.mxu0 %v6730
      %6766 = vmatprep.subr.bf16.mxu0 0
      %6767 = vmatpush1.bf16.msra.mxu0 %v6731
      %6768 = vmatprep.subr.bf16.mxu0 0
      %6769 = vmatpush1.bf16.msra.mxu0 %v6732
      %6770 = vmatprep.subr.bf16.mxu0 0
      %6771 = vmatpush1.bf16.msra.mxu0 %v6733
      %6772 = vmatprep.subr.bf16.mxu0 0
      %6773 = vmatpush1.bf16.msra.mxu0 %v6734
      %6774 = vmatprep.subr.bf16.mxu0 0
      %6775 = vmatpush1.bf16.msra.mxu0 %v6735
      %6776 = vmatprep.subr.bf16.mxu0 0
      %6777 = vmatpush1.bf16.msra.mxu0 %v6736
      %6778 = vmatprep.subr.bf16.mxu0 0
      %6779 = vmatpush1.bf16.msra.mxu0 %v6737
      %6780 = vmatprep.subr.bf16.mxu0 0
      %6781 = vmatpush1.bf16.msra.mxu0 %v6738
      %6782 = vmatprep.subr.bf16.mxu0 0
      %6783 = vmatpush1.bf16.msra.mxu0 %v6739
      %6784 = vmatprep.subr.bf16.mxu0 0
      %6785 = vmatpush1.bf16.msra.mxu0 %v6740
      %6786 = vmatprep.subr.bf16.mxu0 0
      %6787 = vmatpush1.bf16.msra.mxu0 %v6741
      %6788 = vmatprep.subr.bf16.mxu0 0
      %6789 = vmatpush1.bf16.msra.mxu0 %v6742
      %6790 = vmatprep.subr.bf16.mxu0 0
      %6791 = vmatpush1.bf16.msra.mxu0 %v6743
      %6792 = vmatprep.mubr.bf16.mxu0 %v6589
      %6793 = vmatmul.mubr.bf16.gmra.mrb[0].mxu0 %v6572
      %v6794 = vpop.f32.mrb[0].mxu0
      %v6795 = vadd.f32 0.0, %v6794
      %v6796 = vpop.f32.mrb[0].mxu0
      %v6797 = vpop.f32.mrb[0].mxu0
      %v6798 = vadd.f32 0.0, %v6797
      %v6799 = vpop.f32.mrb[0].mxu0
      %6800 = vmatprep.mubr.bf16.mxu0 %v6607
      %6801 = vmatmul.mubr.bf16.gmra.mrb[0].mxu0 %v6598
      %v6802 = vpop.f32.mrb[0].mxu0
      %v6803 = vadd.f32 0.0, %v6802
      %v6804 = vpop.f32.mrb[0].mxu0
      %v6805 = vpop.f32.mrb[0].mxu0
      %v6806 = vadd.f32 0.0, %v6805
      %v6807 = vpop.f32.mrb[0].mxu0
      %6808 = vmatprep.mubr.bf16.mxu0 %v6625
      %6809 = vmatmul.mubr.bf16.gmra.mrb[0].mxu0 %v6616
      %v6810 = vpop.f32.mrb[0].mxu0
      %v6811 = vadd.f32 0.0, %v6810
      %v6812 = vpop.f32.mrb[0].mxu0
      %v6813 = vpop.f32.mrb[0].mxu0
      %v6814 = vadd.f32 0.0, %v6813
      %v6815 = vpop.f32.mrb[0].mxu0
      %6816 = vmatprep.mubr.bf16.mxu0 %v6643
      %6817 = vmatmul.mubr.bf16.gmra.mrb[0].mxu0 %v6634
      %v6818 = vpop.f32.mrb[0].mxu0
      %v6819 = vadd.f32 0.0, %v6818
      %v6820 = vpop.f32.mrb[0].mxu0
      %v6821 = vpop.f32.mrb[0].mxu0
      %v6822 = vadd.f32 0.0, %v6821
      %v6823 = vpop.f32.mrb[0].mxu0
      %6824 = vmatprep.mubr.bf16.mxu0 %v6653
      %6825 = vmatmul.mubr.bf16.gmra.mrb[0].mxu0 %v6648
      %v6826 = vpop.f32.mrb[0].mxu0
      %v6827 = vadd.f32 0.0, %v6826
      %v6828 = vpop.f32.mrb[0].mxu0
      %v6829 = vpop.f32.mrb[0].mxu0
      %v6830 = vpop.f32.mrb[0].mxu0
      %6831 = vdwg.mxu0
      %v6832 = vadd.f32 %v6502, %v6795
      %v6833 = vadd.f32 %v6503, %v6798
      %v6834 = vadd.f32 %v6504, %v6803
      %v6835 = vadd.f32 %v6505, %v6806
      %v6836 = vadd.f32 %v6506, %v6811
      %v6837 = vadd.f32 %v6507, %v6814
      %v6838 = vadd.f32 %v6508, %v6819
      %v6839 = vadd.f32 %v6509, %v6822
      %v6840 = vadd.f32 %v6510, %v6827
      %v6841 = vld [vmem:[#allocation4 + $0x10] sm:$0xe0]
      %v6842 = vld [vmem:[#allocation4 + $0x18] sm:$0xe0]
      %s6843 = scalar_lea.vmem %s7, 1024
      %v6844 = vld [vmem:[%s6843] sm:$0xf]
      %v6845 = vld [vmem:[%s6843 + $0x4] sm:$0xf]
      %v6846 = vld [vmem:[%s6843 + $0x8] sm:$0xf]
      %v6847 = vld [vmem:[%s6843 + $0xc] sm:$0xf]
      %v6848 = vld [vmem:[%s6843 + $0x10] sm:$0xf]
      %v6849 = vld [vmem:[%s6843 + $0x14] sm:$0xf]
      %v6850 = vld [vmem:[%s6843 + $0x18] sm:$0xf]
      %v6851 = vld [vmem:[%s6843 + $0x1c] sm:$0xf]
      %v6852 = vld [vmem:[%s6843 + $0x20] sm:$0xf]
      %v6853 = vld [vmem:[%s6843 + $0x24] sm:$0xf]
      %v6854 = vld [vmem:[%s6843 + $0x28] sm:$0xf]
      %v6855 = vld [vmem:[%s6843 + $0x2c] sm:$0xf]
      %v6856 = vld [vmem:[%s6843 + $0x30] sm:$0xf]
      %v6857 = vld [vmem:[%s6843 + $0x34] sm:$0xf]
      %v6858 = vld [vmem:[%s6843 + $0x38] sm:$0xf]
      %v6859 = vld [vmem:[%s6843 + $0x3c] sm:$0xf]
      %v6860 = vld [vmem:[%s6843 + $0x40] sm:$0xf]
      %v6861 = vld [vmem:[%s6843 + $0x44] sm:$0xf]
      %v6862 = vld [vmem:[%s6843 + $0x48] sm:$0xf]
      %v6863 = vld [vmem:[%s6843 + $0x4c] sm:$0xf]
      %v6864 = vld [vmem:[%s6843 + $0x50] sm:$0xf]
      %v6865 = vld [vmem:[%s6843 + $0x54] sm:$0xf]
      %v6866 = vld [vmem:[%s6843 + $0x58] sm:$0xf]
      %v6867 = vld [vmem:[%s6843 + $0x5c] sm:$0xf]
      %v6868 = vld [vmem:[%s6843 + $0x60] sm:$0xf]
      %v6869 = vld [vmem:[%s6843 + $0x64] sm:$0xf]
      %v6870 = vld [vmem:[%s6843 + $0x68] sm:$0xf]
      %v6871 = vld [vmem:[%s6843 + $0x6c] sm:$0xf]
      %v6872 = vld [vmem:[%s6843 + $0x70] sm:$0xf]
      %v6873 = vld [vmem:[%s6843 + $0x74] sm:$0xf]
      %v6874 = vld [vmem:[%s6843 + $0x78] sm:$0xf]
      %v6875 = vld [vmem:[%s6843 + $0x7c] sm:$0xf]
      %v6888 = vrot.slane %v6841, 5
      %v6889 = vrot.slane %v6513, 5
      %v6890 = vsel %vm3036, %v6888, %v6889
      %v6891 = vrot.slane %v6842, 5
      %v6892 = vrot.slane %v6514, 5
      %v6893 = vsel %vm3036, %v6891, %v6892
      %v6894 = vrot.slane %v6515, 5
      %v6895 = vsel %vm3036, %v6889, %v6894
      %v6896 = vrot.slane %v6516, 5
      %v6897 = vsel %vm3036, %v6892, %v6896
      %v6898 = vrot.slane %v6517, 5
      %v6899 = vsel %vm3036, %v6894, %v6898
      %v6900 = vrot.slane %v6518, 5
      %v6901 = vsel %vm3036, %v6896, %v6900
      %v6902 = vrot.slane %v6519, 5
      %v6903 = vsel %vm3036, %v6898, %v6902
      %v6904 = vrot.slane %v6520, 5
      %v6905 = vsel %vm3036, %v6900, %v6904
      %v6906 = vrot.slane %v6521, 5
      %v6907 = vsel %vm3036, %v6902, %v6906
      %v6908 = vrot.slane %v6522, 5
      %v6909 = vsel %vm3036, %v6904, %v6908
      %v6952 = vunpack.c.l.b16 %v6844
      %v6953 = vunpack.c.l.b16 %v6845
      %v6954 = vunpack.c.l.b16 %v6846
      %v6955 = vunpack.c.l.b16 %v6847
      %v6956 = vunpack.c.l.b16 %v6848
      %v6957 = vunpack.c.l.b16 %v6849
      %v6958 = vunpack.c.l.b16 %v6850
      %v6959 = vunpack.c.l.b16 %v6851
      %v6960 = vunpack.c.l.b16 %v6852
      %v6961 = vunpack.c.l.b16 %v6853
      %v6962 = vunpack.c.l.b16 %v6854
      %v6963 = vunpack.c.l.b16 %v6855
      %v6964 = vunpack.c.l.b16 %v6856
      %v6965 = vunpack.c.l.b16 %v6857
      %v6966 = vunpack.c.l.b16 %v6858
      %v6967 = vunpack.c.l.b16 %v6859
      %v6968 = vunpack.c.l.b16 %v6860
      %v6969 = vunpack.c.l.b16 %v6861
      %v6970 = vunpack.c.l.b16 %v6862
      %v6971 = vunpack.c.l.b16 %v6863
      %v6972 = vunpack.c.l.b16 %v6864
      %v6973 = vunpack.c.l.b16 %v6865
      %v6974 = vunpack.c.l.b16 %v6866
      %v6975 = vunpack.c.l.b16 %v6867
      %v6976 = vunpack.c.l.b16 %v6868
      %v6977 = vunpack.c.l.b16 %v6869
      %v6978 = vunpack.c.l.b16 %v6870
      %v6979 = vunpack.c.l.b16 %v6871
      %v6980 = vunpack.c.l.b16 %v6872
      %v6981 = vunpack.c.l.b16 %v6873
      %v6982 = vunpack.c.l.b16 %v6874
      %v6983 = vunpack.c.l.b16 %v6875
      %v6984 = vpack.c.b16 %v6953, %v6952
      %v6985 = vpack.c.b16 %v6955, %v6954
      %v6986 = vpack.c.b16 %v6957, %v6956
      %v6987 = vpack.c.b16 %v6959, %v6958
      %v6988 = vpack.c.b16 %v6961, %v6960
      %v6989 = vpack.c.b16 %v6963, %v6962
      %v6990 = vpack.c.b16 %v6965, %v6964
      %v6991 = vpack.c.b16 %v6967, %v6966
      %v6992 = vpack.c.b16 %v6969, %v6968
      %v6993 = vpack.c.b16 %v6971, %v6970
      %v6994 = vpack.c.b16 %v6973, %v6972
      %v6995 = vpack.c.b16 %v6975, %v6974
      %v6996 = vpack.c.b16 %v6977, %v6976
      %v6997 = vpack.c.b16 %v6979, %v6978
      %v6998 = vpack.c.b16 %v6981, %v6980
      %v6999 = vpack.c.b16 %v6983, %v6982
      %7016 = vmatprep.subr.bf16.mxu0 0
      %7017 = vmatpush1.bf16.msra.mxu0 %v6984
      %7018 = vmatprep.subr.bf16.mxu0 0
      %7019 = vmatpush1.bf16.msra.mxu0 %v6985
      %7020 = vmatprep.subr.bf16.mxu0 0
      %7021 = vmatpush1.bf16.msra.mxu0 %v6986
      %7022 = vmatprep.subr.bf16.mxu0 0
      %7023 = vmatpush1.bf16.msra.mxu0 %v6987
      %7024 = vmatprep.subr.bf16.mxu0 0
      %7025 = vmatpush1.bf16.msra.mxu0 %v6988
      %7026 = vmatprep.subr.bf16.mxu0 0
      %7027 = vmatpush1.bf16.msra.mxu0 %v6989
      %7028 = vmatprep.subr.bf16.mxu0 0
      %7029 = vmatpush1.bf16.msra.mxu0 %v6990
      %7030 = vmatprep.subr.bf16.mxu0 0
      %7031 = vmatpush1.bf16.msra.mxu0 %v6991
      %7032 = vmatprep.subr.bf16.mxu0 0
      %7033 = vmatpush1.bf16.msra.mxu0 %v6992
      %7034 = vmatprep.subr.bf16.mxu0 0
      %7035 = vmatpush1.bf16.msra.mxu0 %v6993
      %7036 = vmatprep.subr.bf16.mxu0 0
      %7037 = vmatpush1.bf16.msra.mxu0 %v6994
      %7038 = vmatprep.subr.bf16.mxu0 0
      %7039 = vmatpush1.bf16.msra.mxu0 %v6995
      %7040 = vmatprep.subr.bf16.mxu0 0
      %7041 = vmatpush1.bf16.msra.mxu0 %v6996
      %7042 = vmatprep.subr.bf16.mxu0 0
      %7043 = vmatpush1.bf16.msra.mxu0 %v6997
      %7044 = vmatprep.subr.bf16.mxu0 0
      %7045 = vmatpush1.bf16.msra.mxu0 %v6998
      %7046 = vmatprep.subr.bf16.mxu0 0
      %7047 = vmatpush1.bf16.msra.mxu0 %v6999
      %7048 = vmatprep.mubr.bf16.mxu0 %v6893
      %7049 = vmatmul.mubr.bf16.gmra.mrb[0].mxu0 %v6890
      %v7050 = vpop.f32.mrb[0].mxu0
      %v7051 = vadd.f32 0.0, %v7050
      %v7052 = vpop.f32.mrb[0].mxu0
      %v7053 = vpop.f32.mrb[0].mxu0
      %v7054 = vadd.f32 0.0, %v7053
      %v7055 = vpop.f32.mrb[0].mxu0
      %7056 = vmatprep.mubr.bf16.mxu0 %v6897
      %7057 = vmatmul.mubr.bf16.gmra.mrb[0].mxu0 %v6895
      %v7058 = vpop.f32.mrb[0].mxu0
      %v7059 = vadd.f32 0.0, %v7058
      %v7060 = vpop.f32.mrb[0].mxu0
      %v7061 = vpop.f32.mrb[0].mxu0
      %v7062 = vadd.f32 0.0, %v7061
      %v7063 = vpop.f32.mrb[0].mxu0
      %7064 = vmatprep.mubr.bf16.mxu0 %v6901
      %7065 = vmatmul.mubr.bf16.gmra.mrb[0].mxu0 %v6899
      %v7066 = vpop.f32.mrb[0].mxu0
      %v7067 = vadd.f32 0.0, %v7066
      %v7068 = vpop.f32.mrb[0].mxu0
      %v7069 = vpop.f32.mrb[0].mxu0
      %v7070 = vadd.f32 0.0, %v7069
      %v7071 = vpop.f32.mrb[0].mxu0
      %7072 = vmatprep.mubr.bf16.mxu0 %v6905
      %7073 = vmatmul.mubr.bf16.gmra.mrb[0].mxu0 %v6903
      %v7074 = vpop.f32.mrb[0].mxu0
      %v7075 = vadd.f32 0.0, %v7074
      %v7076 = vpop.f32.mrb[0].mxu0
      %v7077 = vpop.f32.mrb[0].mxu0
      %v7078 = vadd.f32 0.0, %v7077
      %v7079 = vpop.f32.mrb[0].mxu0
      %7080 = vmatprep.mubr.bf16.mxu0 %v6909
      %7081 = vmatmul.mubr.bf16.gmra.mrb[0].mxu0 %v6907
      %v7082 = vpop.f32.mrb[0].mxu0
      %v7083 = vadd.f32 0.0, %v7082
      %v7084 = vpop.f32.mrb[0].mxu0
      %v7085 = vpop.f32.mrb[0].mxu0
      %v7086 = vpop.f32.mrb[0].mxu0
      %7087 = vdwg.mxu0
      %v7088 = vadd.f32 %v6832, %v7051
      %v7089 = vadd.f32 %v6833, %v7054
      %v7090 = vadd.f32 %v6834, %v7059
      %v7091 = vadd.f32 %v6835, %v7062
      %v7092 = vadd.f32 %v6836, %v7067
      %v7093 = vadd.f32 %v6837, %v7070
      %v7094 = vadd.f32 %v6838, %v7075
      %v7095 = vadd.f32 %v6839, %v7078
      %v7096 = vadd.f32 %v6840, %v7083
      %v7097 = vld [vmem:[%s8] sm:$0x1]
      %v7099 = vlaneseq
      %v7100 = vshrl.u32 %v7099, 7
      %v7101 = vsub.s32 0, %v7100
      %v7102 = vrot.slane %v7097, %v7101
      %v7104 = vadd.f32 %v7088, %v7102
      %v7105 = vadd.f32 %v7089, %v7102
      %v7106 = vadd.f32 %v7090, %v7102
      %v7107 = vadd.f32 %v7091, %v7102
      %v7108 = vadd.f32 %v7092, %v7102
      %v7109 = vadd.f32 %v7093, %v7102
      %v7110 = vadd.f32 %v7094, %v7102
      %v7111 = vadd.f32 %v7095, %v7102
      %v7112 = vadd.f32 %v7096, %v7102
      %7113 = vst [vmem:[%s359] sm:$0xff] %v7104
      %7114 = vst [vmem:[%s359 + $0x8] sm:$0xff] %v7105
      %7115 = vst [vmem:[%s359 + $0x10] sm:$0xff] %v7106
      %7116 = vst [vmem:[%s359 + $0x18] sm:$0xff] %v7107
      %7117 = vst [vmem:[%s359 + $0x20] sm:$0xff] %v7108
      %7118 = vst [vmem:[%s359 + $0x28] sm:$0xff] %v7109
      %7119 = vst [vmem:[%s359 + $0x30] sm:$0xff] %v7110
      %7120 = vst [vmem:[%s359 + $0x38] sm:$0xff] %v7111
      %7121 = vst [vmem:[%s359 + $0x40] sm:$0xff] %v7112
      %p7122 = scmp.lt.s32.totalorder %s21, 1
      %s7123 = scalar_select %p7122, %s21, 1
      %s7124 = smul.addr %s7123, 9
      %s7125 = smul.addr %s7124, 8
      %s7126 = scalar_lea.vmem %s10, %s7125
      // Predicated region
      $region61: #{_forward.1} parent=59 // pred_check
        %p7127 = pneg %p254
      $region62: #{_forward.1} parent=59 // pred_check_branch
        %7129 = sbr.rel (%p7127) target = $region64
      $region63: #{_forward.1} parent=59 // pred_region
        _
      $region64: #{_forward.1} parent=59 // pred_fallthru
        _
    $region60: #{_forward.1} parent=5 // pred_fallthru
      _
    %p7130 = scmp.le.s32.totalorder 2, %s16
    // Predicated region
    $region65: #{_forward.1} parent=5 // pred_check
      %p7131 = pneg %p7130
    $region66: #{_forward.1} parent=5 // pred_check_branch
      %7133 = sbr.rel (%p7131) target = $region68
    $region67: #{_forward.1} parent=5 // pred_region
      %s7134 = ssub.s32 %s16, 2
      // Predicated region
      $region69: #{_forward.1} parent=67 // pred_check
        %p7135 = pneg %p260
      $region70: #{_forward.1} parent=67 // pred_check_branch
        %7137 = sbr.rel (%p7135) target = $region72
      $region71: #{_forward.1} parent=67 // pred_region
        %p7138 = scmp.lt.s32.totalorder %s22, 1
        %s7139 = scalar_select %p7138, %s22, 1
        %s7140 = smul.addr %s7139, 9
        %s7141 = smul.addr %s7140, 8
        %s7142 = scalar_lea.vmem %s10, %s7141
      $region72: #{_forward.1} parent=67 // pred_fallthru
        _
    $region68: #{_forward.1} parent=5 // pred_fallthru
      _
  $region6: #{_forward.1} parent=0 // loop_footer
    %s20 = sadd.s32 1, %s16
  $region7: #{_forward.1} parent=0 // loop_footer_branch
    %15 = sbr.rel target = $region3
  $region8: #{_forward.1} parent=0 // loop_exit
    _

</llo_original>
